<compile_context>
chip_gen: v6e
topology: v6e:2x2x1
jax: 0.10.0
libtpu: 0.0.40
codegen_flags: <defaults>
</compile_context>

<pallas_src>
import jax
import jax.numpy as jnp
from jax.experimental import pallas as pl
from jax.experimental.pallas import tpu as pltpu


# ---------------------------------------------------------------------------
# Config (mirrors the PyTorch Config; pretrained_embed replaced by a
# deterministic random table since getId2Vec() is not available).
# ---------------------------------------------------------------------------
VOCAB_SIZE = 59290
EMBED_DIM = 50
EMBED_PAD = 64          # K padded to sublane/lane-friendly size (zeros)
OUTPUT_DIM = 2
HIDDEN_SIZE = 128
NUM_LAYERS = 2
INTERNAL = 32
OUT_PAD = 128           # lane-dense padded logits width (sliced to OUTPUT_DIM outside)

MAX_CHUNK = 64          # max timesteps per grid step (keeps VMEM tiny, v7x-safe)
UNROLL = 8              # partial unroll of the in-kernel time loop
VMEM_LIMIT = 48 * 1024 * 1024


def _const_spec(shape):
    nd = len(shape)
    return pl.BlockSpec(shape, lambda i, _n=nd: (0,) * _n)


def _pick_chunk(S, max_chunk=MAX_CHUNK):
    c = min(S, max_chunk)
    while S % c:
        c -= 1
    return c


# ---------------------------------------------------------------------------
# GRU gate math (gate order r, z, n — matches nn.GRU).
#   gx : [B, 3H] f32 = x@W_ih^T + b_ih + b_hh[r,z]   (n-part of b_hh NOT folded)
#   gh : [B, 3H] f32 = h@W_hh^T                       (no bias)
# r and z share one fused sigmoid (halves EUP pushes on the critical path).
# ---------------------------------------------------------------------------
def _gru_gates(gx, gh, bhhn, h_prev, H):
    rz = jax.nn.sigmoid(gx[:, :2 * H] + gh[:, :2 * H])
    r = rz[:, :H]
    z = rz[:, H:]
    n = jnp.tanh(gx[:, 2 * H:] + r * (gh[:, 2 * H:] + bhhn))
    return (1.0 - z) * n + z * h_prev


# ---------------------------------------------------------------------------
# Kernel 1: layer-0 bidirectional GRU over one S-chunk per grid step.
# Fwd direction consumes chunk i, bwd direction consumes chunk n-1-i.
# The input projection for the whole chunk (both directions) is fused in-kernel.
# Carry hf|hb lives in VMEM scratch across grid steps.
# ---------------------------------------------------------------------------
def gru_layer0_kernel(x_f_ref, x_b_ref, wih_f_ref, wih_b_ref, whh_blk_ref,
                      bx_f_ref, bx_b_ref, bhhn_f_ref, bhhn_b_ref,
                      out_f_ref, out_b_ref,
                      h_scr, gxf_scr, gxb_scr, outf_scr, outb_scr):
    B, H2 = h_scr.shape
    H = H2 // 2
    G = 3 * H
    CB = x_f_ref.shape[0]
    C = CB // B

    @pl.when(pl.program_id(0) == 0)
    def _init():
        h_scr[...] = jnp.zeros_like(h_scr)

    # Fused chunk-level input projections (bf16 x bf16 -> f32 accumulate).
    gxf_scr[...] = (jnp.dot(x_f_ref[...], wih_f_ref[...],
                            preferred_element_type=jnp.float32) + bx_f_ref[...])
    gxb_scr[...] = (jnp.dot(x_b_ref[...], wih_b_ref[...],
                            preferred_element_type=jnp.float32) + bx_b_ref[...])

    whh_blk = whh_blk_ref[...]
    bhhn_f = jnp.broadcast_to(bhhn_f_ref[...], (B, H))   # hoisted out of the loop
    bhhn_b = jnp.broadcast_to(bhhn_b_ref[...], (B, H))

    def body(t, carry):
        hf, hb = carry
        # Single block-diagonal recurrent matmul for both directions (K = 2H = 256).
        h_cat = jnp.concatenate([hf, hb], axis=-1).astype(whh_blk.dtype)
        gh = jnp.dot(h_cat, whh_blk, preferred_element_type=jnp.float32)
        rf = pl.multiple_of(t * B, B)
        rb = pl.multiple_of((C - 1 - t) * B, B)
        hf = _gru_gates(gxf_scr[pl.ds(rf, B), :], gh[:, :G], bhhn_f, hf, H)
        hb = _gru_gates(gxb_scr[pl.ds(rb, B), :], gh[:, G:], bhhn_b, hb, H)
        outf_scr[pl.ds(rf, B), :] = hf          # aligned (8,128) f32 tile stores
        outb_scr[pl.ds(rb, B), :] = hb
        return hf, hb

    hf, hb = jax.lax.fori_loop(0, C, body, (h_scr[:, :H], h_scr[:, H:]),
                               unroll=min(C, UNROLL))
    h_scr[:, :H] = hf
    h_scr[:, H:] = hb

    # One fully-aligned chunk-level cast+store into the bf16 inter-layer buffers.
    out_f_ref[...] = outf_scr[...].astype(out_f_ref.dtype)
    out_b_ref[...] = outb_scr[...].astype(out_b_ref.dtype)


# ---------------------------------------------------------------------------
# Kernel 2: layer-1 bidirectional GRU (final layer) + fc1 -> relu -> fc2 head.
# Consumes the layer-0 outputs (bf16) chunk-by-chunk; the layer-1 input
# projection (split-weight sum, no concat) is fused in-kernel.  Only the final
# hidden states feed the head, written once at the last grid step.
# ---------------------------------------------------------------------------
def gru_layer1_head_kernel(of_fc_ref, ob_fc_ref, of_rc_ref, ob_rc_ref,
                           w1f_top_ref, w1f_bot_ref, w1b_top_ref, w1b_bot_ref,
                           whh_blk_ref, bx_f_ref, bx_b_ref, bhhn_f_ref, bhhn_b_ref,
                           fc1_wt_ref, fc1_wb_ref, fc1_b_ref, fc2_w_ref, fc2_b_ref,
                           out_ref,
                           h_scr, gxf_scr, gxb_scr):
    B, H2 = h_scr.shape
    H = H2 // 2
    G = 3 * H
    CB = of_fc_ref.shape[0]
    C = CB // B

    @pl.when(pl.program_id(0) == 0)
    def _init():
        h_scr[...] = jnp.zeros_like(h_scr)

    # Fused layer-1 input projection: gx = out_f@W_top + out_b@W_bot (no concat op).
    gxf_scr[...] = (jnp.dot(of_fc_ref[...], w1f_top_ref[...],
                            preferred_element_type=jnp.float32)
                    + jnp.dot(ob_fc_ref[...], w1f_bot_ref[...],
                              preferred_element_type=jnp.float32)
                    + bx_f_ref[...])
    gxb_scr[...] = (jnp.dot(of_rc_ref[...], w1b_top_ref[...],
                            preferred_element_type=jnp.float32)
                    + jnp.dot(ob_rc_ref[...], w1b_bot_ref[...],
                              preferred_element_type=jnp.float32)
                    + bx_b_ref[...])

    whh_blk = whh_blk_ref[...]
    bhhn_f = jnp.broadcast_to(bhhn_f_ref[...], (B, H))
    bhhn_b = jnp.broadcast_to(bhhn_b_ref[...], (B, H))

    def body(t, carry):
        hf, hb = carry
        h_cat = jnp.concatenate([hf, hb], axis=-1).astype(whh_blk.dtype)
        gh = jnp.dot(h_cat, whh_blk, preferred_element_type=jnp.float32)
        rf = pl.multiple_of(t * B, B)
        rb = pl.multiple_of((C - 1 - t) * B, B)
        hf = _gru_gates(gxf_scr[pl.ds(rf, B), :], gh[:, :G], bhhn_f, hf, H)
        hb = _gru_gates(gxb_scr[pl.ds(rb, B), :], gh[:, G:], bhhn_b, hb, H)
        return hf, hb

    hf, hb = jax.lax.fori_loop(0, C, body, (h_scr[:, :H], h_scr[:, H:]),
                               unroll=min(C, UNROLL))
    h_scr[:, :H] = hf
    h_scr[:, H:] = hb

    @pl.when(pl.program_id(0) == pl.num_programs(0) - 1)
    def _head():
        # hf == h_n[-2] (last-layer fwd final), hb == h_n[-1] (last-layer bwd final).
        # fc1 on the implicit concat([hf, hb]) as two summed matmuls; relu; fc2 (padded).
        h1 = (jnp.dot(hf, fc1_wt_ref[...], preferred_element_type=jnp.float32)
              + jnp.dot(hb, fc1_wb_ref[...], preferred_element_type=jnp.float32)
              + fc1_b_ref[...])
        h1 = jnp.maximum(h1, 0.0)
        # (dropout before fc2 is identity at inference)
        out_ref[...] = (jnp.dot(h1, fc2_w_ref[...], preferred_element_type=jnp.float32)
                        + fc2_b_ref[...])


# ---------------------------------------------------------------------------
# pallas_call wrappers (S-chunk grid, sequential carry => "arbitrary")
# ---------------------------------------------------------------------------
def bigru_layer0(x2d, wih_f, wih_b, whh_blk, bx_f, bx_b, bhhn_f, bhhn_b,
                 *, S, B, chunk):
    H = HIDDEN_SIZE
    n = S // chunk
    CB = chunk * B
    E = x2d.shape[1]
    return pl.pallas_call(
        gru_layer0_kernel,
        out_shape=(jax.ShapeDtypeStruct((S * B, H), jnp.bfloat16),
                   jax.ShapeDtypeStruct((S * B, H), jnp.bfloat16)),
        grid=(n,),
        in_specs=[
            pl.BlockSpec((CB, E), lambda i: (i, 0)),            # fwd chunk
            pl.BlockSpec((CB, E), lambda i: (n - 1 - i, 0)),    # bwd chunk
            _const_spec(wih_f.shape), _const_spec(wih_b.shape),
            _const_spec(whh_blk.shape),
            _const_spec(bx_f.shape), _const_spec(bx_b.shape),
            _const_spec(bhhn_f.shape), _const_spec(bhhn_b.shape),
        ],
        out_specs=(
            pl.BlockSpec((CB, H), lambda i: (i, 0)),
            pl.BlockSpec((CB, H), lambda i: (n - 1 - i, 0)),
        ),
        scratch_shapes=[
            pltpu.VMEM((B, 2 * H), jnp.float32),      # persistent carry hf|hb
            pltpu.VMEM((CB, 3 * H), jnp.float32),     # gx fwd chunk
            pltpu.VMEM((CB, 3 * H), jnp.float32),     # gx bwd chunk
            pltpu.VMEM((CB, H), jnp.float32),         # chunk outputs fwd (f32 staging)
            pltpu.VMEM((CB, H), jnp.float32),         # chunk outputs bwd
        ],
        compiler_params=pltpu.CompilerParams(
            dimension_semantics=("arbitrary",),
            vmem_limit_bytes=VMEM_LIMIT,
        ),
    )(x2d, x2d, wih_f, wih_b, whh_blk, bx_f, bx_b, bhhn_f, bhhn_b)


def bigru_layer1_head(out_f, out_b, w1f_top, w1f_bot, w1b_top, w1b_bot, whh_blk,
                      bx_f, bx_b, bhhn_f, bhhn_b,
                      fc1_wt, fc1_wb, fc1_b, fc2_w, fc2_b, *, S, B, chunk):
    H = HIDDEN_SIZE
    n = S // chunk
    CB = chunk * B
    fwd = pl.BlockSpec((CB, H), lambda i: (i, 0))
    rev = pl.BlockSpec((CB, H), lambda i: (n - 1 - i, 0))
    consts = [w1f_top, w1f_bot, w1b_top, w1b_bot, whh_blk, bx_f, bx_b,
              bhhn_f, bhhn_b, fc1_wt, fc1_wb, fc1_b, fc2_w, fc2_b]
    return pl.pallas_call(
        gru_layer1_head_kernel,
        out_shape=jax.ShapeDtypeStruct((B, OUT_PAD), jnp.float32),
        grid=(n,),
        in_specs=[fwd, fwd, rev, rev] + [_const_spec(c.shape) for c in consts],
        out_specs=pl.BlockSpec((B, OUT_PAD), lambda i: (0, 0)),
        scratch_shapes=[
            pltpu.VMEM((B, 2 * H), jnp.float32),
            pltpu.VMEM((CB, 3 * H), jnp.float32),
            pltpu.VMEM((CB, 3 * H), jnp.float32),
        ],
        compiler_params=pltpu.CompilerParams(
            dimension_semantics=("arbitrary",),
            vmem_limit_bytes=VMEM_LIMIT,
        ),
    )(out_f, out_b, out_f, out_b, *consts)


# ---------------------------------------------------------------------------
# Parameter construction (deterministic, PyTorch-shaped, then pre-transposed,
# bias-folded, padded, bf16 matmul weights).
# ---------------------------------------------------------------------------
def init_params(key):
    H = HIDDEN_SIZE

    def uni(k, shape, scale):
        return jax.random.uniform(k, shape, jnp.float32, -scale, scale)

    keys = iter(jax.random.split(key, 32))
    params = {}

    # TODO(synk): pretrained getId2Vec() embedding replaced by a deterministic random table.
    emb = jax.random.normal(next(keys), (VOCAB_SIZE, EMBED_DIM), jnp.float32) * 0.1
    params["embedding"] = (jnp.zeros((VOCAB_SIZE, EMBED_PAD), jnp.float32)
                           .at[:, :EMBED_DIM].set(emb))

    k_gru = 1.0 / (H ** 0.5)
    for layer in range(NUM_LAYERS):
        d_in = EMBED_DIM if layer == 0 else 2 * H
        per_dir = {}
        for direction in ("fwd", "bwd"):
            w_ih = uni(next(keys), (3 * H, d_in), k_gru)    # PyTorch [3H, D_in], gates r|z|n
            w_hh = uni(next(keys), (3 * H, H), k_gru)       # PyTorch [3H, H]
            b_ih = uni(next(keys), (3 * H,), k_gru)
            b_hh = uni(next(keys), (3 * H,), k_gru)
            wih_t = w_ih.T                                  # [D_in, 3H]
            # Fold b_ih (all gates) + b_hh (r,z gates) into the fused gx projection.
            bx = (b_ih + b_hh.at[2 * H:].set(0.0)).reshape(1, 3 * H)
            per_dir[direction] = {
                "wih_T": wih_t,
                "whh_T": w_hh.T,
                "bx": bx,
                "bhh_n": b_hh[2 * H:].reshape(1, H),        # stays inside r*(...) in the loop
            }

        # Block-diagonal recurrent weight [2H, 6H] bf16 (one MXU pass per step on v6e/v7x).
        blk = jnp.zeros((2 * H, 6 * H), jnp.float32)
        blk = blk.at[:H, :3 * H].set(per_dir["fwd"]["whh_T"])
        blk = blk.at[H:, 3 * H:].set(per_dir["bwd"]["whh_T"])

        lp = {
            "whh_blk": blk.astype(jnp.bfloat16),
            "bx_f": per_dir["fwd"]["bx"], "bx_b": per_dir["bwd"]["bx"],
            "bhhn_f": per_dir["fwd"]["bhh_n"], "bhhn_b": per_dir["bwd"]["bhh_n"],
        }
        if layer == 0:
            for d, tag in (("fwd", "f"), ("bwd", "b")):
                wpad = (jnp.zeros((EMBED_PAD, 3 * H), jnp.float32)
                        .at[:EMBED_DIM].set(per_dir[d]["wih_T"]))
                lp[f"wih_{tag}"] = wpad.astype(jnp.bfloat16)        # [64, 3H] bf16
        else:
            for d, tag in (("fwd", "f"), ("bwd", "b")):
                wih_t = per_dir[d]["wih_T"]                          # [2H, 3H]
                lp[f"w1{tag}_top"] = wih_t[:H].astype(jnp.bfloat16)  # multiplies out_f
                lp[f"w1{tag}_bot"] = wih_t[H:].astype(jnp.bfloat16)  # multiplies out_b
        params[f"l{layer}"] = lp

    k1 = 1.0 / ((2 * H) ** 0.5)
    fc1_w = uni(next(keys), (INTERNAL, 2 * H), k1)          # PyTorch [32, 256]
    fc1_b = uni(next(keys), (INTERNAL,), k1)
    k2 = 1.0 / (INTERNAL ** 0.5)
    fc2_w = uni(next(keys), (OUTPUT_DIM, INTERNAL), k2)     # PyTorch [2, 32]
    fc2_b = uni(next(keys), (OUTPUT_DIM,), k2)

    fc1_wt = fc1_w.T                                        # [256, 32]
    params["fc1_wt"] = fc1_wt[:H]                           # [128, 32] (fwd half)
    params["fc1_wb"] = fc1_wt[H:]                           # [128, 32] (bwd half)
    params["fc1_b"] = fc1_b.reshape(1, INTERNAL)
    params["fc2_w_pad"] = (jnp.zeros((INTERNAL, OUT_PAD), jnp.float32)
                           .at[:, :OUTPUT_DIM].set(fc2_w.T))
    params["fc2_b_pad"] = (jnp.zeros((1, OUT_PAD), jnp.float32)
                           .at[0, :OUTPUT_DIM].set(fc2_b))
    return params


# ---------------------------------------------------------------------------
# Full forward pass
# ---------------------------------------------------------------------------
@jax.jit
def rnn_gru_forward(token_ids, params):
    B0, S = token_ids.shape
    Bp = max(8, ((B0 + 7) // 8) * 8)          # sublane-friendly batch (pad rows unused)
    chunk = _pick_chunk(S)

    ids = jnp.zeros((Bp, S), token_ids.dtype).at[:B0].set(token_ids)
    emb = jnp.take(params["embedding"], ids, axis=0)              # [Bp, S, 64] (XLA gather)
    x2d = (jnp.transpose(emb, (1, 0, 2))
           .reshape(S * Bp, EMBED_PAD)
           .astype(jnp.bfloat16))                                 # [S*Bp, 64] bf16

    l0 = params["l0"]
    out_f, out_b = bigru_layer0(
        x2d, l0["wih_f"], l0["wih_b"], l0["whh_blk"],
        l0["bx_f"], l0["bx_b"], l0["bhhn_f"], l0["bhhn_b"],
        S=S, B=Bp, chunk=chunk)                                   # [S*Bp, H] bf16 each
    # (inter-layer dropout p=0.5 is identity at inference)

    l1 = params["l1"]
    logits_pad = bigru_layer1_head(
        out_f, out_b,
        l1["w1f_top"], l1["w1f_bot"], l1["w1b_top"], l1["w1b_bot"],
        l1["whh_blk"], l1["bx_f"], l1["bx_b"], l1["bhhn_f"], l1["bhhn_b"],
        params["fc1_wt"], params["fc1_wb"], params["fc1_b"],
        params["fc2_w_pad"], params["fc2_b_pad"],
        S=S, B=Bp, chunk=chunk)                                   # [Bp, 128]
    return logits_pad[:B0, :OUTPUT_DIM]                          # [B, 2]


# ---------------------------------------------------------------------------
if __name__ == "__main__":
    BATCH, SEQ = 2, 8
    key = jax.random.PRNGKey(0)
    k_param, k_tok = jax.random.split(key)

    params = init_params(k_param)
    token_ids = jax.random.randint(k_tok, (BATCH, SEQ), 0, VOCAB_SIZE, dtype=jnp.int32)

    out = rnn_gru_forward(token_ids, params)
    out = jax.block_until_ready(out)
    assert out.shape == (BATCH, OUTPUT_DIM), out.shape
    assert bool(jnp.all(jnp.isfinite(out)))
    print("KERNEL_OK")
</pallas_src>

<mosaic_0001>
module attributes {stable_mosaic.version = 11 : i64} {
  func.func @gru_layer0_kernel(%arg0: i32, %arg1: memref<64x64xbf16, #tpu.memory_space<vmem>>, %arg2: memref<64x64xbf16, #tpu.memory_space<vmem>>, %arg3: memref<64x384xbf16, #tpu.memory_space<vmem>>, %arg4: memref<64x384xbf16, #tpu.memory_space<vmem>>, %arg5: memref<256x768xbf16, #tpu.memory_space<vmem>>, %arg6: memref<1x384xf32, #tpu.memory_space<vmem>>, %arg7: memref<1x384xf32, #tpu.memory_space<vmem>>, %arg8: memref<1x128xf32, #tpu.memory_space<vmem>>, %arg9: memref<1x128xf32, #tpu.memory_space<vmem>>, %arg10: memref<64x128xbf16, #tpu.memory_space<vmem>>, %arg11: memref<64x128xbf16, #tpu.memory_space<vmem>>, %arg12: memref<8x256xf32, #tpu.memory_space<vmem>>, %arg13: memref<64x384xf32, #tpu.memory_space<vmem>>, %arg14: memref<64x384xf32, #tpu.memory_space<vmem>>, %arg15: memref<64x128xf32, #tpu.memory_space<vmem>>, %arg16: memref<64x128xf32, #tpu.memory_space<vmem>>) attributes {dimension_semantics = [#tpu.dimension_semantics<arbitrary>], iteration_bounds = array<i64: 1>, scalar_prefetch = 0 : i64, scratch_operands = 5 : i64, tpu.core_type = #tpu.core_type<tc>, window_params = [{transform_indices = @transform_0, window_bounds = array<i64: 64, 64>}, {transform_indices = @transform_1, window_bounds = array<i64: 64, 64>}, {pipeline_mode = #tpu.pipeline_mode<synchronous>, transform_indices = @transform_2, window_bounds = array<i64: 64, 384>}, {pipeline_mode = #tpu.pipeline_mode<synchronous>, transform_indices = @transform_3, window_bounds = array<i64: 64, 384>}, {pipeline_mode = #tpu.pipeline_mode<synchronous>, transform_indices = @transform_4, window_bounds = array<i64: 256, 768>}, {pipeline_mode = #tpu.pipeline_mode<synchronous>, transform_indices = @transform_5, window_bounds = array<i64: 1, 384>}, {pipeline_mode = #tpu.pipeline_mode<synchronous>, transform_indices = @transform_6, window_bounds = array<i64: 1, 384>}, {pipeline_mode = #tpu.pipeline_mode<synchronous>, transform_indices = @transform_7, window_bounds = array<i64: 1, 128>}, {pipeline_mode = #tpu.pipeline_mode<synchronous>, transform_indices = @transform_8, window_bounds = array<i64: 1, 128>}, {transform_indices = @transform_9, window_bounds = array<i64: 64, 128>}, {transform_indices = @transform_10, window_bounds = array<i64: 64, 128>}]} {
    %c0_i32 = arith.constant 0 : i32
    %0 = arith.cmpi eq, %arg0, %c0_i32 : i32
    %1 = arith.extui %0 : i1 to i32
    %c0_i32_0 = arith.constant 0 : i32
    %2 = arith.cmpi ne, %1, %c0_i32_0 : i32
    scf.if %2 {
      %cst_135 = arith.constant 0.000000e+00 : f32
      %514 = vector.broadcast %cst_135 : f32 to vector<8x256xf32>
      %c0_136 = arith.constant 0 : index
      %c0_137 = arith.constant 0 : index
      %515 = vector.load %arg12[%c0_136, %c0_137] : memref<8x256xf32, #tpu.memory_space<vmem>>, vector<8x256xf32>
      tpu.vector_store %arg12[%c0_136, %c0_137], %514 {strides = array<i32>} : memref<8x256xf32, #tpu.memory_space<vmem>>, vector<8x256xf32>,
    } else {
    }
    %c0 = arith.constant 0 : index
    %c0_1 = arith.constant 0 : index
    %3 = vector.load %arg1[%c0, %c0_1] : memref<64x64xbf16, #tpu.memory_space<vmem>>, vector<64x64xbf16>
    %c0_2 = arith.constant 0 : index
    %c0_3 = arith.constant 0 : index
    %4 = vector.load %arg3[%c0_2, %c0_3] : memref<64x384xbf16, #tpu.memory_space<vmem>>, vector<64x384xbf16>
    %cst = arith.constant dense<0.000000e+00> : vector<64x384xf32>
    %5 = tpu.matmul %3, %4, %cst {dimension_numbers = #tpu.dot_dimension_numbers<[1], [0], [0], [1], [0, 0, 1, 1], [], []>} : vector<64x64xbf16>, vector<64x384xbf16>, vector<64x384xf32> -> vector<64x384xf32>
    %c0_4 = arith.constant 0 : index
    %c0_5 = arith.constant 0 : index
    %6 = vector.load %arg6[%c0_4, %c0_5] : memref<1x384xf32, #tpu.memory_space<vmem>>, vector<1x384xf32>
    %7 = vector.broadcast %6 : vector<1x384xf32> to vector<64x384xf32>
    %8 = arith.addf %5, %7 : vector<64x384xf32>
    %c0_6 = arith.constant 0 : index
    %c0_7 = arith.constant 0 : index
    %9 = vector.load %arg13[%c0_6, %c0_7] : memref<64x384xf32, #tpu.memory_space<vmem>>, vector<64x384xf32>
    tpu.vector_store %arg13[%c0_6, %c0_7], %8 {strides = array<i32>} : memref<64x384xf32, #tpu.memory_space<vmem>>, vector<64x384xf32>,
    %c0_8 = arith.constant 0 : index
    %c0_9 = arith.constant 0 : index
    %10 = vector.load %arg2[%c0_8, %c0_9] : memref<64x64xbf16, #tpu.memory_space<vmem>>, vector<64x64xbf16>
    %c0_10 = arith.constant 0 : index
    %c0_11 = arith.constant 0 : index
    %11 = vector.load %arg4[%c0_10, %c0_11] : memref<64x384xbf16, #tpu.memory_space<vmem>>, vector<64x384xbf16>
    %cst_12 = arith.constant dense<0.000000e+00> : vector<64x384xf32>
    %12 = tpu.matmul %10, %11, %cst_12 {dimension_numbers = #tpu.dot_dimension_numbers<[1], [0], [0], [1], [0, 0, 1, 1], [], []>} : vector<64x64xbf16>, vector<64x384xbf16>, vector<64x384xf32> -> vector<64x384xf32>
    %c0_13 = arith.constant 0 : index
    %c0_14 = arith.constant 0 : index
    %13 = vector.load %arg7[%c0_13, %c0_14] : memref<1x384xf32, #tpu.memory_space<vmem>>, vector<1x384xf32>
    %14 = vector.broadcast %13 : vector<1x384xf32> to vector<64x384xf32>
    %15 = arith.addf %12, %14 : vector<64x384xf32>
    %c0_15 = arith.constant 0 : index
    %c0_16 = arith.constant 0 : index
    %16 = vector.load %arg14[%c0_15, %c0_16] : memref<64x384xf32, #tpu.memory_space<vmem>>, vector<64x384xf32>
    tpu.vector_store %arg14[%c0_15, %c0_16], %15 {strides = array<i32>} : memref<64x384xf32, #tpu.memory_space<vmem>>, vector<64x384xf32>,
    %c0_17 = arith.constant 0 : index
    %c0_18 = arith.constant 0 : index
    %17 = vector.load %arg5[%c0_17, %c0_18] : memref<256x768xbf16, #tpu.memory_space<vmem>>, vector<256x768xbf16>
    %c0_19 = arith.constant 0 : index
    %c0_20 = arith.constant 0 : index
    %18 = vector.load %arg8[%c0_19, %c0_20] : memref<1x128xf32, #tpu.memory_space<vmem>>, vector<1x128xf32>
    %19 = vector.shape_cast %18 : vector<1x128xf32> to vector<1x128xf32>
    %20 = vector.broadcast %19 : vector<1x128xf32> to vector<8x128xf32>
    %c0_21 = arith.constant 0 : index
    %c0_22 = arith.constant 0 : index
    %21 = vector.load %arg9[%c0_21, %c0_22] : memref<1x128xf32, #tpu.memory_space<vmem>>, vector<1x128xf32>
    %22 = vector.shape_cast %21 : vector<1x128xf32> to vector<1x128xf32>
    %23 = vector.broadcast %22 : vector<1x128xf32> to vector<8x128xf32>
    %c0_23 = arith.constant 0 : index
    %c0_24 = arith.constant 0 : index
    %24 = vector.load %arg12[%c0_23, %c0_24] : memref<8x256xf32, #tpu.memory_space<vmem>>, vector<8x128xf32>
    %c0_25 = arith.constant 0 : index
    %c128 = arith.constant 128 : index
    %25 = vector.load %arg12[%c0_25, %c128] : memref<8x256xf32, #tpu.memory_space<vmem>>, vector<8x128xf32>
    %c0_i32_26 = arith.constant 0 : i32
    %26 = tpu.concatenate %24, %25 in 1 : vector<8x128xf32>, vector<8x128xf32> -> vector<8x256xf32>
    %27 = arith.truncf %26 : vector<8x256xf32> to vector<8x256xbf16>
    %cst_27 = arith.constant dense<0.000000e+00> : vector<8x768xf32>
    %28 = tpu.matmul %27, %17, %cst_27 {dimension_numbers = #tpu.dot_dimension_numbers<[1], [0], [0], [1], [0, 0, 1, 1], [], []>} : vector<8x256xbf16>, vector<256x768xbf16>, vector<8x768xf32> -> vector<8x768xf32>
    %c8_i32 = arith.constant 8 : i32
    %29 = arith.muli %c0_i32_26, %c8_i32 : i32
    %30 = tpu.assume_multiple %29, 8 : i32
    %c7_i32 = arith.constant 7 : i32
    %31 = arith.subi %c7_i32, %c0_i32_26 : i32
    %c8_i32_28 = arith.constant 8 : i32
    %32 = arith.muli %31, %c8_i32_28 : i32
    %33 = tpu.assume_multiple %32, 8 : i32
    %34 = arith.index_cast %30 : i32 to index
    %c0_29 = arith.constant 0 : index
    %35 = vector.load %arg13[%34, %c0_29] : memref<64x384xf32, #tpu.memory_space<vmem>>, vector<8x384xf32>
    %36 = vector.extract_strided_slice %28 {offsets = [0, 0], sizes = [8, 384], strides = [1, 1]} : vector<8x768xf32> to vector<8x384xf32>
    %37 = vector.extract_strided_slice %35 {offsets = [0, 0], sizes = [8, 256], strides = [1, 1]} : vector<8x384xf32> to vector<8x256xf32>
    %38 = vector.extract_strided_slice %36 {offsets = [0, 0], sizes = [8, 256], strides = [1, 1]} : vector<8x384xf32> to vector<8x256xf32>
    %39 = arith.addf %37, %38 : vector<8x256xf32>
    %40 = arith.negf %39 : vector<8x256xf32>
    %41 = math.exp %40 : vector<8x256xf32>
    %cst_30 = arith.constant 1.000000e+00 : f32
    %42 = vector.broadcast %cst_30 : f32 to vector<8x256xf32>
    %43 = arith.addf %42, %41 : vector<8x256xf32>
    %44 = arith.divf %42, %43 : vector<8x256xf32>
    %45 = vector.extract_strided_slice %44 {offsets = [0, 0], sizes = [8, 128], strides = [1, 1]} : vector<8x256xf32> to vector<8x128xf32>
    %46 = vector.extract_strided_slice %44 {offsets = [0, 128], sizes = [8, 128], strides = [1, 1]} : vector<8x256xf32> to vector<8x128xf32>
    %47 = vector.extract_strided_slice %35 {offsets = [0, 256], sizes = [8, 128], strides = [1, 1]} : vector<8x384xf32> to vector<8x128xf32>
    %48 = vector.extract_strided_slice %36 {offsets = [0, 256], sizes = [8, 128], strides = [1, 1]} : vector<8x384xf32> to vector<8x128xf32>
    %49 = arith.addf %48, %20 : vector<8x128xf32>
    %50 = arith.mulf %45, %49 : vector<8x128xf32>
    %51 = arith.addf %47, %50 : vector<8x128xf32>
    %52 = math.tanh %51 : vector<8x128xf32>
    %cst_31 = arith.constant 1.000000e+00 : f32
    %53 = vector.broadcast %cst_31 : f32 to vector<8x128xf32>
    %54 = arith.subf %53, %46 : vector<8x128xf32>
    %55 = arith.mulf %54, %52 : vector<8x128xf32>
    %56 = arith.mulf %46, %24 : vector<8x128xf32>
    %57 = arith.addf %55, %56 : vector<8x128xf32>
    %58 = arith.index_cast %33 : i32 to index
    %c0_32 = arith.constant 0 : index
    %59 = vector.load %arg14[%58, %c0_32] : memref<64x384xf32, #tpu.memory_space<vmem>>, vector<8x384xf32>
    %60 = vector.extract_strided_slice %28 {offsets = [0, 384], sizes = [8, 384], strides = [1, 1]} : vector<8x768xf32> to vector<8x384xf32>
    %61 = vector.extract_strided_slice %59 {offsets = [0, 0], sizes = [8, 256], strides = [1, 1]} : vector<8x384xf32> to vector<8x256xf32>
    %62 = vector.extract_strided_slice %60 {offsets = [0, 0], sizes = [8, 256], strides = [1, 1]} : vector<8x384xf32> to vector<8x256xf32>
    %63 = arith.addf %61, %62 : vector<8x256xf32>
    %64 = arith.negf %63 : vector<8x256xf32>
    %65 = math.exp %64 : vector<8x256xf32>
    %cst_33 = arith.constant 1.000000e+00 : f32
    %66 = vector.broadcast %cst_33 : f32 to vector<8x256xf32>
    %67 = arith.addf %66, %65 : vector<8x256xf32>
    %68 = arith.divf %66, %67 : vector<8x256xf32>
    %69 = vector.extract_strided_slice %68 {offsets = [0, 0], sizes = [8, 128], strides = [1, 1]} : vector<8x256xf32> to vector<8x128xf32>
    %70 = vector.extract_strided_slice %68 {offsets = [0, 128], sizes = [8, 128], strides = [1, 1]} : vector<8x256xf32> to vector<8x128xf32>
    %71 = vector.extract_strided_slice %59 {offsets = [0, 256], sizes = [8, 128], strides = [1, 1]} : vector<8x384xf32> to vector<8x128xf32>
    %72 = vector.extract_strided_slice %60 {offsets = [0, 256], sizes = [8, 128], strides = [1, 1]} : vector<8x384xf32> to vector<8x128xf32>
    %73 = arith.addf %72, %23 : vector<8x128xf32>
    %74 = arith.mulf %69, %73 : vector<8x128xf32>
    %75 = arith.addf %71, %74 : vector<8x128xf32>
    %76 = math.tanh %75 : vector<8x128xf32>
    %cst_34 = arith.constant 1.000000e+00 : f32
    %77 = vector.broadcast %cst_34 : f32 to vector<8x128xf32>
    %78 = arith.subf %77, %70 : vector<8x128xf32>
    %79 = arith.mulf %78, %76 : vector<8x128xf32>
    %80 = arith.mulf %70, %25 : vector<8x128xf32>
    %81 = arith.addf %79, %80 : vector<8x128xf32>
    %82 = arith.index_cast %30 : i32 to index
    %c0_35 = arith.constant 0 : index
    %83 = vector.load %arg15[%82, %c0_35] : memref<64x128xf32, #tpu.memory_space<vmem>>, vector<8x128xf32>
    tpu.vector_store %arg15[%82, %c0_35], %57 {strides = array<i32>} : memref<64x128xf32, #tpu.memory_space<vmem>>, vector<8x128xf32>,
    %84 = arith.index_cast %33 : i32 to index
    %c0_36 = arith.constant 0 : index
    %85 = vector.load %arg16[%84, %c0_36] : memref<64x128xf32, #tpu.memory_space<vmem>>, vector<8x128xf32>
    tpu.vector_store %arg16[%84, %c0_36], %81 {strides = array<i32>} : memref<64x128xf32, #tpu.memory_space<vmem>>, vector<8x128xf32>,
    %c1_i32 = arith.constant 1 : i32
    %86 = tpu.concatenate %57, %81 in 1 : vector<8x128xf32>, vector<8x128xf32> -> vector<8x256xf32>
    %87 = arith.truncf %86 : vector<8x256xf32> to vector<8x256xbf16>
    %cst_37 = arith.constant dense<0.000000e+00> : vector<8x768xf32>
    %88 = tpu.matmul %87, %17, %cst_37 {dimension_numbers = #tpu.dot_dimension_numbers<[1], [0], [0], [1], [0, 0, 1, 1], [], []>} : vector<8x256xbf16>, vector<256x768xbf16>, vector<8x768xf32> -> vector<8x768xf32>
    %c8_i32_38 = arith.constant 8 : i32
    %89 = arith.muli %c1_i32, %c8_i32_38 : i32
    %90 = tpu.assume_multiple %89, 8 : i32
    %c7_i32_39 = arith.constant 7 : i32
    %91 = arith.subi %c7_i32_39, %c1_i32 : i32
    %c8_i32_40 = arith.constant 8 : i32
    %92 = arith.muli %91, %c8_i32_40 : i32
    %93 = tpu.assume_multiple %92, 8 : i32
    %94 = arith.index_cast %90 : i32 to index
    %c0_41 = arith.constant 0 : index
    %95 = vector.load %arg13[%94, %c0_41] : memref<64x384xf32, #tpu.memory_space<vmem>>, vector<8x384xf32>
    %96 = vector.extract_strided_slice %88 {offsets = [0, 0], sizes = [8, 384], strides = [1, 1]} : vector<8x768xf32> to vector<8x384xf32>
    %97 = vector.extract_strided_slice %95 {offsets = [0, 0], sizes = [8, 256], strides = [1, 1]} : vector<8x384xf32> to vector<8x256xf32>
    %98 = vector.extract_strided_slice %96 {offsets = [0, 0], sizes = [8, 256], strides = [1, 1]} : vector<8x384xf32> to vector<8x256xf32>
    %99 = arith.addf %97, %98 : vector<8x256xf32>
    %100 = arith.negf %99 : vector<8x256xf32>
    %101 = math.exp %100 : vector<8x256xf32>
    %cst_42 = arith.constant 1.000000e+00 : f32
    %102 = vector.broadcast %cst_42 : f32 to vector<8x256xf32>
    %103 = arith.addf %102, %101 : vector<8x256xf32>
    %104 = arith.divf %102, %103 : vector<8x256xf32>
    %105 = vector.extract_strided_slice %104 {offsets = [0, 0], sizes = [8, 128], strides = [1, 1]} : vector<8x256xf32> to vector<8x128xf32>
    %106 = vector.extract_strided_slice %104 {offsets = [0, 128], sizes = [8, 128], strides = [1, 1]} : vector<8x256xf32> to vector<8x128xf32>
    %107 = vector.extract_strided_slice %95 {offsets = [0, 256], sizes = [8, 128], strides = [1, 1]} : vector<8x384xf32> to vector<8x128xf32>
    %108 = vector.extract_strided_slice %96 {offsets = [0, 256], sizes = [8, 128], strides = [1, 1]} : vector<8x384xf32> to vector<8x128xf32>
    %109 = arith.addf %108, %20 : vector<8x128xf32>
    %110 = arith.mulf %105, %109 : vector<8x128xf32>
    %111 = arith.addf %107, %110 : vector<8x128xf32>
    %112 = math.tanh %111 : vector<8x128xf32>
    %cst_43 = arith.constant 1.000000e+00 : f32
    %113 = vector.broadcast %cst_43 : f32 to vector<8x128xf32>
    %114 = arith.subf %113, %106 : vector<8x128xf32>
    %115 = arith.mulf %114, %112 : vector<8x128xf32>
    %116 = arith.mulf %106, %57 : vector<8x128xf32>
    %117 = arith.addf %115, %116 : vector<8x128xf32>
    %118 = arith.index_cast %93 : i32 to index
    %c0_44 = arith.constant 0 : index
    %119 = vector.load %arg14[%118, %c0_44] : memref<64x384xf32, #tpu.memory_space<vmem>>, vector<8x384xf32>
    %120 = vector.extract_strided_slice %88 {offsets = [0, 384], sizes = [8, 384], strides = [1, 1]} : vector<8x768xf32> to vector<8x384xf32>
    %121 = vector.extract_strided_slice %119 {offsets = [0, 0], sizes = [8, 256], strides = [1, 1]} : vector<8x384xf32> to vector<8x256xf32>
    %122 = vector.extract_strided_slice %120 {offsets = [0, 0], sizes = [8, 256], strides = [1, 1]} : vector<8x384xf32> to vector<8x256xf32>
    %123 = arith.addf %121, %122 : vector<8x256xf32>
    %124 = arith.negf %123 : vector<8x256xf32>
    %125 = math.exp %124 : vector<8x256xf32>
    %cst_45 = arith.constant 1.000000e+00 : f32
    %126 = vector.broadcast %cst_45 : f32 to vector<8x256xf32>
    %127 = arith.addf %126, %125 : vector<8x256xf32>
    %128 = arith.divf %126, %127 : vector<8x256xf32>
    %129 = vector.extract_strided_slice %128 {offsets = [0, 0], sizes = [8, 128], strides = [1, 1]} : vector<8x256xf32> to vector<8x128xf32>
    %130 = vector.extract_strided_slice %128 {offsets = [0, 128], sizes = [8, 128], strides = [1, 1]} : vector<8x256xf32> to vector<8x128xf32>
    %131 = vector.extract_strided_slice %119 {offsets = [0, 256], sizes = [8, 128], strides = [1, 1]} : vector<8x384xf32> to vector<8x128xf32>
    %132 = vector.extract_strided_slice %120 {offsets = [0, 256], sizes = [8, 128], strides = [1, 1]} : vector<8x384xf32> to vector<8x128xf32>
    %133 = arith.addf %132, %23 : vector<8x128xf32>
    %134 = arith.mulf %129, %133 : vector<8x128xf32>
    %135 = arith.addf %131, %134 : vector<8x128xf32>
    %136 = math.tanh %135 : vector<8x128xf32>
    %cst_46 = arith.constant 1.000000e+00 : f32
    %137 = vector.broadcast %cst_46 : f32 to vector<8x128xf32>
    %138 = arith.subf %137, %130 : vector<8x128xf32>
    %139 = arith.mulf %138, %136 : vector<8x128xf32>
    %140 = arith.mulf %130, %81 : vector<8x128xf32>
    %141 = arith.addf %139, %140 : vector<8x128xf32>
    %142 = arith.index_cast %90 : i32 to index
    %c0_47 = arith.constant 0 : index
    %143 = vector.load %arg15[%142, %c0_47] : memref<64x128xf32, #tpu.memory_space<vmem>>, vector<8x128xf32>
    tpu.vector_store %arg15[%142, %c0_47], %117 {strides = array<i32>} : memref<64x128xf32, #tpu.memory_space<vmem>>, vector<8x128xf32>,
    %144 = arith.index_cast %93 : i32 to index
    %c0_48 = arith.constant 0 : index
    %145 = vector.load %arg16[%144, %c0_48] : memref<64x128xf32, #tpu.memory_space<vmem>>, vector<8x128xf32>
    tpu.vector_store %arg16[%144, %c0_48], %141 {strides = array<i32>} : memref<64x128xf32, #tpu.memory_space<vmem>>, vector<8x128xf32>,
    %c2_i32 = arith.constant 2 : i32
    %146 = tpu.concatenate %117, %141 in 1 : vector<8x128xf32>, vector<8x128xf32> -> vector<8x256xf32>
    %147 = arith.truncf %146 : vector<8x256xf32> to vector<8x256xbf16>
    %cst_49 = arith.constant dense<0.000000e+00> : vector<8x768xf32>
    %148 = tpu.matmul %147, %17, %cst_49 {dimension_numbers = #tpu.dot_dimension_numbers<[1], [0], [0], [1], [0, 0, 1, 1], [], []>} : vector<8x256xbf16>, vector<256x768xbf16>, vector<8x768xf32> -> vector<8x768xf32>
    %c8_i32_50 = arith.constant 8 : i32
    %149 = arith.muli %c2_i32, %c8_i32_50 : i32
    %150 = tpu.assume_multiple %149, 8 : i32
    %c7_i32_51 = arith.constant 7 : i32
    %151 = arith.subi %c7_i32_51, %c2_i32 : i32
    %c8_i32_52 = arith.constant 8 : i32
    %152 = arith.muli %151, %c8_i32_52 : i32
    %153 = tpu.assume_multiple %152, 8 : i32
    %154 = arith.index_cast %150 : i32 to index
    %c0_53 = arith.constant 0 : index
    %155 = vector.load %arg13[%154, %c0_53] : memref<64x384xf32, #tpu.memory_space<vmem>>, vector<8x384xf32>
    %156 = vector.extract_strided_slice %148 {offsets = [0, 0], sizes = [8, 384], strides = [1, 1]} : vector<8x768xf32> to vector<8x384xf32>
    %157 = vector.extract_strided_slice %155 {offsets = [0, 0], sizes = [8, 256], strides = [1, 1]} : vector<8x384xf32> to vector<8x256xf32>
    %158 = vector.extract_strided_slice %156 {offsets = [0, 0], sizes = [8, 256], strides = [1, 1]} : vector<8x384xf32> to vector<8x256xf32>
    %159 = arith.addf %157, %158 : vector<8x256xf32>
    %160 = arith.negf %159 : vector<8x256xf32>
    %161 = math.exp %160 : vector<8x256xf32>
    %cst_54 = arith.constant 1.000000e+00 : f32
    %162 = vector.broadcast %cst_54 : f32 to vector<8x256xf32>
    %163 = arith.addf %162, %161 : vector<8x256xf32>
    %164 = arith.divf %162, %163 : vector<8x256xf32>
    %165 = vector.extract_strided_slice %164 {offsets = [0, 0], sizes = [8, 128], strides = [1, 1]} : vector<8x256xf32> to vector<8x128xf32>
    %166 = vector.extract_strided_slice %164 {offsets = [0, 128], sizes = [8, 128], strides = [1, 1]} : vector<8x256xf32> to vector<8x128xf32>
    %167 = vector.extract_strided_slice %155 {offsets = [0, 256], sizes = [8, 128], strides = [1, 1]} : vector<8x384xf32> to vector<8x128xf32>
    %168 = vector.extract_strided_slice %156 {offsets = [0, 256], sizes = [8, 128], strides = [1, 1]} : vector<8x384xf32> to vector<8x128xf32>
    %169 = arith.addf %168, %20 : vector<8x128xf32>
    %170 = arith.mulf %165, %169 : vector<8x128xf32>
    %171 = arith.addf %167, %170 : vector<8x128xf32>
    %172 = math.tanh %171 : vector<8x128xf32>
    %cst_55 = arith.constant 1.000000e+00 : f32
    %173 = vector.broadcast %cst_55 : f32 to vector<8x128xf32>
    %174 = arith.subf %173, %166 : vector<8x128xf32>
    %175 = arith.mulf %174, %172 : vector<8x128xf32>
    %176 = arith.mulf %166, %117 : vector<8x128xf32>
    %177 = arith.addf %175, %176 : vector<8x128xf32>
    %178 = arith.index_cast %153 : i32 to index
    %c0_56 = arith.constant 0 : index
    %179 = vector.load %arg14[%178, %c0_56] : memref<64x384xf32, #tpu.memory_space<vmem>>, vector<8x384xf32>
    %180 = vector.extract_strided_slice %148 {offsets = [0, 384], sizes = [8, 384], strides = [1, 1]} : vector<8x768xf32> to vector<8x384xf32>
    %181 = vector.extract_strided_slice %179 {offsets = [0, 0], sizes = [8, 256], strides = [1, 1]} : vector<8x384xf32> to vector<8x256xf32>
    %182 = vector.extract_strided_slice %180 {offsets = [0, 0], sizes = [8, 256], strides = [1, 1]} : vector<8x384xf32> to vector<8x256xf32>
    %183 = arith.addf %181, %182 : vector<8x256xf32>
    %184 = arith.negf %183 : vector<8x256xf32>
    %185 = math.exp %184 : vector<8x256xf32>
    %cst_57 = arith.constant 1.000000e+00 : f32
    %186 = vector.broadcast %cst_57 : f32 to vector<8x256xf32>
    %187 = arith.addf %186, %185 : vector<8x256xf32>
    %188 = arith.divf %186, %187 : vector<8x256xf32>
    %189 = vector.extract_strided_slice %188 {offsets = [0, 0], sizes = [8, 128], strides = [1, 1]} : vector<8x256xf32> to vector<8x128xf32>
    %190 = vector.extract_strided_slice %188 {offsets = [0, 128], sizes = [8, 128], strides = [1, 1]} : vector<8x256xf32> to vector<8x128xf32>
    %191 = vector.extract_strided_slice %179 {offsets = [0, 256], sizes = [8, 128], strides = [1, 1]} : vector<8x384xf32> to vector<8x128xf32>
    %192 = vector.extract_strided_slice %180 {offsets = [0, 256], sizes = [8, 128], strides = [1, 1]} : vector<8x384xf32> to vector<8x128xf32>
    %193 = arith.addf %192, %23 : vector<8x128xf32>
    %194 = arith.mulf %189, %193 : vector<8x128xf32>
    %195 = arith.addf %191, %194 : vector<8x128xf32>
    %196 = math.tanh %195 : vector<8x128xf32>
    %cst_58 = arith.constant 1.000000e+00 : f32
    %197 = vector.broadcast %cst_58 : f32 to vector<8x128xf32>
    %198 = arith.subf %197, %190 : vector<8x128xf32>
    %199 = arith.mulf %198, %196 : vector<8x128xf32>
    %200 = arith.mulf %190, %141 : vector<8x128xf32>
    %201 = arith.addf %199, %200 : vector<8x128xf32>
    %202 = arith.index_cast %150 : i32 to index
    %c0_59 = arith.constant 0 : index
    %203 = vector.load %arg15[%202, %c0_59] : memref<64x128xf32, #tpu.memory_space<vmem>>, vector<8x128xf32>
    tpu.vector_store %arg15[%202, %c0_59], %177 {strides = array<i32>} : memref<64x128xf32, #tpu.memory_space<vmem>>, vector<8x128xf32>,
    %204 = arith.index_cast %153 : i32 to index
    %c0_60 = arith.constant 0 : index
    %205 = vector.load %arg16[%204, %c0_60] : memref<64x128xf32, #tpu.memory_space<vmem>>, vector<8x128xf32>
    tpu.vector_store %arg16[%204, %c0_60], %201 {strides = array<i32>} : memref<64x128xf32, #tpu.memory_space<vmem>>, vector<8x128xf32>,
    %c3_i32 = arith.constant 3 : i32
    %206 = tpu.concatenate %177, %201 in 1 : vector<8x128xf32>, vector<8x128xf32> -> vector<8x256xf32>
    %207 = arith.truncf %206 : vector<8x256xf32> to vector<8x256xbf16>
    %cst_61 = arith.constant dense<0.000000e+00> : vector<8x768xf32>
    %208 = tpu.matmul %207, %17, %cst_61 {dimension_numbers = #tpu.dot_dimension_numbers<[1], [0], [0], [1], [0, 0, 1, 1], [], []>} : vector<8x256xbf16>, vector<256x768xbf16>, vector<8x768xf32> -> vector<8x768xf32>
    %c8_i32_62 = arith.constant 8 : i32
    %209 = arith.muli %c3_i32, %c8_i32_62 : i32
    %210 = tpu.assume_multiple %209, 8 : i32
    %c7_i32_63 = arith.constant 7 : i32
    %211 = arith.subi %c7_i32_63, %c3_i32 : i32
    %c8_i32_64 = arith.constant 8 : i32
    %212 = arith.muli %211, %c8_i32_64 : i32
    %213 = tpu.assume_multiple %212, 8 : i32
    %214 = arith.index_cast %210 : i32 to index
    %c0_65 = arith.constant 0 : index
    %215 = vector.load %arg13[%214, %c0_65] : memref<64x384xf32, #tpu.memory_space<vmem>>, vector<8x384xf32>
    %216 = vector.extract_strided_slice %208 {offsets = [0, 0], sizes = [8, 384], strides = [1, 1]} : vector<8x768xf32> to vector<8x384xf32>
    %217 = vector.extract_strided_slice %215 {offsets = [0, 0], sizes = [8, 256], strides = [1, 1]} : vector<8x384xf32> to vector<8x256xf32>
    %218 = vector.extract_strided_slice %216 {offsets = [0, 0], sizes = [8, 256], strides = [1, 1]} : vector<8x384xf32> to vector<8x256xf32>
    %219 = arith.addf %217, %218 : vector<8x256xf32>
    %220 = arith.negf %219 : vector<8x256xf32>
    %221 = math.exp %220 : vector<8x256xf32>
    %cst_66 = arith.constant 1.000000e+00 : f32
    %222 = vector.broadcast %cst_66 : f32 to vector<8x256xf32>
    %223 = arith.addf %222, %221 : vector<8x256xf32>
    %224 = arith.divf %222, %223 : vector<8x256xf32>
    %225 = vector.extract_strided_slice %224 {offsets = [0, 0], sizes = [8, 128], strides = [1, 1]} : vector<8x256xf32> to vector<8x128xf32>
    %226 = vector.extract_strided_slice %224 {offsets = [0, 128], sizes = [8, 128], strides = [1, 1]} : vector<8x256xf32> to vector<8x128xf32>
    %227 = vector.extract_strided_slice %215 {offsets = [0, 256], sizes = [8, 128], strides = [1, 1]} : vector<8x384xf32> to vector<8x128xf32>
    %228 = vector.extract_strided_slice %216 {offsets = [0, 256], sizes = [8, 128], strides = [1, 1]} : vector<8x384xf32> to vector<8x128xf32>
    %229 = arith.addf %228, %20 : vector<8x128xf32>
    %230 = arith.mulf %225, %229 : vector<8x128xf32>
    %231 = arith.addf %227, %230 : vector<8x128xf32>
    %232 = math.tanh %231 : vector<8x128xf32>
    %cst_67 = arith.constant 1.000000e+00 : f32
    %233 = vector.broadcast %cst_67 : f32 to vector<8x128xf32>
    %234 = arith.subf %233, %226 : vector<8x128xf32>
    %235 = arith.mulf %234, %232 : vector<8x128xf32>
    %236 = arith.mulf %226, %177 : vector<8x128xf32>
    %237 = arith.addf %235, %236 : vector<8x128xf32>
    %238 = arith.index_cast %213 : i32 to index
    %c0_68 = arith.constant 0 : index
    %239 = vector.load %arg14[%238, %c0_68] : memref<64x384xf32, #tpu.memory_space<vmem>>, vector<8x384xf32>
    %240 = vector.extract_strided_slice %208 {offsets = [0, 384], sizes = [8, 384], strides = [1, 1]} : vector<8x768xf32> to vector<8x384xf32>
    %241 = vector.extract_strided_slice %239 {offsets = [0, 0], sizes = [8, 256], strides = [1, 1]} : vector<8x384xf32> to vector<8x256xf32>
    %242 = vector.extract_strided_slice %240 {offsets = [0, 0], sizes = [8, 256], strides = [1, 1]} : vector<8x384xf32> to vector<8x256xf32>
    %243 = arith.addf %241, %242 : vector<8x256xf32>
    %244 = arith.negf %243 : vector<8x256xf32>
    %245 = math.exp %244 : vector<8x256xf32>
    %cst_69 = arith.constant 1.000000e+00 : f32
    %246 = vector.broadcast %cst_69 : f32 to vector<8x256xf32>
    %247 = arith.addf %246, %245 : vector<8x256xf32>
    %248 = arith.divf %246, %247 : vector<8x256xf32>
    %249 = vector.extract_strided_slice %248 {offsets = [0, 0], sizes = [8, 128], strides = [1, 1]} : vector<8x256xf32> to vector<8x128xf32>
    %250 = vector.extract_strided_slice %248 {offsets = [0, 128], sizes = [8, 128], strides = [1, 1]} : vector<8x256xf32> to vector<8x128xf32>
    %251 = vector.extract_strided_slice %239 {offsets = [0, 256], sizes = [8, 128], strides = [1, 1]} : vector<8x384xf32> to vector<8x128xf32>
    %252 = vector.extract_strided_slice %240 {offsets = [0, 256], sizes = [8, 128], strides = [1, 1]} : vector<8x384xf32> to vector<8x128xf32>
    %253 = arith.addf %252, %23 : vector<8x128xf32>
    %254 = arith.mulf %249, %253 : vector<8x128xf32>
    %255 = arith.addf %251, %254 : vector<8x128xf32>
    %256 = math.tanh %255 : vector<8x128xf32>
    %cst_70 = arith.constant 1.000000e+00 : f32
    %257 = vector.broadcast %cst_70 : f32 to vector<8x128xf32>
    %258 = arith.subf %257, %250 : vector<8x128xf32>
    %259 = arith.mulf %258, %256 : vector<8x128xf32>
    %260 = arith.mulf %250, %201 : vector<8x128xf32>
    %261 = arith.addf %259, %260 : vector<8x128xf32>
    %262 = arith.index_cast %210 : i32 to index
    %c0_71 = arith.constant 0 : index
    %263 = vector.load %arg15[%262, %c0_71] : memref<64x128xf32, #tpu.memory_space<vmem>>, vector<8x128xf32>
    tpu.vector_store %arg15[%262, %c0_71], %237 {strides = array<i32>} : memref<64x128xf32, #tpu.memory_space<vmem>>, vector<8x128xf32>,
    %264 = arith.index_cast %213 : i32 to index
    %c0_72 = arith.constant 0 : index
    %265 = vector.load %arg16[%264, %c0_72] : memref<64x128xf32, #tpu.memory_space<vmem>>, vector<8x128xf32>
    tpu.vector_store %arg16[%264, %c0_72], %261 {strides = array<i32>} : memref<64x128xf32, #tpu.memory_space<vmem>>, vector<8x128xf32>,
    %c4_i32 = arith.constant 4 : i32
    %266 = tpu.concatenate %237, %261 in 1 : vector<8x128xf32>, vector<8x128xf32> -> vector<8x256xf32>
    %267 = arith.truncf %266 : vector<8x256xf32> to vector<8x256xbf16>
    %cst_73 = arith.constant dense<0.000000e+00> : vector<8x768xf32>
    %268 = tpu.matmul %267, %17, %cst_73 {dimension_numbers = #tpu.dot_dimension_numbers<[1], [0], [0], [1], [0, 0, 1, 1], [], []>} : vector<8x256xbf16>, vector<256x768xbf16>, vector<8x768xf32> -> vector<8x768xf32>
    %c8_i32_74 = arith.constant 8 : i32
    %269 = arith.muli %c4_i32, %c8_i32_74 : i32
    %270 = tpu.assume_multiple %269, 8 : i32
    %c7_i32_75 = arith.constant 7 : i32
    %271 = arith.subi %c7_i32_75, %c4_i32 : i32
    %c8_i32_76 = arith.constant 8 : i32
    %272 = arith.muli %271, %c8_i32_76 : i32
    %273 = tpu.assume_multiple %272, 8 : i32
    %274 = arith.index_cast %270 : i32 to index
    %c0_77 = arith.constant 0 : index
    %275 = vector.load %arg13[%274, %c0_77] : memref<64x384xf32, #tpu.memory_space<vmem>>, vector<8x384xf32>
    %276 = vector.extract_strided_slice %268 {offsets = [0, 0], sizes = [8, 384], strides = [1, 1]} : vector<8x768xf32> to vector<8x384xf32>
    %277 = vector.extract_strided_slice %275 {offsets = [0, 0], sizes = [8, 256], strides = [1, 1]} : vector<8x384xf32> to vector<8x256xf32>
    %278 = vector.extract_strided_slice %276 {offsets = [0, 0], sizes = [8, 256], strides = [1, 1]} : vector<8x384xf32> to vector<8x256xf32>
    %279 = arith.addf %277, %278 : vector<8x256xf32>
    %280 = arith.negf %279 : vector<8x256xf32>
    %281 = math.exp %280 : vector<8x256xf32>
    %cst_78 = arith.constant 1.000000e+00 : f32
    %282 = vector.broadcast %cst_78 : f32 to vector<8x256xf32>
    %283 = arith.addf %282, %281 : vector<8x256xf32>
    %284 = arith.divf %282, %283 : vector<8x256xf32>
    %285 = vector.extract_strided_slice %284 {offsets = [0, 0], sizes = [8, 128], strides = [1, 1]} : vector<8x256xf32> to vector<8x128xf32>
    %286 = vector.extract_strided_slice %284 {offsets = [0, 128], sizes = [8, 128], strides = [1, 1]} : vector<8x256xf32> to vector<8x128xf32>
    %287 = vector.extract_strided_slice %275 {offsets = [0, 256], sizes = [8, 128], strides = [1, 1]} : vector<8x384xf32> to vector<8x128xf32>
    %288 = vector.extract_strided_slice %276 {offsets = [0, 256], sizes = [8, 128], strides = [1, 1]} : vector<8x384xf32> to vector<8x128xf32>
    %289 = arith.addf %288, %20 : vector<8x128xf32>
    %290 = arith.mulf %285, %289 : vector<8x128xf32>
    %291 = arith.addf %287, %290 : vector<8x128xf32>
    %292 = math.tanh %291 : vector<8x128xf32>
    %cst_79 = arith.constant 1.000000e+00 : f32
    %293 = vector.broadcast %cst_79 : f32 to vector<8x128xf32>
    %294 = arith.subf %293, %286 : vector<8x128xf32>
    %295 = arith.mulf %294, %292 : vector<8x128xf32>
    %296 = arith.mulf %286, %237 : vector<8x128xf32>
    %297 = arith.addf %295, %296 : vector<8x128xf32>
    %298 = arith.index_cast %273 : i32 to index
    %c0_80 = arith.constant 0 : index
    %299 = vector.load %arg14[%298, %c0_80] : memref<64x384xf32, #tpu.memory_space<vmem>>, vector<8x384xf32>
    %300 = vector.extract_strided_slice %268 {offsets = [0, 384], sizes = [8, 384], strides = [1, 1]} : vector<8x768xf32> to vector<8x384xf32>
    %301 = vector.extract_strided_slice %299 {offsets = [0, 0], sizes = [8, 256], strides = [1, 1]} : vector<8x384xf32> to vector<8x256xf32>
    %302 = vector.extract_strided_slice %300 {offsets = [0, 0], sizes = [8, 256], strides = [1, 1]} : vector<8x384xf32> to vector<8x256xf32>
    %303 = arith.addf %301, %302 : vector<8x256xf32>
    %304 = arith.negf %303 : vector<8x256xf32>
    %305 = math.exp %304 : vector<8x256xf32>
    %cst_81 = arith.constant 1.000000e+00 : f32
    %306 = vector.broadcast %cst_81 : f32 to vector<8x256xf32>
    %307 = arith.addf %306, %305 : vector<8x256xf32>
    %308 = arith.divf %306, %307 : vector<8x256xf32>
    %309 = vector.extract_strided_slice %308 {offsets = [0, 0], sizes = [8, 128], strides = [1, 1]} : vector<8x256xf32> to vector<8x128xf32>
    %310 = vector.extract_strided_slice %308 {offsets = [0, 128], sizes = [8, 128], strides = [1, 1]} : vector<8x256xf32> to vector<8x128xf32>
    %311 = vector.extract_strided_slice %299 {offsets = [0, 256], sizes = [8, 128], strides = [1, 1]} : vector<8x384xf32> to vector<8x128xf32>
    %312 = vector.extract_strided_slice %300 {offsets = [0, 256], sizes = [8, 128], strides = [1, 1]} : vector<8x384xf32> to vector<8x128xf32>
    %313 = arith.addf %312, %23 : vector<8x128xf32>
    %314 = arith.mulf %309, %313 : vector<8x128xf32>
    %315 = arith.addf %311, %314 : vector<8x128xf32>
    %316 = math.tanh %315 : vector<8x128xf32>
    %cst_82 = arith.constant 1.000000e+00 : f32
    %317 = vector.broadcast %cst_82 : f32 to vector<8x128xf32>
    %318 = arith.subf %317, %310 : vector<8x128xf32>
    %319 = arith.mulf %318, %316 : vector<8x128xf32>
    %320 = arith.mulf %310, %261 : vector<8x128xf32>
    %321 = arith.addf %319, %320 : vector<8x128xf32>
    %322 = arith.index_cast %270 : i32 to index
    %c0_83 = arith.constant 0 : index
    %323 = vector.load %arg15[%322, %c0_83] : memref<64x128xf32, #tpu.memory_space<vmem>>, vector<8x128xf32>
    tpu.vector_store %arg15[%322, %c0_83], %297 {strides = array<i32>} : memref<64x128xf32, #tpu.memory_space<vmem>>, vector<8x128xf32>,
    %324 = arith.index_cast %273 : i32 to index
    %c0_84 = arith.constant 0 : index
    %325 = vector.load %arg16[%324, %c0_84] : memref<64x128xf32, #tpu.memory_space<vmem>>, vector<8x128xf32>
    tpu.vector_store %arg16[%324, %c0_84], %321 {strides = array<i32>} : memref<64x128xf32, #tpu.memory_space<vmem>>, vector<8x128xf32>,
    %c5_i32 = arith.constant 5 : i32
    %326 = tpu.concatenate %297, %321 in 1 : vector<8x128xf32>, vector<8x128xf32> -> vector<8x256xf32>
    %327 = arith.truncf %326 : vector<8x256xf32> to vector<8x256xbf16>
    %cst_85 = arith.constant dense<0.000000e+00> : vector<8x768xf32>
    %328 = tpu.matmul %327, %17, %cst_85 {dimension_numbers = #tpu.dot_dimension_numbers<[1], [0], [0], [1], [0, 0, 1, 1], [], []>} : vector<8x256xbf16>, vector<256x768xbf16>, vector<8x768xf32> -> vector<8x768xf32>
    %c8_i32_86 = arith.constant 8 : i32
    %329 = arith.muli %c5_i32, %c8_i32_86 : i32
    %330 = tpu.assume_multiple %329, 8 : i32
    %c7_i32_87 = arith.constant 7 : i32
    %331 = arith.subi %c7_i32_87, %c5_i32 : i32
    %c8_i32_88 = arith.constant 8 : i32
    %332 = arith.muli %331, %c8_i32_88 : i32
    %333 = tpu.assume_multiple %332, 8 : i32
    %334 = arith.index_cast %330 : i32 to index
    %c0_89 = arith.constant 0 : index
    %335 = vector.load %arg13[%334, %c0_89] : memref<64x384xf32, #tpu.memory_space<vmem>>, vector<8x384xf32>
    %336 = vector.extract_strided_slice %328 {offsets = [0, 0], sizes = [8, 384], strides = [1, 1]} : vector<8x768xf32> to vector<8x384xf32>
    %337 = vector.extract_strided_slice %335 {offsets = [0, 0], sizes = [8, 256], strides = [1, 1]} : vector<8x384xf32> to vector<8x256xf32>
    %338 = vector.extract_strided_slice %336 {offsets = [0, 0], sizes = [8, 256], strides = [1, 1]} : vector<8x384xf32> to vector<8x256xf32>
    %339 = arith.addf %337, %338 : vector<8x256xf32>
    %340 = arith.negf %339 : vector<8x256xf32>
    %341 = math.exp %340 : vector<8x256xf32>
    %cst_90 = arith.constant 1.000000e+00 : f32
    %342 = vector.broadcast %cst_90 : f32 to vector<8x256xf32>
    %343 = arith.addf %342, %341 : vector<8x256xf32>
    %344 = arith.divf %342, %343 : vector<8x256xf32>
    %345 = vector.extract_strided_slice %344 {offsets = [0, 0], sizes = [8, 128], strides = [1, 1]} : vector<8x256xf32> to vector<8x128xf32>
    %346 = vector.extract_strided_slice %344 {offsets = [0, 128], sizes = [8, 128], strides = [1, 1]} : vector<8x256xf32> to vector<8x128xf32>
    %347 = vector.extract_strided_slice %335 {offsets = [0, 256], sizes = [8, 128], strides = [1, 1]} : vector<8x384xf32> to vector<8x128xf32>
    %348 = vector.extract_strided_slice %336 {offsets = [0, 256], sizes = [8, 128], strides = [1, 1]} : vector<8x384xf32> to vector<8x128xf32>
    %349 = arith.addf %348, %20 : vector<8x128xf32>
    %350 = arith.mulf %345, %349 : vector<8x128xf32>
    %351 = arith.addf %347, %350 : vector<8x128xf32>
    %352 = math.tanh %351 : vector<8x128xf32>
    %cst_91 = arith.constant 1.000000e+00 : f32
    %353 = vector.broadcast %cst_91 : f32 to vector<8x128xf32>
    %354 = arith.subf %353, %346 : vector<8x128xf32>
    %355 = arith.mulf %354, %352 : vector<8x128xf32>
    %356 = arith.mulf %346, %297 : vector<8x128xf32>
    %357 = arith.addf %355, %356 : vector<8x128xf32>
    %358 = arith.index_cast %333 : i32 to index
    %c0_92 = arith.constant 0 : index
    %359 = vector.load %arg14[%358, %c0_92] : memref<64x384xf32, #tpu.memory_space<vmem>>, vector<8x384xf32>
    %360 = vector.extract_strided_slice %328 {offsets = [0, 384], sizes = [8, 384], strides = [1, 1]} : vector<8x768xf32> to vector<8x384xf32>
    %361 = vector.extract_strided_slice %359 {offsets = [0, 0], sizes = [8, 256], strides = [1, 1]} : vector<8x384xf32> to vector<8x256xf32>
    %362 = vector.extract_strided_slice %360 {offsets = [0, 0], sizes = [8, 256], strides = [1, 1]} : vector<8x384xf32> to vector<8x256xf32>
    %363 = arith.addf %361, %362 : vector<8x256xf32>
    %364 = arith.negf %363 : vector<8x256xf32>
    %365 = math.exp %364 : vector<8x256xf32>
    %cst_93 = arith.constant 1.000000e+00 : f32
    %366 = vector.broadcast %cst_93 : f32 to vector<8x256xf32>
    %367 = arith.addf %366, %365 : vector<8x256xf32>
    %368 = arith.divf %366, %367 : vector<8x256xf32>
    %369 = vector.extract_strided_slice %368 {offsets = [0, 0], sizes = [8, 128], strides = [1, 1]} : vector<8x256xf32> to vector<8x128xf32>
    %370 = vector.extract_strided_slice %368 {offsets = [0, 128], sizes = [8, 128], strides = [1, 1]} : vector<8x256xf32> to vector<8x128xf32>
    %371 = vector.extract_strided_slice %359 {offsets = [0, 256], sizes = [8, 128], strides = [1, 1]} : vector<8x384xf32> to vector<8x128xf32>
    %372 = vector.extract_strided_slice %360 {offsets = [0, 256], sizes = [8, 128], strides = [1, 1]} : vector<8x384xf32> to vector<8x128xf32>
    %373 = arith.addf %372, %23 : vector<8x128xf32>
    %374 = arith.mulf %369, %373 : vector<8x128xf32>
    %375 = arith.addf %371, %374 : vector<8x128xf32>
    %376 = math.tanh %375 : vector<8x128xf32>
    %cst_94 = arith.constant 1.000000e+00 : f32
    %377 = vector.broadcast %cst_94 : f32 to vector<8x128xf32>
    %378 = arith.subf %377, %370 : vector<8x128xf32>
    %379 = arith.mulf %378, %376 : vector<8x128xf32>
    %380 = arith.mulf %370, %321 : vector<8x128xf32>
    %381 = arith.addf %379, %380 : vector<8x128xf32>
    %382 = arith.index_cast %330 : i32 to index
    %c0_95 = arith.constant 0 : index
    %383 = vector.load %arg15[%382, %c0_95] : memref<64x128xf32, #tpu.memory_space<vmem>>, vector<8x128xf32>
    tpu.vector_store %arg15[%382, %c0_95], %357 {strides = array<i32>} : memref<64x128xf32, #tpu.memory_space<vmem>>, vector<8x128xf32>,
    %384 = arith.index_cast %333 : i32 to index
    %c0_96 = arith.constant 0 : index
    %385 = vector.load %arg16[%384, %c0_96] : memref<64x128xf32, #tpu.memory_space<vmem>>, vector<8x128xf32>
    tpu.vector_store %arg16[%384, %c0_96], %381 {strides = array<i32>} : memref<64x128xf32, #tpu.memory_space<vmem>>, vector<8x128xf32>,
    %c6_i32 = arith.constant 6 : i32
    %386 = tpu.concatenate %357, %381 in 1 : vector<8x128xf32>, vector<8x128xf32> -> vector<8x256xf32>
    %387 = arith.truncf %386 : vector<8x256xf32> to vector<8x256xbf16>
    %cst_97 = arith.constant dense<0.000000e+00> : vector<8x768xf32>
    %388 = tpu.matmul %387, %17, %cst_97 {dimension_numbers = #tpu.dot_dimension_numbers<[1], [0], [0], [1], [0, 0, 1, 1], [], []>} : vector<8x256xbf16>, vector<256x768xbf16>, vector<8x768xf32> -> vector<8x768xf32>
    %c8_i32_98 = arith.constant 8 : i32
    %389 = arith.muli %c6_i32, %c8_i32_98 : i32
    %390 = tpu.assume_multiple %389, 8 : i32
    %c7_i32_99 = arith.constant 7 : i32
    %391 = arith.subi %c7_i32_99, %c6_i32 : i32
    %c8_i32_100 = arith.constant 8 : i32
    %392 = arith.muli %391, %c8_i32_100 : i32
    %393 = tpu.assume_multiple %392, 8 : i32
    %394 = arith.index_cast %390 : i32 to index
    %c0_101 = arith.constant 0 : index
    %395 = vector.load %arg13[%394, %c0_101] : memref<64x384xf32, #tpu.memory_space<vmem>>, vector<8x384xf32>
    %396 = vector.extract_strided_slice %388 {offsets = [0, 0], sizes = [8, 384], strides = [1, 1]} : vector<8x768xf32> to vector<8x384xf32>
    %397 = vector.extract_strided_slice %395 {offsets = [0, 0], sizes = [8, 256], strides = [1, 1]} : vector<8x384xf32> to vector<8x256xf32>
    %398 = vector.extract_strided_slice %396 {offsets = [0, 0], sizes = [8, 256], strides = [1, 1]} : vector<8x384xf32> to vector<8x256xf32>
    %399 = arith.addf %397, %398 : vector<8x256xf32>
    %400 = arith.negf %399 : vector<8x256xf32>
    %401 = math.exp %400 : vector<8x256xf32>
    %cst_102 = arith.constant 1.000000e+00 : f32
    %402 = vector.broadcast %cst_102 : f32 to vector<8x256xf32>
    %403 = arith.addf %402, %401 : vector<8x256xf32>
    %404 = arith.divf %402, %403 : vector<8x256xf32>
    %405 = vector.extract_strided_slice %404 {offsets = [0, 0], sizes = [8, 128], strides = [1, 1]} : vector<8x256xf32> to vector<8x128xf32>
    %406 = vector.extract_strided_slice %404 {offsets = [0, 128], sizes = [8, 128], strides = [1, 1]} : vector<8x256xf32> to vector<8x128xf32>
    %407 = vector.extract_strided_slice %395 {offsets = [0, 256], sizes = [8, 128], strides = [1, 1]} : vector<8x384xf32> to vector<8x128xf32>
    %408 = vector.extract_strided_slice %396 {offsets = [0, 256], sizes = [8, 128], strides = [1, 1]} : vector<8x384xf32> to vector<8x128xf32>
    %409 = arith.addf %408, %20 : vector<8x128xf32>
    %410 = arith.mulf %405, %409 : vector<8x128xf32>
    %411 = arith.addf %407, %410 : vector<8x128xf32>
    %412 = math.tanh %411 : vector<8x128xf32>
    %cst_103 = arith.constant 1.000000e+00 : f32
    %413 = vector.broadcast %cst_103 : f32 to vector<8x128xf32>
    %414 = arith.subf %413, %406 : vector<8x128xf32>
    %415 = arith.mulf %414, %412 : vector<8x128xf32>
    %416 = arith.mulf %406, %357 : vector<8x128xf32>
    %417 = arith.addf %415, %416 : vector<8x128xf32>
    %418 = arith.index_cast %393 : i32 to index
    %c0_104 = arith.constant 0 : index
    %419 = vector.load %arg14[%418, %c0_104] : memref<64x384xf32, #tpu.memory_space<vmem>>, vector<8x384xf32>
    %420 = vector.extract_strided_slice %388 {offsets = [0, 384], sizes = [8, 384], strides = [1, 1]} : vector<8x768xf32> to vector<8x384xf32>
    %421 = vector.extract_strided_slice %419 {offsets = [0, 0], sizes = [8, 256], strides = [1, 1]} : vector<8x384xf32> to vector<8x256xf32>
    %422 = vector.extract_strided_slice %420 {offsets = [0, 0], sizes = [8, 256], strides = [1, 1]} : vector<8x384xf32> to vector<8x256xf32>
    %423 = arith.addf %421, %422 : vector<8x256xf32>
    %424 = arith.negf %423 : vector<8x256xf32>
    %425 = math.exp %424 : vector<8x256xf32>
    %cst_105 = arith.constant 1.000000e+00 : f32
    %426 = vector.broadcast %cst_105 : f32 to vector<8x256xf32>
    %427 = arith.addf %426, %425 : vector<8x256xf32>
    %428 = arith.divf %426, %427 : vector<8x256xf32>
    %429 = vector.extract_strided_slice %428 {offsets = [0, 0], sizes = [8, 128], strides = [1, 1]} : vector<8x256xf32> to vector<8x128xf32>
    %430 = vector.extract_strided_slice %428 {offsets = [0, 128], sizes = [8, 128], strides = [1, 1]} : vector<8x256xf32> to vector<8x128xf32>
    %431 = vector.extract_strided_slice %419 {offsets = [0, 256], sizes = [8, 128], strides = [1, 1]} : vector<8x384xf32> to vector<8x128xf32>
    %432 = vector.extract_strided_slice %420 {offsets = [0, 256], sizes = [8, 128], strides = [1, 1]} : vector<8x384xf32> to vector<8x128xf32>
    %433 = arith.addf %432, %23 : vector<8x128xf32>
    %434 = arith.mulf %429, %433 : vector<8x128xf32>
    %435 = arith.addf %431, %434 : vector<8x128xf32>
    %436 = math.tanh %435 : vector<8x128xf32>
    %cst_106 = arith.constant 1.000000e+00 : f32
    %437 = vector.broadcast %cst_106 : f32 to vector<8x128xf32>
    %438 = arith.subf %437, %430 : vector<8x128xf32>
    %439 = arith.mulf %438, %436 : vector<8x128xf32>
    %440 = arith.mulf %430, %381 : vector<8x128xf32>
    %441 = arith.addf %439, %440 : vector<8x128xf32>
    %442 = arith.index_cast %390 : i32 to index
    %c0_107 = arith.constant 0 : index
    %443 = vector.load %arg15[%442, %c0_107] : memref<64x128xf32, #tpu.memory_space<vmem>>, vector<8x128xf32>
    tpu.vector_store %arg15[%442, %c0_107], %417 {strides = array<i32>} : memref<64x128xf32, #tpu.memory_space<vmem>>, vector<8x128xf32>,
    %444 = arith.index_cast %393 : i32 to index
    %c0_108 = arith.constant 0 : index
    %445 = vector.load %arg16[%444, %c0_108] : memref<64x128xf32, #tpu.memory_space<vmem>>, vector<8x128xf32>
    tpu.vector_store %arg16[%444, %c0_108], %441 {strides = array<i32>} : memref<64x128xf32, #tpu.memory_space<vmem>>, vector<8x128xf32>,
    %c7_i32_109 = arith.constant 7 : i32
    %446 = tpu.concatenate %417, %441 in 1 : vector<8x128xf32>, vector<8x128xf32> -> vector<8x256xf32>
    %447 = arith.truncf %446 : vector<8x256xf32> to vector<8x256xbf16>
    %cst_110 = arith.constant dense<0.000000e+00> : vector<8x768xf32>
    %448 = tpu.matmul %447, %17, %cst_110 {dimension_numbers = #tpu.dot_dimension_numbers<[1], [0], [0], [1], [0, 0, 1, 1], [], []>} : vector<8x256xbf16>, vector<256x768xbf16>, vector<8x768xf32> -> vector<8x768xf32>
    %c8_i32_111 = arith.constant 8 : i32
    %449 = arith.muli %c7_i32_109, %c8_i32_111 : i32
    %450 = tpu.assume_multiple %449, 8 : i32
    %c7_i32_112 = arith.constant 7 : i32
    %451 = arith.subi %c7_i32_112, %c7_i32_109 : i32
    %c8_i32_113 = arith.constant 8 : i32
    %452 = arith.muli %451, %c8_i32_113 : i32
    %453 = tpu.assume_multiple %452, 8 : i32
    %454 = arith.index_cast %450 : i32 to index
    %c0_114 = arith.constant 0 : index
    %455 = vector.load %arg13[%454, %c0_114] : memref<64x384xf32, #tpu.memory_space<vmem>>, vector<8x384xf32>
    %456 = vector.extract_strided_slice %448 {offsets = [0, 0], sizes = [8, 384], strides = [1, 1]} : vector<8x768xf32> to vector<8x384xf32>
    %457 = vector.extract_strided_slice %455 {offsets = [0, 0], sizes = [8, 256], strides = [1, 1]} : vector<8x384xf32> to vector<8x256xf32>
    %458 = vector.extract_strided_slice %456 {offsets = [0, 0], sizes = [8, 256], strides = [1, 1]} : vector<8x384xf32> to vector<8x256xf32>
    %459 = arith.addf %457, %458 : vector<8x256xf32>
    %460 = arith.negf %459 : vector<8x256xf32>
    %461 = math.exp %460 : vector<8x256xf32>
    %cst_115 = arith.constant 1.000000e+00 : f32
    %462 = vector.broadcast %cst_115 : f32 to vector<8x256xf32>
    %463 = arith.addf %462, %461 : vector<8x256xf32>
    %464 = arith.divf %462, %463 : vector<8x256xf32>
    %465 = vector.extract_strided_slice %464 {offsets = [0, 0], sizes = [8, 128], strides = [1, 1]} : vector<8x256xf32> to vector<8x128xf32>
    %466 = vector.extract_strided_slice %464 {offsets = [0, 128], sizes = [8, 128], strides = [1, 1]} : vector<8x256xf32> to vector<8x128xf32>
    %467 = vector.extract_strided_slice %455 {offsets = [0, 256], sizes = [8, 128], strides = [1, 1]} : vector<8x384xf32> to vector<8x128xf32>
    %468 = vector.extract_strided_slice %456 {offsets = [0, 256], sizes = [8, 128], strides = [1, 1]} : vector<8x384xf32> to vector<8x128xf32>
    %469 = arith.addf %468, %20 : vector<8x128xf32>
    %470 = arith.mulf %465, %469 : vector<8x128xf32>
    %471 = arith.addf %467, %470 : vector<8x128xf32>
    %472 = math.tanh %471 : vector<8x128xf32>
    %cst_116 = arith.constant 1.000000e+00 : f32
    %473 = vector.broadcast %cst_116 : f32 to vector<8x128xf32>
    %474 = arith.subf %473, %466 : vector<8x128xf32>
    %475 = arith.mulf %474, %472 : vector<8x128xf32>
    %476 = arith.mulf %466, %417 : vector<8x128xf32>
    %477 = arith.addf %475, %476 : vector<8x128xf32>
    %478 = arith.index_cast %453 : i32 to index
    %c0_117 = arith.constant 0 : index
    %479 = vector.load %arg14[%478, %c0_117] : memref<64x384xf32, #tpu.memory_space<vmem>>, vector<8x384xf32>
    %480 = vector.extract_strided_slice %448 {offsets = [0, 384], sizes = [8, 384], strides = [1, 1]} : vector<8x768xf32> to vector<8x384xf32>
    %481 = vector.extract_strided_slice %479 {offsets = [0, 0], sizes = [8, 256], strides = [1, 1]} : vector<8x384xf32> to vector<8x256xf32>
    %482 = vector.extract_strided_slice %480 {offsets = [0, 0], sizes = [8, 256], strides = [1, 1]} : vector<8x384xf32> to vector<8x256xf32>
    %483 = arith.addf %481, %482 : vector<8x256xf32>
    %484 = arith.negf %483 : vector<8x256xf32>
    %485 = math.exp %484 : vector<8x256xf32>
    %cst_118 = arith.constant 1.000000e+00 : f32
    %486 = vector.broadcast %cst_118 : f32 to vector<8x256xf32>
    %487 = arith.addf %486, %485 : vector<8x256xf32>
    %488 = arith.divf %486, %487 : vector<8x256xf32>
    %489 = vector.extract_strided_slice %488 {offsets = [0, 0], sizes = [8, 128], strides = [1, 1]} : vector<8x256xf32> to vector<8x128xf32>
    %490 = vector.extract_strided_slice %488 {offsets = [0, 128], sizes = [8, 128], strides = [1, 1]} : vector<8x256xf32> to vector<8x128xf32>
    %491 = vector.extract_strided_slice %479 {offsets = [0, 256], sizes = [8, 128], strides = [1, 1]} : vector<8x384xf32> to vector<8x128xf32>
    %492 = vector.extract_strided_slice %480 {offsets = [0, 256], sizes = [8, 128], strides = [1, 1]} : vector<8x384xf32> to vector<8x128xf32>
    %493 = arith.addf %492, %23 : vector<8x128xf32>
    %494 = arith.mulf %489, %493 : vector<8x128xf32>
    %495 = arith.addf %491, %494 : vector<8x128xf32>
    %496 = math.tanh %495 : vector<8x128xf32>
    %cst_119 = arith.constant 1.000000e+00 : f32
    %497 = vector.broadcast %cst_119 : f32 to vector<8x128xf32>
    %498 = arith.subf %497, %490 : vector<8x128xf32>
    %499 = arith.mulf %498, %496 : vector<8x128xf32>
    %500 = arith.mulf %490, %441 : vector<8x128xf32>
    %501 = arith.addf %499, %500 : vector<8x128xf32>
    %502 = arith.index_cast %450 : i32 to index
    %c0_120 = arith.constant 0 : index
    %503 = vector.load %arg15[%502, %c0_120] : memref<64x128xf32, #tpu.memory_space<vmem>>, vector<8x128xf32>
    tpu.vector_store %arg15[%502, %c0_120], %477 {strides = array<i32>} : memref<64x128xf32, #tpu.memory_space<vmem>>, vector<8x128xf32>,
    %504 = arith.index_cast %453 : i32 to index
    %c0_121 = arith.constant 0 : index
    %505 = vector.load %arg16[%504, %c0_121] : memref<64x128xf32, #tpu.memory_space<vmem>>, vector<8x128xf32>
    tpu.vector_store %arg16[%504, %c0_121], %501 {strides = array<i32>} : memref<64x128xf32, #tpu.memory_space<vmem>>, vector<8x128xf32>,
    %c8_i32_122 = arith.constant 8 : i32
    %c0_123 = arith.constant 0 : index
    %c0_124 = arith.constant 0 : index
    %506 = vector.load %arg12[%c0_123, %c0_124] : memref<8x256xf32, #tpu.memory_space<vmem>>, vector<8x128xf32>
    tpu.vector_store %arg12[%c0_123, %c0_124], %477 {strides = array<i32>} : memref<8x256xf32, #tpu.memory_space<vmem>>, vector<8x128xf32>,
    %c0_125 = arith.constant 0 : index
    %c128_126 = arith.constant 128 : index
    %507 = vector.load %arg12[%c0_125, %c128_126] : memref<8x256xf32, #tpu.memory_space<vmem>>, vector<8x128xf32>
    tpu.vector_store %arg12[%c0_125, %c128_126], %501 {strides = array<i32>} : memref<8x256xf32, #tpu.memory_space<vmem>>, vector<8x128xf32>,
    %c0_127 = arith.constant 0 : index
    %c0_128 = arith.constant 0 : index
    %508 = vector.load %arg15[%c0_127, %c0_128] : memref<64x128xf32, #tpu.memory_space<vmem>>, vector<64x128xf32>
    %509 = arith.truncf %508 : vector<64x128xf32> to vector<64x128xbf16>
    %c0_129 = arith.constant 0 : index
    %c0_130 = arith.constant 0 : index
    %510 = vector.load %arg10[%c0_129, %c0_130] : memref<64x128xbf16, #tpu.memory_space<vmem>>, vector<64x128xbf16>
    tpu.vector_store %arg10[%c0_129, %c0_130], %509 {strides = array<i32>} : memref<64x128xbf16, #tpu.memory_space<vmem>>, vector<64x128xbf16>,
    %c0_131 = arith.constant 0 : index
    %c0_132 = arith.constant 0 : index
    %511 = vector.load %arg16[%c0_131, %c0_132] : memref<64x128xf32, #tpu.memory_space<vmem>>, vector<64x128xf32>
    %512 = arith.truncf %511 : vector<64x128xf32> to vector<64x128xbf16>
    %c0_133 = arith.constant 0 : index
    %c0_134 = arith.constant 0 : index
    %513 = vector.load %arg11[%c0_133, %c0_134] : memref<64x128xbf16, #tpu.memory_space<vmem>>, vector<64x128xbf16>
    tpu.vector_store %arg11[%c0_133, %c0_134], %512 {strides = array<i32>} : memref<64x128xbf16, #tpu.memory_space<vmem>>, vector<64x128xbf16>,
    return
  }
  func.func @transform_0(%arg0: i32) -> (i32, i32) {
    %c0_i32 = arith.constant 0 : i32
    %c0_i32_0 = arith.constant 0 : i32
    return %arg0, %c0_i32 : i32, i32
  }
  func.func @transform_1(%arg0: i32) -> (i32, i32) {
    %c0_i32 = arith.constant 0 : i32
    %0 = arith.subi %c0_i32, %arg0 : i32
    %c0_i32_0 = arith.constant 0 : i32
    %c0_i32_1 = arith.constant 0 : i32
    return %0, %c0_i32_0 : i32, i32
  }
  func.func @transform_2(%arg0: i32) -> (i32, i32) {
    %c0_i32 = arith.constant 0 : i32
    %c0_i32_0 = arith.constant 0 : i32
    %c0_i32_1 = arith.constant 0 : i32
    return %c0_i32, %c0_i32_0 : i32, i32
  }
  func.func @transform_3(%arg0: i32) -> (i32, i32) {
    %c0_i32 = arith.constant 0 : i32
    %c0_i32_0 = arith.constant 0 : i32
    %c0_i32_1 = arith.constant 0 : i32
    return %c0_i32, %c0_i32_0 : i32, i32
  }
  func.func @transform_4(%arg0: i32) -> (i32, i32) {
    %c0_i32 = arith.constant 0 : i32
    %c0_i32_0 = arith.constant 0 : i32
    %c0_i32_1 = arith.constant 0 : i32
    return %c0_i32, %c0_i32_0 : i32, i32
  }
  func.func @transform_5(%arg0: i32) -> (i32, i32) {
    %c0_i32 = arith.constant 0 : i32
    %c0_i32_0 = arith.constant 0 : i32
    %c0_i32_1 = arith.constant 0 : i32
    return %c0_i32, %c0_i32_0 : i32, i32
  }
  func.func @transform_6(%arg0: i32) -> (i32, i32) {
    %c0_i32 = arith.constant 0 : i32
    %c0_i32_0 = arith.constant 0 : i32
    %c0_i32_1 = arith.constant 0 : i32
    return %c0_i32, %c0_i32_0 : i32, i32
  }
  func.func @transform_7(%arg0: i32) -> (i32, i32) {
    %c0_i32 = arith.constant 0 : i32
    %c0_i32_0 = arith.constant 0 : i32
    %c0_i32_1 = arith.constant 0 : i32
    return %c0_i32, %c0_i32_0 : i32, i32
  }
  func.func @transform_8(%arg0: i32) -> (i32, i32) {
    %c0_i32 = arith.constant 0 : i32
    %c0_i32_0 = arith.constant 0 : i32
    %c0_i32_1 = arith.constant 0 : i32
    return %c0_i32, %c0_i32_0 : i32, i32
  }
  func.func @transform_9(%arg0: i32) -> (i32, i32) {
    %c0_i32 = arith.constant 0 : i32
    %c0_i32_0 = arith.constant 0 : i32
    return %arg0, %c0_i32 : i32, i32
  }
  func.func @transform_10(%arg0: i32) -> (i32, i32) {
    %c0_i32 = arith.constant 0 : i32
    %0 = arith.subi %c0_i32, %arg0 : i32
    %c0_i32_0 = arith.constant 0 : i32
    %c0_i32_1 = arith.constant 0 : i32
    return %0, %c0_i32_0 : i32, i32
  }
}

module attributes {stable_mosaic.version = 11 : i64} {
  func.func @gru_layer1_head_kernel(%arg0: i32, %arg1: memref<64x128xbf16, #tpu.memory_space<vmem>>, %arg2: memref<64x128xbf16, #tpu.memory_space<vmem>>, %arg3: memref<64x128xbf16, #tpu.memory_space<vmem>>, %arg4: memref<64x128xbf16, #tpu.memory_space<vmem>>, %arg5: memref<128x384xbf16, #tpu.memory_space<vmem>>, %arg6: memref<128x384xbf16, #tpu.memory_space<vmem>>, %arg7: memref<128x384xbf16, #tpu.memory_space<vmem>>, %arg8: memref<128x384xbf16, #tpu.memory_space<vmem>>, %arg9: memref<256x768xbf16, #tpu.memory_space<vmem>>, %arg10: memref<1x384xf32, #tpu.memory_space<vmem>>, %arg11: memref<1x384xf32, #tpu.memory_space<vmem>>, %arg12: memref<1x128xf32, #tpu.memory_space<vmem>>, %arg13: memref<1x128xf32, #tpu.memory_space<vmem>>, %arg14: memref<128x32xf32, #tpu.memory_space<vmem>>, %arg15: memref<128x32xf32, #tpu.memory_space<vmem>>, %arg16: memref<1x32xf32, #tpu.memory_space<vmem>>, %arg17: memref<32x128xf32, #tpu.memory_space<vmem>>, %arg18: memref<1x128xf32, #tpu.memory_space<vmem>>, %arg19: memref<8x128xf32, #tpu.memory_space<vmem>>, %arg20: memref<8x256xf32, #tpu.memory_space<vmem>>, %arg21: memref<64x384xf32, #tpu.memory_space<vmem>>, %arg22: memref<64x384xf32, #tpu.memory_space<vmem>>) attributes {dimension_semantics = [#tpu.dimension_semantics<arbitrary>], iteration_bounds = array<i64: 1>, scalar_prefetch = 0 : i64, scratch_operands = 3 : i64, tpu.core_type = #tpu.core_type<tc>, window_params = [{transform_indices = @transform_0, window_bounds = array<i64: 64, 128>}, {transform_indices = @transform_1, window_bounds = array<i64: 64, 128>}, {transform_indices = @transform_2, window_bounds = array<i64: 64, 128>}, {transform_indices = @transform_3, window_bounds = array<i64: 64, 128>}, {pipeline_mode = #tpu.pipeline_mode<synchronous>, transform_indices = @transform_4, window_bounds = array<i64: 128, 384>}, {pipeline_mode = #tpu.pipeline_mode<synchronous>, transform_indices = @transform_5, window_bounds = array<i64: 128, 384>}, {pipeline_mode = #tpu.pipeline_mode<synchronous>, transform_indices = @transform_6, window_bounds = array<i64: 128, 384>}, {pipeline_mode = #tpu.pipeline_mode<synchronous>, transform_indices = @transform_7, window_bounds = array<i64: 128, 384>}, {pipeline_mode = #tpu.pipeline_mode<synchronous>, transform_indices = @transform_8, window_bounds = array<i64: 256, 768>}, {pipeline_mode = #tpu.pipeline_mode<synchronous>, transform_indices = @transform_9, window_bounds = array<i64: 1, 384>}, {pipeline_mode = #tpu.pipeline_mode<synchronous>, transform_indices = @transform_10, window_bounds = array<i64: 1, 384>}, {pipeline_mode = #tpu.pipeline_mode<synchronous>, transform_indices = @transform_11, window_bounds = array<i64: 1, 128>}, {pipeline_mode = #tpu.pipeline_mode<synchronous>, transform_indices = @transform_12, window_bounds = array<i64: 1, 128>}, {pipeline_mode = #tpu.pipeline_mode<synchronous>, transform_indices = @transform_13, window_bounds = array<i64: 128, 32>}, {pipeline_mode = #tpu.pipeline_mode<synchronous>, transform_indices = @transform_14, window_bounds = array<i64: 128, 32>}, {pipeline_mode = #tpu.pipeline_mode<synchronous>, transform_indices = @transform_15, window_bounds = array<i64: 1, 32>}, {pipeline_mode = #tpu.pipeline_mode<synchronous>, transform_indices = @transform_16, window_bounds = array<i64: 32, 128>}, {pipeline_mode = #tpu.pipeline_mode<synchronous>, transform_indices = @transform_17, window_bounds = array<i64: 1, 128>}, {pipeline_mode = #tpu.pipeline_mode<synchronous>, transform_indices = @transform_18, window_bounds = array<i64: 8, 128>}]} {
    %c0_i32 = arith.constant 0 : i32
    %0 = arith.cmpi eq, %arg0, %c0_i32 : i32
    %1 = arith.extui %0 : i1 to i32
    %c0_i32_0 = arith.constant 0 : i32
    %2 = arith.cmpi ne, %1, %c0_i32_0 : i32
    scf.if %2 {
      %cst_123 = arith.constant 0.000000e+00 : f32
      %487 = vector.broadcast %cst_123 : f32 to vector<8x256xf32>
      %c0_124 = arith.constant 0 : index
      %c0_125 = arith.constant 0 : index
      %488 = vector.load %arg20[%c0_124, %c0_125] : memref<8x256xf32, #tpu.memory_space<vmem>>, vector<8x256xf32>
      tpu.vector_store %arg20[%c0_124, %c0_125], %487 {strides = array<i32>} : memref<8x256xf32, #tpu.memory_space<vmem>>, vector<8x256xf32>,
    } else {
    }
    %c0 = arith.constant 0 : index
    %c0_1 = arith.constant 0 : index
    %3 = vector.load %arg1[%c0, %c0_1] : memref<64x128xbf16, #tpu.memory_space<vmem>>, vector<64x128xbf16>
    %c0_2 = arith.constant 0 : index
    %c0_3 = arith.constant 0 : index
    %4 = vector.load %arg5[%c0_2, %c0_3] : memref<128x384xbf16, #tpu.memory_space<vmem>>, vector<128x384xbf16>
    %cst = arith.constant dense<0.000000e+00> : vector<64x384xf32>
    %5 = tpu.matmul %3, %4, %cst {dimension_numbers = #tpu.dot_dimension_numbers<[1], [0], [0], [1], [0, 0, 1, 1], [], []>} : vector<64x128xbf16>, vector<128x384xbf16>, vector<64x384xf32> -> vector<64x384xf32>
    %c0_4 = arith.constant 0 : index
    %c0_5 = arith.constant 0 : index
    %6 = vector.load %arg2[%c0_4, %c0_5] : memref<64x128xbf16, #tpu.memory_space<vmem>>, vector<64x128xbf16>
    %c0_6 = arith.constant 0 : index
    %c0_7 = arith.constant 0 : index
    %7 = vector.load %arg6[%c0_6, %c0_7] : memref<128x384xbf16, #tpu.memory_space<vmem>>, vector<128x384xbf16>
    %cst_8 = arith.constant dense<0.000000e+00> : vector<64x384xf32>
    %8 = tpu.matmul %6, %7, %cst_8 {dimension_numbers = #tpu.dot_dimension_numbers<[1], [0], [0], [1], [0, 0, 1, 1], [], []>} : vector<64x128xbf16>, vector<128x384xbf16>, vector<64x384xf32> -> vector<64x384xf32>
    %9 = arith.addf %5, %8 : vector<64x384xf32>
    %c0_9 = arith.constant 0 : index
    %c0_10 = arith.constant 0 : index
    %10 = vector.load %arg10[%c0_9, %c0_10] : memref<1x384xf32, #tpu.memory_space<vmem>>, vector<1x384xf32>
    %11 = vector.broadcast %10 : vector<1x384xf32> to vector<64x384xf32>
    %12 = arith.addf %9, %11 : vector<64x384xf32>
    %c0_11 = arith.constant 0 : index
    %c0_12 = arith.constant 0 : index
    %13 = vector.load %arg21[%c0_11, %c0_12] : memref<64x384xf32, #tpu.memory_space<vmem>>, vector<64x384xf32>
    tpu.vector_store %arg21[%c0_11, %c0_12], %12 {strides = array<i32>} : memref<64x384xf32, #tpu.memory_space<vmem>>, vector<64x384xf32>,
    %c0_13 = arith.constant 0 : index
    %c0_14 = arith.constant 0 : index
    %14 = vector.load %arg3[%c0_13, %c0_14] : memref<64x128xbf16, #tpu.memory_space<vmem>>, vector<64x128xbf16>
    %c0_15 = arith.constant 0 : index
    %c0_16 = arith.constant 0 : index
    %15 = vector.load %arg7[%c0_15, %c0_16] : memref<128x384xbf16, #tpu.memory_space<vmem>>, vector<128x384xbf16>
    %cst_17 = arith.constant dense<0.000000e+00> : vector<64x384xf32>
    %16 = tpu.matmul %14, %15, %cst_17 {dimension_numbers = #tpu.dot_dimension_numbers<[1], [0], [0], [1], [0, 0, 1, 1], [], []>} : vector<64x128xbf16>, vector<128x384xbf16>, vector<64x384xf32> -> vector<64x384xf32>
    %c0_18 = arith.constant 0 : index
    %c0_19 = arith.constant 0 : index
    %17 = vector.load %arg4[%c0_18, %c0_19] : memref<64x128xbf16, #tpu.memory_space<vmem>>, vector<64x128xbf16>
    %c0_20 = arith.constant 0 : index
    %c0_21 = arith.constant 0 : index
    %18 = vector.load %arg8[%c0_20, %c0_21] : memref<128x384xbf16, #tpu.memory_space<vmem>>, vector<128x384xbf16>
    %cst_22 = arith.constant dense<0.000000e+00> : vector<64x384xf32>
    %19 = tpu.matmul %17, %18, %cst_22 {dimension_numbers = #tpu.dot_dimension_numbers<[1], [0], [0], [1], [0, 0, 1, 1], [], []>} : vector<64x128xbf16>, vector<128x384xbf16>, vector<64x384xf32> -> vector<64x384xf32>
    %20 = arith.addf %16, %19 : vector<64x384xf32>
    %c0_23 = arith.constant 0 : index
    %c0_24 = arith.constant 0 : index
    %21 = vector.load %arg11[%c0_23, %c0_24] : memref<1x384xf32, #tpu.memory_space<vmem>>, vector<1x384xf32>
    %22 = vector.broadcast %21 : vector<1x384xf32> to vector<64x384xf32>
    %23 = arith.addf %20, %22 : vector<64x384xf32>
    %c0_25 = arith.constant 0 : index
    %c0_26 = arith.constant 0 : index
    %24 = vector.load %arg22[%c0_25, %c0_26] : memref<64x384xf32, #tpu.memory_space<vmem>>, vector<64x384xf32>
    tpu.vector_store %arg22[%c0_25, %c0_26], %23 {strides = array<i32>} : memref<64x384xf32, #tpu.memory_space<vmem>>, vector<64x384xf32>,
    %c0_27 = arith.constant 0 : index
    %c0_28 = arith.constant 0 : index
    %25 = vector.load %arg9[%c0_27, %c0_28] : memref<256x768xbf16, #tpu.memory_space<vmem>>, vector<256x768xbf16>
    %c0_29 = arith.constant 0 : index
    %c0_30 = arith.constant 0 : index
    %26 = vector.load %arg12[%c0_29, %c0_30] : memref<1x128xf32, #tpu.memory_space<vmem>>, vector<1x128xf32>
    %27 = vector.shape_cast %26 : vector<1x128xf32> to vector<1x128xf32>
    %28 = vector.broadcast %27 : vector<1x128xf32> to vector<8x128xf32>
    %c0_31 = arith.constant 0 : index
    %c0_32 = arith.constant 0 : index
    %29 = vector.load %arg13[%c0_31, %c0_32] : memref<1x128xf32, #tpu.memory_space<vmem>>, vector<1x128xf32>
    %30 = vector.shape_cast %29 : vector<1x128xf32> to vector<1x128xf32>
    %31 = vector.broadcast %30 : vector<1x128xf32> to vector<8x128xf32>
    %c0_33 = arith.constant 0 : index
    %c0_34 = arith.constant 0 : index
    %32 = vector.load %arg20[%c0_33, %c0_34] : memref<8x256xf32, #tpu.memory_space<vmem>>, vector<8x128xf32>
    %c0_35 = arith.constant 0 : index
    %c128 = arith.constant 128 : index
    %33 = vector.load %arg20[%c0_35, %c128] : memref<8x256xf32, #tpu.memory_space<vmem>>, vector<8x128xf32>
    %c0_i32_36 = arith.constant 0 : i32
    %34 = tpu.concatenate %32, %33 in 1 : vector<8x128xf32>, vector<8x128xf32> -> vector<8x256xf32>
    %35 = arith.truncf %34 : vector<8x256xf32> to vector<8x256xbf16>
    %cst_37 = arith.constant dense<0.000000e+00> : vector<8x768xf32>
    %36 = tpu.matmul %35, %25, %cst_37 {dimension_numbers = #tpu.dot_dimension_numbers<[1], [0], [0], [1], [0, 0, 1, 1], [], []>} : vector<8x256xbf16>, vector<256x768xbf16>, vector<8x768xf32> -> vector<8x768xf32>
    %c8_i32 = arith.constant 8 : i32
    %37 = arith.muli %c0_i32_36, %c8_i32 : i32
    %38 = tpu.assume_multiple %37, 8 : i32
    %c7_i32 = arith.constant 7 : i32
    %39 = arith.subi %c7_i32, %c0_i32_36 : i32
    %c8_i32_38 = arith.constant 8 : i32
    %40 = arith.muli %39, %c8_i32_38 : i32
    %41 = tpu.assume_multiple %40, 8 : i32
    %42 = arith.index_cast %38 : i32 to index
    %c0_39 = arith.constant 0 : index
    %43 = vector.load %arg21[%42, %c0_39] : memref<64x384xf32, #tpu.memory_space<vmem>>, vector<8x384xf32>
    %44 = vector.extract_strided_slice %36 {offsets = [0, 0], sizes = [8, 384], strides = [1, 1]} : vector<8x768xf32> to vector<8x384xf32>
    %45 = vector.extract_strided_slice %43 {offsets = [0, 0], sizes = [8, 256], strides = [1, 1]} : vector<8x384xf32> to vector<8x256xf32>
    %46 = vector.extract_strided_slice %44 {offsets = [0, 0], sizes = [8, 256], strides = [1, 1]} : vector<8x384xf32> to vector<8x256xf32>
    %47 = arith.addf %45, %46 : vector<8x256xf32>
    %48 = arith.negf %47 : vector<8x256xf32>
    %49 = math.exp %48 : vector<8x256xf32>
    %cst_40 = arith.constant 1.000000e+00 : f32
    %50 = vector.broadcast %cst_40 : f32 to vector<8x256xf32>
    %51 = arith.addf %50, %49 : vector<8x256xf32>
    %52 = arith.divf %50, %51 : vector<8x256xf32>
    %53 = vector.extract_strided_slice %52 {offsets = [0, 0], sizes = [8, 128], strides = [1, 1]} : vector<8x256xf32> to vector<8x128xf32>
    %54 = vector.extract_strided_slice %52 {offsets = [0, 128], sizes = [8, 128], strides = [1, 1]} : vector<8x256xf32> to vector<8x128xf32>
    %55 = vector.extract_strided_slice %43 {offsets = [0, 256], sizes = [8, 128], strides = [1, 1]} : vector<8x384xf32> to vector<8x128xf32>
    %56 = vector.extract_strided_slice %44 {offsets = [0, 256], sizes = [8, 128], strides = [1, 1]} : vector<8x384xf32> to vector<8x128xf32>
    %57 = arith.addf %56, %28 : vector<8x128xf32>
    %58 = arith.mulf %53, %57 : vector<8x128xf32>
    %59 = arith.addf %55, %58 : vector<8x128xf32>
    %60 = math.tanh %59 : vector<8x128xf32>
    %cst_41 = arith.constant 1.000000e+00 : f32
    %61 = vector.broadcast %cst_41 : f32 to vector<8x128xf32>
    %62 = arith.subf %61, %54 : vector<8x128xf32>
    %63 = arith.mulf %62, %60 : vector<8x128xf32>
    %64 = arith.mulf %54, %32 : vector<8x128xf32>
    %65 = arith.addf %63, %64 : vector<8x128xf32>
    %66 = arith.index_cast %41 : i32 to index
    %c0_42 = arith.constant 0 : index
    %67 = vector.load %arg22[%66, %c0_42] : memref<64x384xf32, #tpu.memory_space<vmem>>, vector<8x384xf32>
    %68 = vector.extract_strided_slice %36 {offsets = [0, 384], sizes = [8, 384], strides = [1, 1]} : vector<8x768xf32> to vector<8x384xf32>
    %69 = vector.extract_strided_slice %67 {offsets = [0, 0], sizes = [8, 256], strides = [1, 1]} : vector<8x384xf32> to vector<8x256xf32>
    %70 = vector.extract_strided_slice %68 {offsets = [0, 0], sizes = [8, 256], strides = [1, 1]} : vector<8x384xf32> to vector<8x256xf32>
    %71 = arith.addf %69, %70 : vector<8x256xf32>
    %72 = arith.negf %71 : vector<8x256xf32>
    %73 = math.exp %72 : vector<8x256xf32>
    %cst_43 = arith.constant 1.000000e+00 : f32
    %74 = vector.broadcast %cst_43 : f32 to vector<8x256xf32>
    %75 = arith.addf %74, %73 : vector<8x256xf32>
    %76 = arith.divf %74, %75 : vector<8x256xf32>
    %77 = vector.extract_strided_slice %76 {offsets = [0, 0], sizes = [8, 128], strides = [1, 1]} : vector<8x256xf32> to vector<8x128xf32>
    %78 = vector.extract_strided_slice %76 {offsets = [0, 128], sizes = [8, 128], strides = [1, 1]} : vector<8x256xf32> to vector<8x128xf32>
    %79 = vector.extract_strided_slice %67 {offsets = [0, 256], sizes = [8, 128], strides = [1, 1]} : vector<8x384xf32> to vector<8x128xf32>
    %80 = vector.extract_strided_slice %68 {offsets = [0, 256], sizes = [8, 128], strides = [1, 1]} : vector<8x384xf32> to vector<8x128xf32>
    %81 = arith.addf %80, %31 : vector<8x128xf32>
    %82 = arith.mulf %77, %81 : vector<8x128xf32>
    %83 = arith.addf %79, %82 : vector<8x128xf32>
    %84 = math.tanh %83 : vector<8x128xf32>
    %cst_44 = arith.constant 1.000000e+00 : f32
    %85 = vector.broadcast %cst_44 : f32 to vector<8x128xf32>
    %86 = arith.subf %85, %78 : vector<8x128xf32>
    %87 = arith.mulf %86, %84 : vector<8x128xf32>
    %88 = arith.mulf %78, %33 : vector<8x128xf32>
    %89 = arith.addf %87, %88 : vector<8x128xf32>
    %c1_i32 = arith.constant 1 : i32
    %90 = tpu.concatenate %65, %89 in 1 : vector<8x128xf32>, vector<8x128xf32> -> vector<8x256xf32>
    %91 = arith.truncf %90 : vector<8x256xf32> to vector<8x256xbf16>
    %cst_45 = arith.constant dense<0.000000e+00> : vector<8x768xf32>
    %92 = tpu.matmul %91, %25, %cst_45 {dimension_numbers = #tpu.dot_dimension_numbers<[1], [0], [0], [1], [0, 0, 1, 1], [], []>} : vector<8x256xbf16>, vector<256x768xbf16>, vector<8x768xf32> -> vector<8x768xf32>
    %c8_i32_46 = arith.constant 8 : i32
    %93 = arith.muli %c1_i32, %c8_i32_46 : i32
    %94 = tpu.assume_multiple %93, 8 : i32
    %c7_i32_47 = arith.constant 7 : i32
    %95 = arith.subi %c7_i32_47, %c1_i32 : i32
    %c8_i32_48 = arith.constant 8 : i32
    %96 = arith.muli %95, %c8_i32_48 : i32
    %97 = tpu.assume_multiple %96, 8 : i32
    %98 = arith.index_cast %94 : i32 to index
    %c0_49 = arith.constant 0 : index
    %99 = vector.load %arg21[%98, %c0_49] : memref<64x384xf32, #tpu.memory_space<vmem>>, vector<8x384xf32>
    %100 = vector.extract_strided_slice %92 {offsets = [0, 0], sizes = [8, 384], strides = [1, 1]} : vector<8x768xf32> to vector<8x384xf32>
    %101 = vector.extract_strided_slice %99 {offsets = [0, 0], sizes = [8, 256], strides = [1, 1]} : vector<8x384xf32> to vector<8x256xf32>
    %102 = vector.extract_strided_slice %100 {offsets = [0, 0], sizes = [8, 256], strides = [1, 1]} : vector<8x384xf32> to vector<8x256xf32>
    %103 = arith.addf %101, %102 : vector<8x256xf32>
    %104 = arith.negf %103 : vector<8x256xf32>
    %105 = math.exp %104 : vector<8x256xf32>
    %cst_50 = arith.constant 1.000000e+00 : f32
    %106 = vector.broadcast %cst_50 : f32 to vector<8x256xf32>
    %107 = arith.addf %106, %105 : vector<8x256xf32>
    %108 = arith.divf %106, %107 : vector<8x256xf32>
    %109 = vector.extract_strided_slice %108 {offsets = [0, 0], sizes = [8, 128], strides = [1, 1]} : vector<8x256xf32> to vector<8x128xf32>
    %110 = vector.extract_strided_slice %108 {offsets = [0, 128], sizes = [8, 128], strides = [1, 1]} : vector<8x256xf32> to vector<8x128xf32>
    %111 = vector.extract_strided_slice %99 {offsets = [0, 256], sizes = [8, 128], strides = [1, 1]} : vector<8x384xf32> to vector<8x128xf32>
    %112 = vector.extract_strided_slice %100 {offsets = [0, 256], sizes = [8, 128], strides = [1, 1]} : vector<8x384xf32> to vector<8x128xf32>
    %113 = arith.addf %112, %28 : vector<8x128xf32>
    %114 = arith.mulf %109, %113 : vector<8x128xf32>
    %115 = arith.addf %111, %114 : vector<8x128xf32>
    %116 = math.tanh %115 : vector<8x128xf32>
    %cst_51 = arith.constant 1.000000e+00 : f32
    %117 = vector.broadcast %cst_51 : f32 to vector<8x128xf32>
    %118 = arith.subf %117, %110 : vector<8x128xf32>
    %119 = arith.mulf %118, %116 : vector<8x128xf32>
    %120 = arith.mulf %110, %65 : vector<8x128xf32>
    %121 = arith.addf %119, %120 : vector<8x128xf32>
    %122 = arith.index_cast %97 : i32 to index
    %c0_52 = arith.constant 0 : index
    %123 = vector.load %arg22[%122, %c0_52] : memref<64x384xf32, #tpu.memory_space<vmem>>, vector<8x384xf32>
    %124 = vector.extract_strided_slice %92 {offsets = [0, 384], sizes = [8, 384], strides = [1, 1]} : vector<8x768xf32> to vector<8x384xf32>
    %125 = vector.extract_strided_slice %123 {offsets = [0, 0], sizes = [8, 256], strides = [1, 1]} : vector<8x384xf32> to vector<8x256xf32>
    %126 = vector.extract_strided_slice %124 {offsets = [0, 0], sizes = [8, 256], strides = [1, 1]} : vector<8x384xf32> to vector<8x256xf32>
    %127 = arith.addf %125, %126 : vector<8x256xf32>
    %128 = arith.negf %127 : vector<8x256xf32>
    %129 = math.exp %128 : vector<8x256xf32>
    %cst_53 = arith.constant 1.000000e+00 : f32
    %130 = vector.broadcast %cst_53 : f32 to vector<8x256xf32>
    %131 = arith.addf %130, %129 : vector<8x256xf32>
    %132 = arith.divf %130, %131 : vector<8x256xf32>
    %133 = vector.extract_strided_slice %132 {offsets = [0, 0], sizes = [8, 128], strides = [1, 1]} : vector<8x256xf32> to vector<8x128xf32>
    %134 = vector.extract_strided_slice %132 {offsets = [0, 128], sizes = [8, 128], strides = [1, 1]} : vector<8x256xf32> to vector<8x128xf32>
    %135 = vector.extract_strided_slice %123 {offsets = [0, 256], sizes = [8, 128], strides = [1, 1]} : vector<8x384xf32> to vector<8x128xf32>
    %136 = vector.extract_strided_slice %124 {offsets = [0, 256], sizes = [8, 128], strides = [1, 1]} : vector<8x384xf32> to vector<8x128xf32>
    %137 = arith.addf %136, %31 : vector<8x128xf32>
    %138 = arith.mulf %133, %137 : vector<8x128xf32>
    %139 = arith.addf %135, %138 : vector<8x128xf32>
    %140 = math.tanh %139 : vector<8x128xf32>
    %cst_54 = arith.constant 1.000000e+00 : f32
    %141 = vector.broadcast %cst_54 : f32 to vector<8x128xf32>
    %142 = arith.subf %141, %134 : vector<8x128xf32>
    %143 = arith.mulf %142, %140 : vector<8x128xf32>
    %144 = arith.mulf %134, %89 : vector<8x128xf32>
    %145 = arith.addf %143, %144 : vector<8x128xf32>
    %c2_i32 = arith.constant 2 : i32
    %146 = tpu.concatenate %121, %145 in 1 : vector<8x128xf32>, vector<8x128xf32> -> vector<8x256xf32>
    %147 = arith.truncf %146 : vector<8x256xf32> to vector<8x256xbf16>
    %cst_55 = arith.constant dense<0.000000e+00> : vector<8x768xf32>
    %148 = tpu.matmul %147, %25, %cst_55 {dimension_numbers = #tpu.dot_dimension_numbers<[1], [0], [0], [1], [0, 0, 1, 1], [], []>} : vector<8x256xbf16>, vector<256x768xbf16>, vector<8x768xf32> -> vector<8x768xf32>
    %c8_i32_56 = arith.constant 8 : i32
    %149 = arith.muli %c2_i32, %c8_i32_56 : i32
    %150 = tpu.assume_multiple %149, 8 : i32
    %c7_i32_57 = arith.constant 7 : i32
    %151 = arith.subi %c7_i32_57, %c2_i32 : i32
    %c8_i32_58 = arith.constant 8 : i32
    %152 = arith.muli %151, %c8_i32_58 : i32
    %153 = tpu.assume_multiple %152, 8 : i32
    %154 = arith.index_cast %150 : i32 to index
    %c0_59 = arith.constant 0 : index
    %155 = vector.load %arg21[%154, %c0_59] : memref<64x384xf32, #tpu.memory_space<vmem>>, vector<8x384xf32>
    %156 = vector.extract_strided_slice %148 {offsets = [0, 0], sizes = [8, 384], strides = [1, 1]} : vector<8x768xf32> to vector<8x384xf32>
    %157 = vector.extract_strided_slice %155 {offsets = [0, 0], sizes = [8, 256], strides = [1, 1]} : vector<8x384xf32> to vector<8x256xf32>
    %158 = vector.extract_strided_slice %156 {offsets = [0, 0], sizes = [8, 256], strides = [1, 1]} : vector<8x384xf32> to vector<8x256xf32>
    %159 = arith.addf %157, %158 : vector<8x256xf32>
    %160 = arith.negf %159 : vector<8x256xf32>
    %161 = math.exp %160 : vector<8x256xf32>
    %cst_60 = arith.constant 1.000000e+00 : f32
    %162 = vector.broadcast %cst_60 : f32 to vector<8x256xf32>
    %163 = arith.addf %162, %161 : vector<8x256xf32>
    %164 = arith.divf %162, %163 : vector<8x256xf32>
    %165 = vector.extract_strided_slice %164 {offsets = [0, 0], sizes = [8, 128], strides = [1, 1]} : vector<8x256xf32> to vector<8x128xf32>
    %166 = vector.extract_strided_slice %164 {offsets = [0, 128], sizes = [8, 128], strides = [1, 1]} : vector<8x256xf32> to vector<8x128xf32>
    %167 = vector.extract_strided_slice %155 {offsets = [0, 256], sizes = [8, 128], strides = [1, 1]} : vector<8x384xf32> to vector<8x128xf32>
    %168 = vector.extract_strided_slice %156 {offsets = [0, 256], sizes = [8, 128], strides = [1, 1]} : vector<8x384xf32> to vector<8x128xf32>
    %169 = arith.addf %168, %28 : vector<8x128xf32>
    %170 = arith.mulf %165, %169 : vector<8x128xf32>
    %171 = arith.addf %167, %170 : vector<8x128xf32>
    %172 = math.tanh %171 : vector<8x128xf32>
    %cst_61 = arith.constant 1.000000e+00 : f32
    %173 = vector.broadcast %cst_61 : f32 to vector<8x128xf32>
    %174 = arith.subf %173, %166 : vector<8x128xf32>
    %175 = arith.mulf %174, %172 : vector<8x128xf32>
    %176 = arith.mulf %166, %121 : vector<8x128xf32>
    %177 = arith.addf %175, %176 : vector<8x128xf32>
    %178 = arith.index_cast %153 : i32 to index
    %c0_62 = arith.constant 0 : index
    %179 = vector.load %arg22[%178, %c0_62] : memref<64x384xf32, #tpu.memory_space<vmem>>, vector<8x384xf32>
    %180 = vector.extract_strided_slice %148 {offsets = [0, 384], sizes = [8, 384], strides = [1, 1]} : vector<8x768xf32> to vector<8x384xf32>
    %181 = vector.extract_strided_slice %179 {offsets = [0, 0], sizes = [8, 256], strides = [1, 1]} : vector<8x384xf32> to vector<8x256xf32>
    %182 = vector.extract_strided_slice %180 {offsets = [0, 0], sizes = [8, 256], strides = [1, 1]} : vector<8x384xf32> to vector<8x256xf32>
    %183 = arith.addf %181, %182 : vector<8x256xf32>
    %184 = arith.negf %183 : vector<8x256xf32>
    %185 = math.exp %184 : vector<8x256xf32>
    %cst_63 = arith.constant 1.000000e+00 : f32
    %186 = vector.broadcast %cst_63 : f32 to vector<8x256xf32>
    %187 = arith.addf %186, %185 : vector<8x256xf32>
    %188 = arith.divf %186, %187 : vector<8x256xf32>
    %189 = vector.extract_strided_slice %188 {offsets = [0, 0], sizes = [8, 128], strides = [1, 1]} : vector<8x256xf32> to vector<8x128xf32>
    %190 = vector.extract_strided_slice %188 {offsets = [0, 128], sizes = [8, 128], strides = [1, 1]} : vector<8x256xf32> to vector<8x128xf32>
    %191 = vector.extract_strided_slice %179 {offsets = [0, 256], sizes = [8, 128], strides = [1, 1]} : vector<8x384xf32> to vector<8x128xf32>
    %192 = vector.extract_strided_slice %180 {offsets = [0, 256], sizes = [8, 128], strides = [1, 1]} : vector<8x384xf32> to vector<8x128xf32>
    %193 = arith.addf %192, %31 : vector<8x128xf32>
    %194 = arith.mulf %189, %193 : vector<8x128xf32>
    %195 = arith.addf %191, %194 : vector<8x128xf32>
    %196 = math.tanh %195 : vector<8x128xf32>
    %cst_64 = arith.constant 1.000000e+00 : f32
    %197 = vector.broadcast %cst_64 : f32 to vector<8x128xf32>
    %198 = arith.subf %197, %190 : vector<8x128xf32>
    %199 = arith.mulf %198, %196 : vector<8x128xf32>
    %200 = arith.mulf %190, %145 : vector<8x128xf32>
    %201 = arith.addf %199, %200 : vector<8x128xf32>
    %c3_i32 = arith.constant 3 : i32
    %202 = tpu.concatenate %177, %201 in 1 : vector<8x128xf32>, vector<8x128xf32> -> vector<8x256xf32>
    %203 = arith.truncf %202 : vector<8x256xf32> to vector<8x256xbf16>
    %cst_65 = arith.constant dense<0.000000e+00> : vector<8x768xf32>
    %204 = tpu.matmul %203, %25, %cst_65 {dimension_numbers = #tpu.dot_dimension_numbers<[1], [0], [0], [1], [0, 0, 1, 1], [], []>} : vector<8x256xbf16>, vector<256x768xbf16>, vector<8x768xf32> -> vector<8x768xf32>
    %c8_i32_66 = arith.constant 8 : i32
    %205 = arith.muli %c3_i32, %c8_i32_66 : i32
    %206 = tpu.assume_multiple %205, 8 : i32
    %c7_i32_67 = arith.constant 7 : i32
    %207 = arith.subi %c7_i32_67, %c3_i32 : i32
    %c8_i32_68 = arith.constant 8 : i32
    %208 = arith.muli %207, %c8_i32_68 : i32
    %209 = tpu.assume_multiple %208, 8 : i32
    %210 = arith.index_cast %206 : i32 to index
    %c0_69 = arith.constant 0 : index
    %211 = vector.load %arg21[%210, %c0_69] : memref<64x384xf32, #tpu.memory_space<vmem>>, vector<8x384xf32>
    %212 = vector.extract_strided_slice %204 {offsets = [0, 0], sizes = [8, 384], strides = [1, 1]} : vector<8x768xf32> to vector<8x384xf32>
    %213 = vector.extract_strided_slice %211 {offsets = [0, 0], sizes = [8, 256], strides = [1, 1]} : vector<8x384xf32> to vector<8x256xf32>
    %214 = vector.extract_strided_slice %212 {offsets = [0, 0], sizes = [8, 256], strides = [1, 1]} : vector<8x384xf32> to vector<8x256xf32>
    %215 = arith.addf %213, %214 : vector<8x256xf32>
    %216 = arith.negf %215 : vector<8x256xf32>
    %217 = math.exp %216 : vector<8x256xf32>
    %cst_70 = arith.constant 1.000000e+00 : f32
    %218 = vector.broadcast %cst_70 : f32 to vector<8x256xf32>
    %219 = arith.addf %218, %217 : vector<8x256xf32>
    %220 = arith.divf %218, %219 : vector<8x256xf32>
    %221 = vector.extract_strided_slice %220 {offsets = [0, 0], sizes = [8, 128], strides = [1, 1]} : vector<8x256xf32> to vector<8x128xf32>
    %222 = vector.extract_strided_slice %220 {offsets = [0, 128], sizes = [8, 128], strides = [1, 1]} : vector<8x256xf32> to vector<8x128xf32>
    %223 = vector.extract_strided_slice %211 {offsets = [0, 256], sizes = [8, 128], strides = [1, 1]} : vector<8x384xf32> to vector<8x128xf32>
    %224 = vector.extract_strided_slice %212 {offsets = [0, 256], sizes = [8, 128], strides = [1, 1]} : vector<8x384xf32> to vector<8x128xf32>
    %225 = arith.addf %224, %28 : vector<8x128xf32>
    %226 = arith.mulf %221, %225 : vector<8x128xf32>
    %227 = arith.addf %223, %226 : vector<8x128xf32>
    %228 = math.tanh %227 : vector<8x128xf32>
    %cst_71 = arith.constant 1.000000e+00 : f32
    %229 = vector.broadcast %cst_71 : f32 to vector<8x128xf32>
    %230 = arith.subf %229, %222 : vector<8x128xf32>
    %231 = arith.mulf %230, %228 : vector<8x128xf32>
    %232 = arith.mulf %222, %177 : vector<8x128xf32>
    %233 = arith.addf %231, %232 : vector<8x128xf32>
    %234 = arith.index_cast %209 : i32 to index
    %c0_72 = arith.constant 0 : index
    %235 = vector.load %arg22[%234, %c0_72] : memref<64x384xf32, #tpu.memory_space<vmem>>, vector<8x384xf32>
    %236 = vector.extract_strided_slice %204 {offsets = [0, 384], sizes = [8, 384], strides = [1, 1]} : vector<8x768xf32> to vector<8x384xf32>
    %237 = vector.extract_strided_slice %235 {offsets = [0, 0], sizes = [8, 256], strides = [1, 1]} : vector<8x384xf32> to vector<8x256xf32>
    %238 = vector.extract_strided_slice %236 {offsets = [0, 0], sizes = [8, 256], strides = [1, 1]} : vector<8x384xf32> to vector<8x256xf32>
    %239 = arith.addf %237, %238 : vector<8x256xf32>
    %240 = arith.negf %239 : vector<8x256xf32>
    %241 = math.exp %240 : vector<8x256xf32>
    %cst_73 = arith.constant 1.000000e+00 : f32
    %242 = vector.broadcast %cst_73 : f32 to vector<8x256xf32>
    %243 = arith.addf %242, %241 : vector<8x256xf32>
    %244 = arith.divf %242, %243 : vector<8x256xf32>
    %245 = vector.extract_strided_slice %244 {offsets = [0, 0], sizes = [8, 128], strides = [1, 1]} : vector<8x256xf32> to vector<8x128xf32>
    %246 = vector.extract_strided_slice %244 {offsets = [0, 128], sizes = [8, 128], strides = [1, 1]} : vector<8x256xf32> to vector<8x128xf32>
    %247 = vector.extract_strided_slice %235 {offsets = [0, 256], sizes = [8, 128], strides = [1, 1]} : vector<8x384xf32> to vector<8x128xf32>
    %248 = vector.extract_strided_slice %236 {offsets = [0, 256], sizes = [8, 128], strides = [1, 1]} : vector<8x384xf32> to vector<8x128xf32>
    %249 = arith.addf %248, %31 : vector<8x128xf32>
    %250 = arith.mulf %245, %249 : vector<8x128xf32>
    %251 = arith.addf %247, %250 : vector<8x128xf32>
    %252 = math.tanh %251 : vector<8x128xf32>
    %cst_74 = arith.constant 1.000000e+00 : f32
    %253 = vector.broadcast %cst_74 : f32 to vector<8x128xf32>
    %254 = arith.subf %253, %246 : vector<8x128xf32>
    %255 = arith.mulf %254, %252 : vector<8x128xf32>
    %256 = arith.mulf %246, %201 : vector<8x128xf32>
    %257 = arith.addf %255, %256 : vector<8x128xf32>
    %c4_i32 = arith.constant 4 : i32
    %258 = tpu.concatenate %233, %257 in 1 : vector<8x128xf32>, vector<8x128xf32> -> vector<8x256xf32>
    %259 = arith.truncf %258 : vector<8x256xf32> to vector<8x256xbf16>
    %cst_75 = arith.constant dense<0.000000e+00> : vector<8x768xf32>
    %260 = tpu.matmul %259, %25, %cst_75 {dimension_numbers = #tpu.dot_dimension_numbers<[1], [0], [0], [1], [0, 0, 1, 1], [], []>} : vector<8x256xbf16>, vector<256x768xbf16>, vector<8x768xf32> -> vector<8x768xf32>
    %c8_i32_76 = arith.constant 8 : i32
    %261 = arith.muli %c4_i32, %c8_i32_76 : i32
    %262 = tpu.assume_multiple %261, 8 : i32
    %c7_i32_77 = arith.constant 7 : i32
    %263 = arith.subi %c7_i32_77, %c4_i32 : i32
    %c8_i32_78 = arith.constant 8 : i32
    %264 = arith.muli %263, %c8_i32_78 : i32
    %265 = tpu.assume_multiple %264, 8 : i32
    %266 = arith.index_cast %262 : i32 to index
    %c0_79 = arith.constant 0 : index
    %267 = vector.load %arg21[%266, %c0_79] : memref<64x384xf32, #tpu.memory_space<vmem>>, vector<8x384xf32>
    %268 = vector.extract_strided_slice %260 {offsets = [0, 0], sizes = [8, 384], strides = [1, 1]} : vector<8x768xf32> to vector<8x384xf32>
    %269 = vector.extract_strided_slice %267 {offsets = [0, 0], sizes = [8, 256], strides = [1, 1]} : vector<8x384xf32> to vector<8x256xf32>
    %270 = vector.extract_strided_slice %268 {offsets = [0, 0], sizes = [8, 256], strides = [1, 1]} : vector<8x384xf32> to vector<8x256xf32>
    %271 = arith.addf %269, %270 : vector<8x256xf32>
    %272 = arith.negf %271 : vector<8x256xf32>
    %273 = math.exp %272 : vector<8x256xf32>
    %cst_80 = arith.constant 1.000000e+00 : f32
    %274 = vector.broadcast %cst_80 : f32 to vector<8x256xf32>
    %275 = arith.addf %274, %273 : vector<8x256xf32>
    %276 = arith.divf %274, %275 : vector<8x256xf32>
    %277 = vector.extract_strided_slice %276 {offsets = [0, 0], sizes = [8, 128], strides = [1, 1]} : vector<8x256xf32> to vector<8x128xf32>
    %278 = vector.extract_strided_slice %276 {offsets = [0, 128], sizes = [8, 128], strides = [1, 1]} : vector<8x256xf32> to vector<8x128xf32>
    %279 = vector.extract_strided_slice %267 {offsets = [0, 256], sizes = [8, 128], strides = [1, 1]} : vector<8x384xf32> to vector<8x128xf32>
    %280 = vector.extract_strided_slice %268 {offsets = [0, 256], sizes = [8, 128], strides = [1, 1]} : vector<8x384xf32> to vector<8x128xf32>
    %281 = arith.addf %280, %28 : vector<8x128xf32>
    %282 = arith.mulf %277, %281 : vector<8x128xf32>
    %283 = arith.addf %279, %282 : vector<8x128xf32>
    %284 = math.tanh %283 : vector<8x128xf32>
    %cst_81 = arith.constant 1.000000e+00 : f32
    %285 = vector.broadcast %cst_81 : f32 to vector<8x128xf32>
    %286 = arith.subf %285, %278 : vector<8x128xf32>
    %287 = arith.mulf %286, %284 : vector<8x128xf32>
    %288 = arith.mulf %278, %233 : vector<8x128xf32>
    %289 = arith.addf %287, %288 : vector<8x128xf32>
    %290 = arith.index_cast %265 : i32 to index
    %c0_82 = arith.constant 0 : index
    %291 = vector.load %arg22[%290, %c0_82] : memref<64x384xf32, #tpu.memory_space<vmem>>, vector<8x384xf32>
    %292 = vector.extract_strided_slice %260 {offsets = [0, 384], sizes = [8, 384], strides = [1, 1]} : vector<8x768xf32> to vector<8x384xf32>
    %293 = vector.extract_strided_slice %291 {offsets = [0, 0], sizes = [8, 256], strides = [1, 1]} : vector<8x384xf32> to vector<8x256xf32>
    %294 = vector.extract_strided_slice %292 {offsets = [0, 0], sizes = [8, 256], strides = [1, 1]} : vector<8x384xf32> to vector<8x256xf32>
    %295 = arith.addf %293, %294 : vector<8x256xf32>
    %296 = arith.negf %295 : vector<8x256xf32>
    %297 = math.exp %296 : vector<8x256xf32>
    %cst_83 = arith.constant 1.000000e+00 : f32
    %298 = vector.broadcast %cst_83 : f32 to vector<8x256xf32>
    %299 = arith.addf %298, %297 : vector<8x256xf32>
    %300 = arith.divf %298, %299 : vector<8x256xf32>
    %301 = vector.extract_strided_slice %300 {offsets = [0, 0], sizes = [8, 128], strides = [1, 1]} : vector<8x256xf32> to vector<8x128xf32>
    %302 = vector.extract_strided_slice %300 {offsets = [0, 128], sizes = [8, 128], strides = [1, 1]} : vector<8x256xf32> to vector<8x128xf32>
    %303 = vector.extract_strided_slice %291 {offsets = [0, 256], sizes = [8, 128], strides = [1, 1]} : vector<8x384xf32> to vector<8x128xf32>
    %304 = vector.extract_strided_slice %292 {offsets = [0, 256], sizes = [8, 128], strides = [1, 1]} : vector<8x384xf32> to vector<8x128xf32>
    %305 = arith.addf %304, %31 : vector<8x128xf32>
    %306 = arith.mulf %301, %305 : vector<8x128xf32>
    %307 = arith.addf %303, %306 : vector<8x128xf32>
    %308 = math.tanh %307 : vector<8x128xf32>
    %cst_84 = arith.constant 1.000000e+00 : f32
    %309 = vector.broadcast %cst_84 : f32 to vector<8x128xf32>
    %310 = arith.subf %309, %302 : vector<8x128xf32>
    %311 = arith.mulf %310, %308 : vector<8x128xf32>
    %312 = arith.mulf %302, %257 : vector<8x128xf32>
    %313 = arith.addf %311, %312 : vector<8x128xf32>
    %c5_i32 = arith.constant 5 : i32
    %314 = tpu.concatenate %289, %313 in 1 : vector<8x128xf32>, vector<8x128xf32> -> vector<8x256xf32>
    %315 = arith.truncf %314 : vector<8x256xf32> to vector<8x256xbf16>
    %cst_85 = arith.constant dense<0.000000e+00> : vector<8x768xf32>
    %316 = tpu.matmul %315, %25, %cst_85 {dimension_numbers = #tpu.dot_dimension_numbers<[1], [0], [0], [1], [0, 0, 1, 1], [], []>} : vector<8x256xbf16>, vector<256x768xbf16>, vector<8x768xf32> -> vector<8x768xf32>
    %c8_i32_86 = arith.constant 8 : i32
    %317 = arith.muli %c5_i32, %c8_i32_86 : i32
    %318 = tpu.assume_multiple %317, 8 : i32
    %c7_i32_87 = arith.constant 7 : i32
    %319 = arith.subi %c7_i32_87, %c5_i32 : i32
    %c8_i32_88 = arith.constant 8 : i32
    %320 = arith.muli %319, %c8_i32_88 : i32
    %321 = tpu.assume_multiple %320, 8 : i32
    %322 = arith.index_cast %318 : i32 to index
    %c0_89 = arith.constant 0 : index
    %323 = vector.load %arg21[%322, %c0_89] : memref<64x384xf32, #tpu.memory_space<vmem>>, vector<8x384xf32>
    %324 = vector.extract_strided_slice %316 {offsets = [0, 0], sizes = [8, 384], strides = [1, 1]} : vector<8x768xf32> to vector<8x384xf32>
    %325 = vector.extract_strided_slice %323 {offsets = [0, 0], sizes = [8, 256], strides = [1, 1]} : vector<8x384xf32> to vector<8x256xf32>
    %326 = vector.extract_strided_slice %324 {offsets = [0, 0], sizes = [8, 256], strides = [1, 1]} : vector<8x384xf32> to vector<8x256xf32>
    %327 = arith.addf %325, %326 : vector<8x256xf32>
    %328 = arith.negf %327 : vector<8x256xf32>
    %329 = math.exp %328 : vector<8x256xf32>
    %cst_90 = arith.constant 1.000000e+00 : f32
    %330 = vector.broadcast %cst_90 : f32 to vector<8x256xf32>
    %331 = arith.addf %330, %329 : vector<8x256xf32>
    %332 = arith.divf %330, %331 : vector<8x256xf32>
    %333 = vector.extract_strided_slice %332 {offsets = [0, 0], sizes = [8, 128], strides = [1, 1]} : vector<8x256xf32> to vector<8x128xf32>
    %334 = vector.extract_strided_slice %332 {offsets = [0, 128], sizes = [8, 128], strides = [1, 1]} : vector<8x256xf32> to vector<8x128xf32>
    %335 = vector.extract_strided_slice %323 {offsets = [0, 256], sizes = [8, 128], strides = [1, 1]} : vector<8x384xf32> to vector<8x128xf32>
    %336 = vector.extract_strided_slice %324 {offsets = [0, 256], sizes = [8, 128], strides = [1, 1]} : vector<8x384xf32> to vector<8x128xf32>
    %337 = arith.addf %336, %28 : vector<8x128xf32>
    %338 = arith.mulf %333, %337 : vector<8x128xf32>
    %339 = arith.addf %335, %338 : vector<8x128xf32>
    %340 = math.tanh %339 : vector<8x128xf32>
    %cst_91 = arith.constant 1.000000e+00 : f32
    %341 = vector.broadcast %cst_91 : f32 to vector<8x128xf32>
    %342 = arith.subf %341, %334 : vector<8x128xf32>
    %343 = arith.mulf %342, %340 : vector<8x128xf32>
    %344 = arith.mulf %334, %289 : vector<8x128xf32>
    %345 = arith.addf %343, %344 : vector<8x128xf32>
    %346 = arith.index_cast %321 : i32 to index
    %c0_92 = arith.constant 0 : index
    %347 = vector.load %arg22[%346, %c0_92] : memref<64x384xf32, #tpu.memory_space<vmem>>, vector<8x384xf32>
    %348 = vector.extract_strided_slice %316 {offsets = [0, 384], sizes = [8, 384], strides = [1, 1]} : vector<8x768xf32> to vector<8x384xf32>
    %349 = vector.extract_strided_slice %347 {offsets = [0, 0], sizes = [8, 256], strides = [1, 1]} : vector<8x384xf32> to vector<8x256xf32>
    %350 = vector.extract_strided_slice %348 {offsets = [0, 0], sizes = [8, 256], strides = [1, 1]} : vector<8x384xf32> to vector<8x256xf32>
    %351 = arith.addf %349, %350 : vector<8x256xf32>
    %352 = arith.negf %351 : vector<8x256xf32>
    %353 = math.exp %352 : vector<8x256xf32>
    %cst_93 = arith.constant 1.000000e+00 : f32
    %354 = vector.broadcast %cst_93 : f32 to vector<8x256xf32>
    %355 = arith.addf %354, %353 : vector<8x256xf32>
    %356 = arith.divf %354, %355 : vector<8x256xf32>
    %357 = vector.extract_strided_slice %356 {offsets = [0, 0], sizes = [8, 128], strides = [1, 1]} : vector<8x256xf32> to vector<8x128xf32>
    %358 = vector.extract_strided_slice %356 {offsets = [0, 128], sizes = [8, 128], strides = [1, 1]} : vector<8x256xf32> to vector<8x128xf32>
    %359 = vector.extract_strided_slice %347 {offsets = [0, 256], sizes = [8, 128], strides = [1, 1]} : vector<8x384xf32> to vector<8x128xf32>
    %360 = vector.extract_strided_slice %348 {offsets = [0, 256], sizes = [8, 128], strides = [1, 1]} : vector<8x384xf32> to vector<8x128xf32>
    %361 = arith.addf %360, %31 : vector<8x128xf32>
    %362 = arith.mulf %357, %361 : vector<8x128xf32>
    %363 = arith.addf %359, %362 : vector<8x128xf32>
    %364 = math.tanh %363 : vector<8x128xf32>
    %cst_94 = arith.constant 1.000000e+00 : f32
    %365 = vector.broadcast %cst_94 : f32 to vector<8x128xf32>
    %366 = arith.subf %365, %358 : vector<8x128xf32>
    %367 = arith.mulf %366, %364 : vector<8x128xf32>
    %368 = arith.mulf %358, %313 : vector<8x128xf32>
    %369 = arith.addf %367, %368 : vector<8x128xf32>
    %c6_i32 = arith.constant 6 : i32
    %370 = tpu.concatenate %345, %369 in 1 : vector<8x128xf32>, vector<8x128xf32> -> vector<8x256xf32>
    %371 = arith.truncf %370 : vector<8x256xf32> to vector<8x256xbf16>
    %cst_95 = arith.constant dense<0.000000e+00> : vector<8x768xf32>
    %372 = tpu.matmul %371, %25, %cst_95 {dimension_numbers = #tpu.dot_dimension_numbers<[1], [0], [0], [1], [0, 0, 1, 1], [], []>} : vector<8x256xbf16>, vector<256x768xbf16>, vector<8x768xf32> -> vector<8x768xf32>
    %c8_i32_96 = arith.constant 8 : i32
    %373 = arith.muli %c6_i32, %c8_i32_96 : i32
    %374 = tpu.assume_multiple %373, 8 : i32
    %c7_i32_97 = arith.constant 7 : i32
    %375 = arith.subi %c7_i32_97, %c6_i32 : i32
    %c8_i32_98 = arith.constant 8 : i32
    %376 = arith.muli %375, %c8_i32_98 : i32
    %377 = tpu.assume_multiple %376, 8 : i32
    %378 = arith.index_cast %374 : i32 to index
    %c0_99 = arith.constant 0 : index
    %379 = vector.load %arg21[%378, %c0_99] : memref<64x384xf32, #tpu.memory_space<vmem>>, vector<8x384xf32>
    %380 = vector.extract_strided_slice %372 {offsets = [0, 0], sizes = [8, 384], strides = [1, 1]} : vector<8x768xf32> to vector<8x384xf32>
    %381 = vector.extract_strided_slice %379 {offsets = [0, 0], sizes = [8, 256], strides = [1, 1]} : vector<8x384xf32> to vector<8x256xf32>
    %382 = vector.extract_strided_slice %380 {offsets = [0, 0], sizes = [8, 256], strides = [1, 1]} : vector<8x384xf32> to vector<8x256xf32>
    %383 = arith.addf %381, %382 : vector<8x256xf32>
    %384 = arith.negf %383 : vector<8x256xf32>
    %385 = math.exp %384 : vector<8x256xf32>
    %cst_100 = arith.constant 1.000000e+00 : f32
    %386 = vector.broadcast %cst_100 : f32 to vector<8x256xf32>
    %387 = arith.addf %386, %385 : vector<8x256xf32>
    %388 = arith.divf %386, %387 : vector<8x256xf32>
    %389 = vector.extract_strided_slice %388 {offsets = [0, 0], sizes = [8, 128], strides = [1, 1]} : vector<8x256xf32> to vector<8x128xf32>
    %390 = vector.extract_strided_slice %388 {offsets = [0, 128], sizes = [8, 128], strides = [1, 1]} : vector<8x256xf32> to vector<8x128xf32>
    %391 = vector.extract_strided_slice %379 {offsets = [0, 256], sizes = [8, 128], strides = [1, 1]} : vector<8x384xf32> to vector<8x128xf32>
    %392 = vector.extract_strided_slice %380 {offsets = [0, 256], sizes = [8, 128], strides = [1, 1]} : vector<8x384xf32> to vector<8x128xf32>
    %393 = arith.addf %392, %28 : vector<8x128xf32>
    %394 = arith.mulf %389, %393 : vector<8x128xf32>
    %395 = arith.addf %391, %394 : vector<8x128xf32>
    %396 = math.tanh %395 : vector<8x128xf32>
    %cst_101 = arith.constant 1.000000e+00 : f32
    %397 = vector.broadcast %cst_101 : f32 to vector<8x128xf32>
    %398 = arith.subf %397, %390 : vector<8x128xf32>
    %399 = arith.mulf %398, %396 : vector<8x128xf32>
    %400 = arith.mulf %390, %345 : vector<8x128xf32>
    %401 = arith.addf %399, %400 : vector<8x128xf32>
    %402 = arith.index_cast %377 : i32 to index
    %c0_102 = arith.constant 0 : index
    %403 = vector.load %arg22[%402, %c0_102] : memref<64x384xf32, #tpu.memory_space<vmem>>, vector<8x384xf32>
    %404 = vector.extract_strided_slice %372 {offsets = [0, 384], sizes = [8, 384], strides = [1, 1]} : vector<8x768xf32> to vector<8x384xf32>
    %405 = vector.extract_strided_slice %403 {offsets = [0, 0], sizes = [8, 256], strides = [1, 1]} : vector<8x384xf32> to vector<8x256xf32>
    %406 = vector.extract_strided_slice %404 {offsets = [0, 0], sizes = [8, 256], strides = [1, 1]} : vector<8x384xf32> to vector<8x256xf32>
    %407 = arith.addf %405, %406 : vector<8x256xf32>
    %408 = arith.negf %407 : vector<8x256xf32>
    %409 = math.exp %408 : vector<8x256xf32>
    %cst_103 = arith.constant 1.000000e+00 : f32
    %410 = vector.broadcast %cst_103 : f32 to vector<8x256xf32>
    %411 = arith.addf %410, %409 : vector<8x256xf32>
    %412 = arith.divf %410, %411 : vector<8x256xf32>
    %413 = vector.extract_strided_slice %412 {offsets = [0, 0], sizes = [8, 128], strides = [1, 1]} : vector<8x256xf32> to vector<8x128xf32>
    %414 = vector.extract_strided_slice %412 {offsets = [0, 128], sizes = [8, 128], strides = [1, 1]} : vector<8x256xf32> to vector<8x128xf32>
    %415 = vector.extract_strided_slice %403 {offsets = [0, 256], sizes = [8, 128], strides = [1, 1]} : vector<8x384xf32> to vector<8x128xf32>
    %416 = vector.extract_strided_slice %404 {offsets = [0, 256], sizes = [8, 128], strides = [1, 1]} : vector<8x384xf32> to vector<8x128xf32>
    %417 = arith.addf %416, %31 : vector<8x128xf32>
    %418 = arith.mulf %413, %417 : vector<8x128xf32>
    %419 = arith.addf %415, %418 : vector<8x128xf32>
    %420 = math.tanh %419 : vector<8x128xf32>
    %cst_104 = arith.constant 1.000000e+00 : f32
    %421 = vector.broadcast %cst_104 : f32 to vector<8x128xf32>
    %422 = arith.subf %421, %414 : vector<8x128xf32>
    %423 = arith.mulf %422, %420 : vector<8x128xf32>
    %424 = arith.mulf %414, %369 : vector<8x128xf32>
    %425 = arith.addf %423, %424 : vector<8x128xf32>
    %c7_i32_105 = arith.constant 7 : i32
    %426 = tpu.concatenate %401, %425 in 1 : vector<8x128xf32>, vector<8x128xf32> -> vector<8x256xf32>
    %427 = arith.truncf %426 : vector<8x256xf32> to vector<8x256xbf16>
    %cst_106 = arith.constant dense<0.000000e+00> : vector<8x768xf32>
    %428 = tpu.matmul %427, %25, %cst_106 {dimension_numbers = #tpu.dot_dimension_numbers<[1], [0], [0], [1], [0, 0, 1, 1], [], []>} : vector<8x256xbf16>, vector<256x768xbf16>, vector<8x768xf32> -> vector<8x768xf32>
    %c8_i32_107 = arith.constant 8 : i32
    %429 = arith.muli %c7_i32_105, %c8_i32_107 : i32
    %430 = tpu.assume_multiple %429, 8 : i32
    %c7_i32_108 = arith.constant 7 : i32
    %431 = arith.subi %c7_i32_108, %c7_i32_105 : i32
    %c8_i32_109 = arith.constant 8 : i32
    %432 = arith.muli %431, %c8_i32_109 : i32
    %433 = tpu.assume_multiple %432, 8 : i32
    %434 = arith.index_cast %430 : i32 to index
    %c0_110 = arith.constant 0 : index
    %435 = vector.load %arg21[%434, %c0_110] : memref<64x384xf32, #tpu.memory_space<vmem>>, vector<8x384xf32>
    %436 = vector.extract_strided_slice %428 {offsets = [0, 0], sizes = [8, 384], strides = [1, 1]} : vector<8x768xf32> to vector<8x384xf32>
    %437 = vector.extract_strided_slice %435 {offsets = [0, 0], sizes = [8, 256], strides = [1, 1]} : vector<8x384xf32> to vector<8x256xf32>
    %438 = vector.extract_strided_slice %436 {offsets = [0, 0], sizes = [8, 256], strides = [1, 1]} : vector<8x384xf32> to vector<8x256xf32>
    %439 = arith.addf %437, %438 : vector<8x256xf32>
    %440 = arith.negf %439 : vector<8x256xf32>
    %441 = math.exp %440 : vector<8x256xf32>
    %cst_111 = arith.constant 1.000000e+00 : f32
    %442 = vector.broadcast %cst_111 : f32 to vector<8x256xf32>
    %443 = arith.addf %442, %441 : vector<8x256xf32>
    %444 = arith.divf %442, %443 : vector<8x256xf32>
    %445 = vector.extract_strided_slice %444 {offsets = [0, 0], sizes = [8, 128], strides = [1, 1]} : vector<8x256xf32> to vector<8x128xf32>
    %446 = vector.extract_strided_slice %444 {offsets = [0, 128], sizes = [8, 128], strides = [1, 1]} : vector<8x256xf32> to vector<8x128xf32>
    %447 = vector.extract_strided_slice %435 {offsets = [0, 256], sizes = [8, 128], strides = [1, 1]} : vector<8x384xf32> to vector<8x128xf32>
    %448 = vector.extract_strided_slice %436 {offsets = [0, 256], sizes = [8, 128], strides = [1, 1]} : vector<8x384xf32> to vector<8x128xf32>
    %449 = arith.addf %448, %28 : vector<8x128xf32>
    %450 = arith.mulf %445, %449 : vector<8x128xf32>
    %451 = arith.addf %447, %450 : vector<8x128xf32>
    %452 = math.tanh %451 : vector<8x128xf32>
    %cst_112 = arith.constant 1.000000e+00 : f32
    %453 = vector.broadcast %cst_112 : f32 to vector<8x128xf32>
    %454 = arith.subf %453, %446 : vector<8x128xf32>
    %455 = arith.mulf %454, %452 : vector<8x128xf32>
    %456 = arith.mulf %446, %401 : vector<8x128xf32>
    %457 = arith.addf %455, %456 : vector<8x128xf32>
    %458 = arith.index_cast %433 : i32 to index
    %c0_113 = arith.constant 0 : index
    %459 = vector.load %arg22[%458, %c0_113] : memref<64x384xf32, #tpu.memory_space<vmem>>, vector<8x384xf32>
    %460 = vector.extract_strided_slice %428 {offsets = [0, 384], sizes = [8, 384], strides = [1, 1]} : vector<8x768xf32> to vector<8x384xf32>
    %461 = vector.extract_strided_slice %459 {offsets = [0, 0], sizes = [8, 256], strides = [1, 1]} : vector<8x384xf32> to vector<8x256xf32>
    %462 = vector.extract_strided_slice %460 {offsets = [0, 0], sizes = [8, 256], strides = [1, 1]} : vector<8x384xf32> to vector<8x256xf32>
    %463 = arith.addf %461, %462 : vector<8x256xf32>
    %464 = arith.negf %463 : vector<8x256xf32>
    %465 = math.exp %464 : vector<8x256xf32>
    %cst_114 = arith.constant 1.000000e+00 : f32
    %466 = vector.broadcast %cst_114 : f32 to vector<8x256xf32>
    %467 = arith.addf %466, %465 : vector<8x256xf32>
    %468 = arith.divf %466, %467 : vector<8x256xf32>
    %469 = vector.extract_strided_slice %468 {offsets = [0, 0], sizes = [8, 128], strides = [1, 1]} : vector<8x256xf32> to vector<8x128xf32>
    %470 = vector.extract_strided_slice %468 {offsets = [0, 128], sizes = [8, 128], strides = [1, 1]} : vector<8x256xf32> to vector<8x128xf32>
    %471 = vector.extract_strided_slice %459 {offsets = [0, 256], sizes = [8, 128], strides = [1, 1]} : vector<8x384xf32> to vector<8x128xf32>
    %472 = vector.extract_strided_slice %460 {offsets = [0, 256], sizes = [8, 128], strides = [1, 1]} : vector<8x384xf32> to vector<8x128xf32>
    %473 = arith.addf %472, %31 : vector<8x128xf32>
    %474 = arith.mulf %469, %473 : vector<8x128xf32>
    %475 = arith.addf %471, %474 : vector<8x128xf32>
    %476 = math.tanh %475 : vector<8x128xf32>
    %cst_115 = arith.constant 1.000000e+00 : f32
    %477 = vector.broadcast %cst_115 : f32 to vector<8x128xf32>
    %478 = arith.subf %477, %470 : vector<8x128xf32>
    %479 = arith.mulf %478, %476 : vector<8x128xf32>
    %480 = arith.mulf %470, %425 : vector<8x128xf32>
    %481 = arith.addf %479, %480 : vector<8x128xf32>
    %c8_i32_116 = arith.constant 8 : i32
    %c0_117 = arith.constant 0 : index
    %c0_118 = arith.constant 0 : index
    %482 = vector.load %arg20[%c0_117, %c0_118] : memref<8x256xf32, #tpu.memory_space<vmem>>, vector<8x128xf32>
    tpu.vector_store %arg20[%c0_117, %c0_118], %457 {strides = array<i32>} : memref<8x256xf32, #tpu.memory_space<vmem>>, vector<8x128xf32>,
    %c0_119 = arith.constant 0 : index
    %c128_120 = arith.constant 128 : index
    %483 = vector.load %arg20[%c0_119, %c128_120] : memref<8x256xf32, #tpu.memory_space<vmem>>, vector<8x128xf32>
    tpu.vector_store %arg20[%c0_119, %c128_120], %481 {strides = array<i32>} : memref<8x256xf32, #tpu.memory_space<vmem>>, vector<8x128xf32>,
    %c0_i32_121 = arith.constant 0 : i32
    %484 = arith.cmpi eq, %arg0, %c0_i32_121 : i32
    %485 = arith.extui %484 : i1 to i32
    %c0_i32_122 = arith.constant 0 : i32
    %486 = arith.cmpi ne, %485, %c0_i32_122 : i32
    scf.if %486 {
      %c0_123 = arith.constant 0 : index
      %c0_124 = arith.constant 0 : index
      %487 = vector.load %arg14[%c0_123, %c0_124] : memref<128x32xf32, #tpu.memory_space<vmem>>, vector<128x32xf32>
      %cst_125 = arith.constant dense<0.000000e+00> : vector<8x32xf32>
      %488 = tpu.matmul %457, %487, %cst_125 {dimension_numbers = #tpu.dot_dimension_numbers<[1], [0], [0], [1], [0, 0, 1, 1], [], []>} : vector<8x128xf32>, vector<128x32xf32>, vector<8x32xf32> -> vector<8x32xf32>
      %c0_126 = arith.constant 0 : index
      %c0_127 = arith.constant 0 : index
      %489 = vector.load %arg15[%c0_126, %c0_127] : memref<128x32xf32, #tpu.memory_space<vmem>>, vector<128x32xf32>
      %cst_128 = arith.constant dense<0.000000e+00> : vector<8x32xf32>
      %490 = tpu.matmul %481, %489, %cst_128 {dimension_numbers = #tpu.dot_dimension_numbers<[1], [0], [0], [1], [0, 0, 1, 1], [], []>} : vector<8x128xf32>, vector<128x32xf32>, vector<8x32xf32> -> vector<8x32xf32>
      %491 = arith.addf %488, %490 : vector<8x32xf32>
      %c0_129 = arith.constant 0 : index
      %c0_130 = arith.constant 0 : index
      %492 = vector.load %arg16[%c0_129, %c0_130] : memref<1x32xf32, #tpu.memory_space<vmem>>, vector<1x32xf32>
      %493 = vector.broadcast %492 : vector<1x32xf32> to vector<8x32xf32>
      %494 = arith.addf %491, %493 : vector<8x32xf32>
      %cst_131 = arith.constant 0.000000e+00 : f32
      %495 = vector.broadcast %cst_131 : f32 to vector<8x32xf32>
      %496 = arith.maximumf %494, %495 : vector<8x32xf32>
      %c0_132 = arith.constant 0 : index
      %c0_133 = arith.constant 0 : index
      %497 = vector.load %arg17[%c0_132, %c0_133] : memref<32x128xf32, #tpu.memory_space<vmem>>, vector<32x128xf32>
      %cst_134 = arith.constant dense<0.000000e+00> : vector<8x128xf32>
      %498 = tpu.matmul %496, %497, %cst_134 {dimension_numbers = #tpu.dot_dimension_numbers<[1], [0], [0], [1], [0, 0, 1, 1], [], []>} : vector<8x32xf32>, vector<32x128xf32>, vector<8x128xf32> -> vector<8x128xf32>
      %c0_135 = arith.constant 0 : index
      %c0_136 = arith.constant 0 : index
      %499 = vector.load %arg18[%c0_135, %c0_136] : memref<1x128xf32, #tpu.memory_space<vmem>>, vector<1x128xf32>
      %500 = vector.broadcast %499 : vector<1x128xf32> to vector<8x128xf32>
      %501 = arith.addf %498, %500 : vector<8x128xf32>
      %c0_137 = arith.constant 0 : index
      %c0_138 = arith.constant 0 : index
      %502 = vector.load %arg19[%c0_137, %c0_138] : memref<8x128xf32, #tpu.memory_space<vmem>>, vector<8x128xf32>
      tpu.vector_store %arg19[%c0_137, %c0_138], %501 {strides = array<i32>} : memref<8x128xf32, #tpu.memory_space<vmem>>, vector<8x128xf32>,
    } else {
    }
    return
  }
  func.func @transform_0(%arg0: i32) -> (i32, i32) {
    %c0_i32 = arith.constant 0 : i32
    %c0_i32_0 = arith.constant 0 : i32
    return %arg0, %c0_i32 : i32, i32
  }
  func.func @transform_1(%arg0: i32) -> (i32, i32) {
    %c0_i32 = arith.constant 0 : i32
    %c0_i32_0 = arith.constant 0 : i32
    return %arg0, %c0_i32 : i32, i32
  }
  func.func @transform_2(%arg0: i32) -> (i32, i32) {
    %c0_i32 = arith.constant 0 : i32
    %0 = arith.subi %c0_i32, %arg0 : i32
    %c0_i32_0 = arith.constant 0 : i32
    %c0_i32_1 = arith.constant 0 : i32
    return %0, %c0_i32_0 : i32, i32
  }
  func.func @transform_3(%arg0: i32) -> (i32, i32) {
    %c0_i32 = arith.constant 0 : i32
    %0 = arith.subi %c0_i32, %arg0 : i32
    %c0_i32_0 = arith.constant 0 : i32
    %c0_i32_1 = arith.constant 0 : i32
    return %0, %c0_i32_0 : i32, i32
  }
  func.func @transform_4(%arg0: i32) -> (i32, i32) {
    %c0_i32 = arith.constant 0 : i32
    %c0_i32_0 = arith.constant 0 : i32
    %c0_i32_1 = arith.constant 0 : i32
    return %c0_i32, %c0_i32_0 : i32, i32
  }
  func.func @transform_5(%arg0: i32) -> (i32, i32) {
    %c0_i32 = arith.constant 0 : i32
    %c0_i32_0 = arith.constant 0 : i32
    %c0_i32_1 = arith.constant 0 : i32
    return %c0_i32, %c0_i32_0 : i32, i32
  }
  func.func @transform_6(%arg0: i32) -> (i32, i32) {
    %c0_i32 = arith.constant 0 : i32
    %c0_i32_0 = arith.constant 0 : i32
    %c0_i32_1 = arith.constant 0 : i32
    return %c0_i32, %c0_i32_0 : i32, i32
  }
  func.func @transform_7(%arg0: i32) -> (i32, i32) {
    %c0_i32 = arith.constant 0 : i32
    %c0_i32_0 = arith.constant 0 : i32
    %c0_i32_1 = arith.constant 0 : i32
    return %c0_i32, %c0_i32_0 : i32, i32
  }
  func.func @transform_8(%arg0: i32) -> (i32, i32) {
    %c0_i32 = arith.constant 0 : i32
    %c0_i32_0 = arith.constant 0 : i32
    %c0_i32_1 = arith.constant 0 : i32
    return %c0_i32, %c0_i32_0 : i32, i32
  }
  func.func @transform_9(%arg0: i32) -> (i32, i32) {
    %c0_i32 = arith.constant 0 : i32
    %c0_i32_0 = arith.constant 0 : i32
    %c0_i32_1 = arith.constant 0 : i32
    return %c0_i32, %c0_i32_0 : i32, i32
  }
  func.func @transform_10(%arg0: i32) -> (i32, i32) {
    %c0_i32 = arith.constant 0 : i32
    %c0_i32_0 = arith.constant 0 : i32
    %c0_i32_1 = arith.constant 0 : i32
    return %c0_i32, %c0_i32_0 : i32, i32
  }
  func.func @transform_11(%arg0: i32) -> (i32, i32) {
    %c0_i32 = arith.constant 0 : i32
    %c0_i32_0 = arith.constant 0 : i32
    %c0_i32_1 = arith.constant 0 : i32
    return %c0_i32, %c0_i32_0 : i32, i32
  }
  func.func @transform_12(%arg0: i32) -> (i32, i32) {
    %c0_i32 = arith.constant 0 : i32
    %c0_i32_0 = arith.constant 0 : i32
    %c0_i32_1 = arith.constant 0 : i32
    return %c0_i32, %c0_i32_0 : i32, i32
  }
  func.func @transform_13(%arg0: i32) -> (i32, i32) {
    %c0_i32 = arith.constant 0 : i32
    %c0_i32_0 = arith.constant 0 : i32
    %c0_i32_1 = arith.constant 0 : i32
    return %c0_i32, %c0_i32_0 : i32, i32
  }
  func.func @transform_14(%arg0: i32) -> (i32, i32) {
    %c0_i32 = arith.constant 0 : i32
    %c0_i32_0 = arith.constant 0 : i32
    %c0_i32_1 = arith.constant 0 : i32
    return %c0_i32, %c0_i32_0 : i32, i32
  }
  func.func @transform_15(%arg0: i32) -> (i32, i32) {
    %c0_i32 = arith.constant 0 : i32
    %c0_i32_0 = arith.constant 0 : i32
    %c0_i32_1 = arith.constant 0 : i32
    return %c0_i32, %c0_i32_0 : i32, i32
  }
  func.func @transform_16(%arg0: i32) -> (i32, i32) {
    %c0_i32 = arith.constant 0 : i32
    %c0_i32_0 = arith.constant 0 : i32
    %c0_i32_1 = arith.constant 0 : i32
    return %c0_i32, %c0_i32_0 : i32, i32
  }
  func.func @transform_17(%arg0: i32) -> (i32, i32) {
    %c0_i32 = arith.constant 0 : i32
    %c0_i32_0 = arith.constant 0 : i32
    %c0_i32_1 = arith.constant 0 : i32
    return %c0_i32, %c0_i32_0 : i32, i32
  }
  func.func @transform_18(%arg0: i32) -> (i32, i32) {
    %c0_i32 = arith.constant 0 : i32
    %c0_i32_0 = arith.constant 0 : i32
    %c0_i32_1 = arith.constant 0 : i32
    return %c0_i32, %c0_i32_0 : i32, i32
  }
}

</mosaic_0001>

<llo_original>
// kernel: rnn_gru_forward.2
$region0: #{rnn_gru_forward.2}
  #allocation0 [shape = 'u32[]', space=smem, size = 0x4, offset = 0x4, fixed_abs, tag = 'smem constant byte address 0x4 - core index']
  #allocation1 [shape = 'u32[144,128]{1,0:T(1,128)}', space=vmem, size = 0x12000, scoped, tag = 'internal scratch']
  #allocation2 [shape = 'f32[8,256]{1,0:T(8,128)}', space=vmem, size = 0x2000, scoped, tag = 'scratch operand']
  #allocation3 [shape = 'f32[64,384]{1,0:T(8,128)}', space=vmem, size = 0x18000, scoped, tag = 'scratch operand']
  #allocation4 [shape = 'f32[64,384]{1,0:T(8,128)}', space=vmem, size = 0x18000, scoped, tag = 'scratch operand']
  #allocation5 [shape = 'f32[64,128]{1,0:T(8,128)}', space=vmem, size = 0x8000, scoped, tag = 'scratch operand']
  #allocation6 [shape = 'f32[64,128]{1,0:T(8,128)}', space=vmem, size = 0x8000, scoped, tag = 'scratch operand']
  %s0 = inlined_call_operand.vmem [shape: bf16[64,64], index: 0, kind: input, shape index: {}, may-alias: {0,1}]
  %s1 = inlined_call_operand.vmem [shape: bf16[64,64], index: 1, kind: input, shape index: {}, may-alias: {0,1}]
  %s2 = inlined_call_operand.vmem [shape: bf16[64,384], index: 2, kind: input, shape index: {}]
  %s3 = inlined_call_operand.vmem [shape: bf16[64,384], index: 3, kind: input, shape index: {}]
  %s4 = inlined_call_operand.vmem [shape: bf16[256,768], index: 4, kind: input, shape index: {}]
  %s5 = inlined_call_operand.vmem [shape: f32[1,384], index: 5, kind: input, shape index: {}]
  %s6 = inlined_call_operand.vmem [shape: f32[1,384], index: 6, kind: input, shape index: {}]
  %s7 = inlined_call_operand.vmem [shape: f32[1,128], index: 7, kind: input, shape index: {}]
  %s8 = inlined_call_operand.vmem [shape: f32[1,128], index: 8, kind: input, shape index: {}]
  %s9 = inlined_call_operand.vmem [shape: bf16[64,128], index: 9, kind: output, shape index: {0}]
  %s10 = inlined_call_operand.vmem [shape: bf16[64,128], index: 10, kind: output, shape index: {1}]
  %11 = xla_tuple %s9, %s10
  %s12 = sld [smem:[#allocation0]]
  $region58: #{rnn_gru_forward.2} parent=0
    _
  %s14 = ssub.s32 1, %s12
  %s15 = scalar_select 0, %s14, %s12
  // Predicated region
  $region2: #{rnn_gru_forward.2} parent=0 // pred_check
    _
  $region3: #{rnn_gru_forward.2} parent=0 // pred_check_branch
    %17 = sbr.rel (0) target = $region5
  $region4: #{rnn_gru_forward.2} parent=0 // pred_region
    _
  $region5: #{rnn_gru_forward.2} parent=0 // pred_fallthru
    _
  // Predicated region
  $region6: #{rnn_gru_forward.2} parent=0 // pred_check
    _
  $region7: #{rnn_gru_forward.2} parent=0 // pred_check_branch
    %19 = sbr.rel (0) target = $region9
  $region8: #{rnn_gru_forward.2} parent=0 // pred_region
    %s20 = ssub.s32 0, 0
    %s21 = smul.u32 8, %s20
    %p22 = scmp.lt.s32.totalorder %s21, 7
    %s23 = scalar_select %p22, %s21, 7
    %s24 = smul.addr %s23, 4
    %s25 = scalar_lea.vmem %s1, %s24
    %s26 = ssub.s32 0, 0
    %s27 = smul.u32 8, %s26
  $region9: #{rnn_gru_forward.2} parent=0 // pred_fallthru
    _
  // Predicated region
  $region10: #{rnn_gru_forward.2} parent=0 // pred_check
    _
  $region11: #{rnn_gru_forward.2} parent=0 // pred_check_branch
    %29 = sbr.rel (0) target = $region13
  $region12: #{rnn_gru_forward.2} parent=0 // pred_region
    _
  $region13: #{rnn_gru_forward.2} parent=0 // pred_fallthru
    _
  // Predicated region
  $region14: #{rnn_gru_forward.2} parent=0 // pred_check
    _
  $region15: #{rnn_gru_forward.2} parent=0 // pred_check_branch
    %31 = sbr.rel (0) target = $region17
  $region16: #{rnn_gru_forward.2} parent=0 // pred_region
    _
  $region17: #{rnn_gru_forward.2} parent=0 // pred_fallthru
    _
  // Predicated region
  $region18: #{rnn_gru_forward.2} parent=0 // pred_check
    _
  $region19: #{rnn_gru_forward.2} parent=0 // pred_check_branch
    %33 = sbr.rel (0) target = $region21
  $region20: #{rnn_gru_forward.2} parent=0 // pred_region
    _
  $region21: #{rnn_gru_forward.2} parent=0 // pred_fallthru
    _
  // Predicated region
  $region22: #{rnn_gru_forward.2} parent=0 // pred_check
    _
  $region23: #{rnn_gru_forward.2} parent=0 // pred_check_branch
    %35 = sbr.rel (0) target = $region25
  $region24: #{rnn_gru_forward.2} parent=0 // pred_region
    _
  $region25: #{rnn_gru_forward.2} parent=0 // pred_fallthru
    _
  // Predicated region
  $region26: #{rnn_gru_forward.2} parent=0 // pred_check
    _
  $region27: #{rnn_gru_forward.2} parent=0 // pred_check_branch
    %37 = sbr.rel (0) target = $region29
  $region28: #{rnn_gru_forward.2} parent=0 // pred_region
    _
  $region29: #{rnn_gru_forward.2} parent=0 // pred_fallthru
    _
  // Predicated region
  $region30: #{rnn_gru_forward.2} parent=0 // pred_check
    _
  $region31: #{rnn_gru_forward.2} parent=0 // pred_check_branch
    %39 = sbr.rel (0) target = $region33
  $region32: #{rnn_gru_forward.2} parent=0 // pred_region
    _
  $region33: #{rnn_gru_forward.2} parent=0 // pred_fallthru
    _
  // Predicated region
  $region34: #{rnn_gru_forward.2} parent=0 // pred_check
    _
  $region35: #{rnn_gru_forward.2} parent=0 // pred_check_branch
    %41 = sbr.rel (0) target = $region37
  $region36: #{rnn_gru_forward.2} parent=0 // pred_region
    _
  $region37: #{rnn_gru_forward.2} parent=0 // pred_fallthru
    _
  %s42 = ssub.s32 0, 0
  %s43 = smul.u32 8, %s42
  %p44 = scmp.lt.s32.totalorder %s43, 7
  %s45 = scalar_select %p44, %s43, 7
  %s46 = smul.addr %s45, 4
  %s47 = scalar_lea.vmem %s1, %s46
  %s48 = ssub.s32 0, 0
  %s49 = smul.u32 8, %s48
  %p50 = scmp.lt.s32.totalorder %s49, 7
  %s51 = scalar_select %p50, %s49, 7
  %s52 = smul.addr %s51, 4
  %s53 = scalar_lea.vmem %s10, %s52
  %s54 = ssub.s32 0, 0
  %s55 = smul.u32 8, %s54
  %p56 = scmp.lt.s32.totalorder %s55, 7
  %s57 = scalar_select %p56, %s55, 7
  %s58 = smul.addr %s57, 4
  %s59 = scalar_lea.vmem %s1, %s58
  %s60 = ssub.s32 0, 0
  %s61 = smul.u32 8, %s60
  %s62 = ssub.s32 0, 0
  %s63 = smul.u32 8, %s62
  %p64 = scmp.lt.s32.totalorder %s63, 7
  %s65 = scalar_select %p64, %s63, 7
  %s66 = smul.addr %s65, 4
  %s67 = scalar_lea.vmem %s10, %s66
  %s68 = ssub.s32 0, 0
  %s69 = smul.u32 8, %s68
  %p71 = scmp.eq.s32.totalorder 0, 0
  // Predicated region
  $region38: #{rnn_gru_forward.2} parent=0 // pred_check
    %p72 = pneg %p71
  $region39: #{rnn_gru_forward.2} parent=0 // pred_check_branch
    %74 = sbr.rel (%p72) target = $region41
  $region40: #{rnn_gru_forward.2} parent=0 // pred_region
    %75 = vst [vmem:[#allocation2] sm:$0xff] 0.0
    %76 = vst [vmem:[#allocation2 + $0x8] sm:$0xff] 0.0
  $region41: #{rnn_gru_forward.2} parent=0 // pred_fallthru
    _
  %v77 = vld [vmem:[%s0] sm:$0xf]
  %v78 = vld [vmem:[%s0 + $0x4] sm:$0xf]
  %v79 = vld [vmem:[%s0 + $0x8] sm:$0xf]
  %v80 = vld [vmem:[%s0 + $0xc] sm:$0xf]
  %v81 = vld [vmem:[%s0 + $0x10] sm:$0xf]
  %v82 = vld [vmem:[%s0 + $0x14] sm:$0xf]
  %v83 = vld [vmem:[%s0 + $0x18] sm:$0xf]
  %v84 = vld [vmem:[%s0 + $0x1c] sm:$0xf]
  %v85 = vld [vmem:[%s2] sm:$0xff]
  %v86 = vld [vmem:[%s2 + $0x8] sm:$0xf]
  %v87 = vld [vmem:[%s2 + $0xc] sm:$0xff]
  %v88 = vld [vmem:[%s2 + $0x14] sm:$0xf]
  %v89 = vld [vmem:[%s2 + $0x18] sm:$0xff]
  %v90 = vld [vmem:[%s2 + $0x20] sm:$0xf]
  %v91 = vld [vmem:[%s2 + $0x24] sm:$0xff]
  %v92 = vld [vmem:[%s2 + $0x2c] sm:$0xf]
  %v93 = vld [vmem:[%s2 + $0x30] sm:$0xff]
  %v94 = vld [vmem:[%s2 + $0x38] sm:$0xf]
  %v95 = vld [vmem:[%s2 + $0x3c] sm:$0xff]
  %v96 = vld [vmem:[%s2 + $0x44] sm:$0xf]
  %v97 = vld [vmem:[%s2 + $0x48] sm:$0xff]
  %v98 = vld [vmem:[%s2 + $0x50] sm:$0xf]
  %v99 = vld [vmem:[%s2 + $0x54] sm:$0xff]
  %v100 = vld [vmem:[%s2 + $0x5c] sm:$0xf]
  %v101 = vld [vmem:[%s5] sm:$0x7]
  %v103 = vlaneseq
  %v104 = vshrl.u32 %v103, 7
  %v105 = vsub.s32 0, %v104
  %v106 = vrot.slane %v101, %v105
  %v107 = vlaneseq
  %v108 = vshrl.u32 %v107, 7
  %v109 = vsub.s32 1, %v108
  %v110 = vrot.slane %v101, %v109
  %v111 = vlaneseq
  %v112 = vshrl.u32 %v111, 7
  %v113 = vsub.s32 2, %v112
  %v114 = vrot.slane %v101, %v113
  %v126 = vunpack.c.l.b16 %v77
  %v127 = vunpack.c.l.b16 %v78
  %v128 = vunpack.c.l.b16 %v79
  %v129 = vunpack.c.l.b16 %v80
  %v130 = vunpack.c.l.b16 %v81
  %v131 = vunpack.c.l.b16 %v82
  %v132 = vunpack.c.l.b16 %v83
  %v133 = vunpack.c.l.b16 %v84
  %v134 = vpack.c.b16 %v127, %v126
  %v135 = vpack.c.b16 %v129, %v128
  %v136 = vpack.c.b16 %v131, %v130
  %v137 = vpack.c.b16 %v133, %v132
  %v154 = vunpack.c.l.b16 %v85
  %v155 = vunpack.c.h.b16 %v85
  %v156 = vunpack.c.l.b16 %v86
  %v157 = vunpack.c.l.b16 %v87
  %v158 = vunpack.c.h.b16 %v87
  %v159 = vunpack.c.l.b16 %v88
  %v160 = vunpack.c.l.b16 %v89
  %v161 = vunpack.c.h.b16 %v89
  %v162 = vunpack.c.l.b16 %v90
  %v163 = vunpack.c.l.b16 %v91
  %v164 = vunpack.c.h.b16 %v91
  %v165 = vunpack.c.l.b16 %v92
  %v166 = vunpack.c.l.b16 %v93
  %v167 = vunpack.c.h.b16 %v93
  %v168 = vunpack.c.l.b16 %v94
  %v169 = vunpack.c.l.b16 %v95
  %v170 = vunpack.c.h.b16 %v95
  %v171 = vunpack.c.l.b16 %v96
  %v172 = vunpack.c.l.b16 %v97
  %v173 = vunpack.c.h.b16 %v97
  %v174 = vunpack.c.l.b16 %v98
  %v175 = vunpack.c.l.b16 %v99
  %v176 = vunpack.c.h.b16 %v99
  %v177 = vunpack.c.l.b16 %v100
  %v178 = vpack.c.b16 %v157, %v154
  %v179 = vpack.c.b16 %v158, %v155
  %v180 = vpack.c.b16 %v159, %v156
  %v181 = vpack.c.b16 %v163, %v160
  %v182 = vpack.c.b16 %v164, %v161
  %v183 = vpack.c.b16 %v165, %v162
  %v184 = vpack.c.b16 %v169, %v166
  %v185 = vpack.c.b16 %v170, %v167
  %v186 = vpack.c.b16 %v171, %v168
  %v187 = vpack.c.b16 %v175, %v172
  %v188 = vpack.c.b16 %v176, %v173
  %v189 = vpack.c.b16 %v177, %v174
  %vm202 = vcmask 523264
  %v204 = vsel %vm202, %v134, 0
  %v207 = vsel %vm202, %v135, 0
  %v210 = vsel %vm202, %v136, 0
  %v213 = vsel %vm202, %v137, 0
  %215 = vmatprep.subr.bf16.mxu0 0
  %216 = vmatpush1.bf16.msra.mxu0 0
  %217 = vmatprep.subr.bf16.mxu0 0
  %218 = vmatpush1.bf16.msra.mxu0 0
  %219 = vmatprep.subr.bf16.mxu0 0
  %220 = vmatpush1.bf16.msra.mxu0 0
  %221 = vmatprep.subr.bf16.mxu0 0
  %222 = vmatpush1.bf16.msra.mxu0 0
  %223 = vmatprep.subr.bf16.mxu0 %v188
  %224 = vmatpush1.bf16.msra.mxu0 %v187
  %225 = vmatprep.subr.bf16.mxu0 %v185
  %226 = vmatpush1.bf16.msra.mxu0 %v184
  %227 = vmatprep.subr.bf16.mxu0 %v182
  %228 = vmatpush1.bf16.msra.mxu0 %v181
  %229 = vmatprep.subr.bf16.mxu0 %v179
  %230 = vmatpush1.bf16.msra.mxu0 %v178
  %231 = vmatprep.subr.bf16.mxu0 0
  %232 = vmatpush2.bf16.msra.mxu0 0
  %233 = vmatprep.subr.bf16.mxu0 0
  %234 = vmatpush2.bf16.msra.mxu0 0
  %235 = vmatprep.subr.bf16.mxu0 0
  %236 = vmatpush2.bf16.msra.mxu0 0
  %237 = vmatprep.subr.bf16.mxu0 0
  %238 = vmatpush2.bf16.msra.mxu0 0
  %239 = vmatprep.subr.bf16.mxu0 0
  %240 = vmatpush2.bf16.msra.mxu0 0
  %241 = vmatprep.subr.bf16.mxu0 0
  %242 = vmatpush2.bf16.msra.mxu0 0
  %243 = vmatprep.subr.bf16.mxu0 0
  %244 = vmatpush2.bf16.msra.mxu0 0
  %245 = vmatprep.subr.bf16.mxu0 0
  %246 = vmatpush2.bf16.msra.mxu0 0
  %247 = vmatprep.mubr.bf16.mxu0 0
  %248 = vmatmul.mubr.bf16.gmra.mxu0 %v204
  %v249 = vpop.f32.mrf.mxu0
  %v250 = vadd.f32 %v106, %v249
  %v251 = vpop.f32.mrf.mxu0
  %v252 = vadd.f32 %v110, %v251
  %v253 = vpop.f32.mrf.mxu0
  %v254 = vadd.f32 %v106, %v253
  %v255 = vpop.f32.mrf.mxu0
  %v256 = vadd.f32 %v110, %v255
  %257 = vmatprep.mubr.bf16.mxu0 0
  %258 = vmatmul.mubr.bf16.gmra.mxu0 %v207
  %v259 = vpop.f32.mrf.mxu0
  %v260 = vadd.f32 %v106, %v259
  %v261 = vpop.f32.mrf.mxu0
  %v262 = vadd.f32 %v110, %v261
  %v263 = vpop.f32.mrf.mxu0
  %v264 = vadd.f32 %v106, %v263
  %v265 = vpop.f32.mrf.mxu0
  %v266 = vadd.f32 %v110, %v265
  %267 = vmatprep.mubr.bf16.mxu0 0
  %268 = vmatmul.mubr.bf16.gmra.mxu0 %v210
  %v269 = vpop.f32.mrf.mxu0
  %v270 = vadd.f32 %v106, %v269
  %v271 = vpop.f32.mrf.mxu0
  %v272 = vadd.f32 %v110, %v271
  %v273 = vpop.f32.mrf.mxu0
  %v274 = vadd.f32 %v106, %v273
  %v275 = vpop.f32.mrf.mxu0
  %v276 = vadd.f32 %v110, %v275
  %277 = vmatprep.mubr.bf16.mxu0 0
  %278 = vmatmul.mubr.bf16.gmra.mxu0 %v213
  %v279 = vpop.f32.mrf.mxu0
  %v280 = vadd.f32 %v106, %v279
  %v281 = vpop.f32.mrf.mxu0
  %v282 = vadd.f32 %v110, %v281
  %v283 = vpop.f32.mrf.mxu0
  %v284 = vadd.f32 %v106, %v283
  %v285 = vpop.f32.mrf.mxu0
  %v286 = vadd.f32 %v110, %v285
  %287 = vdwg.mxu0
  %288 = vmatprep.subr.bf16.mxu0 0
  %289 = vmatpush1.bf16.msra.mxu0 0
  %290 = vmatprep.subr.bf16.mxu0 0
  %291 = vmatpush1.bf16.msra.mxu0 0
  %292 = vmatprep.subr.bf16.mxu0 0
  %293 = vmatpush1.bf16.msra.mxu0 0
  %294 = vmatprep.subr.bf16.mxu0 0
  %295 = vmatpush1.bf16.msra.mxu0 0
  %296 = vmatprep.subr.bf16.mxu0 0
  %297 = vmatpush1.bf16.msra.mxu0 %v189
  %298 = vmatprep.subr.bf16.mxu0 0
  %299 = vmatpush1.bf16.msra.mxu0 %v186
  %300 = vmatprep.subr.bf16.mxu0 0
  %301 = vmatpush1.bf16.msra.mxu0 %v183
  %302 = vmatprep.subr.bf16.mxu0 0
  %303 = vmatpush1.bf16.msra.mxu0 %v180
  %304 = vmatprep.subr.bf16.mxu0 0
  %305 = vmatpush2.bf16.msra.mxu0 0
  %306 = vmatprep.subr.bf16.mxu0 0
  %307 = vmatpush2.bf16.msra.mxu0 0
  %308 = vmatprep.subr.bf16.mxu0 0
  %309 = vmatpush2.bf16.msra.mxu0 0
  %310 = vmatprep.subr.bf16.mxu0 0
  %311 = vmatpush2.bf16.msra.mxu0 0
  %312 = vmatprep.subr.bf16.mxu0 0
  %313 = vmatpush2.bf16.msra.mxu0 0
  %314 = vmatprep.subr.bf16.mxu0 0
  %315 = vmatpush2.bf16.msra.mxu0 0
  %316 = vmatprep.subr.bf16.mxu0 0
  %317 = vmatpush2.bf16.msra.mxu0 0
  %318 = vmatprep.subr.bf16.mxu0 0
  %319 = vmatpush2.bf16.msra.mxu0 0
  %320 = vmatprep.mubr.bf16.mxu0 0
  %321 = vmatmul.mubr.bf16.gmra.mxu0 %v204
  %v322 = vpop.f32.mrf.mxu0
  %v323 = vadd.f32 %v114, %v322
  %v324 = vpop.f32.mrf.mxu0
  %v325 = vpop.f32.mrf.mxu0
  %v326 = vadd.f32 %v114, %v325
  %v327 = vpop.f32.mrf.mxu0
  %328 = vmatprep.mubr.bf16.mxu0 0
  %329 = vmatmul.mubr.bf16.gmra.mxu0 %v207
  %v330 = vpop.f32.mrf.mxu0
  %v331 = vadd.f32 %v114, %v330
  %v332 = vpop.f32.mrf.mxu0
  %v333 = vpop.f32.mrf.mxu0
  %v334 = vadd.f32 %v114, %v333
  %v335 = vpop.f32.mrf.mxu0
  %336 = vmatprep.mubr.bf16.mxu0 0
  %337 = vmatmul.mubr.bf16.gmra.mxu0 %v210
  %v338 = vpop.f32.mrf.mxu0
  %v339 = vadd.f32 %v114, %v338
  %v340 = vpop.f32.mrf.mxu0
  %v341 = vpop.f32.mrf.mxu0
  %v342 = vadd.f32 %v114, %v341
  %v343 = vpop.f32.mrf.mxu0
  %344 = vmatprep.mubr.bf16.mxu0 0
  %345 = vmatmul.mubr.bf16.gmra.mxu0 %v213
  %v346 = vpop.f32.mrf.mxu0
  %v347 = vadd.f32 %v114, %v346
  %v348 = vpop.f32.mrf.mxu0
  %v349 = vpop.f32.mrf.mxu0
  %v350 = vadd.f32 %v114, %v349
  %v351 = vpop.f32.mrf.mxu0
  %352 = vdwg.mxu0
  %353 = vst [vmem:[#allocation3] sm:$0xff] %v250
  %354 = vst [vmem:[#allocation3 + $0x8] sm:$0xff] %v252
  %355 = vst [vmem:[#allocation3 + $0x10] sm:$0xff] %v323
  %356 = vst [vmem:[#allocation3 + $0x18] sm:$0xff] %v254
  %357 = vst [vmem:[#allocation3 + $0x20] sm:$0xff] %v256
  %358 = vst [vmem:[#allocation3 + $0x28] sm:$0xff] %v326
  %359 = vst [vmem:[#allocation3 + $0x30] sm:$0xff] %v260
  %360 = vst [vmem:[#allocation3 + $0x38] sm:$0xff] %v262
  %361 = vst [vmem:[#allocation3 + $0x40] sm:$0xff] %v331
  %362 = vst [vmem:[#allocation3 + $0x48] sm:$0xff] %v264
  %363 = vst [vmem:[#allocation3 + $0x50] sm:$0xff] %v266
  %364 = vst [vmem:[#allocation3 + $0x58] sm:$0xff] %v334
  %365 = vst [vmem:[#allocation3 + $0x60] sm:$0xff] %v270
  %366 = vst [vmem:[#allocation3 + $0x68] sm:$0xff] %v272
  %367 = vst [vmem:[#allocation3 + $0x70] sm:$0xff] %v339
  %368 = vst [vmem:[#allocation3 + $0x78] sm:$0xff] %v274
  %369 = vst [vmem:[#allocation3 + $0x80] sm:$0xff] %v276
  %370 = vst [vmem:[#allocation3 + $0x88] sm:$0xff] %v342
  %371 = vst [vmem:[#allocation3 + $0x90] sm:$0xff] %v280
  %372 = vst [vmem:[#allocation3 + $0x98] sm:$0xff] %v282
  %373 = vst [vmem:[#allocation3 + $0xa0] sm:$0xff] %v347
  %374 = vst [vmem:[#allocation3 + $0xa8] sm:$0xff] %v284
  %375 = vst [vmem:[#allocation3 + $0xb0] sm:$0xff] %v286
  %376 = vst [vmem:[#allocation3 + $0xb8] sm:$0xff] %v350
  %v377 = vld [vmem:[%s59] sm:$0xf]
  %v378 = vld [vmem:[%s59 + $0x4] sm:$0xf]
  %v379 = vld [vmem:[%s59 + $0x8] sm:$0xf]
  %v380 = vld [vmem:[%s59 + $0xc] sm:$0xf]
  %v381 = vld [vmem:[%s59 + $0x10] sm:$0xf]
  %v382 = vld [vmem:[%s59 + $0x14] sm:$0xf]
  %v383 = vld [vmem:[%s59 + $0x18] sm:$0xf]
  %v384 = vld [vmem:[%s59 + $0x1c] sm:$0xf]
  %v385 = vld [vmem:[%s3] sm:$0xff]
  %v386 = vld [vmem:[%s3 + $0x8] sm:$0xf]
  %v387 = vld [vmem:[%s3 + $0xc] sm:$0xff]
  %v388 = vld [vmem:[%s3 + $0x14] sm:$0xf]
  %v389 = vld [vmem:[%s3 + $0x18] sm:$0xff]
  %v390 = vld [vmem:[%s3 + $0x20] sm:$0xf]
  %v391 = vld [vmem:[%s3 + $0x24] sm:$0xff]
  %v392 = vld [vmem:[%s3 + $0x2c] sm:$0xf]
  %v393 = vld [vmem:[%s3 + $0x30] sm:$0xff]
  %v394 = vld [vmem:[%s3 + $0x38] sm:$0xf]
  %v395 = vld [vmem:[%s3 + $0x3c] sm:$0xff]
  %v396 = vld [vmem:[%s3 + $0x44] sm:$0xf]
  %v397 = vld [vmem:[%s3 + $0x48] sm:$0xff]
  %v398 = vld [vmem:[%s3 + $0x50] sm:$0xf]
  %v399 = vld [vmem:[%s3 + $0x54] sm:$0xff]
  %v400 = vld [vmem:[%s3 + $0x5c] sm:$0xf]
  %v401 = vld [vmem:[%s6] sm:$0x7]
  %v403 = vlaneseq
  %v404 = vshrl.u32 %v403, 7
  %v405 = vsub.s32 0, %v404
  %v406 = vrot.slane %v401, %v405
  %v407 = vlaneseq
  %v408 = vshrl.u32 %v407, 7
  %v409 = vsub.s32 1, %v408
  %v410 = vrot.slane %v401, %v409
  %v411 = vlaneseq
  %v412 = vshrl.u32 %v411, 7
  %v413 = vsub.s32 2, %v412
  %v414 = vrot.slane %v401, %v413
  %v426 = vunpack.c.l.b16 %v377
  %v427 = vunpack.c.l.b16 %v378
  %v428 = vunpack.c.l.b16 %v379
  %v429 = vunpack.c.l.b16 %v380
  %v430 = vunpack.c.l.b16 %v381
  %v431 = vunpack.c.l.b16 %v382
  %v432 = vunpack.c.l.b16 %v383
  %v433 = vunpack.c.l.b16 %v384
  %v434 = vpack.c.b16 %v427, %v426
  %v435 = vpack.c.b16 %v429, %v428
  %v436 = vpack.c.b16 %v431, %v430
  %v437 = vpack.c.b16 %v433, %v432
  %v454 = vunpack.c.l.b16 %v385
  %v455 = vunpack.c.h.b16 %v385
  %v456 = vunpack.c.l.b16 %v386
  %v457 = vunpack.c.l.b16 %v387
  %v458 = vunpack.c.h.b16 %v387
  %v459 = vunpack.c.l.b16 %v388
  %v460 = vunpack.c.l.b16 %v389
  %v461 = vunpack.c.h.b16 %v389
  %v462 = vunpack.c.l.b16 %v390
  %v463 = vunpack.c.l.b16 %v391
  %v464 = vunpack.c.h.b16 %v391
  %v465 = vunpack.c.l.b16 %v392
  %v466 = vunpack.c.l.b16 %v393
  %v467 = vunpack.c.h.b16 %v393
  %v468 = vunpack.c.l.b16 %v394
  %v469 = vunpack.c.l.b16 %v395
  %v470 = vunpack.c.h.b16 %v395
  %v471 = vunpack.c.l.b16 %v396
  %v472 = vunpack.c.l.b16 %v397
  %v473 = vunpack.c.h.b16 %v397
  %v474 = vunpack.c.l.b16 %v398
  %v475 = vunpack.c.l.b16 %v399
  %v476 = vunpack.c.h.b16 %v399
  %v477 = vunpack.c.l.b16 %v400
  %v478 = vpack.c.b16 %v457, %v454
  %v479 = vpack.c.b16 %v458, %v455
  %v480 = vpack.c.b16 %v459, %v456
  %v481 = vpack.c.b16 %v463, %v460
  %v482 = vpack.c.b16 %v464, %v461
  %v483 = vpack.c.b16 %v465, %v462
  %v484 = vpack.c.b16 %v469, %v466
  %v485 = vpack.c.b16 %v470, %v467
  %v486 = vpack.c.b16 %v471, %v468
  %v487 = vpack.c.b16 %v475, %v472
  %v488 = vpack.c.b16 %v476, %v473
  %v489 = vpack.c.b16 %v477, %v474
  %v503 = vsel %vm202, %v434, 0
  %v506 = vsel %vm202, %v435, 0
  %v509 = vsel %vm202, %v436, 0
  %v512 = vsel %vm202, %v437, 0
  %514 = vmatprep.subr.bf16.mxu0 0
  %515 = vmatpush1.bf16.msra.mxu0 0
  %516 = vmatprep.subr.bf16.mxu0 0
  %517 = vmatpush1.bf16.msra.mxu0 0
  %518 = vmatprep.subr.bf16.mxu0 0
  %519 = vmatpush1.bf16.msra.mxu0 0
  %520 = vmatprep.subr.bf16.mxu0 0
  %521 = vmatpush1.bf16.msra.mxu0 0
  %522 = vmatprep.subr.bf16.mxu0 %v488
  %523 = vmatpush1.bf16.msra.mxu0 %v487
  %524 = vmatprep.subr.bf16.mxu0 %v485
  %525 = vmatpush1.bf16.msra.mxu0 %v484
  %526 = vmatprep.subr.bf16.mxu0 %v482
  %527 = vmatpush1.bf16.msra.mxu0 %v481
  %528 = vmatprep.subr.bf16.mxu0 %v479
  %529 = vmatpush1.bf16.msra.mxu0 %v478
  %530 = vmatprep.subr.bf16.mxu0 0
  %531 = vmatpush2.bf16.msra.mxu0 0
  %532 = vmatprep.subr.bf16.mxu0 0
  %533 = vmatpush2.bf16.msra.mxu0 0
  %534 = vmatprep.subr.bf16.mxu0 0
  %535 = vmatpush2.bf16.msra.mxu0 0
  %536 = vmatprep.subr.bf16.mxu0 0
  %537 = vmatpush2.bf16.msra.mxu0 0
  %538 = vmatprep.subr.bf16.mxu0 0
  %539 = vmatpush2.bf16.msra.mxu0 0
  %540 = vmatprep.subr.bf16.mxu0 0
  %541 = vmatpush2.bf16.msra.mxu0 0
  %542 = vmatprep.subr.bf16.mxu0 0
  %543 = vmatpush2.bf16.msra.mxu0 0
  %544 = vmatprep.subr.bf16.mxu0 0
  %545 = vmatpush2.bf16.msra.mxu0 0
  %546 = vmatprep.mubr.bf16.mxu0 0
  %547 = vmatmul.mubr.bf16.gmra.mxu0 %v503
  %v548 = vpop.f32.mrf.mxu0
  %v549 = vadd.f32 %v406, %v548
  %v550 = vpop.f32.mrf.mxu0
  %v551 = vadd.f32 %v410, %v550
  %v552 = vpop.f32.mrf.mxu0
  %v553 = vadd.f32 %v406, %v552
  %v554 = vpop.f32.mrf.mxu0
  %v555 = vadd.f32 %v410, %v554
  %556 = vmatprep.mubr.bf16.mxu0 0
  %557 = vmatmul.mubr.bf16.gmra.mxu0 %v506
  %v558 = vpop.f32.mrf.mxu0
  %v559 = vadd.f32 %v406, %v558
  %v560 = vpop.f32.mrf.mxu0
  %v561 = vadd.f32 %v410, %v560
  %v562 = vpop.f32.mrf.mxu0
  %v563 = vadd.f32 %v406, %v562
  %v564 = vpop.f32.mrf.mxu0
  %v565 = vadd.f32 %v410, %v564
  %566 = vmatprep.mubr.bf16.mxu0 0
  %567 = vmatmul.mubr.bf16.gmra.mxu0 %v509
  %v568 = vpop.f32.mrf.mxu0
  %v569 = vadd.f32 %v406, %v568
  %v570 = vpop.f32.mrf.mxu0
  %v571 = vadd.f32 %v410, %v570
  %v572 = vpop.f32.mrf.mxu0
  %v573 = vadd.f32 %v406, %v572
  %v574 = vpop.f32.mrf.mxu0
  %v575 = vadd.f32 %v410, %v574
  %576 = vmatprep.mubr.bf16.mxu0 0
  %577 = vmatmul.mubr.bf16.gmra.mxu0 %v512
  %v578 = vpop.f32.mrf.mxu0
  %v579 = vadd.f32 %v406, %v578
  %v580 = vpop.f32.mrf.mxu0
  %v581 = vadd.f32 %v410, %v580
  %v582 = vpop.f32.mrf.mxu0
  %v583 = vadd.f32 %v406, %v582
  %v584 = vpop.f32.mrf.mxu0
  %v585 = vadd.f32 %v410, %v584
  %586 = vdwg.mxu0
  %587 = vmatprep.subr.bf16.mxu0 0
  %588 = vmatpush1.bf16.msra.mxu0 0
  %589 = vmatprep.subr.bf16.mxu0 0
  %590 = vmatpush1.bf16.msra.mxu0 0
  %591 = vmatprep.subr.bf16.mxu0 0
  %592 = vmatpush1.bf16.msra.mxu0 0
  %593 = vmatprep.subr.bf16.mxu0 0
  %594 = vmatpush1.bf16.msra.mxu0 0
  %595 = vmatprep.subr.bf16.mxu0 0
  %596 = vmatpush1.bf16.msra.mxu0 %v489
  %597 = vmatprep.subr.bf16.mxu0 0
  %598 = vmatpush1.bf16.msra.mxu0 %v486
  %599 = vmatprep.subr.bf16.mxu0 0
  %600 = vmatpush1.bf16.msra.mxu0 %v483
  %601 = vmatprep.subr.bf16.mxu0 0
  %602 = vmatpush1.bf16.msra.mxu0 %v480
  %603 = vmatprep.subr.bf16.mxu0 0
  %604 = vmatpush2.bf16.msra.mxu0 0
  %605 = vmatprep.subr.bf16.mxu0 0
  %606 = vmatpush2.bf16.msra.mxu0 0
  %607 = vmatprep.subr.bf16.mxu0 0
  %608 = vmatpush2.bf16.msra.mxu0 0
  %609 = vmatprep.subr.bf16.mxu0 0
  %610 = vmatpush2.bf16.msra.mxu0 0
  %611 = vmatprep.subr.bf16.mxu0 0
  %612 = vmatpush2.bf16.msra.mxu0 0
  %613 = vmatprep.subr.bf16.mxu0 0
  %614 = vmatpush2.bf16.msra.mxu0 0
  %615 = vmatprep.subr.bf16.mxu0 0
  %616 = vmatpush2.bf16.msra.mxu0 0
  %617 = vmatprep.subr.bf16.mxu0 0
  %618 = vmatpush2.bf16.msra.mxu0 0
  %619 = vmatprep.mubr.bf16.mxu0 0
  %620 = vmatmul.mubr.bf16.gmra.mxu0 %v503
  %v621 = vpop.f32.mrf.mxu0
  %v622 = vadd.f32 %v414, %v621
  %v623 = vpop.f32.mrf.mxu0
  %v624 = vpop.f32.mrf.mxu0
  %v625 = vadd.f32 %v414, %v624
  %v626 = vpop.f32.mrf.mxu0
  %627 = vmatprep.mubr.bf16.mxu0 0
  %628 = vmatmul.mubr.bf16.gmra.mxu0 %v506
  %v629 = vpop.f32.mrf.mxu0
  %v630 = vadd.f32 %v414, %v629
  %v631 = vpop.f32.mrf.mxu0
  %v632 = vpop.f32.mrf.mxu0
  %v633 = vadd.f32 %v414, %v632
  %v634 = vpop.f32.mrf.mxu0
  %635 = vmatprep.mubr.bf16.mxu0 0
  %636 = vmatmul.mubr.bf16.gmra.mxu0 %v509
  %v637 = vpop.f32.mrf.mxu0
  %v638 = vadd.f32 %v414, %v637
  %v639 = vpop.f32.mrf.mxu0
  %v640 = vpop.f32.mrf.mxu0
  %v641 = vadd.f32 %v414, %v640
  %v642 = vpop.f32.mrf.mxu0
  %643 = vmatprep.mubr.bf16.mxu0 0
  %644 = vmatmul.mubr.bf16.gmra.mxu0 %v512
  %v645 = vpop.f32.mrf.mxu0
  %v646 = vadd.f32 %v414, %v645
  %v647 = vpop.f32.mrf.mxu0
  %v648 = vpop.f32.mrf.mxu0
  %v649 = vadd.f32 %v414, %v648
  %v650 = vpop.f32.mrf.mxu0
  %651 = vdwg.mxu0
  %652 = vst [vmem:[#allocation4] sm:$0xff] %v549
  %653 = vst [vmem:[#allocation4 + $0x8] sm:$0xff] %v551
  %654 = vst [vmem:[#allocation4 + $0x10] sm:$0xff] %v622
  %655 = vst [vmem:[#allocation4 + $0x18] sm:$0xff] %v553
  %656 = vst [vmem:[#allocation4 + $0x20] sm:$0xff] %v555
  %657 = vst [vmem:[#allocation4 + $0x28] sm:$0xff] %v625
  %658 = vst [vmem:[#allocation4 + $0x30] sm:$0xff] %v559
  %659 = vst [vmem:[#allocation4 + $0x38] sm:$0xff] %v561
  %660 = vst [vmem:[#allocation4 + $0x40] sm:$0xff] %v630
  %661 = vst [vmem:[#allocation4 + $0x48] sm:$0xff] %v563
  %662 = vst [vmem:[#allocation4 + $0x50] sm:$0xff] %v565
  %663 = vst [vmem:[#allocation4 + $0x58] sm:$0xff] %v633
  %664 = vst [vmem:[#allocation4 + $0x60] sm:$0xff] %v569
  %665 = vst [vmem:[#allocation4 + $0x68] sm:$0xff] %v571
  %666 = vst [vmem:[#allocation4 + $0x70] sm:$0xff] %v638
  %667 = vst [vmem:[#allocation4 + $0x78] sm:$0xff] %v573
  %668 = vst [vmem:[#allocation4 + $0x80] sm:$0xff] %v575
  %669 = vst [vmem:[#allocation4 + $0x88] sm:$0xff] %v641
  %670 = vst [vmem:[#allocation4 + $0x90] sm:$0xff] %v579
  %671 = vst [vmem:[#allocation4 + $0x98] sm:$0xff] %v581
  %672 = vst [vmem:[#allocation4 + $0xa0] sm:$0xff] %v646
  %673 = vst [vmem:[#allocation4 + $0xa8] sm:$0xff] %v583
  %674 = vst [vmem:[#allocation4 + $0xb0] sm:$0xff] %v585
  %675 = vst [vmem:[#allocation4 + $0xb8] sm:$0xff] %v649
  %v676 = vld [vmem:[%s4] sm:$0xff]
  %v677 = vld [vmem:[%s4 + $0x8] sm:$0xff]
  %v678 = vld [vmem:[%s4 + $0x10] sm:$0xff]
  %v679 = vld [vmem:[%s4 + $0x18] sm:$0xff]
  %v680 = vld [vmem:[%s4 + $0x20] sm:$0xff]
  %v681 = vld [vmem:[%s4 + $0x28] sm:$0xff]
  %v682 = vld [vmem:[%s4 + $0x30] sm:$0xff]
  %v683 = vld [vmem:[%s4 + $0x38] sm:$0xff]
  %v684 = vld [vmem:[%s4 + $0x40] sm:$0xff]
  %v685 = vld [vmem:[%s4 + $0x48] sm:$0xff]
  %v686 = vld [vmem:[%s4 + $0x50] sm:$0xff]
  %v687 = vld [vmem:[%s4 + $0x58] sm:$0xff]
  %v688 = vld [vmem:[%s4 + $0x60] sm:$0xff]
  %v689 = vld [vmem:[%s4 + $0x68] sm:$0xff]
  %v690 = vld [vmem:[%s4 + $0x70] sm:$0xff]
  %v691 = vld [vmem:[%s4 + $0x78] sm:$0xff]
  %v692 = vld [vmem:[%s4 + $0x80] sm:$0xff]
  %v693 = vld [vmem:[%s4 + $0x88] sm:$0xff]
  %v694 = vld [vmem:[%s4 + $0x90] sm:$0xff]
  %v695 = vld [vmem:[%s4 + $0x98] sm:$0xff]
  %v696 = vld [vmem:[%s4 + $0xa0] sm:$0xff]
  %v697 = vld [vmem:[%s4 + $0xa8] sm:$0xff]
  %v698 = vld [vmem:[%s4 + $0xb0] sm:$0xff]
  %v699 = vld [vmem:[%s4 + $0xb8] sm:$0xff]
  %v700 = vld [vmem:[%s4 + $0xc0] sm:$0xff]
  %v701 = vld [vmem:[%s4 + $0xc8] sm:$0xff]
  %v702 = vld [vmem:[%s4 + $0xd0] sm:$0xff]
  %v703 = vld [vmem:[%s4 + $0xd8] sm:$0xff]
  %v704 = vld [vmem:[%s4 + $0xe0] sm:$0xff]
  %v705 = vld [vmem:[%s4 + $0xe8] sm:$0xff]
  %v706 = vld [vmem:[%s4 + $0xf0] sm:$0xff]
  %v707 = vld [vmem:[%s4 + $0xf8] sm:$0xff]
  %v708 = vld [vmem:[%s4 + $0x100] sm:$0xff]
  %v709 = vld [vmem:[%s4 + $0x108] sm:$0xff]
  %v710 = vld [vmem:[%s4 + $0x110] sm:$0xff]
  %v711 = vld [vmem:[%s4 + $0x118] sm:$0xff]
  %v712 = vld [vmem:[%s4 + $0x120] sm:$0xff]
  %v713 = vld [vmem:[%s4 + $0x128] sm:$0xff]
  %v714 = vld [vmem:[%s4 + $0x130] sm:$0xff]
  %v715 = vld [vmem:[%s4 + $0x138] sm:$0xff]
  %v716 = vld [vmem:[%s4 + $0x140] sm:$0xff]
  %v717 = vld [vmem:[%s4 + $0x148] sm:$0xff]
  %v718 = vld [vmem:[%s4 + $0x150] sm:$0xff]
  %v719 = vld [vmem:[%s4 + $0x158] sm:$0xff]
  %v720 = vld [vmem:[%s4 + $0x160] sm:$0xff]
  %v721 = vld [vmem:[%s4 + $0x168] sm:$0xff]
  %v722 = vld [vmem:[%s4 + $0x170] sm:$0xff]
  %v723 = vld [vmem:[%s4 + $0x178] sm:$0xff]
  %v724 = vld [vmem:[%s4 + $0x180] sm:$0xff]
  %v725 = vld [vmem:[%s4 + $0x188] sm:$0xff]
  %v726 = vld [vmem:[%s4 + $0x190] sm:$0xff]
  %v727 = vld [vmem:[%s4 + $0x198] sm:$0xff]
  %v728 = vld [vmem:[%s4 + $0x1a0] sm:$0xff]
  %v729 = vld [vmem:[%s4 + $0x1a8] sm:$0xff]
  %v730 = vld [vmem:[%s4 + $0x1b0] sm:$0xff]
  %v731 = vld [vmem:[%s4 + $0x1b8] sm:$0xff]
  %v732 = vld [vmem:[%s4 + $0x1c0] sm:$0xff]
  %v733 = vld [vmem:[%s4 + $0x1c8] sm:$0xff]
  %v734 = vld [vmem:[%s4 + $0x1d0] sm:$0xff]
  %v735 = vld [vmem:[%s4 + $0x1d8] sm:$0xff]
  %v736 = vld [vmem:[%s4 + $0x1e0] sm:$0xff]
  %v737 = vld [vmem:[%s4 + $0x1e8] sm:$0xff]
  %v738 = vld [vmem:[%s4 + $0x1f0] sm:$0xff]
  %v739 = vld [vmem:[%s4 + $0x1f8] sm:$0xff]
  %v740 = vld [vmem:[%s4 + $0x200] sm:$0xff]
  %v741 = vld [vmem:[%s4 + $0x208] sm:$0xff]
  %v742 = vld [vmem:[%s4 + $0x210] sm:$0xff]
  %v743 = vld [vmem:[%s4 + $0x218] sm:$0xff]
  %v744 = vld [vmem:[%s4 + $0x220] sm:$0xff]
  %v745 = vld [vmem:[%s4 + $0x228] sm:$0xff]
  %v746 = vld [vmem:[%s4 + $0x230] sm:$0xff]
  %v747 = vld [vmem:[%s4 + $0x238] sm:$0xff]
  %v748 = vld [vmem:[%s4 + $0x240] sm:$0xff]
  %v749 = vld [vmem:[%s4 + $0x248] sm:$0xff]
  %v750 = vld [vmem:[%s4 + $0x250] sm:$0xff]
  %v751 = vld [vmem:[%s4 + $0x258] sm:$0xff]
  %v752 = vld [vmem:[%s4 + $0x260] sm:$0xff]
  %v753 = vld [vmem:[%s4 + $0x268] sm:$0xff]
  %v754 = vld [vmem:[%s4 + $0x270] sm:$0xff]
  %v755 = vld [vmem:[%s4 + $0x278] sm:$0xff]
  %v756 = vld [vmem:[%s4 + $0x280] sm:$0xff]
  %v757 = vld [vmem:[%s4 + $0x288] sm:$0xff]
  %v758 = vld [vmem:[%s4 + $0x290] sm:$0xff]
  %v759 = vld [vmem:[%s4 + $0x298] sm:$0xff]
  %v760 = vld [vmem:[%s4 + $0x2a0] sm:$0xff]
  %v761 = vld [vmem:[%s4 + $0x2a8] sm:$0xff]
  %v762 = vld [vmem:[%s4 + $0x2b0] sm:$0xff]
  %v763 = vld [vmem:[%s4 + $0x2b8] sm:$0xff]
  %v764 = vld [vmem:[%s4 + $0x2c0] sm:$0xff]
  %v765 = vld [vmem:[%s4 + $0x2c8] sm:$0xff]
  %v766 = vld [vmem:[%s4 + $0x2d0] sm:$0xff]
  %v767 = vld [vmem:[%s4 + $0x2d8] sm:$0xff]
  %v768 = vld [vmem:[%s4 + $0x2e0] sm:$0xff]
  %v769 = vld [vmem:[%s4 + $0x2e8] sm:$0xff]
  %v770 = vld [vmem:[%s4 + $0x2f0] sm:$0xff]
  %v771 = vld [vmem:[%s4 + $0x2f8] sm:$0xff]
  %v772 = vld [vmem:[%s7] sm:$0x1]
  %v774 = vlaneseq
  %v775 = vshrl.u32 %v774, 7
  %v776 = vsub.s32 0, %v775
  %v777 = vrot.slane %v772, %v776
  %v779 = vld [vmem:[%s8] sm:$0x1]
  %v781 = vlaneseq
  %v782 = vshrl.u32 %v781, 7
  %v783 = vsub.s32 0, %v782
  %v784 = vrot.slane %v779, %v783
  %v786 = vld [vmem:[#allocation2] sm:$0xff]
  %v787 = vld [vmem:[#allocation2 + $0x8] sm:$0xff]
  %v788 = vpack.c.bf16 %v786, %v786
  %v789 = vpack.c.bf16 %v787, %v787
  %v886 = vunpack.c.l.b16 %v676
  %v887 = vunpack.c.h.b16 %v676
  %v888 = vunpack.c.l.b16 %v677
  %v889 = vunpack.c.h.b16 %v677
  %v890 = vunpack.c.l.b16 %v678
  %v891 = vunpack.c.h.b16 %v678
  %v892 = vunpack.c.l.b16 %v679
  %v893 = vunpack.c.h.b16 %v679
  %v894 = vunpack.c.l.b16 %v680
  %v895 = vunpack.c.h.b16 %v680
  %v896 = vunpack.c.l.b16 %v681
  %v897 = vunpack.c.h.b16 %v681
  %v898 = vunpack.c.l.b16 %v682
  %v899 = vunpack.c.h.b16 %v682
  %v900 = vunpack.c.l.b16 %v683
  %v901 = vunpack.c.h.b16 %v683
  %v902 = vunpack.c.l.b16 %v684
  %v903 = vunpack.c.h.b16 %v684
  %v904 = vunpack.c.l.b16 %v685
  %v905 = vunpack.c.h.b16 %v685
  %v906 = vunpack.c.l.b16 %v686
  %v907 = vunpack.c.h.b16 %v686
  %v908 = vunpack.c.l.b16 %v687
  %v909 = vunpack.c.h.b16 %v687
  %v910 = vunpack.c.l.b16 %v688
  %v911 = vunpack.c.h.b16 %v688
  %v912 = vunpack.c.l.b16 %v689
  %v913 = vunpack.c.h.b16 %v689
  %v914 = vunpack.c.l.b16 %v690
  %v915 = vunpack.c.h.b16 %v690
  %v916 = vunpack.c.l.b16 %v691
  %v917 = vunpack.c.h.b16 %v691
  %v918 = vunpack.c.l.b16 %v692
  %v919 = vunpack.c.h.b16 %v692
  %v920 = vunpack.c.l.b16 %v693
  %v921 = vunpack.c.h.b16 %v693
  %v922 = vunpack.c.l.b16 %v694
  %v923 = vunpack.c.h.b16 %v694
  %v924 = vunpack.c.l.b16 %v695
  %v925 = vunpack.c.h.b16 %v695
  %v926 = vunpack.c.l.b16 %v696
  %v927 = vunpack.c.h.b16 %v696
  %v928 = vunpack.c.l.b16 %v697
  %v929 = vunpack.c.h.b16 %v697
  %v930 = vunpack.c.l.b16 %v698
  %v931 = vunpack.c.h.b16 %v698
  %v932 = vunpack.c.l.b16 %v699
  %v933 = vunpack.c.h.b16 %v699
  %v934 = vunpack.c.l.b16 %v700
  %v935 = vunpack.c.h.b16 %v700
  %v936 = vunpack.c.l.b16 %v701
  %v937 = vunpack.c.h.b16 %v701
  %v938 = vunpack.c.l.b16 %v702
  %v939 = vunpack.c.h.b16 %v702
  %v940 = vunpack.c.l.b16 %v703
  %v941 = vunpack.c.h.b16 %v703
  %v942 = vunpack.c.l.b16 %v704
  %v943 = vunpack.c.h.b16 %v704
  %v944 = vunpack.c.l.b16 %v705
  %v945 = vunpack.c.h.b16 %v705
  %v946 = vunpack.c.l.b16 %v706
  %v947 = vunpack.c.h.b16 %v706
  %v948 = vunpack.c.l.b16 %v707
  %v949 = vunpack.c.h.b16 %v707
  %v950 = vunpack.c.l.b16 %v708
  %v951 = vunpack.c.h.b16 %v708
  %v952 = vunpack.c.l.b16 %v709
  %v953 = vunpack.c.h.b16 %v709
  %v954 = vunpack.c.l.b16 %v710
  %v955 = vunpack.c.h.b16 %v710
  %v956 = vunpack.c.l.b16 %v711
  %v957 = vunpack.c.h.b16 %v711
  %v958 = vunpack.c.l.b16 %v712
  %v959 = vunpack.c.h.b16 %v712
  %v960 = vunpack.c.l.b16 %v713
  %v961 = vunpack.c.h.b16 %v713
  %v962 = vunpack.c.l.b16 %v714
  %v963 = vunpack.c.h.b16 %v714
  %v964 = vunpack.c.l.b16 %v715
  %v965 = vunpack.c.h.b16 %v715
  %v966 = vunpack.c.l.b16 %v716
  %v967 = vunpack.c.h.b16 %v716
  %v968 = vunpack.c.l.b16 %v717
  %v969 = vunpack.c.h.b16 %v717
  %v970 = vunpack.c.l.b16 %v718
  %v971 = vunpack.c.h.b16 %v718
  %v972 = vunpack.c.l.b16 %v719
  %v973 = vunpack.c.h.b16 %v719
  %v974 = vunpack.c.l.b16 %v720
  %v975 = vunpack.c.h.b16 %v720
  %v976 = vunpack.c.l.b16 %v721
  %v977 = vunpack.c.h.b16 %v721
  %v978 = vunpack.c.l.b16 %v722
  %v979 = vunpack.c.h.b16 %v722
  %v980 = vunpack.c.l.b16 %v723
  %v981 = vunpack.c.h.b16 %v723
  %v982 = vunpack.c.l.b16 %v724
  %v983 = vunpack.c.h.b16 %v724
  %v984 = vunpack.c.l.b16 %v725
  %v985 = vunpack.c.h.b16 %v725
  %v986 = vunpack.c.l.b16 %v726
  %v987 = vunpack.c.h.b16 %v726
  %v988 = vunpack.c.l.b16 %v727
  %v989 = vunpack.c.h.b16 %v727
  %v990 = vunpack.c.l.b16 %v728
  %v991 = vunpack.c.h.b16 %v728
  %v992 = vunpack.c.l.b16 %v729
  %v993 = vunpack.c.h.b16 %v729
  %v994 = vunpack.c.l.b16 %v730
  %v995 = vunpack.c.h.b16 %v730
  %v996 = vunpack.c.l.b16 %v731
  %v997 = vunpack.c.h.b16 %v731
  %v998 = vunpack.c.l.b16 %v732
  %v999 = vunpack.c.h.b16 %v732
  %v1000 = vunpack.c.l.b16 %v733
  %v1001 = vunpack.c.h.b16 %v733
  %v1002 = vunpack.c.l.b16 %v734
  %v1003 = vunpack.c.h.b16 %v734
  %v1004 = vunpack.c.l.b16 %v735
  %v1005 = vunpack.c.h.b16 %v735
  %v1006 = vunpack.c.l.b16 %v736
  %v1007 = vunpack.c.h.b16 %v736
  %v1008 = vunpack.c.l.b16 %v737
  %v1009 = vunpack.c.h.b16 %v737
  %v1010 = vunpack.c.l.b16 %v738
  %v1011 = vunpack.c.h.b16 %v738
  %v1012 = vunpack.c.l.b16 %v739
  %v1013 = vunpack.c.h.b16 %v739
  %v1014 = vunpack.c.l.b16 %v740
  %v1015 = vunpack.c.h.b16 %v740
  %v1016 = vunpack.c.l.b16 %v741
  %v1017 = vunpack.c.h.b16 %v741
  %v1018 = vunpack.c.l.b16 %v742
  %v1019 = vunpack.c.h.b16 %v742
  %v1020 = vunpack.c.l.b16 %v743
  %v1021 = vunpack.c.h.b16 %v743
  %v1022 = vunpack.c.l.b16 %v744
  %v1023 = vunpack.c.h.b16 %v744
  %v1024 = vunpack.c.l.b16 %v745
  %v1025 = vunpack.c.h.b16 %v745
  %v1026 = vunpack.c.l.b16 %v746
  %v1027 = vunpack.c.h.b16 %v746
  %v1028 = vunpack.c.l.b16 %v747
  %v1029 = vunpack.c.h.b16 %v747
  %v1030 = vunpack.c.l.b16 %v748
  %v1031 = vunpack.c.h.b16 %v748
  %v1032 = vunpack.c.l.b16 %v749
  %v1033 = vunpack.c.h.b16 %v749
  %v1034 = vunpack.c.l.b16 %v750
  %v1035 = vunpack.c.h.b16 %v750
  %v1036 = vunpack.c.l.b16 %v751
  %v1037 = vunpack.c.h.b16 %v751
  %v1038 = vunpack.c.l.b16 %v752
  %v1039 = vunpack.c.h.b16 %v752
  %v1040 = vunpack.c.l.b16 %v753
  %v1041 = vunpack.c.h.b16 %v753
  %v1042 = vunpack.c.l.b16 %v754
  %v1043 = vunpack.c.h.b16 %v754
  %v1044 = vunpack.c.l.b16 %v755
  %v1045 = vunpack.c.h.b16 %v755
  %v1046 = vunpack.c.l.b16 %v756
  %v1047 = vunpack.c.h.b16 %v756
  %v1048 = vunpack.c.l.b16 %v757
  %v1049 = vunpack.c.h.b16 %v757
  %v1050 = vunpack.c.l.b16 %v758
  %v1051 = vunpack.c.h.b16 %v758
  %v1052 = vunpack.c.l.b16 %v759
  %v1053 = vunpack.c.h.b16 %v759
  %v1054 = vunpack.c.l.b16 %v760
  %v1055 = vunpack.c.h.b16 %v760
  %v1056 = vunpack.c.l.b16 %v761
  %v1057 = vunpack.c.h.b16 %v761
  %v1058 = vunpack.c.l.b16 %v762
  %v1059 = vunpack.c.h.b16 %v762
  %v1060 = vunpack.c.l.b16 %v763
  %v1061 = vunpack.c.h.b16 %v763
  %v1062 = vunpack.c.l.b16 %v764
  %v1063 = vunpack.c.h.b16 %v764
  %v1064 = vunpack.c.l.b16 %v765
  %v1065 = vunpack.c.h.b16 %v765
  %v1066 = vunpack.c.l.b16 %v766
  %v1067 = vunpack.c.h.b16 %v766
  %v1068 = vunpack.c.l.b16 %v767
  %v1069 = vunpack.c.h.b16 %v767
  %v1070 = vunpack.c.l.b16 %v768
  %v1071 = vunpack.c.h.b16 %v768
  %v1072 = vunpack.c.l.b16 %v769
  %v1073 = vunpack.c.h.b16 %v769
  %v1074 = vunpack.c.l.b16 %v770
  %v1075 = vunpack.c.h.b16 %v770
  %v1076 = vunpack.c.l.b16 %v771
  %v1077 = vunpack.c.h.b16 %v771
  %v1078 = vpack.c.b16 %v892, %v886
  %v1079 = vpack.c.b16 %v893, %v887
  %v1080 = vpack.c.b16 %v894, %v888
  %v1081 = vpack.c.b16 %v895, %v889
  %v1082 = vpack.c.b16 %v896, %v890
  %v1083 = vpack.c.b16 %v897, %v891
  %v1084 = vpack.c.b16 %v904, %v898
  %v1085 = vpack.c.b16 %v905, %v899
  %v1086 = vpack.c.b16 %v906, %v900
  %v1087 = vpack.c.b16 %v907, %v901
  %v1088 = vpack.c.b16 %v908, %v902
  %v1089 = vpack.c.b16 %v909, %v903
  %v1090 = vpack.c.b16 %v916, %v910
  %v1091 = vpack.c.b16 %v917, %v911
  %v1092 = vpack.c.b16 %v918, %v912
  %v1093 = vpack.c.b16 %v919, %v913
  %v1094 = vpack.c.b16 %v920, %v914
  %v1095 = vpack.c.b16 %v921, %v915
  %v1096 = vpack.c.b16 %v928, %v922
  %v1097 = vpack.c.b16 %v929, %v923
  %v1098 = vpack.c.b16 %v930, %v924
  %v1099 = vpack.c.b16 %v931, %v925
  %v1100 = vpack.c.b16 %v932, %v926
  %v1101 = vpack.c.b16 %v933, %v927
  %v1102 = vpack.c.b16 %v940, %v934
  %v1103 = vpack.c.b16 %v941, %v935
  %v1104 = vpack.c.b16 %v942, %v936
  %v1105 = vpack.c.b16 %v943, %v937
  %v1106 = vpack.c.b16 %v944, %v938
  %v1107 = vpack.c.b16 %v945, %v939
  %v1108 = vpack.c.b16 %v952, %v946
  %v1109 = vpack.c.b16 %v953, %v947
  %v1110 = vpack.c.b16 %v954, %v948
  %v1111 = vpack.c.b16 %v955, %v949
  %v1112 = vpack.c.b16 %v956, %v950
  %v1113 = vpack.c.b16 %v957, %v951
  %v1114 = vpack.c.b16 %v964, %v958
  %v1115 = vpack.c.b16 %v965, %v959
  %v1116 = vpack.c.b16 %v966, %v960
  %v1117 = vpack.c.b16 %v967, %v961
  %v1118 = vpack.c.b16 %v968, %v962
  %v1119 = vpack.c.b16 %v969, %v963
  %v1120 = vpack.c.b16 %v976, %v970
  %v1121 = vpack.c.b16 %v977, %v971
  %v1122 = vpack.c.b16 %v978, %v972
  %v1123 = vpack.c.b16 %v979, %v973
  %v1124 = vpack.c.b16 %v980, %v974
  %v1125 = vpack.c.b16 %v981, %v975
  %v1126 = vpack.c.b16 %v988, %v982
  %v1127 = vpack.c.b16 %v989, %v983
  %v1128 = vpack.c.b16 %v990, %v984
  %v1129 = vpack.c.b16 %v991, %v985
  %v1130 = vpack.c.b16 %v992, %v986
  %v1131 = vpack.c.b16 %v993, %v987
  %v1132 = vpack.c.b16 %v1000, %v994
  %v1133 = vpack.c.b16 %v1001, %v995
  %v1134 = vpack.c.b16 %v1002, %v996
  %v1135 = vpack.c.b16 %v1003, %v997
  %v1136 = vpack.c.b16 %v1004, %v998
  %v1137 = vpack.c.b16 %v1005, %v999
  %v1138 = vpack.c.b16 %v1012, %v1006
  %v1139 = vpack.c.b16 %v1013, %v1007
  %v1140 = vpack.c.b16 %v1014, %v1008
  %v1141 = vpack.c.b16 %v1015, %v1009
  %v1142 = vpack.c.b16 %v1016, %v1010
  %v1143 = vpack.c.b16 %v1017, %v1011
  %v1144 = vpack.c.b16 %v1024, %v1018
  %v1145 = vpack.c.b16 %v1025, %v1019
  %v1146 = vpack.c.b16 %v1026, %v1020
  %v1147 = vpack.c.b16 %v1027, %v1021
  %v1148 = vpack.c.b16 %v1028, %v1022
  %v1149 = vpack.c.b16 %v1029, %v1023
  %v1150 = vpack.c.b16 %v1036, %v1030
  %v1151 = vpack.c.b16 %v1037, %v1031
  %v1152 = vpack.c.b16 %v1038, %v1032
  %v1153 = vpack.c.b16 %v1039, %v1033
  %v1154 = vpack.c.b16 %v1040, %v1034
  %v1155 = vpack.c.b16 %v1041, %v1035
  %v1156 = vpack.c.b16 %v1048, %v1042
  %v1157 = vpack.c.b16 %v1049, %v1043
  %v1158 = vpack.c.b16 %v1050, %v1044
  %v1159 = vpack.c.b16 %v1051, %v1045
  %v1160 = vpack.c.b16 %v1052, %v1046
  %v1161 = vpack.c.b16 %v1053, %v1047
  %v1162 = vpack.c.b16 %v1060, %v1054
  %v1163 = vpack.c.b16 %v1061, %v1055
  %v1164 = vpack.c.b16 %v1062, %v1056
  %v1165 = vpack.c.b16 %v1063, %v1057
  %v1166 = vpack.c.b16 %v1064, %v1058
  %v1167 = vpack.c.b16 %v1065, %v1059
  %v1168 = vpack.c.b16 %v1072, %v1066
  %v1169 = vpack.c.b16 %v1073, %v1067
  %v1170 = vpack.c.b16 %v1074, %v1068
  %v1171 = vpack.c.b16 %v1075, %v1069
  %v1172 = vpack.c.b16 %v1076, %v1070
  %v1173 = vpack.c.b16 %v1077, %v1071
  %1270 = vmatprep.subr.bf16.mxu0 %v1121
  %1271 = vmatpush1.bf16.msra.mxu0 %v1120
  %1272 = vmatprep.subr.bf16.mxu0 %v1115
  %1273 = vmatpush1.bf16.msra.mxu0 %v1114
  %1274 = vmatprep.subr.bf16.mxu0 %v1109
  %1275 = vmatpush1.bf16.msra.mxu0 %v1108
  %1276 = vmatprep.subr.bf16.mxu0 %v1103
  %1277 = vmatpush1.bf16.msra.mxu0 %v1102
  %1278 = vmatprep.subr.bf16.mxu0 %v1097
  %1279 = vmatpush1.bf16.msra.mxu0 %v1096
  %1280 = vmatprep.subr.bf16.mxu0 %v1091
  %1281 = vmatpush1.bf16.msra.mxu0 %v1090
  %1282 = vmatprep.subr.bf16.mxu0 %v1085
  %1283 = vmatpush1.bf16.msra.mxu0 %v1084
  %1284 = vmatprep.subr.bf16.mxu0 %v1079
  %1285 = vmatpush1.bf16.msra.mxu0 %v1078
  %1286 = vmatprep.subr.bf16.mxu0 %v1169
  %1287 = vmatpush2.bf16.msra.mxu0 %v1168
  %1288 = vmatprep.subr.bf16.mxu0 %v1163
  %1289 = vmatpush2.bf16.msra.mxu0 %v1162
  %1290 = vmatprep.subr.bf16.mxu0 %v1157
  %1291 = vmatpush2.bf16.msra.mxu0 %v1156
  %1292 = vmatprep.subr.bf16.mxu0 %v1151
  %1293 = vmatpush2.bf16.msra.mxu0 %v1150
  %1294 = vmatprep.subr.bf16.mxu0 %v1145
  %1295 = vmatpush2.bf16.msra.mxu0 %v1144
  %1296 = vmatprep.subr.bf16.mxu0 %v1139
  %1297 = vmatpush2.bf16.msra.mxu0 %v1138
  %1298 = vmatprep.subr.bf16.mxu0 %v1133
  %1299 = vmatpush2.bf16.msra.mxu0 %v1132
  %1300 = vmatprep.subr.bf16.mxu0 %v1127
  %1301 = vmatpush2.bf16.msra.mxu0 %v1126
  %1302 = vmatprep.mubr.bf16.mxu0 %v789
  %1303 = vmatmul.mubr.bf16.gmra.mxu0 %v788
  %v1304 = vpop.f32.mrf.mxu0
  %v1305 = vadd.f32 0.0, %v1304
  %v1306 = vpop.f32.mrf.mxu0
  %v1307 = vadd.f32 0.0, %v1306
  %v1308 = vpop.f32.mrf.mxu0
  %v1309 = vpop.f32.mrf.mxu0
  %1310 = vdwg.mxu0
  %1311 = vmatprep.subr.bf16.mxu0 %v1123
  %1312 = vmatpush1.bf16.msra.mxu0 %v1122
  %1313 = vmatprep.subr.bf16.mxu0 %v1117
  %1314 = vmatpush1.bf16.msra.mxu0 %v1116
  %1315 = vmatprep.subr.bf16.mxu0 %v1111
  %1316 = vmatpush1.bf16.msra.mxu0 %v1110
  %1317 = vmatprep.subr.bf16.mxu0 %v1105
  %1318 = vmatpush1.bf16.msra.mxu0 %v1104
  %1319 = vmatprep.subr.bf16.mxu0 %v1099
  %1320 = vmatpush1.bf16.msra.mxu0 %v1098
  %1321 = vmatprep.subr.bf16.mxu0 %v1093
  %1322 = vmatpush1.bf16.msra.mxu0 %v1092
  %1323 = vmatprep.subr.bf16.mxu0 %v1087
  %1324 = vmatpush1.bf16.msra.mxu0 %v1086
  %1325 = vmatprep.subr.bf16.mxu0 %v1081
  %1326 = vmatpush1.bf16.msra.mxu0 %v1080
  %1327 = vmatprep.subr.bf16.mxu0 %v1171
  %1328 = vmatpush2.bf16.msra.mxu0 %v1170
  %1329 = vmatprep.subr.bf16.mxu0 %v1165
  %1330 = vmatpush2.bf16.msra.mxu0 %v1164
  %1331 = vmatprep.subr.bf16.mxu0 %v1159
  %1332 = vmatpush2.bf16.msra.mxu0 %v1158
  %1333 = vmatprep.subr.bf16.mxu0 %v1153
  %1334 = vmatpush2.bf16.msra.mxu0 %v1152
  %1335 = vmatprep.subr.bf16.mxu0 %v1147
  %1336 = vmatpush2.bf16.msra.mxu0 %v1146
  %1337 = vmatprep.subr.bf16.mxu0 %v1141
  %1338 = vmatpush2.bf16.msra.mxu0 %v1140
  %1339 = vmatprep.subr.bf16.mxu0 %v1135
  %1340 = vmatpush2.bf16.msra.mxu0 %v1134
  %1341 = vmatprep.subr.bf16.mxu0 %v1129
  %1342 = vmatpush2.bf16.msra.mxu0 %v1128
  %1343 = vmatprep.mubr.bf16.mxu0 %v789
  %1344 = vmatmul.mubr.bf16.gmra.mxu0 %v788
  %v1345 = vpop.f32.mrf.mxu0
  %v1346 = vadd.f32 0.0, %v1345
  %v1347 = vpop.f32.mrf.mxu0
  %v1348 = vadd.f32 0.0, %v1347
  %v1349 = vpop.f32.mrf.mxu0
  %v1350 = vpop.f32.mrf.mxu0
  %1351 = vdwg.mxu0
  %1352 = vmatprep.subr.bf16.mxu0 %v1125
  %1353 = vmatpush1.bf16.msra.mxu0 %v1124
  %1354 = vmatprep.subr.bf16.mxu0 %v1119
  %1355 = vmatpush1.bf16.msra.mxu0 %v1118
  %1356 = vmatprep.subr.bf16.mxu0 %v1113
  %1357 = vmatpush1.bf16.msra.mxu0 %v1112
  %1358 = vmatprep.subr.bf16.mxu0 %v1107
  %1359 = vmatpush1.bf16.msra.mxu0 %v1106
  %1360 = vmatprep.subr.bf16.mxu0 %v1101
  %1361 = vmatpush1.bf16.msra.mxu0 %v1100
  %1362 = vmatprep.subr.bf16.mxu0 %v1095
  %1363 = vmatpush1.bf16.msra.mxu0 %v1094
  %1364 = vmatprep.subr.bf16.mxu0 %v1089
  %1365 = vmatpush1.bf16.msra.mxu0 %v1088
  %1366 = vmatprep.subr.bf16.mxu0 %v1083
  %1367 = vmatpush1.bf16.msra.mxu0 %v1082
  %1368 = vmatprep.subr.bf16.mxu0 %v1173
  %1369 = vmatpush2.bf16.msra.mxu0 %v1172
  %1370 = vmatprep.subr.bf16.mxu0 %v1167
  %1371 = vmatpush2.bf16.msra.mxu0 %v1166
  %1372 = vmatprep.subr.bf16.mxu0 %v1161
  %1373 = vmatpush2.bf16.msra.mxu0 %v1160
  %1374 = vmatprep.subr.bf16.mxu0 %v1155
  %1375 = vmatpush2.bf16.msra.mxu0 %v1154
  %1376 = vmatprep.subr.bf16.mxu0 %v1149
  %1377 = vmatpush2.bf16.msra.mxu0 %v1148
  %1378 = vmatprep.subr.bf16.mxu0 %v1143
  %1379 = vmatpush2.bf16.msra.mxu0 %v1142
  %1380 = vmatprep.subr.bf16.mxu0 %v1137
  %1381 = vmatpush2.bf16.msra.mxu0 %v1136
  %1382 = vmatprep.subr.bf16.mxu0 %v1131
  %1383 = vmatpush2.bf16.msra.mxu0 %v1130
  %1384 = vmatprep.mubr.bf16.mxu0 %v789
  %1385 = vmatmul.mubr.bf16.gmra.mxu0 %v788
  %v1386 = vpop.f32.mrf.mxu0
  %v1387 = vadd.f32 0.0, %v1386
  %v1388 = vpop.f32.mrf.mxu0
  %v1389 = vadd.f32 0.0, %v1388
  %v1390 = vpop.f32.mrf.mxu0
  %v1391 = vpop.f32.mrf.mxu0
  %1392 = vdwg.mxu0
  %s1393 = smul.u32 0, 3
  %s1394 = smul.addr %s1393, 8
  %s1395 = scalar_lea.vmem [#allocation3], %s1394
  %v1396 = vld [vmem:[%s1395] sm:$0xff]
  %v1397 = vld [vmem:[%s1395 + $0x8] sm:$0xff]
  %v1398 = vld [vmem:[%s1395 + $0x10] sm:$0xff]
  %v1399 = vadd.f32 %v1396, %v1305
  %v1400 = vadd.f32 %v1397, %v1307
  %v1401 = vxor.u32 %v1399, 2147483648
  %v1402 = vxor.u32 %v1400, 2147483648
  %v1403 = vmul.f32 %v1401, 1.442695
  %v1404 = vpow.pop %v1403
  %v1405 = vmul.f32 %v1402, 1.442695
  %v1406 = vpow.pop %v1405
  %v1407 = vadd.f32 %v1404, 1.0
  %v1408 = vadd.f32 %v1406, 1.0
  %v1409 = vrcp.pop %v1407
  %v1410 = vmul.f32 1.0, %v1409
  %v1411 = vrcp.pop %v1408
  %v1412 = vmul.f32 1.0, %v1411
  %v1413 = vadd.f32 %v1346, %v777
  %v1414 = vmul.f32 %v1410, %v1413
  %v1415 = vadd.f32 %v1398, %v1414
  %v1416 = vtanh.pop %v1415
  %v1417 = vsub.f32 1.0, %v1412
  %v1418 = vmul.f32 %v1417, %v1416
  %v1419 = vmul.f32 %v1412, %v786
  %v1420 = vadd.f32 %v1418, %v1419
  %s1421 = smul.u32 7, 3
  %s1422 = smul.addr %s1421, 8
  %s1423 = scalar_lea.vmem [#allocation4], %s1422
  %v1424 = vld [vmem:[%s1423] sm:$0xff]
  %v1425 = vld [vmem:[%s1423 + $0x8] sm:$0xff]
  %v1426 = vld [vmem:[%s1423 + $0x10] sm:$0xff]
  %v1427 = vadd.f32 %v1424, %v1348
  %v1428 = vadd.f32 %v1425, %v1387
  %v1429 = vxor.u32 %v1427, 2147483648
  %v1430 = vxor.u32 %v1428, 2147483648
  %v1431 = vmul.f32 %v1429, 1.442695
  %v1432 = vpow.pop %v1431
  %v1433 = vmul.f32 %v1430, 1.442695
  %v1434 = vpow.pop %v1433
  %v1435 = vadd.f32 %v1432, 1.0
  %v1436 = vadd.f32 %v1434, 1.0
  %v1437 = vrcp.pop %v1435
  %v1438 = vmul.f32 1.0, %v1437
  %v1439 = vrcp.pop %v1436
  %v1440 = vmul.f32 1.0, %v1439
  %v1441 = vadd.f32 %v1389, %v784
  %v1442 = vmul.f32 %v1438, %v1441
  %v1443 = vadd.f32 %v1426, %v1442
  %v1444 = vtanh.pop %v1443
  %v1445 = vsub.f32 1.0, %v1440
  %v1446 = vmul.f32 %v1445, %v1444
  %v1447 = vmul.f32 %v1440, %v787
  %v1448 = vadd.f32 %v1446, %v1447
  %1449 = vst [vmem:[#allocation5] sm:$0xff] %v1420
  %s1450 = scalar_lea.vmem [#allocation6], 56
  %1451 = vst [vmem:[%s1450] sm:$0xff] %v1448
  %v1452 = vpack.c.bf16 %v1420, %v1420
  %v1453 = vpack.c.bf16 %v1448, %v1448
  %1454 = vmatprep.subr.bf16.mxu0 %v1121
  %1455 = vmatpush1.bf16.msra.mxu0 %v1120
  %1456 = vmatprep.subr.bf16.mxu0 %v1115
  %1457 = vmatpush1.bf16.msra.mxu0 %v1114
  %1458 = vmatprep.subr.bf16.mxu0 %v1109
  %1459 = vmatpush1.bf16.msra.mxu0 %v1108
  %1460 = vmatprep.subr.bf16.mxu0 %v1103
  %1461 = vmatpush1.bf16.msra.mxu0 %v1102
  %1462 = vmatprep.subr.bf16.mxu0 %v1097
  %1463 = vmatpush1.bf16.msra.mxu0 %v1096
  %1464 = vmatprep.subr.bf16.mxu0 %v1091
  %1465 = vmatpush1.bf16.msra.mxu0 %v1090
  %1466 = vmatprep.subr.bf16.mxu0 %v1085
  %1467 = vmatpush1.bf16.msra.mxu0 %v1084
  %1468 = vmatprep.subr.bf16.mxu0 %v1079
  %1469 = vmatpush1.bf16.msra.mxu0 %v1078
  %1470 = vmatprep.subr.bf16.mxu0 %v1169
  %1471 = vmatpush2.bf16.msra.mxu0 %v1168
  %1472 = vmatprep.subr.bf16.mxu0 %v1163
  %1473 = vmatpush2.bf16.msra.mxu0 %v1162
  %1474 = vmatprep.subr.bf16.mxu0 %v1157
  %1475 = vmatpush2.bf16.msra.mxu0 %v1156
  %1476 = vmatprep.subr.bf16.mxu0 %v1151
  %1477 = vmatpush2.bf16.msra.mxu0 %v1150
  %1478 = vmatprep.subr.bf16.mxu0 %v1145
  %1479 = vmatpush2.bf16.msra.mxu0 %v1144
  %1480 = vmatprep.subr.bf16.mxu0 %v1139
  %1481 = vmatpush2.bf16.msra.mxu0 %v1138
  %1482 = vmatprep.subr.bf16.mxu0 %v1133
  %1483 = vmatpush2.bf16.msra.mxu0 %v1132
  %1484 = vmatprep.subr.bf16.mxu0 %v1127
  %1485 = vmatpush2.bf16.msra.mxu0 %v1126
  %1486 = vmatprep.mubr.bf16.mxu0 %v1453
  %1487 = vmatmul.mubr.bf16.gmra.mxu0 %v1452
  %v1488 = vpop.f32.mrf.mxu0
  %v1489 = vadd.f32 0.0, %v1488
  %v1490 = vpop.f32.mrf.mxu0
  %v1491 = vadd.f32 0.0, %v1490
  %v1492 = vpop.f32.mrf.mxu0
  %v1493 = vpop.f32.mrf.mxu0
  %1494 = vdwg.mxu0
  %1495 = vmatprep.subr.bf16.mxu0 %v1123
  %1496 = vmatpush1.bf16.msra.mxu0 %v1122
  %1497 = vmatprep.subr.bf16.mxu0 %v1117
  %1498 = vmatpush1.bf16.msra.mxu0 %v1116
  %1499 = vmatprep.subr.bf16.mxu0 %v1111
  %1500 = vmatpush1.bf16.msra.mxu0 %v1110
  %1501 = vmatprep.subr.bf16.mxu0 %v1105
  %1502 = vmatpush1.bf16.msra.mxu0 %v1104
  %1503 = vmatprep.subr.bf16.mxu0 %v1099
  %1504 = vmatpush1.bf16.msra.mxu0 %v1098
  %1505 = vmatprep.subr.bf16.mxu0 %v1093
  %1506 = vmatpush1.bf16.msra.mxu0 %v1092
  %1507 = vmatprep.subr.bf16.mxu0 %v1087
  %1508 = vmatpush1.bf16.msra.mxu0 %v1086
  %1509 = vmatprep.subr.bf16.mxu0 %v1081
  %1510 = vmatpush1.bf16.msra.mxu0 %v1080
  %1511 = vmatprep.subr.bf16.mxu0 %v1171
  %1512 = vmatpush2.bf16.msra.mxu0 %v1170
  %1513 = vmatprep.subr.bf16.mxu0 %v1165
  %1514 = vmatpush2.bf16.msra.mxu0 %v1164
  %1515 = vmatprep.subr.bf16.mxu0 %v1159
  %1516 = vmatpush2.bf16.msra.mxu0 %v1158
  %1517 = vmatprep.subr.bf16.mxu0 %v1153
  %1518 = vmatpush2.bf16.msra.mxu0 %v1152
  %1519 = vmatprep.subr.bf16.mxu0 %v1147
  %1520 = vmatpush2.bf16.msra.mxu0 %v1146
  %1521 = vmatprep.subr.bf16.mxu0 %v1141
  %1522 = vmatpush2.bf16.msra.mxu0 %v1140
  %1523 = vmatprep.subr.bf16.mxu0 %v1135
  %1524 = vmatpush2.bf16.msra.mxu0 %v1134
  %1525 = vmatprep.subr.bf16.mxu0 %v1129
  %1526 = vmatpush2.bf16.msra.mxu0 %v1128
  %1527 = vmatprep.mubr.bf16.mxu0 %v1453
  %1528 = vmatmul.mubr.bf16.gmra.mxu0 %v1452
  %v1529 = vpop.f32.mrf.mxu0
  %v1530 = vadd.f32 0.0, %v1529
  %v1531 = vpop.f32.mrf.mxu0
  %v1532 = vadd.f32 0.0, %v1531
  %v1533 = vpop.f32.mrf.mxu0
  %v1534 = vpop.f32.mrf.mxu0
  %1535 = vdwg.mxu0
  %1536 = vmatprep.subr.bf16.mxu0 %v1125
  %1537 = vmatpush1.bf16.msra.mxu0 %v1124
  %1538 = vmatprep.subr.bf16.mxu0 %v1119
  %1539 = vmatpush1.bf16.msra.mxu0 %v1118
  %1540 = vmatprep.subr.bf16.mxu0 %v1113
  %1541 = vmatpush1.bf16.msra.mxu0 %v1112
  %1542 = vmatprep.subr.bf16.mxu0 %v1107
  %1543 = vmatpush1.bf16.msra.mxu0 %v1106
  %1544 = vmatprep.subr.bf16.mxu0 %v1101
  %1545 = vmatpush1.bf16.msra.mxu0 %v1100
  %1546 = vmatprep.subr.bf16.mxu0 %v1095
  %1547 = vmatpush1.bf16.msra.mxu0 %v1094
  %1548 = vmatprep.subr.bf16.mxu0 %v1089
  %1549 = vmatpush1.bf16.msra.mxu0 %v1088
  %1550 = vmatprep.subr.bf16.mxu0 %v1083
  %1551 = vmatpush1.bf16.msra.mxu0 %v1082
  %1552 = vmatprep.subr.bf16.mxu0 %v1173
  %1553 = vmatpush2.bf16.msra.mxu0 %v1172
  %1554 = vmatprep.subr.bf16.mxu0 %v1167
  %1555 = vmatpush2.bf16.msra.mxu0 %v1166
  %1556 = vmatprep.subr.bf16.mxu0 %v1161
  %1557 = vmatpush2.bf16.msra.mxu0 %v1160
  %1558 = vmatprep.subr.bf16.mxu0 %v1155
  %1559 = vmatpush2.bf16.msra.mxu0 %v1154
  %1560 = vmatprep.subr.bf16.mxu0 %v1149
  %1561 = vmatpush2.bf16.msra.mxu0 %v1148
  %1562 = vmatprep.subr.bf16.mxu0 %v1143
  %1563 = vmatpush2.bf16.msra.mxu0 %v1142
  %1564 = vmatprep.subr.bf16.mxu0 %v1137
  %1565 = vmatpush2.bf16.msra.mxu0 %v1136
  %1566 = vmatprep.subr.bf16.mxu0 %v1131
  %1567 = vmatpush2.bf16.msra.mxu0 %v1130
  %1568 = vmatprep.mubr.bf16.mxu0 %v1453
  %1569 = vmatmul.mubr.bf16.gmra.mxu0 %v1452
  %v1570 = vpop.f32.mrf.mxu0
  %v1571 = vadd.f32 0.0, %v1570
  %v1572 = vpop.f32.mrf.mxu0
  %v1573 = vadd.f32 0.0, %v1572
  %v1574 = vpop.f32.mrf.mxu0
  %v1575 = vpop.f32.mrf.mxu0
  %1576 = vdwg.mxu0
  %s1577 = smul.u32 1, 3
  %s1578 = smul.addr %s1577, 8
  %s1579 = scalar_lea.vmem [#allocation3], %s1578
  %v1580 = vld [vmem:[%s1579] sm:$0xff]
  %v1581 = vld [vmem:[%s1579 + $0x8] sm:$0xff]
  %v1582 = vld [vmem:[%s1579 + $0x10] sm:$0xff]
  %v1583 = vadd.f32 %v1580, %v1489
  %v1584 = vadd.f32 %v1581, %v1491
  %v1585 = vxor.u32 %v1583, 2147483648
  %v1586 = vxor.u32 %v1584, 2147483648
  %v1587 = vmul.f32 %v1585, 1.442695
  %v1588 = vpow.pop %v1587
  %v1589 = vmul.f32 %v1586, 1.442695
  %v1590 = vpow.pop %v1589
  %v1591 = vadd.f32 %v1588, 1.0
  %v1592 = vadd.f32 %v1590, 1.0
  %v1593 = vrcp.pop %v1591
  %v1594 = vmul.f32 1.0, %v1593
  %v1595 = vrcp.pop %v1592
  %v1596 = vmul.f32 1.0, %v1595
  %v1597 = vadd.f32 %v1530, %v777
  %v1598 = vmul.f32 %v1594, %v1597
  %v1599 = vadd.f32 %v1582, %v1598
  %v1600 = vtanh.pop %v1599
  %v1601 = vsub.f32 1.0, %v1596
  %v1602 = vmul.f32 %v1601, %v1600
  %v1603 = vmul.f32 %v1596, %v1420
  %v1604 = vadd.f32 %v1602, %v1603
  %s1605 = smul.u32 6, 3
  %s1606 = smul.addr %s1605, 8
  %s1607 = scalar_lea.vmem [#allocation4], %s1606
  %v1608 = vld [vmem:[%s1607] sm:$0xff]
  %v1609 = vld [vmem:[%s1607 + $0x8] sm:$0xff]
  %v1610 = vld [vmem:[%s1607 + $0x10] sm:$0xff]
  %v1611 = vadd.f32 %v1608, %v1532
  %v1612 = vadd.f32 %v1609, %v1571
  %v1613 = vxor.u32 %v1611, 2147483648
  %v1614 = vxor.u32 %v1612, 2147483648
  %v1615 = vmul.f32 %v1613, 1.442695
  %v1616 = vpow.pop %v1615
  %v1617 = vmul.f32 %v1614, 1.442695
  %v1618 = vpow.pop %v1617
  %v1619 = vadd.f32 %v1616, 1.0
  %v1620 = vadd.f32 %v1618, 1.0
  %v1621 = vrcp.pop %v1619
  %v1622 = vmul.f32 1.0, %v1621
  %v1623 = vrcp.pop %v1620
  %v1624 = vmul.f32 1.0, %v1623
  %v1625 = vadd.f32 %v1573, %v784
  %v1626 = vmul.f32 %v1622, %v1625
  %v1627 = vadd.f32 %v1610, %v1626
  %v1628 = vtanh.pop %v1627
  %v1629 = vsub.f32 1.0, %v1624
  %v1630 = vmul.f32 %v1629, %v1628
  %v1631 = vmul.f32 %v1624, %v1448
  %v1632 = vadd.f32 %v1630, %v1631
  %s1633 = scalar_lea.vmem [#allocation5], 8
  %1634 = vst [vmem:[%s1633] sm:$0xff] %v1604
  %s1635 = scalar_lea.vmem [#allocation6], 48
  %1636 = vst [vmem:[%s1635] sm:$0xff] %v1632
  %v1637 = vpack.c.bf16 %v1604, %v1604
  %v1638 = vpack.c.bf16 %v1632, %v1632
  %1639 = vmatprep.subr.bf16.mxu0 %v1121
  %1640 = vmatpush1.bf16.msra.mxu0 %v1120
  %1641 = vmatprep.subr.bf16.mxu0 %v1115
  %1642 = vmatpush1.bf16.msra.mxu0 %v1114
  %1643 = vmatprep.subr.bf16.mxu0 %v1109
  %1644 = vmatpush1.bf16.msra.mxu0 %v1108
  %1645 = vmatprep.subr.bf16.mxu0 %v1103
  %1646 = vmatpush1.bf16.msra.mxu0 %v1102
  %1647 = vmatprep.subr.bf16.mxu0 %v1097
  %1648 = vmatpush1.bf16.msra.mxu0 %v1096
  %1649 = vmatprep.subr.bf16.mxu0 %v1091
  %1650 = vmatpush1.bf16.msra.mxu0 %v1090
  %1651 = vmatprep.subr.bf16.mxu0 %v1085
  %1652 = vmatpush1.bf16.msra.mxu0 %v1084
  %1653 = vmatprep.subr.bf16.mxu0 %v1079
  %1654 = vmatpush1.bf16.msra.mxu0 %v1078
  %1655 = vmatprep.subr.bf16.mxu0 %v1169
  %1656 = vmatpush2.bf16.msra.mxu0 %v1168
  %1657 = vmatprep.subr.bf16.mxu0 %v1163
  %1658 = vmatpush2.bf16.msra.mxu0 %v1162
  %1659 = vmatprep.subr.bf16.mxu0 %v1157
  %1660 = vmatpush2.bf16.msra.mxu0 %v1156
  %1661 = vmatprep.subr.bf16.mxu0 %v1151
  %1662 = vmatpush2.bf16.msra.mxu0 %v1150
  %1663 = vmatprep.subr.bf16.mxu0 %v1145
  %1664 = vmatpush2.bf16.msra.mxu0 %v1144
  %1665 = vmatprep.subr.bf16.mxu0 %v1139
  %1666 = vmatpush2.bf16.msra.mxu0 %v1138
  %1667 = vmatprep.subr.bf16.mxu0 %v1133
  %1668 = vmatpush2.bf16.msra.mxu0 %v1132
  %1669 = vmatprep.subr.bf16.mxu0 %v1127
  %1670 = vmatpush2.bf16.msra.mxu0 %v1126
  %1671 = vmatprep.mubr.bf16.mxu0 %v1638
  %1672 = vmatmul.mubr.bf16.gmra.mxu0 %v1637
  %v1673 = vpop.f32.mrf.mxu0
  %v1674 = vadd.f32 0.0, %v1673
  %v1675 = vpop.f32.mrf.mxu0
  %v1676 = vadd.f32 0.0, %v1675
  %v1677 = vpop.f32.mrf.mxu0
  %v1678 = vpop.f32.mrf.mxu0
  %1679 = vdwg.mxu0
  %1680 = vmatprep.subr.bf16.mxu0 %v1123
  %1681 = vmatpush1.bf16.msra.mxu0 %v1122
  %1682 = vmatprep.subr.bf16.mxu0 %v1117
  %1683 = vmatpush1.bf16.msra.mxu0 %v1116
  %1684 = vmatprep.subr.bf16.mxu0 %v1111
  %1685 = vmatpush1.bf16.msra.mxu0 %v1110
  %1686 = vmatprep.subr.bf16.mxu0 %v1105
  %1687 = vmatpush1.bf16.msra.mxu0 %v1104
  %1688 = vmatprep.subr.bf16.mxu0 %v1099
  %1689 = vmatpush1.bf16.msra.mxu0 %v1098
  %1690 = vmatprep.subr.bf16.mxu0 %v1093
  %1691 = vmatpush1.bf16.msra.mxu0 %v1092
  %1692 = vmatprep.subr.bf16.mxu0 %v1087
  %1693 = vmatpush1.bf16.msra.mxu0 %v1086
  %1694 = vmatprep.subr.bf16.mxu0 %v1081
  %1695 = vmatpush1.bf16.msra.mxu0 %v1080
  %1696 = vmatprep.subr.bf16.mxu0 %v1171
  %1697 = vmatpush2.bf16.msra.mxu0 %v1170
  %1698 = vmatprep.subr.bf16.mxu0 %v1165
  %1699 = vmatpush2.bf16.msra.mxu0 %v1164
  %1700 = vmatprep.subr.bf16.mxu0 %v1159
  %1701 = vmatpush2.bf16.msra.mxu0 %v1158
  %1702 = vmatprep.subr.bf16.mxu0 %v1153
  %1703 = vmatpush2.bf16.msra.mxu0 %v1152
  %1704 = vmatprep.subr.bf16.mxu0 %v1147
  %1705 = vmatpush2.bf16.msra.mxu0 %v1146
  %1706 = vmatprep.subr.bf16.mxu0 %v1141
  %1707 = vmatpush2.bf16.msra.mxu0 %v1140
  %1708 = vmatprep.subr.bf16.mxu0 %v1135
  %1709 = vmatpush2.bf16.msra.mxu0 %v1134
  %1710 = vmatprep.subr.bf16.mxu0 %v1129
  %1711 = vmatpush2.bf16.msra.mxu0 %v1128
  %1712 = vmatprep.mubr.bf16.mxu0 %v1638
  %1713 = vmatmul.mubr.bf16.gmra.mxu0 %v1637
  %v1714 = vpop.f32.mrf.mxu0
  %v1715 = vadd.f32 0.0, %v1714
  %v1716 = vpop.f32.mrf.mxu0
  %v1717 = vadd.f32 0.0, %v1716
  %v1718 = vpop.f32.mrf.mxu0
  %v1719 = vpop.f32.mrf.mxu0
  %1720 = vdwg.mxu0
  %1721 = vmatprep.subr.bf16.mxu0 %v1125
  %1722 = vmatpush1.bf16.msra.mxu0 %v1124
  %1723 = vmatprep.subr.bf16.mxu0 %v1119
  %1724 = vmatpush1.bf16.msra.mxu0 %v1118
  %1725 = vmatprep.subr.bf16.mxu0 %v1113
  %1726 = vmatpush1.bf16.msra.mxu0 %v1112
  %1727 = vmatprep.subr.bf16.mxu0 %v1107
  %1728 = vmatpush1.bf16.msra.mxu0 %v1106
  %1729 = vmatprep.subr.bf16.mxu0 %v1101
  %1730 = vmatpush1.bf16.msra.mxu0 %v1100
  %1731 = vmatprep.subr.bf16.mxu0 %v1095
  %1732 = vmatpush1.bf16.msra.mxu0 %v1094
  %1733 = vmatprep.subr.bf16.mxu0 %v1089
  %1734 = vmatpush1.bf16.msra.mxu0 %v1088
  %1735 = vmatprep.subr.bf16.mxu0 %v1083
  %1736 = vmatpush1.bf16.msra.mxu0 %v1082
  %1737 = vmatprep.subr.bf16.mxu0 %v1173
  %1738 = vmatpush2.bf16.msra.mxu0 %v1172
  %1739 = vmatprep.subr.bf16.mxu0 %v1167
  %1740 = vmatpush2.bf16.msra.mxu0 %v1166
  %1741 = vmatprep.subr.bf16.mxu0 %v1161
  %1742 = vmatpush2.bf16.msra.mxu0 %v1160
  %1743 = vmatprep.subr.bf16.mxu0 %v1155
  %1744 = vmatpush2.bf16.msra.mxu0 %v1154
  %1745 = vmatprep.subr.bf16.mxu0 %v1149
  %1746 = vmatpush2.bf16.msra.mxu0 %v1148
  %1747 = vmatprep.subr.bf16.mxu0 %v1143
  %1748 = vmatpush2.bf16.msra.mxu0 %v1142
  %1749 = vmatprep.subr.bf16.mxu0 %v1137
  %1750 = vmatpush2.bf16.msra.mxu0 %v1136
  %1751 = vmatprep.subr.bf16.mxu0 %v1131
  %1752 = vmatpush2.bf16.msra.mxu0 %v1130
  %1753 = vmatprep.mubr.bf16.mxu0 %v1638
  %1754 = vmatmul.mubr.bf16.gmra.mxu0 %v1637
  %v1755 = vpop.f32.mrf.mxu0
  %v1756 = vadd.f32 0.0, %v1755
  %v1757 = vpop.f32.mrf.mxu0
  %v1758 = vadd.f32 0.0, %v1757
  %v1759 = vpop.f32.mrf.mxu0
  %v1760 = vpop.f32.mrf.mxu0
  %1761 = vdwg.mxu0
  %s1762 = smul.u32 2, 3
  %s1763 = smul.addr %s1762, 8
  %s1764 = scalar_lea.vmem [#allocation3], %s1763
  %v1765 = vld [vmem:[%s1764] sm:$0xff]
  %v1766 = vld [vmem:[%s1764 + $0x8] sm:$0xff]
  %v1767 = vld [vmem:[%s1764 + $0x10] sm:$0xff]
  %v1768 = vadd.f32 %v1765, %v1674
  %v1769 = vadd.f32 %v1766, %v1676
  %v1770 = vxor.u32 %v1768, 2147483648
  %v1771 = vxor.u32 %v1769, 2147483648
  %v1772 = vmul.f32 %v1770, 1.442695
  %v1773 = vpow.pop %v1772
  %v1774 = vmul.f32 %v1771, 1.442695
  %v1775 = vpow.pop %v1774
  %v1776 = vadd.f32 %v1773, 1.0
  %v1777 = vadd.f32 %v1775, 1.0
  %v1778 = vrcp.pop %v1776
  %v1779 = vmul.f32 1.0, %v1778
  %v1780 = vrcp.pop %v1777
  %v1781 = vmul.f32 1.0, %v1780
  %v1782 = vadd.f32 %v1715, %v777
  %v1783 = vmul.f32 %v1779, %v1782
  %v1784 = vadd.f32 %v1767, %v1783
  %v1785 = vtanh.pop %v1784
  %v1786 = vsub.f32 1.0, %v1781
  %v1787 = vmul.f32 %v1786, %v1785
  %v1788 = vmul.f32 %v1781, %v1604
  %v1789 = vadd.f32 %v1787, %v1788
  %s1790 = smul.u32 5, 3
  %s1791 = smul.addr %s1790, 8
  %s1792 = scalar_lea.vmem [#allocation4], %s1791
  %v1793 = vld [vmem:[%s1792] sm:$0xff]
  %v1794 = vld [vmem:[%s1792 + $0x8] sm:$0xff]
  %v1795 = vld [vmem:[%s1792 + $0x10] sm:$0xff]
  %v1796 = vadd.f32 %v1793, %v1717
  %v1797 = vadd.f32 %v1794, %v1756
  %v1798 = vxor.u32 %v1796, 2147483648
  %v1799 = vxor.u32 %v1797, 2147483648
  %v1800 = vmul.f32 %v1798, 1.442695
  %v1801 = vpow.pop %v1800
  %v1802 = vmul.f32 %v1799, 1.442695
  %v1803 = vpow.pop %v1802
  %v1804 = vadd.f32 %v1801, 1.0
  %v1805 = vadd.f32 %v1803, 1.0
  %v1806 = vrcp.pop %v1804
  %v1807 = vmul.f32 1.0, %v1806
  %v1808 = vrcp.pop %v1805
  %v1809 = vmul.f32 1.0, %v1808
  %v1810 = vadd.f32 %v1758, %v784
  %v1811 = vmul.f32 %v1807, %v1810
  %v1812 = vadd.f32 %v1795, %v1811
  %v1813 = vtanh.pop %v1812
  %v1814 = vsub.f32 1.0, %v1809
  %v1815 = vmul.f32 %v1814, %v1813
  %v1816 = vmul.f32 %v1809, %v1632
  %v1817 = vadd.f32 %v1815, %v1816
  %s1818 = scalar_lea.vmem [#allocation5], 16
  %1819 = vst [vmem:[%s1818] sm:$0xff] %v1789
  %s1820 = scalar_lea.vmem [#allocation6], 40
  %1821 = vst [vmem:[%s1820] sm:$0xff] %v1817
  %v1822 = vpack.c.bf16 %v1789, %v1789
  %v1823 = vpack.c.bf16 %v1817, %v1817
  %1824 = vmatprep.subr.bf16.mxu0 %v1121
  %1825 = vmatpush1.bf16.msra.mxu0 %v1120
  %1826 = vmatprep.subr.bf16.mxu0 %v1115
  %1827 = vmatpush1.bf16.msra.mxu0 %v1114
  %1828 = vmatprep.subr.bf16.mxu0 %v1109
  %1829 = vmatpush1.bf16.msra.mxu0 %v1108
  %1830 = vmatprep.subr.bf16.mxu0 %v1103
  %1831 = vmatpush1.bf16.msra.mxu0 %v1102
  %1832 = vmatprep.subr.bf16.mxu0 %v1097
  %1833 = vmatpush1.bf16.msra.mxu0 %v1096
  %1834 = vmatprep.subr.bf16.mxu0 %v1091
  %1835 = vmatpush1.bf16.msra.mxu0 %v1090
  %1836 = vmatprep.subr.bf16.mxu0 %v1085
  %1837 = vmatpush1.bf16.msra.mxu0 %v1084
  %1838 = vmatprep.subr.bf16.mxu0 %v1079
  %1839 = vmatpush1.bf16.msra.mxu0 %v1078
  %1840 = vmatprep.subr.bf16.mxu0 %v1169
  %1841 = vmatpush2.bf16.msra.mxu0 %v1168
  %1842 = vmatprep.subr.bf16.mxu0 %v1163
  %1843 = vmatpush2.bf16.msra.mxu0 %v1162
  %1844 = vmatprep.subr.bf16.mxu0 %v1157
  %1845 = vmatpush2.bf16.msra.mxu0 %v1156
  %1846 = vmatprep.subr.bf16.mxu0 %v1151
  %1847 = vmatpush2.bf16.msra.mxu0 %v1150
  %1848 = vmatprep.subr.bf16.mxu0 %v1145
  %1849 = vmatpush2.bf16.msra.mxu0 %v1144
  %1850 = vmatprep.subr.bf16.mxu0 %v1139
  %1851 = vmatpush2.bf16.msra.mxu0 %v1138
  %1852 = vmatprep.subr.bf16.mxu0 %v1133
  %1853 = vmatpush2.bf16.msra.mxu0 %v1132
  %1854 = vmatprep.subr.bf16.mxu0 %v1127
  %1855 = vmatpush2.bf16.msra.mxu0 %v1126
  %1856 = vmatprep.mubr.bf16.mxu0 %v1823
  %1857 = vmatmul.mubr.bf16.gmra.mxu0 %v1822
  %v1858 = vpop.f32.mrf.mxu0
  %v1859 = vadd.f32 0.0, %v1858
  %v1860 = vpop.f32.mrf.mxu0
  %v1861 = vadd.f32 0.0, %v1860
  %v1862 = vpop.f32.mrf.mxu0
  %v1863 = vpop.f32.mrf.mxu0
  %1864 = vdwg.mxu0
  %1865 = vmatprep.subr.bf16.mxu0 %v1123
  %1866 = vmatpush1.bf16.msra.mxu0 %v1122
  %1867 = vmatprep.subr.bf16.mxu0 %v1117
  %1868 = vmatpush1.bf16.msra.mxu0 %v1116
  %1869 = vmatprep.subr.bf16.mxu0 %v1111
  %1870 = vmatpush1.bf16.msra.mxu0 %v1110
  %1871 = vmatprep.subr.bf16.mxu0 %v1105
  %1872 = vmatpush1.bf16.msra.mxu0 %v1104
  %1873 = vmatprep.subr.bf16.mxu0 %v1099
  %1874 = vmatpush1.bf16.msra.mxu0 %v1098
  %1875 = vmatprep.subr.bf16.mxu0 %v1093
  %1876 = vmatpush1.bf16.msra.mxu0 %v1092
  %1877 = vmatprep.subr.bf16.mxu0 %v1087
  %1878 = vmatpush1.bf16.msra.mxu0 %v1086
  %1879 = vmatprep.subr.bf16.mxu0 %v1081
  %1880 = vmatpush1.bf16.msra.mxu0 %v1080
  %1881 = vmatprep.subr.bf16.mxu0 %v1171
  %1882 = vmatpush2.bf16.msra.mxu0 %v1170
  %1883 = vmatprep.subr.bf16.mxu0 %v1165
  %1884 = vmatpush2.bf16.msra.mxu0 %v1164
  %1885 = vmatprep.subr.bf16.mxu0 %v1159
  %1886 = vmatpush2.bf16.msra.mxu0 %v1158
  %1887 = vmatprep.subr.bf16.mxu0 %v1153
  %1888 = vmatpush2.bf16.msra.mxu0 %v1152
  %1889 = vmatprep.subr.bf16.mxu0 %v1147
  %1890 = vmatpush2.bf16.msra.mxu0 %v1146
  %1891 = vmatprep.subr.bf16.mxu0 %v1141
  %1892 = vmatpush2.bf16.msra.mxu0 %v1140
  %1893 = vmatprep.subr.bf16.mxu0 %v1135
  %1894 = vmatpush2.bf16.msra.mxu0 %v1134
  %1895 = vmatprep.subr.bf16.mxu0 %v1129
  %1896 = vmatpush2.bf16.msra.mxu0 %v1128
  %1897 = vmatprep.mubr.bf16.mxu0 %v1823
  %1898 = vmatmul.mubr.bf16.gmra.mxu0 %v1822
  %v1899 = vpop.f32.mrf.mxu0
  %v1900 = vadd.f32 0.0, %v1899
  %v1901 = vpop.f32.mrf.mxu0
  %v1902 = vadd.f32 0.0, %v1901
  %v1903 = vpop.f32.mrf.mxu0
  %v1904 = vpop.f32.mrf.mxu0
  %1905 = vdwg.mxu0
  %1906 = vmatprep.subr.bf16.mxu0 %v1125
  %1907 = vmatpush1.bf16.msra.mxu0 %v1124
  %1908 = vmatprep.subr.bf16.mxu0 %v1119
  %1909 = vmatpush1.bf16.msra.mxu0 %v1118
  %1910 = vmatprep.subr.bf16.mxu0 %v1113
  %1911 = vmatpush1.bf16.msra.mxu0 %v1112
  %1912 = vmatprep.subr.bf16.mxu0 %v1107
  %1913 = vmatpush1.bf16.msra.mxu0 %v1106
  %1914 = vmatprep.subr.bf16.mxu0 %v1101
  %1915 = vmatpush1.bf16.msra.mxu0 %v1100
  %1916 = vmatprep.subr.bf16.mxu0 %v1095
  %1917 = vmatpush1.bf16.msra.mxu0 %v1094
  %1918 = vmatprep.subr.bf16.mxu0 %v1089
  %1919 = vmatpush1.bf16.msra.mxu0 %v1088
  %1920 = vmatprep.subr.bf16.mxu0 %v1083
  %1921 = vmatpush1.bf16.msra.mxu0 %v1082
  %1922 = vmatprep.subr.bf16.mxu0 %v1173
  %1923 = vmatpush2.bf16.msra.mxu0 %v1172
  %1924 = vmatprep.subr.bf16.mxu0 %v1167
  %1925 = vmatpush2.bf16.msra.mxu0 %v1166
  %1926 = vmatprep.subr.bf16.mxu0 %v1161
  %1927 = vmatpush2.bf16.msra.mxu0 %v1160
  %1928 = vmatprep.subr.bf16.mxu0 %v1155
  %1929 = vmatpush2.bf16.msra.mxu0 %v1154
  %1930 = vmatprep.subr.bf16.mxu0 %v1149
  %1931 = vmatpush2.bf16.msra.mxu0 %v1148
  %1932 = vmatprep.subr.bf16.mxu0 %v1143
  %1933 = vmatpush2.bf16.msra.mxu0 %v1142
  %1934 = vmatprep.subr.bf16.mxu0 %v1137
  %1935 = vmatpush2.bf16.msra.mxu0 %v1136
  %1936 = vmatprep.subr.bf16.mxu0 %v1131
  %1937 = vmatpush2.bf16.msra.mxu0 %v1130
  %1938 = vmatprep.mubr.bf16.mxu0 %v1823
  %1939 = vmatmul.mubr.bf16.gmra.mxu0 %v1822
  %v1940 = vpop.f32.mrf.mxu0
  %v1941 = vadd.f32 0.0, %v1940
  %v1942 = vpop.f32.mrf.mxu0
  %v1943 = vadd.f32 0.0, %v1942
  %v1944 = vpop.f32.mrf.mxu0
  %v1945 = vpop.f32.mrf.mxu0
  %1946 = vdwg.mxu0
  %s1947 = smul.u32 3, 3
  %s1948 = smul.addr %s1947, 8
  %s1949 = scalar_lea.vmem [#allocation3], %s1948
  %v1950 = vld [vmem:[%s1949] sm:$0xff]
  %v1951 = vld [vmem:[%s1949 + $0x8] sm:$0xff]
  %v1952 = vld [vmem:[%s1949 + $0x10] sm:$0xff]
  %v1953 = vadd.f32 %v1950, %v1859
  %v1954 = vadd.f32 %v1951, %v1861
  %v1955 = vxor.u32 %v1953, 2147483648
  %v1956 = vxor.u32 %v1954, 2147483648
  %v1957 = vmul.f32 %v1955, 1.442695
  %v1958 = vpow.pop %v1957
  %v1959 = vmul.f32 %v1956, 1.442695
  %v1960 = vpow.pop %v1959
  %v1961 = vadd.f32 %v1958, 1.0
  %v1962 = vadd.f32 %v1960, 1.0
  %v1963 = vrcp.pop %v1961
  %v1964 = vmul.f32 1.0, %v1963
  %v1965 = vrcp.pop %v1962
  %v1966 = vmul.f32 1.0, %v1965
  %v1967 = vadd.f32 %v1900, %v777
  %v1968 = vmul.f32 %v1964, %v1967
  %v1969 = vadd.f32 %v1952, %v1968
  %v1970 = vtanh.pop %v1969
  %v1971 = vsub.f32 1.0, %v1966
  %v1972 = vmul.f32 %v1971, %v1970
  %v1973 = vmul.f32 %v1966, %v1789
  %v1974 = vadd.f32 %v1972, %v1973
  %s1975 = smul.u32 4, 3
  %s1976 = smul.addr %s1975, 8
  %s1977 = scalar_lea.vmem [#allocation4], %s1976
  %v1978 = vld [vmem:[%s1977] sm:$0xff]
  %v1979 = vld [vmem:[%s1977 + $0x8] sm:$0xff]
  %v1980 = vld [vmem:[%s1977 + $0x10] sm:$0xff]
  %v1981 = vadd.f32 %v1978, %v1902
  %v1982 = vadd.f32 %v1979, %v1941
  %v1983 = vxor.u32 %v1981, 2147483648
  %v1984 = vxor.u32 %v1982, 2147483648
  %v1985 = vmul.f32 %v1983, 1.442695
  %v1986 = vpow.pop %v1985
  %v1987 = vmul.f32 %v1984, 1.442695
  %v1988 = vpow.pop %v1987
  %v1989 = vadd.f32 %v1986, 1.0
  %v1990 = vadd.f32 %v1988, 1.0
  %v1991 = vrcp.pop %v1989
  %v1992 = vmul.f32 1.0, %v1991
  %v1993 = vrcp.pop %v1990
  %v1994 = vmul.f32 1.0, %v1993
  %v1995 = vadd.f32 %v1943, %v784
  %v1996 = vmul.f32 %v1992, %v1995
  %v1997 = vadd.f32 %v1980, %v1996
  %v1998 = vtanh.pop %v1997
  %v1999 = vsub.f32 1.0, %v1994
  %v2000 = vmul.f32 %v1999, %v1998
  %v2001 = vmul.f32 %v1994, %v1817
  %v2002 = vadd.f32 %v2000, %v2001
  %s2003 = scalar_lea.vmem [#allocation5], 24
  %2004 = vst [vmem:[%s2003] sm:$0xff] %v1974
  %s2005 = scalar_lea.vmem [#allocation6], 32
  %2006 = vst [vmem:[%s2005] sm:$0xff] %v2002
  %v2007 = vpack.c.bf16 %v1974, %v1974
  %v2008 = vpack.c.bf16 %v2002, %v2002
  %2009 = vmatprep.subr.bf16.mxu0 %v1121
  %2010 = vmatpush1.bf16.msra.mxu0 %v1120
  %2011 = vmatprep.subr.bf16.mxu0 %v1115
  %2012 = vmatpush1.bf16.msra.mxu0 %v1114
  %2013 = vmatprep.subr.bf16.mxu0 %v1109
  %2014 = vmatpush1.bf16.msra.mxu0 %v1108
  %2015 = vmatprep.subr.bf16.mxu0 %v1103
  %2016 = vmatpush1.bf16.msra.mxu0 %v1102
  %2017 = vmatprep.subr.bf16.mxu0 %v1097
  %2018 = vmatpush1.bf16.msra.mxu0 %v1096
  %2019 = vmatprep.subr.bf16.mxu0 %v1091
  %2020 = vmatpush1.bf16.msra.mxu0 %v1090
  %2021 = vmatprep.subr.bf16.mxu0 %v1085
  %2022 = vmatpush1.bf16.msra.mxu0 %v1084
  %2023 = vmatprep.subr.bf16.mxu0 %v1079
  %2024 = vmatpush1.bf16.msra.mxu0 %v1078
  %2025 = vmatprep.subr.bf16.mxu0 %v1169
  %2026 = vmatpush2.bf16.msra.mxu0 %v1168
  %2027 = vmatprep.subr.bf16.mxu0 %v1163
  %2028 = vmatpush2.bf16.msra.mxu0 %v1162
  %2029 = vmatprep.subr.bf16.mxu0 %v1157
  %2030 = vmatpush2.bf16.msra.mxu0 %v1156
  %2031 = vmatprep.subr.bf16.mxu0 %v1151
  %2032 = vmatpush2.bf16.msra.mxu0 %v1150
  %2033 = vmatprep.subr.bf16.mxu0 %v1145
  %2034 = vmatpush2.bf16.msra.mxu0 %v1144
  %2035 = vmatprep.subr.bf16.mxu0 %v1139
  %2036 = vmatpush2.bf16.msra.mxu0 %v1138
  %2037 = vmatprep.subr.bf16.mxu0 %v1133
  %2038 = vmatpush2.bf16.msra.mxu0 %v1132
  %2039 = vmatprep.subr.bf16.mxu0 %v1127
  %2040 = vmatpush2.bf16.msra.mxu0 %v1126
  %2041 = vmatprep.mubr.bf16.mxu0 %v2008
  %2042 = vmatmul.mubr.bf16.gmra.mxu0 %v2007
  %v2043 = vpop.f32.mrf.mxu0
  %v2044 = vadd.f32 0.0, %v2043
  %v2045 = vpop.f32.mrf.mxu0
  %v2046 = vadd.f32 0.0, %v2045
  %v2047 = vpop.f32.mrf.mxu0
  %v2048 = vpop.f32.mrf.mxu0
  %2049 = vdwg.mxu0
  %2050 = vmatprep.subr.bf16.mxu0 %v1123
  %2051 = vmatpush1.bf16.msra.mxu0 %v1122
  %2052 = vmatprep.subr.bf16.mxu0 %v1117
  %2053 = vmatpush1.bf16.msra.mxu0 %v1116
  %2054 = vmatprep.subr.bf16.mxu0 %v1111
  %2055 = vmatpush1.bf16.msra.mxu0 %v1110
  %2056 = vmatprep.subr.bf16.mxu0 %v1105
  %2057 = vmatpush1.bf16.msra.mxu0 %v1104
  %2058 = vmatprep.subr.bf16.mxu0 %v1099
  %2059 = vmatpush1.bf16.msra.mxu0 %v1098
  %2060 = vmatprep.subr.bf16.mxu0 %v1093
  %2061 = vmatpush1.bf16.msra.mxu0 %v1092
  %2062 = vmatprep.subr.bf16.mxu0 %v1087
  %2063 = vmatpush1.bf16.msra.mxu0 %v1086
  %2064 = vmatprep.subr.bf16.mxu0 %v1081
  %2065 = vmatpush1.bf16.msra.mxu0 %v1080
  %2066 = vmatprep.subr.bf16.mxu0 %v1171
  %2067 = vmatpush2.bf16.msra.mxu0 %v1170
  %2068 = vmatprep.subr.bf16.mxu0 %v1165
  %2069 = vmatpush2.bf16.msra.mxu0 %v1164
  %2070 = vmatprep.subr.bf16.mxu0 %v1159
  %2071 = vmatpush2.bf16.msra.mxu0 %v1158
  %2072 = vmatprep.subr.bf16.mxu0 %v1153
  %2073 = vmatpush2.bf16.msra.mxu0 %v1152
  %2074 = vmatprep.subr.bf16.mxu0 %v1147
  %2075 = vmatpush2.bf16.msra.mxu0 %v1146
  %2076 = vmatprep.subr.bf16.mxu0 %v1141
  %2077 = vmatpush2.bf16.msra.mxu0 %v1140
  %2078 = vmatprep.subr.bf16.mxu0 %v1135
  %2079 = vmatpush2.bf16.msra.mxu0 %v1134
  %2080 = vmatprep.subr.bf16.mxu0 %v1129
  %2081 = vmatpush2.bf16.msra.mxu0 %v1128
  %2082 = vmatprep.mubr.bf16.mxu0 %v2008
  %2083 = vmatmul.mubr.bf16.gmra.mxu0 %v2007
  %v2084 = vpop.f32.mrf.mxu0
  %v2085 = vadd.f32 0.0, %v2084
  %v2086 = vpop.f32.mrf.mxu0
  %v2087 = vadd.f32 0.0, %v2086
  %v2088 = vpop.f32.mrf.mxu0
  %v2089 = vpop.f32.mrf.mxu0
  %2090 = vdwg.mxu0
  %2091 = vmatprep.subr.bf16.mxu0 %v1125
  %2092 = vmatpush1.bf16.msra.mxu0 %v1124
  %2093 = vmatprep.subr.bf16.mxu0 %v1119
  %2094 = vmatpush1.bf16.msra.mxu0 %v1118
  %2095 = vmatprep.subr.bf16.mxu0 %v1113
  %2096 = vmatpush1.bf16.msra.mxu0 %v1112
  %2097 = vmatprep.subr.bf16.mxu0 %v1107
  %2098 = vmatpush1.bf16.msra.mxu0 %v1106
  %2099 = vmatprep.subr.bf16.mxu0 %v1101
  %2100 = vmatpush1.bf16.msra.mxu0 %v1100
  %2101 = vmatprep.subr.bf16.mxu0 %v1095
  %2102 = vmatpush1.bf16.msra.mxu0 %v1094
  %2103 = vmatprep.subr.bf16.mxu0 %v1089
  %2104 = vmatpush1.bf16.msra.mxu0 %v1088
  %2105 = vmatprep.subr.bf16.mxu0 %v1083
  %2106 = vmatpush1.bf16.msra.mxu0 %v1082
  %2107 = vmatprep.subr.bf16.mxu0 %v1173
  %2108 = vmatpush2.bf16.msra.mxu0 %v1172
  %2109 = vmatprep.subr.bf16.mxu0 %v1167
  %2110 = vmatpush2.bf16.msra.mxu0 %v1166
  %2111 = vmatprep.subr.bf16.mxu0 %v1161
  %2112 = vmatpush2.bf16.msra.mxu0 %v1160
  %2113 = vmatprep.subr.bf16.mxu0 %v1155
  %2114 = vmatpush2.bf16.msra.mxu0 %v1154
  %2115 = vmatprep.subr.bf16.mxu0 %v1149
  %2116 = vmatpush2.bf16.msra.mxu0 %v1148
  %2117 = vmatprep.subr.bf16.mxu0 %v1143
  %2118 = vmatpush2.bf16.msra.mxu0 %v1142
  %2119 = vmatprep.subr.bf16.mxu0 %v1137
  %2120 = vmatpush2.bf16.msra.mxu0 %v1136
  %2121 = vmatprep.subr.bf16.mxu0 %v1131
  %2122 = vmatpush2.bf16.msra.mxu0 %v1130
  %2123 = vmatprep.mubr.bf16.mxu0 %v2008
  %2124 = vmatmul.mubr.bf16.gmra.mxu0 %v2007
  %v2125 = vpop.f32.mrf.mxu0
  %v2126 = vadd.f32 0.0, %v2125
  %v2127 = vpop.f32.mrf.mxu0
  %v2128 = vadd.f32 0.0, %v2127
  %v2129 = vpop.f32.mrf.mxu0
  %v2130 = vpop.f32.mrf.mxu0
  %2131 = vdwg.mxu0
  %s2132 = smul.addr %s1975, 8
  %s2133 = scalar_lea.vmem [#allocation3], %s2132
  %v2134 = vld [vmem:[%s2133] sm:$0xff]
  %v2135 = vld [vmem:[%s2133 + $0x8] sm:$0xff]
  %v2136 = vld [vmem:[%s2133 + $0x10] sm:$0xff]
  %v2137 = vadd.f32 %v2134, %v2044
  %v2138 = vadd.f32 %v2135, %v2046
  %v2139 = vxor.u32 %v2137, 2147483648
  %v2140 = vxor.u32 %v2138, 2147483648
  %v2141 = vmul.f32 %v2139, 1.442695
  %v2142 = vpow.pop %v2141
  %v2143 = vmul.f32 %v2140, 1.442695
  %v2144 = vpow.pop %v2143
  %v2145 = vadd.f32 %v2142, 1.0
  %v2146 = vadd.f32 %v2144, 1.0
  %v2147 = vrcp.pop %v2145
  %v2148 = vmul.f32 1.0, %v2147
  %v2149 = vrcp.pop %v2146
  %v2150 = vmul.f32 1.0, %v2149
  %v2151 = vadd.f32 %v2085, %v777
  %v2152 = vmul.f32 %v2148, %v2151
  %v2153 = vadd.f32 %v2136, %v2152
  %v2154 = vtanh.pop %v2153
  %v2155 = vsub.f32 1.0, %v2150
  %v2156 = vmul.f32 %v2155, %v2154
  %v2157 = vmul.f32 %v2150, %v1974
  %v2158 = vadd.f32 %v2156, %v2157
  %s2159 = smul.addr %s1947, 8
  %s2160 = scalar_lea.vmem [#allocation4], %s2159
  %v2161 = vld [vmem:[%s2160] sm:$0xff]
  %v2162 = vld [vmem:[%s2160 + $0x8] sm:$0xff]
  %v2163 = vld [vmem:[%s2160 + $0x10] sm:$0xff]
  %v2164 = vadd.f32 %v2161, %v2087
  %v2165 = vadd.f32 %v2162, %v2126
  %v2166 = vxor.u32 %v2164, 2147483648
  %v2167 = vxor.u32 %v2165, 2147483648
  %v2168 = vmul.f32 %v2166, 1.442695
  %v2169 = vpow.pop %v2168
  %v2170 = vmul.f32 %v2167, 1.442695
  %v2171 = vpow.pop %v2170
  %v2172 = vadd.f32 %v2169, 1.0
  %v2173 = vadd.f32 %v2171, 1.0
  %v2174 = vrcp.pop %v2172
  %v2175 = vmul.f32 1.0, %v2174
  %v2176 = vrcp.pop %v2173
  %v2177 = vmul.f32 1.0, %v2176
  %v2178 = vadd.f32 %v2128, %v784
  %v2179 = vmul.f32 %v2175, %v2178
  %v2180 = vadd.f32 %v2163, %v2179
  %v2181 = vtanh.pop %v2180
  %v2182 = vsub.f32 1.0, %v2177
  %v2183 = vmul.f32 %v2182, %v2181
  %v2184 = vmul.f32 %v2177, %v2002
  %v2185 = vadd.f32 %v2183, %v2184
  %s2186 = scalar_lea.vmem [#allocation5], 32
  %2187 = vst [vmem:[%s2186] sm:$0xff] %v2158
  %s2188 = scalar_lea.vmem [#allocation6], 24
  %2189 = vst [vmem:[%s2188] sm:$0xff] %v2185
  %v2190 = vpack.c.bf16 %v2158, %v2158
  %v2191 = vpack.c.bf16 %v2185, %v2185
  %2192 = vmatprep.subr.bf16.mxu0 %v1121
  %2193 = vmatpush1.bf16.msra.mxu0 %v1120
  %2194 = vmatprep.subr.bf16.mxu0 %v1115
  %2195 = vmatpush1.bf16.msra.mxu0 %v1114
  %2196 = vmatprep.subr.bf16.mxu0 %v1109
  %2197 = vmatpush1.bf16.msra.mxu0 %v1108
  %2198 = vmatprep.subr.bf16.mxu0 %v1103
  %2199 = vmatpush1.bf16.msra.mxu0 %v1102
  %2200 = vmatprep.subr.bf16.mxu0 %v1097
  %2201 = vmatpush1.bf16.msra.mxu0 %v1096
  %2202 = vmatprep.subr.bf16.mxu0 %v1091
  %2203 = vmatpush1.bf16.msra.mxu0 %v1090
  %2204 = vmatprep.subr.bf16.mxu0 %v1085
  %2205 = vmatpush1.bf16.msra.mxu0 %v1084
  %2206 = vmatprep.subr.bf16.mxu0 %v1079
  %2207 = vmatpush1.bf16.msra.mxu0 %v1078
  %2208 = vmatprep.subr.bf16.mxu0 %v1169
  %2209 = vmatpush2.bf16.msra.mxu0 %v1168
  %2210 = vmatprep.subr.bf16.mxu0 %v1163
  %2211 = vmatpush2.bf16.msra.mxu0 %v1162
  %2212 = vmatprep.subr.bf16.mxu0 %v1157
  %2213 = vmatpush2.bf16.msra.mxu0 %v1156
  %2214 = vmatprep.subr.bf16.mxu0 %v1151
  %2215 = vmatpush2.bf16.msra.mxu0 %v1150
  %2216 = vmatprep.subr.bf16.mxu0 %v1145
  %2217 = vmatpush2.bf16.msra.mxu0 %v1144
  %2218 = vmatprep.subr.bf16.mxu0 %v1139
  %2219 = vmatpush2.bf16.msra.mxu0 %v1138
  %2220 = vmatprep.subr.bf16.mxu0 %v1133
  %2221 = vmatpush2.bf16.msra.mxu0 %v1132
  %2222 = vmatprep.subr.bf16.mxu0 %v1127
  %2223 = vmatpush2.bf16.msra.mxu0 %v1126
  %2224 = vmatprep.mubr.bf16.mxu0 %v2191
  %2225 = vmatmul.mubr.bf16.gmra.mxu0 %v2190
  %v2226 = vpop.f32.mrf.mxu0
  %v2227 = vadd.f32 0.0, %v2226
  %v2228 = vpop.f32.mrf.mxu0
  %v2229 = vadd.f32 0.0, %v2228
  %v2230 = vpop.f32.mrf.mxu0
  %v2231 = vpop.f32.mrf.mxu0
  %2232 = vdwg.mxu0
  %2233 = vmatprep.subr.bf16.mxu0 %v1123
  %2234 = vmatpush1.bf16.msra.mxu0 %v1122
  %2235 = vmatprep.subr.bf16.mxu0 %v1117
  %2236 = vmatpush1.bf16.msra.mxu0 %v1116
  %2237 = vmatprep.subr.bf16.mxu0 %v1111
  %2238 = vmatpush1.bf16.msra.mxu0 %v1110
  %2239 = vmatprep.subr.bf16.mxu0 %v1105
  %2240 = vmatpush1.bf16.msra.mxu0 %v1104
  %2241 = vmatprep.subr.bf16.mxu0 %v1099
  %2242 = vmatpush1.bf16.msra.mxu0 %v1098
  %2243 = vmatprep.subr.bf16.mxu0 %v1093
  %2244 = vmatpush1.bf16.msra.mxu0 %v1092
  %2245 = vmatprep.subr.bf16.mxu0 %v1087
  %2246 = vmatpush1.bf16.msra.mxu0 %v1086
  %2247 = vmatprep.subr.bf16.mxu0 %v1081
  %2248 = vmatpush1.bf16.msra.mxu0 %v1080
  %2249 = vmatprep.subr.bf16.mxu0 %v1171
  %2250 = vmatpush2.bf16.msra.mxu0 %v1170
  %2251 = vmatprep.subr.bf16.mxu0 %v1165
  %2252 = vmatpush2.bf16.msra.mxu0 %v1164
  %2253 = vmatprep.subr.bf16.mxu0 %v1159
  %2254 = vmatpush2.bf16.msra.mxu0 %v1158
  %2255 = vmatprep.subr.bf16.mxu0 %v1153
  %2256 = vmatpush2.bf16.msra.mxu0 %v1152
  %2257 = vmatprep.subr.bf16.mxu0 %v1147
  %2258 = vmatpush2.bf16.msra.mxu0 %v1146
  %2259 = vmatprep.subr.bf16.mxu0 %v1141
  %2260 = vmatpush2.bf16.msra.mxu0 %v1140
  %2261 = vmatprep.subr.bf16.mxu0 %v1135
  %2262 = vmatpush2.bf16.msra.mxu0 %v1134
  %2263 = vmatprep.subr.bf16.mxu0 %v1129
  %2264 = vmatpush2.bf16.msra.mxu0 %v1128
  %2265 = vmatprep.mubr.bf16.mxu0 %v2191
  %2266 = vmatmul.mubr.bf16.gmra.mxu0 %v2190
  %v2267 = vpop.f32.mrf.mxu0
  %v2268 = vadd.f32 0.0, %v2267
  %v2269 = vpop.f32.mrf.mxu0
  %v2270 = vadd.f32 0.0, %v2269
  %v2271 = vpop.f32.mrf.mxu0
  %v2272 = vpop.f32.mrf.mxu0
  %2273 = vdwg.mxu0
  %2274 = vmatprep.subr.bf16.mxu0 %v1125
  %2275 = vmatpush1.bf16.msra.mxu0 %v1124
  %2276 = vmatprep.subr.bf16.mxu0 %v1119
  %2277 = vmatpush1.bf16.msra.mxu0 %v1118
  %2278 = vmatprep.subr.bf16.mxu0 %v1113
  %2279 = vmatpush1.bf16.msra.mxu0 %v1112
  %2280 = vmatprep.subr.bf16.mxu0 %v1107
  %2281 = vmatpush1.bf16.msra.mxu0 %v1106
  %2282 = vmatprep.subr.bf16.mxu0 %v1101
  %2283 = vmatpush1.bf16.msra.mxu0 %v1100
  %2284 = vmatprep.subr.bf16.mxu0 %v1095
  %2285 = vmatpush1.bf16.msra.mxu0 %v1094
  %2286 = vmatprep.subr.bf16.mxu0 %v1089
  %2287 = vmatpush1.bf16.msra.mxu0 %v1088
  %2288 = vmatprep.subr.bf16.mxu0 %v1083
  %2289 = vmatpush1.bf16.msra.mxu0 %v1082
  %2290 = vmatprep.subr.bf16.mxu0 %v1173
  %2291 = vmatpush2.bf16.msra.mxu0 %v1172
  %2292 = vmatprep.subr.bf16.mxu0 %v1167
  %2293 = vmatpush2.bf16.msra.mxu0 %v1166
  %2294 = vmatprep.subr.bf16.mxu0 %v1161
  %2295 = vmatpush2.bf16.msra.mxu0 %v1160
  %2296 = vmatprep.subr.bf16.mxu0 %v1155
  %2297 = vmatpush2.bf16.msra.mxu0 %v1154
  %2298 = vmatprep.subr.bf16.mxu0 %v1149
  %2299 = vmatpush2.bf16.msra.mxu0 %v1148
  %2300 = vmatprep.subr.bf16.mxu0 %v1143
  %2301 = vmatpush2.bf16.msra.mxu0 %v1142
  %2302 = vmatprep.subr.bf16.mxu0 %v1137
  %2303 = vmatpush2.bf16.msra.mxu0 %v1136
  %2304 = vmatprep.subr.bf16.mxu0 %v1131
  %2305 = vmatpush2.bf16.msra.mxu0 %v1130
  %2306 = vmatprep.mubr.bf16.mxu0 %v2191
  %2307 = vmatmul.mubr.bf16.gmra.mxu0 %v2190
  %v2308 = vpop.f32.mrf.mxu0
  %v2309 = vadd.f32 0.0, %v2308
  %v2310 = vpop.f32.mrf.mxu0
  %v2311 = vadd.f32 0.0, %v2310
  %v2312 = vpop.f32.mrf.mxu0
  %v2313 = vpop.f32.mrf.mxu0
  %2314 = vdwg.mxu0
  %s2315 = smul.addr %s1790, 8
  %s2316 = scalar_lea.vmem [#allocation3], %s2315
  %v2317 = vld [vmem:[%s2316] sm:$0xff]
  %v2318 = vld [vmem:[%s2316 + $0x8] sm:$0xff]
  %v2319 = vld [vmem:[%s2316 + $0x10] sm:$0xff]
  %v2320 = vadd.f32 %v2317, %v2227
  %v2321 = vadd.f32 %v2318, %v2229
  %v2322 = vxor.u32 %v2320, 2147483648
  %v2323 = vxor.u32 %v2321, 2147483648
  %v2324 = vmul.f32 %v2322, 1.442695
  %v2325 = vpow.pop %v2324
  %v2326 = vmul.f32 %v2323, 1.442695
  %v2327 = vpow.pop %v2326
  %v2328 = vadd.f32 %v2325, 1.0
  %v2329 = vadd.f32 %v2327, 1.0
  %v2330 = vrcp.pop %v2328
  %v2331 = vmul.f32 1.0, %v2330
  %v2332 = vrcp.pop %v2329
  %v2333 = vmul.f32 1.0, %v2332
  %v2334 = vadd.f32 %v2268, %v777
  %v2335 = vmul.f32 %v2331, %v2334
  %v2336 = vadd.f32 %v2319, %v2335
  %v2337 = vtanh.pop %v2336
  %v2338 = vsub.f32 1.0, %v2333
  %v2339 = vmul.f32 %v2338, %v2337
  %v2340 = vmul.f32 %v2333, %v2158
  %v2341 = vadd.f32 %v2339, %v2340
  %s2342 = smul.addr %s1762, 8
  %s2343 = scalar_lea.vmem [#allocation4], %s2342
  %v2344 = vld [vmem:[%s2343] sm:$0xff]
  %v2345 = vld [vmem:[%s2343 + $0x8] sm:$0xff]
  %v2346 = vld [vmem:[%s2343 + $0x10] sm:$0xff]
  %v2347 = vadd.f32 %v2344, %v2270
  %v2348 = vadd.f32 %v2345, %v2309
  %v2349 = vxor.u32 %v2347, 2147483648
  %v2350 = vxor.u32 %v2348, 2147483648
  %v2351 = vmul.f32 %v2349, 1.442695
  %v2352 = vpow.pop %v2351
  %v2353 = vmul.f32 %v2350, 1.442695
  %v2354 = vpow.pop %v2353
  %v2355 = vadd.f32 %v2352, 1.0
  %v2356 = vadd.f32 %v2354, 1.0
  %v2357 = vrcp.pop %v2355
  %v2358 = vmul.f32 1.0, %v2357
  %v2359 = vrcp.pop %v2356
  %v2360 = vmul.f32 1.0, %v2359
  %v2361 = vadd.f32 %v2311, %v784
  %v2362 = vmul.f32 %v2358, %v2361
  %v2363 = vadd.f32 %v2346, %v2362
  %v2364 = vtanh.pop %v2363
  %v2365 = vsub.f32 1.0, %v2360
  %v2366 = vmul.f32 %v2365, %v2364
  %v2367 = vmul.f32 %v2360, %v2185
  %v2368 = vadd.f32 %v2366, %v2367
  %s2369 = scalar_lea.vmem [#allocation5], 40
  %2370 = vst [vmem:[%s2369] sm:$0xff] %v2341
  %s2371 = scalar_lea.vmem [#allocation6], 16
  %2372 = vst [vmem:[%s2371] sm:$0xff] %v2368
  %v2373 = vpack.c.bf16 %v2341, %v2341
  %v2374 = vpack.c.bf16 %v2368, %v2368
  %2375 = vmatprep.subr.bf16.mxu0 %v1121
  %2376 = vmatpush1.bf16.msra.mxu0 %v1120
  %2377 = vmatprep.subr.bf16.mxu0 %v1115
  %2378 = vmatpush1.bf16.msra.mxu0 %v1114
  %2379 = vmatprep.subr.bf16.mxu0 %v1109
  %2380 = vmatpush1.bf16.msra.mxu0 %v1108
  %2381 = vmatprep.subr.bf16.mxu0 %v1103
  %2382 = vmatpush1.bf16.msra.mxu0 %v1102
  %2383 = vmatprep.subr.bf16.mxu0 %v1097
  %2384 = vmatpush1.bf16.msra.mxu0 %v1096
  %2385 = vmatprep.subr.bf16.mxu0 %v1091
  %2386 = vmatpush1.bf16.msra.mxu0 %v1090
  %2387 = vmatprep.subr.bf16.mxu0 %v1085
  %2388 = vmatpush1.bf16.msra.mxu0 %v1084
  %2389 = vmatprep.subr.bf16.mxu0 %v1079
  %2390 = vmatpush1.bf16.msra.mxu0 %v1078
  %2391 = vmatprep.subr.bf16.mxu0 %v1169
  %2392 = vmatpush2.bf16.msra.mxu0 %v1168
  %2393 = vmatprep.subr.bf16.mxu0 %v1163
  %2394 = vmatpush2.bf16.msra.mxu0 %v1162
  %2395 = vmatprep.subr.bf16.mxu0 %v1157
  %2396 = vmatpush2.bf16.msra.mxu0 %v1156
  %2397 = vmatprep.subr.bf16.mxu0 %v1151
  %2398 = vmatpush2.bf16.msra.mxu0 %v1150
  %2399 = vmatprep.subr.bf16.mxu0 %v1145
  %2400 = vmatpush2.bf16.msra.mxu0 %v1144
  %2401 = vmatprep.subr.bf16.mxu0 %v1139
  %2402 = vmatpush2.bf16.msra.mxu0 %v1138
  %2403 = vmatprep.subr.bf16.mxu0 %v1133
  %2404 = vmatpush2.bf16.msra.mxu0 %v1132
  %2405 = vmatprep.subr.bf16.mxu0 %v1127
  %2406 = vmatpush2.bf16.msra.mxu0 %v1126
  %2407 = vmatprep.mubr.bf16.mxu0 %v2374
  %2408 = vmatmul.mubr.bf16.gmra.mxu0 %v2373
  %v2409 = vpop.f32.mrf.mxu0
  %v2410 = vadd.f32 0.0, %v2409
  %v2411 = vpop.f32.mrf.mxu0
  %v2412 = vadd.f32 0.0, %v2411
  %v2413 = vpop.f32.mrf.mxu0
  %v2414 = vpop.f32.mrf.mxu0
  %2415 = vdwg.mxu0
  %2416 = vmatprep.subr.bf16.mxu0 %v1123
  %2417 = vmatpush1.bf16.msra.mxu0 %v1122
  %2418 = vmatprep.subr.bf16.mxu0 %v1117
  %2419 = vmatpush1.bf16.msra.mxu0 %v1116
  %2420 = vmatprep.subr.bf16.mxu0 %v1111
  %2421 = vmatpush1.bf16.msra.mxu0 %v1110
  %2422 = vmatprep.subr.bf16.mxu0 %v1105
  %2423 = vmatpush1.bf16.msra.mxu0 %v1104
  %2424 = vmatprep.subr.bf16.mxu0 %v1099
  %2425 = vmatpush1.bf16.msra.mxu0 %v1098
  %2426 = vmatprep.subr.bf16.mxu0 %v1093
  %2427 = vmatpush1.bf16.msra.mxu0 %v1092
  %2428 = vmatprep.subr.bf16.mxu0 %v1087
  %2429 = vmatpush1.bf16.msra.mxu0 %v1086
  %2430 = vmatprep.subr.bf16.mxu0 %v1081
  %2431 = vmatpush1.bf16.msra.mxu0 %v1080
  %2432 = vmatprep.subr.bf16.mxu0 %v1171
  %2433 = vmatpush2.bf16.msra.mxu0 %v1170
  %2434 = vmatprep.subr.bf16.mxu0 %v1165
  %2435 = vmatpush2.bf16.msra.mxu0 %v1164
  %2436 = vmatprep.subr.bf16.mxu0 %v1159
  %2437 = vmatpush2.bf16.msra.mxu0 %v1158
  %2438 = vmatprep.subr.bf16.mxu0 %v1153
  %2439 = vmatpush2.bf16.msra.mxu0 %v1152
  %2440 = vmatprep.subr.bf16.mxu0 %v1147
  %2441 = vmatpush2.bf16.msra.mxu0 %v1146
  %2442 = vmatprep.subr.bf16.mxu0 %v1141
  %2443 = vmatpush2.bf16.msra.mxu0 %v1140
  %2444 = vmatprep.subr.bf16.mxu0 %v1135
  %2445 = vmatpush2.bf16.msra.mxu0 %v1134
  %2446 = vmatprep.subr.bf16.mxu0 %v1129
  %2447 = vmatpush2.bf16.msra.mxu0 %v1128
  %2448 = vmatprep.mubr.bf16.mxu0 %v2374
  %2449 = vmatmul.mubr.bf16.gmra.mxu0 %v2373
  %v2450 = vpop.f32.mrf.mxu0
  %v2451 = vadd.f32 0.0, %v2450
  %v2452 = vpop.f32.mrf.mxu0
  %v2453 = vadd.f32 0.0, %v2452
  %v2454 = vpop.f32.mrf.mxu0
  %v2455 = vpop.f32.mrf.mxu0
  %2456 = vdwg.mxu0
  %2457 = vmatprep.subr.bf16.mxu0 %v1125
  %2458 = vmatpush1.bf16.msra.mxu0 %v1124
  %2459 = vmatprep.subr.bf16.mxu0 %v1119
  %2460 = vmatpush1.bf16.msra.mxu0 %v1118
  %2461 = vmatprep.subr.bf16.mxu0 %v1113
  %2462 = vmatpush1.bf16.msra.mxu0 %v1112
  %2463 = vmatprep.subr.bf16.mxu0 %v1107
  %2464 = vmatpush1.bf16.msra.mxu0 %v1106
  %2465 = vmatprep.subr.bf16.mxu0 %v1101
  %2466 = vmatpush1.bf16.msra.mxu0 %v1100
  %2467 = vmatprep.subr.bf16.mxu0 %v1095
  %2468 = vmatpush1.bf16.msra.mxu0 %v1094
  %2469 = vmatprep.subr.bf16.mxu0 %v1089
  %2470 = vmatpush1.bf16.msra.mxu0 %v1088
  %2471 = vmatprep.subr.bf16.mxu0 %v1083
  %2472 = vmatpush1.bf16.msra.mxu0 %v1082
  %2473 = vmatprep.subr.bf16.mxu0 %v1173
  %2474 = vmatpush2.bf16.msra.mxu0 %v1172
  %2475 = vmatprep.subr.bf16.mxu0 %v1167
  %2476 = vmatpush2.bf16.msra.mxu0 %v1166
  %2477 = vmatprep.subr.bf16.mxu0 %v1161
  %2478 = vmatpush2.bf16.msra.mxu0 %v1160
  %2479 = vmatprep.subr.bf16.mxu0 %v1155
  %2480 = vmatpush2.bf16.msra.mxu0 %v1154
  %2481 = vmatprep.subr.bf16.mxu0 %v1149
  %2482 = vmatpush2.bf16.msra.mxu0 %v1148
  %2483 = vmatprep.subr.bf16.mxu0 %v1143
  %2484 = vmatpush2.bf16.msra.mxu0 %v1142
  %2485 = vmatprep.subr.bf16.mxu0 %v1137
  %2486 = vmatpush2.bf16.msra.mxu0 %v1136
  %2487 = vmatprep.subr.bf16.mxu0 %v1131
  %2488 = vmatpush2.bf16.msra.mxu0 %v1130
  %2489 = vmatprep.mubr.bf16.mxu0 %v2374
  %2490 = vmatmul.mubr.bf16.gmra.mxu0 %v2373
  %v2491 = vpop.f32.mrf.mxu0
  %v2492 = vadd.f32 0.0, %v2491
  %v2493 = vpop.f32.mrf.mxu0
  %v2494 = vadd.f32 0.0, %v2493
  %v2495 = vpop.f32.mrf.mxu0
  %v2496 = vpop.f32.mrf.mxu0
  %2497 = vdwg.mxu0
  %s2498 = smul.addr %s1605, 8
  %s2499 = scalar_lea.vmem [#allocation3], %s2498
  %v2500 = vld [vmem:[%s2499] sm:$0xff]
  %v2501 = vld [vmem:[%s2499 + $0x8] sm:$0xff]
  %v2502 = vld [vmem:[%s2499 + $0x10] sm:$0xff]
  %v2503 = vadd.f32 %v2500, %v2410
  %v2504 = vadd.f32 %v2501, %v2412
  %v2505 = vxor.u32 %v2503, 2147483648
  %v2506 = vxor.u32 %v2504, 2147483648
  %v2507 = vmul.f32 %v2505, 1.442695
  %v2508 = vpow.pop %v2507
  %v2509 = vmul.f32 %v2506, 1.442695
  %v2510 = vpow.pop %v2509
  %v2511 = vadd.f32 %v2508, 1.0
  %v2512 = vadd.f32 %v2510, 1.0
  %v2513 = vrcp.pop %v2511
  %v2514 = vmul.f32 1.0, %v2513
  %v2515 = vrcp.pop %v2512
  %v2516 = vmul.f32 1.0, %v2515
  %v2517 = vadd.f32 %v2451, %v777
  %v2518 = vmul.f32 %v2514, %v2517
  %v2519 = vadd.f32 %v2502, %v2518
  %v2520 = vtanh.pop %v2519
  %v2521 = vsub.f32 1.0, %v2516
  %v2522 = vmul.f32 %v2521, %v2520
  %v2523 = vmul.f32 %v2516, %v2341
  %v2524 = vadd.f32 %v2522, %v2523
  %s2525 = smul.addr %s1577, 8
  %s2526 = scalar_lea.vmem [#allocation4], %s2525
  %v2527 = vld [vmem:[%s2526] sm:$0xff]
  %v2528 = vld [vmem:[%s2526 + $0x8] sm:$0xff]
  %v2529 = vld [vmem:[%s2526 + $0x10] sm:$0xff]
  %v2530 = vadd.f32 %v2527, %v2453
  %v2531 = vadd.f32 %v2528, %v2492
  %v2532 = vxor.u32 %v2530, 2147483648
  %v2533 = vxor.u32 %v2531, 2147483648
  %v2534 = vmul.f32 %v2532, 1.442695
  %v2535 = vpow.pop %v2534
  %v2536 = vmul.f32 %v2533, 1.442695
  %v2537 = vpow.pop %v2536
  %v2538 = vadd.f32 %v2535, 1.0
  %v2539 = vadd.f32 %v2537, 1.0
  %v2540 = vrcp.pop %v2538
  %v2541 = vmul.f32 1.0, %v2540
  %v2542 = vrcp.pop %v2539
  %v2543 = vmul.f32 1.0, %v2542
  %v2544 = vadd.f32 %v2494, %v784
  %v2545 = vmul.f32 %v2541, %v2544
  %v2546 = vadd.f32 %v2529, %v2545
  %v2547 = vtanh.pop %v2546
  %v2548 = vsub.f32 1.0, %v2543
  %v2549 = vmul.f32 %v2548, %v2547
  %v2550 = vmul.f32 %v2543, %v2368
  %v2551 = vadd.f32 %v2549, %v2550
  %s2552 = scalar_lea.vmem [#allocation5], 48
  %2553 = vst [vmem:[%s2552] sm:$0xff] %v2524
  %s2554 = scalar_lea.vmem [#allocation6], 8
  %2555 = vst [vmem:[%s2554] sm:$0xff] %v2551
  %v2556 = vpack.c.bf16 %v2524, %v2524
  %v2557 = vpack.c.bf16 %v2551, %v2551
  %2558 = vmatprep.subr.bf16.mxu0 %v1121
  %2559 = vmatpush1.bf16.msra.mxu0 %v1120
  %2560 = vmatprep.subr.bf16.mxu0 %v1115
  %2561 = vmatpush1.bf16.msra.mxu0 %v1114
  %2562 = vmatprep.subr.bf16.mxu0 %v1109
  %2563 = vmatpush1.bf16.msra.mxu0 %v1108
  %2564 = vmatprep.subr.bf16.mxu0 %v1103
  %2565 = vmatpush1.bf16.msra.mxu0 %v1102
  %2566 = vmatprep.subr.bf16.mxu0 %v1097
  %2567 = vmatpush1.bf16.msra.mxu0 %v1096
  %2568 = vmatprep.subr.bf16.mxu0 %v1091
  %2569 = vmatpush1.bf16.msra.mxu0 %v1090
  %2570 = vmatprep.subr.bf16.mxu0 %v1085
  %2571 = vmatpush1.bf16.msra.mxu0 %v1084
  %2572 = vmatprep.subr.bf16.mxu0 %v1079
  %2573 = vmatpush1.bf16.msra.mxu0 %v1078
  %2574 = vmatprep.subr.bf16.mxu0 %v1169
  %2575 = vmatpush2.bf16.msra.mxu0 %v1168
  %2576 = vmatprep.subr.bf16.mxu0 %v1163
  %2577 = vmatpush2.bf16.msra.mxu0 %v1162
  %2578 = vmatprep.subr.bf16.mxu0 %v1157
  %2579 = vmatpush2.bf16.msra.mxu0 %v1156
  %2580 = vmatprep.subr.bf16.mxu0 %v1151
  %2581 = vmatpush2.bf16.msra.mxu0 %v1150
  %2582 = vmatprep.subr.bf16.mxu0 %v1145
  %2583 = vmatpush2.bf16.msra.mxu0 %v1144
  %2584 = vmatprep.subr.bf16.mxu0 %v1139
  %2585 = vmatpush2.bf16.msra.mxu0 %v1138
  %2586 = vmatprep.subr.bf16.mxu0 %v1133
  %2587 = vmatpush2.bf16.msra.mxu0 %v1132
  %2588 = vmatprep.subr.bf16.mxu0 %v1127
  %2589 = vmatpush2.bf16.msra.mxu0 %v1126
  %2590 = vmatprep.mubr.bf16.mxu0 %v2557
  %2591 = vmatmul.mubr.bf16.gmra.mxu0 %v2556
  %v2592 = vpop.f32.mrf.mxu0
  %v2593 = vadd.f32 0.0, %v2592
  %v2594 = vpop.f32.mrf.mxu0
  %v2595 = vadd.f32 0.0, %v2594
  %v2596 = vpop.f32.mrf.mxu0
  %v2597 = vpop.f32.mrf.mxu0
  %2598 = vdwg.mxu0
  %2599 = vmatprep.subr.bf16.mxu0 %v1123
  %2600 = vmatpush1.bf16.msra.mxu0 %v1122
  %2601 = vmatprep.subr.bf16.mxu0 %v1117
  %2602 = vmatpush1.bf16.msra.mxu0 %v1116
  %2603 = vmatprep.subr.bf16.mxu0 %v1111
  %2604 = vmatpush1.bf16.msra.mxu0 %v1110
  %2605 = vmatprep.subr.bf16.mxu0 %v1105
  %2606 = vmatpush1.bf16.msra.mxu0 %v1104
  %2607 = vmatprep.subr.bf16.mxu0 %v1099
  %2608 = vmatpush1.bf16.msra.mxu0 %v1098
  %2609 = vmatprep.subr.bf16.mxu0 %v1093
  %2610 = vmatpush1.bf16.msra.mxu0 %v1092
  %2611 = vmatprep.subr.bf16.mxu0 %v1087
  %2612 = vmatpush1.bf16.msra.mxu0 %v1086
  %2613 = vmatprep.subr.bf16.mxu0 %v1081
  %2614 = vmatpush1.bf16.msra.mxu0 %v1080
  %2615 = vmatprep.subr.bf16.mxu0 %v1171
  %2616 = vmatpush2.bf16.msra.mxu0 %v1170
  %2617 = vmatprep.subr.bf16.mxu0 %v1165
  %2618 = vmatpush2.bf16.msra.mxu0 %v1164
  %2619 = vmatprep.subr.bf16.mxu0 %v1159
  %2620 = vmatpush2.bf16.msra.mxu0 %v1158
  %2621 = vmatprep.subr.bf16.mxu0 %v1153
  %2622 = vmatpush2.bf16.msra.mxu0 %v1152
  %2623 = vmatprep.subr.bf16.mxu0 %v1147
  %2624 = vmatpush2.bf16.msra.mxu0 %v1146
  %2625 = vmatprep.subr.bf16.mxu0 %v1141
  %2626 = vmatpush2.bf16.msra.mxu0 %v1140
  %2627 = vmatprep.subr.bf16.mxu0 %v1135
  %2628 = vmatpush2.bf16.msra.mxu0 %v1134
  %2629 = vmatprep.subr.bf16.mxu0 %v1129
  %2630 = vmatpush2.bf16.msra.mxu0 %v1128
  %2631 = vmatprep.mubr.bf16.mxu0 %v2557
  %2632 = vmatmul.mubr.bf16.gmra.mxu0 %v2556
  %v2633 = vpop.f32.mrf.mxu0
  %v2634 = vadd.f32 0.0, %v2633
  %v2635 = vpop.f32.mrf.mxu0
  %v2636 = vadd.f32 0.0, %v2635
  %v2637 = vpop.f32.mrf.mxu0
  %v2638 = vpop.f32.mrf.mxu0
  %2639 = vdwg.mxu0
  %2640 = vmatprep.subr.bf16.mxu0 %v1125
  %2641 = vmatpush1.bf16.msra.mxu0 %v1124
  %2642 = vmatprep.subr.bf16.mxu0 %v1119
  %2643 = vmatpush1.bf16.msra.mxu0 %v1118
  %2644 = vmatprep.subr.bf16.mxu0 %v1113
  %2645 = vmatpush1.bf16.msra.mxu0 %v1112
  %2646 = vmatprep.subr.bf16.mxu0 %v1107
  %2647 = vmatpush1.bf16.msra.mxu0 %v1106
  %2648 = vmatprep.subr.bf16.mxu0 %v1101
  %2649 = vmatpush1.bf16.msra.mxu0 %v1100
  %2650 = vmatprep.subr.bf16.mxu0 %v1095
  %2651 = vmatpush1.bf16.msra.mxu0 %v1094
  %2652 = vmatprep.subr.bf16.mxu0 %v1089
  %2653 = vmatpush1.bf16.msra.mxu0 %v1088
  %2654 = vmatprep.subr.bf16.mxu0 %v1083
  %2655 = vmatpush1.bf16.msra.mxu0 %v1082
  %2656 = vmatprep.subr.bf16.mxu0 %v1173
  %2657 = vmatpush2.bf16.msra.mxu0 %v1172
  %2658 = vmatprep.subr.bf16.mxu0 %v1167
  %2659 = vmatpush2.bf16.msra.mxu0 %v1166
  %2660 = vmatprep.subr.bf16.mxu0 %v1161
  %2661 = vmatpush2.bf16.msra.mxu0 %v1160
  %2662 = vmatprep.subr.bf16.mxu0 %v1155
  %2663 = vmatpush2.bf16.msra.mxu0 %v1154
  %2664 = vmatprep.subr.bf16.mxu0 %v1149
  %2665 = vmatpush2.bf16.msra.mxu0 %v1148
  %2666 = vmatprep.subr.bf16.mxu0 %v1143
  %2667 = vmatpush2.bf16.msra.mxu0 %v1142
  %2668 = vmatprep.subr.bf16.mxu0 %v1137
  %2669 = vmatpush2.bf16.msra.mxu0 %v1136
  %2670 = vmatprep.subr.bf16.mxu0 %v1131
  %2671 = vmatpush2.bf16.msra.mxu0 %v1130
  %2672 = vmatprep.mubr.bf16.mxu0 %v2557
  %2673 = vmatmul.mubr.bf16.gmra.mxu0 %v2556
  %v2674 = vpop.f32.mrf.mxu0
  %v2675 = vadd.f32 0.0, %v2674
  %v2676 = vpop.f32.mrf.mxu0
  %v2677 = vadd.f32 0.0, %v2676
  %v2678 = vpop.f32.mrf.mxu0
  %v2679 = vpop.f32.mrf.mxu0
  %2680 = vdwg.mxu0
  %s2681 = smul.addr %s1421, 8
  %s2682 = scalar_lea.vmem [#allocation3], %s2681
  %v2683 = vld [vmem:[%s2682] sm:$0xff]
  %v2684 = vld [vmem:[%s2682 + $0x8] sm:$0xff]
  %v2685 = vld [vmem:[%s2682 + $0x10] sm:$0xff]
  %v2686 = vadd.f32 %v2683, %v2593
  %v2687 = vadd.f32 %v2684, %v2595
  %v2688 = vxor.u32 %v2686, 2147483648
  %v2689 = vxor.u32 %v2687, 2147483648
  %v2690 = vmul.f32 %v2688, 1.442695
  %v2691 = vpow.pop %v2690
  %v2692 = vmul.f32 %v2689, 1.442695
  %v2693 = vpow.pop %v2692
  %v2694 = vadd.f32 %v2691, 1.0
  %v2695 = vadd.f32 %v2693, 1.0
  %v2696 = vrcp.pop %v2694
  %v2697 = vmul.f32 1.0, %v2696
  %v2698 = vrcp.pop %v2695
  %v2699 = vmul.f32 1.0, %v2698
  %v2700 = vadd.f32 %v2634, %v777
  %v2701 = vmul.f32 %v2697, %v2700
  %v2702 = vadd.f32 %v2685, %v2701
  %v2703 = vtanh.pop %v2702
  %v2704 = vsub.f32 1.0, %v2699
  %v2705 = vmul.f32 %v2704, %v2703
  %v2706 = vmul.f32 %v2699, %v2524
  %v2707 = vadd.f32 %v2705, %v2706
  %s2708 = smul.addr %s1393, 8
  %s2709 = scalar_lea.vmem [#allocation4], %s2708
  %v2710 = vld [vmem:[%s2709] sm:$0xff]
  %v2711 = vld [vmem:[%s2709 + $0x8] sm:$0xff]
  %v2712 = vld [vmem:[%s2709 + $0x10] sm:$0xff]
  %v2713 = vadd.f32 %v2710, %v2636
  %v2714 = vadd.f32 %v2711, %v2675
  %v2715 = vxor.u32 %v2713, 2147483648
  %v2716 = vxor.u32 %v2714, 2147483648
  %v2717 = vmul.f32 %v2715, 1.442695
  %v2718 = vpow.pop %v2717
  %v2719 = vmul.f32 %v2716, 1.442695
  %v2720 = vpow.pop %v2719
  %v2721 = vadd.f32 %v2718, 1.0
  %v2722 = vadd.f32 %v2720, 1.0
  %v2723 = vrcp.pop %v2721
  %v2724 = vmul.f32 1.0, %v2723
  %v2725 = vrcp.pop %v2722
  %v2726 = vmul.f32 1.0, %v2725
  %v2727 = vadd.f32 %v2677, %v784
  %v2728 = vmul.f32 %v2724, %v2727
  %v2729 = vadd.f32 %v2712, %v2728
  %v2730 = vtanh.pop %v2729
  %v2731 = vsub.f32 1.0, %v2726
  %v2732 = vmul.f32 %v2731, %v2730
  %v2733 = vmul.f32 %v2726, %v2551
  %v2734 = vadd.f32 %v2732, %v2733
  %s2735 = scalar_lea.vmem [#allocation5], 56
  %2736 = vst [vmem:[%s2735] sm:$0xff] %v2707
  %2737 = vst [vmem:[#allocation6] sm:$0xff] %v2734
  %2738 = vst [vmem:[#allocation2] sm:$0xff] %v2707
  %2739 = vst [vmem:[#allocation2 + $0x8] sm:$0xff] %v2734
  %v2740 = vld [vmem:[#allocation5] sm:$0xff]
  %v2741 = vld [vmem:[#allocation5 + $0x8] sm:$0xff]
  %v2742 = vld [vmem:[#allocation5 + $0x10] sm:$0xff]
  %v2743 = vld [vmem:[#allocation5 + $0x18] sm:$0xff]
  %v2744 = vld [vmem:[#allocation5 + $0x20] sm:$0xff]
  %v2745 = vld [vmem:[#allocation5 + $0x28] sm:$0xff]
  %v2746 = vld [vmem:[#allocation5 + $0x30] sm:$0xff]
  %v2747 = vld [vmem:[#allocation5 + $0x38] sm:$0xff]
  %v2748 = vpack.c.bf16 %v2741, %v2740
  %v2749 = vpack.c.bf16 %v2743, %v2742
  %v2750 = vpack.c.bf16 %v2745, %v2744
  %v2751 = vpack.c.bf16 %v2747, %v2746
  %v2756 = vunpack.c.l.b16 %v2748
  %v2757 = vunpack.c.h.b16 %v2748
  %v2758 = vunpack.c.l.b16 %v2749
  %v2759 = vunpack.c.h.b16 %v2749
  %v2760 = vunpack.c.l.b16 %v2750
  %v2761 = vunpack.c.h.b16 %v2750
  %v2762 = vunpack.c.l.b16 %v2751
  %v2763 = vunpack.c.h.b16 %v2751
  %v2764 = vpack.c.b16 %v2756, %v2756
  %v2765 = vpack.c.b16 %v2757, %v2757
  %v2766 = vpack.c.b16 %v2758, %v2758
  %v2767 = vpack.c.b16 %v2759, %v2759
  %v2768 = vpack.c.b16 %v2760, %v2760
  %v2769 = vpack.c.b16 %v2761, %v2761
  %v2770 = vpack.c.b16 %v2762, %v2762
  %v2771 = vpack.c.b16 %v2763, %v2763
  %2780 = vst [vmem:[%s9] sm:$0xf] %v2764
  %2781 = vst [vmem:[%s9 + $0x4] sm:$0xf] %v2765
  %2782 = vst [vmem:[%s9 + $0x8] sm:$0xf] %v2766
  %2783 = vst [vmem:[%s9 + $0xc] sm:$0xf] %v2767
  %2784 = vst [vmem:[%s9 + $0x10] sm:$0xf] %v2768
  %2785 = vst [vmem:[%s9 + $0x14] sm:$0xf] %v2769
  %2786 = vst [vmem:[%s9 + $0x18] sm:$0xf] %v2770
  %2787 = vst [vmem:[%s9 + $0x1c] sm:$0xf] %v2771
  %v2788 = vld [vmem:[#allocation6] sm:$0xff]
  %v2789 = vld [vmem:[#allocation6 + $0x8] sm:$0xff]
  %v2790 = vld [vmem:[#allocation6 + $0x10] sm:$0xff]
  %v2791 = vld [vmem:[#allocation6 + $0x18] sm:$0xff]
  %v2792 = vld [vmem:[#allocation6 + $0x20] sm:$0xff]
  %v2793 = vld [vmem:[#allocation6 + $0x28] sm:$0xff]
  %v2794 = vld [vmem:[#allocation6 + $0x30] sm:$0xff]
  %v2795 = vld [vmem:[#allocation6 + $0x38] sm:$0xff]
  %v2796 = vpack.c.bf16 %v2789, %v2788
  %v2797 = vpack.c.bf16 %v2791, %v2790
  %v2798 = vpack.c.bf16 %v2793, %v2792
  %v2799 = vpack.c.bf16 %v2795, %v2794
  %v2804 = vunpack.c.l.b16 %v2796
  %v2805 = vunpack.c.h.b16 %v2796
  %v2806 = vunpack.c.l.b16 %v2797
  %v2807 = vunpack.c.h.b16 %v2797
  %v2808 = vunpack.c.l.b16 %v2798
  %v2809 = vunpack.c.h.b16 %v2798
  %v2810 = vunpack.c.l.b16 %v2799
  %v2811 = vunpack.c.h.b16 %v2799
  %v2812 = vpack.c.b16 %v2804, %v2804
  %v2813 = vpack.c.b16 %v2805, %v2805
  %v2814 = vpack.c.b16 %v2806, %v2806
  %v2815 = vpack.c.b16 %v2807, %v2807
  %v2816 = vpack.c.b16 %v2808, %v2808
  %v2817 = vpack.c.b16 %v2809, %v2809
  %v2818 = vpack.c.b16 %v2810, %v2810
  %v2819 = vpack.c.b16 %v2811, %v2811
  %2828 = vst [vmem:[%s67] sm:$0xf] %v2812
  %2829 = vst [vmem:[%s67 + $0x4] sm:$0xf] %v2813
  %2830 = vst [vmem:[%s67 + $0x8] sm:$0xf] %v2814
  %2831 = vst [vmem:[%s67 + $0xc] sm:$0xf] %v2815
  %2832 = vst [vmem:[%s67 + $0x10] sm:$0xf] %v2816
  %2833 = vst [vmem:[%s67 + $0x14] sm:$0xf] %v2817
  %2834 = vst [vmem:[%s67 + $0x18] sm:$0xf] %v2818
  %2835 = vst [vmem:[%s67 + $0x1c] sm:$0xf] %v2819
  %s2836 = ssub.s32 0, 0
  %s2837 = smul.u32 8, %s2836
  %p2838 = scmp.lt.s32.totalorder %s2837, 7
  %s2839 = scalar_select %p2838, %s2837, 7
  %s2840 = smul.addr %s2839, 4
  %s2841 = scalar_lea.vmem %s10, %s2840
  // Predicated region
  $region42: #{rnn_gru_forward.2} parent=0 // pred_check
    _
  $region43: #{rnn_gru_forward.2} parent=0 // pred_check_branch
    %2843 = sbr.rel (0) target = $region45
  $region44: #{rnn_gru_forward.2} parent=0 // pred_region
    _
  $region45: #{rnn_gru_forward.2} parent=0 // pred_fallthru
    _
  // Predicated region
  $region46: #{rnn_gru_forward.2} parent=0 // pred_check
    _
  $region47: #{rnn_gru_forward.2} parent=0 // pred_check_branch
    %2845 = sbr.rel (0) target = $region49
  $region48: #{rnn_gru_forward.2} parent=0 // pred_region
    %s2846 = ssub.s32 0, 0
    %s2847 = smul.u32 8, %s2846
  $region49: #{rnn_gru_forward.2} parent=0 // pred_fallthru
    _
  // Predicated region
  $region50: #{rnn_gru_forward.2} parent=0 // pred_check
    _
  $region51: #{rnn_gru_forward.2} parent=0 // pred_check_branch
    %2849 = sbr.rel (0) target = $region53
  $region52: #{rnn_gru_forward.2} parent=0 // pred_region
    _
  $region53: #{rnn_gru_forward.2} parent=0 // pred_fallthru
    _
  // Predicated region
  $region54: #{rnn_gru_forward.2} parent=0 // pred_check
    _
  $region55: #{rnn_gru_forward.2} parent=0 // pred_check_branch
    %2851 = sbr.rel (0) target = $region57
  $region56: #{rnn_gru_forward.2} parent=0 // pred_region
    %s2852 = ssub.s32 0, 0
    %s2853 = smul.u32 8, %s2852
    %p2854 = scmp.lt.s32.totalorder %s2853, 7
    %s2855 = scalar_select %p2854, %s2853, 7
    %s2856 = smul.addr %s2855, 4
    %s2857 = scalar_lea.vmem %s10, %s2856
  $region57: #{rnn_gru_forward.2} parent=0 // pred_fallthru
    _

// kernel: rnn_gru_forward.3
$region0: #{rnn_gru_forward.3}
  #allocation0 [shape = 'u32[]', space=smem, size = 0x4, offset = 0x4, fixed_abs, tag = 'smem constant byte address 0x4 - core index']
  #allocation1 [shape = 'u32[144,128]{1,0:T(1,128)}', space=vmem, size = 0x12000, scoped, tag = 'internal scratch']
  #allocation2 [shape = 'f32[8,256]{1,0:T(8,128)}', space=vmem, size = 0x2000, scoped, tag = 'scratch operand']
  #allocation3 [shape = 'f32[64,384]{1,0:T(8,128)}', space=vmem, size = 0x18000, scoped, tag = 'scratch operand']
  #allocation4 [shape = 'f32[64,384]{1,0:T(8,128)}', space=vmem, size = 0x18000, scoped, tag = 'scratch operand']
  %s0 = inlined_call_operand.vmem [shape: bf16[64,128], index: 0, kind: input, shape index: {}, may-alias: {0,2}]
  %s1 = inlined_call_operand.vmem [shape: bf16[64,128], index: 1, kind: input, shape index: {}, may-alias: {1,3}]
  %s2 = inlined_call_operand.vmem [shape: bf16[64,128], index: 2, kind: input, shape index: {}, may-alias: {0,2}]
  %s3 = inlined_call_operand.vmem [shape: bf16[64,128], index: 3, kind: input, shape index: {}, may-alias: {1,3}]
  %s4 = inlined_call_operand.vmem [shape: bf16[128,384], index: 4, kind: input, shape index: {}]
  %s5 = inlined_call_operand.vmem [shape: bf16[128,384], index: 5, kind: input, shape index: {}]
  %s6 = inlined_call_operand.vmem [shape: bf16[128,384], index: 6, kind: input, shape index: {}]
  %s7 = inlined_call_operand.vmem [shape: bf16[128,384], index: 7, kind: input, shape index: {}]
  %s8 = inlined_call_operand.vmem [shape: bf16[256,768], index: 8, kind: input, shape index: {}]
  %s9 = inlined_call_operand.vmem [shape: f32[1,384], index: 9, kind: input, shape index: {}]
  %s10 = inlined_call_operand.vmem [shape: f32[1,384], index: 10, kind: input, shape index: {}]
  %s11 = inlined_call_operand.vmem [shape: f32[1,128], index: 11, kind: input, shape index: {}]
  %s12 = inlined_call_operand.vmem [shape: f32[1,128], index: 12, kind: input, shape index: {}]
  %s13 = inlined_call_operand.vmem [shape: f32[128,32], index: 13, kind: input, shape index: {}]
  %s14 = inlined_call_operand.vmem [shape: f32[128,32], index: 14, kind: input, shape index: {}]
  %s15 = inlined_call_operand.vmem [shape: f32[1,32], index: 15, kind: input, shape index: {}]
  %s16 = inlined_call_operand.vmem [shape: f32[32,128], index: 16, kind: input, shape index: {}]
  %s17 = inlined_call_operand.vmem [shape: f32[1,128], index: 17, kind: input, shape index: {}]
  %s18 = inlined_call_operand.vmem [shape: f32[8,128], index: 18, kind: output, shape index: {}]
  %s19 = sld [smem:[#allocation0]]
  $region90: #{rnn_gru_forward.3} parent=0
    _
  %s21 = ssub.s32 1, %s19
  %s22 = scalar_select 0, %s21, %s19
  // Predicated region
  $region2: #{rnn_gru_forward.3} parent=0 // pred_check
    _
  $region3: #{rnn_gru_forward.3} parent=0 // pred_check_branch
    %24 = sbr.rel (0) target = $region5
  $region4: #{rnn_gru_forward.3} parent=0 // pred_region
    _
  $region5: #{rnn_gru_forward.3} parent=0 // pred_fallthru
    _
  // Predicated region
  $region6: #{rnn_gru_forward.3} parent=0 // pred_check
    _
  $region7: #{rnn_gru_forward.3} parent=0 // pred_check_branch
    %26 = sbr.rel (0) target = $region9
  $region8: #{rnn_gru_forward.3} parent=0 // pred_region
    _
  $region9: #{rnn_gru_forward.3} parent=0 // pred_fallthru
    _
  // Predicated region
  $region10: #{rnn_gru_forward.3} parent=0 // pred_check
    _
  $region11: #{rnn_gru_forward.3} parent=0 // pred_check_branch
    %28 = sbr.rel (0) target = $region13
  $region12: #{rnn_gru_forward.3} parent=0 // pred_region
    %s29 = ssub.s32 0, 0
    %s30 = smul.u32 8, %s29
    %p31 = scmp.lt.s32.totalorder %s30, 7
    %s32 = scalar_select %p31, %s30, 7
    %s33 = smul.addr %s32, 4
    %s34 = scalar_lea.vmem %s2, %s33
    %s35 = ssub.s32 0, 0
    %s36 = smul.u32 8, %s35
  $region13: #{rnn_gru_forward.3} parent=0 // pred_fallthru
    _
  // Predicated region
  $region14: #{rnn_gru_forward.3} parent=0 // pred_check
    _
  $region15: #{rnn_gru_forward.3} parent=0 // pred_check_branch
    %38 = sbr.rel (0) target = $region17
  $region16: #{rnn_gru_forward.3} parent=0 // pred_region
    %s39 = ssub.s32 0, 0
    %s40 = smul.u32 8, %s39
    %p41 = scmp.lt.s32.totalorder %s40, 7
    %s42 = scalar_select %p41, %s40, 7
    %s43 = smul.addr %s42, 4
    %s44 = scalar_lea.vmem %s3, %s43
    %s45 = ssub.s32 0, 0
    %s46 = smul.u32 8, %s45
  $region17: #{rnn_gru_forward.3} parent=0 // pred_fallthru
    _
  // Predicated region
  $region18: #{rnn_gru_forward.3} parent=0 // pred_check
    _
  $region19: #{rnn_gru_forward.3} parent=0 // pred_check_branch
    %48 = sbr.rel (0) target = $region21
  $region20: #{rnn_gru_forward.3} parent=0 // pred_region
    _
  $region21: #{rnn_gru_forward.3} parent=0 // pred_fallthru
    _
  // Predicated region
  $region22: #{rnn_gru_forward.3} parent=0 // pred_check
    _
  $region23: #{rnn_gru_forward.3} parent=0 // pred_check_branch
    %50 = sbr.rel (0) target = $region25
  $region24: #{rnn_gru_forward.3} parent=0 // pred_region
    _
  $region25: #{rnn_gru_forward.3} parent=0 // pred_fallthru
    _
  // Predicated region
  $region26: #{rnn_gru_forward.3} parent=0 // pred_check
    _
  $region27: #{rnn_gru_forward.3} parent=0 // pred_check_branch
    %52 = sbr.rel (0) target = $region29
  $region28: #{rnn_gru_forward.3} parent=0 // pred_region
    _
  $region29: #{rnn_gru_forward.3} parent=0 // pred_fallthru
    _
  // Predicated region
  $region30: #{rnn_gru_forward.3} parent=0 // pred_check
    _
  $region31: #{rnn_gru_forward.3} parent=0 // pred_check_branch
    %54 = sbr.rel (0) target = $region33
  $region32: #{rnn_gru_forward.3} parent=0 // pred_region
    _
  $region33: #{rnn_gru_forward.3} parent=0 // pred_fallthru
    _
  // Predicated region
  $region34: #{rnn_gru_forward.3} parent=0 // pred_check
    _
  $region35: #{rnn_gru_forward.3} parent=0 // pred_check_branch
    %56 = sbr.rel (0) target = $region37
  $region36: #{rnn_gru_forward.3} parent=0 // pred_region
    _
  $region37: #{rnn_gru_forward.3} parent=0 // pred_fallthru
    _
  // Predicated region
  $region38: #{rnn_gru_forward.3} parent=0 // pred_check
    _
  $region39: #{rnn_gru_forward.3} parent=0 // pred_check_branch
    %58 = sbr.rel (0) target = $region41
  $region40: #{rnn_gru_forward.3} parent=0 // pred_region
    _
  $region41: #{rnn_gru_forward.3} parent=0 // pred_fallthru
    _
  // Predicated region
  $region42: #{rnn_gru_forward.3} parent=0 // pred_check
    _
  $region43: #{rnn_gru_forward.3} parent=0 // pred_check_branch
    %60 = sbr.rel (0) target = $region45
  $region44: #{rnn_gru_forward.3} parent=0 // pred_region
    _
  $region45: #{rnn_gru_forward.3} parent=0 // pred_fallthru
    _
  // Predicated region
  $region46: #{rnn_gru_forward.3} parent=0 // pred_check
    _
  $region47: #{rnn_gru_forward.3} parent=0 // pred_check_branch
    %62 = sbr.rel (0) target = $region49
  $region48: #{rnn_gru_forward.3} parent=0 // pred_region
    _
  $region49: #{rnn_gru_forward.3} parent=0 // pred_fallthru
    _
  // Predicated region
  $region50: #{rnn_gru_forward.3} parent=0 // pred_check
    _
  $region51: #{rnn_gru_forward.3} parent=0 // pred_check_branch
    %64 = sbr.rel (0) target = $region53
  $region52: #{rnn_gru_forward.3} parent=0 // pred_region
    _
  $region53: #{rnn_gru_forward.3} parent=0 // pred_fallthru
    _
  // Predicated region
  $region54: #{rnn_gru_forward.3} parent=0 // pred_check
    _
  $region55: #{rnn_gru_forward.3} parent=0 // pred_check_branch
    %66 = sbr.rel (0) target = $region57
  $region56: #{rnn_gru_forward.3} parent=0 // pred_region
    _
  $region57: #{rnn_gru_forward.3} parent=0 // pred_fallthru
    _
  // Predicated region
  $region58: #{rnn_gru_forward.3} parent=0 // pred_check
    _
  $region59: #{rnn_gru_forward.3} parent=0 // pred_check_branch
    %68 = sbr.rel (0) target = $region61
  $region60: #{rnn_gru_forward.3} parent=0 // pred_region
    _
  $region61: #{rnn_gru_forward.3} parent=0 // pred_fallthru
    _
  // Predicated region
  $region62: #{rnn_gru_forward.3} parent=0 // pred_check
    _
  $region63: #{rnn_gru_forward.3} parent=0 // pred_check_branch
    %70 = sbr.rel (0) target = $region65
  $region64: #{rnn_gru_forward.3} parent=0 // pred_region
    _
  $region65: #{rnn_gru_forward.3} parent=0 // pred_fallthru
    _
  // Predicated region
  $region66: #{rnn_gru_forward.3} parent=0 // pred_check
    _
  $region67: #{rnn_gru_forward.3} parent=0 // pred_check_branch
    %72 = sbr.rel (0) target = $region69
  $region68: #{rnn_gru_forward.3} parent=0 // pred_region
    _
  $region69: #{rnn_gru_forward.3} parent=0 // pred_fallthru
    _
  // Predicated region
  $region70: #{rnn_gru_forward.3} parent=0 // pred_check
    _
  $region71: #{rnn_gru_forward.3} parent=0 // pred_check_branch
    %74 = sbr.rel (0) target = $region73
  $region72: #{rnn_gru_forward.3} parent=0 // pred_region
    _
  $region73: #{rnn_gru_forward.3} parent=0 // pred_fallthru
    _
  %s75 = ssub.s32 0, 0
  %s76 = smul.u32 8, %s75
  %p77 = scmp.lt.s32.totalorder %s76, 7
  %s78 = scalar_select %p77, %s76, 7
  %s79 = smul.addr %s78, 4
  %s80 = scalar_lea.vmem %s2, %s79
  %s81 = ssub.s32 0, 0
  %s82 = smul.u32 8, %s81
  %p83 = scmp.lt.s32.totalorder %s82, 7
  %s84 = scalar_select %p83, %s82, 7
  %s85 = smul.addr %s84, 4
  %s86 = scalar_lea.vmem %s3, %s85
  %s87 = ssub.s32 0, 0
  %s88 = smul.u32 8, %s87
  %p89 = scmp.lt.s32.totalorder %s88, 7
  %s90 = scalar_select %p89, %s88, 7
  %s91 = smul.addr %s90, 4
  %s92 = scalar_lea.vmem %s2, %s91
  %s93 = ssub.s32 0, 0
  %s94 = smul.u32 8, %s93
  %s95 = ssub.s32 0, 0
  %s96 = smul.u32 8, %s95
  %p97 = scmp.lt.s32.totalorder %s96, 7
  %s98 = scalar_select %p97, %s96, 7
  %s99 = smul.addr %s98, 4
  %s100 = scalar_lea.vmem %s3, %s99
  %s101 = ssub.s32 0, 0
  %s102 = smul.u32 8, %s101
  %p104 = scmp.eq.s32.totalorder 0, 0
  // Predicated region
  $region74: #{rnn_gru_forward.3} parent=0 // pred_check
    %p105 = pneg %p104
  $region75: #{rnn_gru_forward.3} parent=0 // pred_check_branch
    %107 = sbr.rel (%p105) target = $region77
  $region76: #{rnn_gru_forward.3} parent=0 // pred_region
    %108 = vst [vmem:[#allocation2] sm:$0xff] 0.0
    %109 = vst [vmem:[#allocation2 + $0x8] sm:$0xff] 0.0
  $region77: #{rnn_gru_forward.3} parent=0 // pred_fallthru
    _
  %v110 = vld [vmem:[%s0] sm:$0xf]
  %v111 = vld [vmem:[%s0 + $0x4] sm:$0xf]
  %v112 = vld [vmem:[%s0 + $0x8] sm:$0xf]
  %v113 = vld [vmem:[%s0 + $0xc] sm:$0xf]
  %v114 = vld [vmem:[%s0 + $0x10] sm:$0xf]
  %v115 = vld [vmem:[%s0 + $0x14] sm:$0xf]
  %v116 = vld [vmem:[%s0 + $0x18] sm:$0xf]
  %v117 = vld [vmem:[%s0 + $0x1c] sm:$0xf]
  %v118 = vld [vmem:[%s4] sm:$0xff]
  %v119 = vld [vmem:[%s4 + $0x8] sm:$0xf]
  %v120 = vld [vmem:[%s4 + $0xc] sm:$0xff]
  %v121 = vld [vmem:[%s4 + $0x14] sm:$0xf]
  %v122 = vld [vmem:[%s4 + $0x18] sm:$0xff]
  %v123 = vld [vmem:[%s4 + $0x20] sm:$0xf]
  %v124 = vld [vmem:[%s4 + $0x24] sm:$0xff]
  %v125 = vld [vmem:[%s4 + $0x2c] sm:$0xf]
  %v126 = vld [vmem:[%s4 + $0x30] sm:$0xff]
  %v127 = vld [vmem:[%s4 + $0x38] sm:$0xf]
  %v128 = vld [vmem:[%s4 + $0x3c] sm:$0xff]
  %v129 = vld [vmem:[%s4 + $0x44] sm:$0xf]
  %v130 = vld [vmem:[%s4 + $0x48] sm:$0xff]
  %v131 = vld [vmem:[%s4 + $0x50] sm:$0xf]
  %v132 = vld [vmem:[%s4 + $0x54] sm:$0xff]
  %v133 = vld [vmem:[%s4 + $0x5c] sm:$0xf]
  %v134 = vld [vmem:[%s4 + $0x60] sm:$0xff]
  %v135 = vld [vmem:[%s4 + $0x68] sm:$0xf]
  %v136 = vld [vmem:[%s4 + $0x6c] sm:$0xff]
  %v137 = vld [vmem:[%s4 + $0x74] sm:$0xf]
  %v138 = vld [vmem:[%s4 + $0x78] sm:$0xff]
  %v139 = vld [vmem:[%s4 + $0x80] sm:$0xf]
  %v140 = vld [vmem:[%s4 + $0x84] sm:$0xff]
  %v141 = vld [vmem:[%s4 + $0x8c] sm:$0xf]
  %v142 = vld [vmem:[%s4 + $0x90] sm:$0xff]
  %v143 = vld [vmem:[%s4 + $0x98] sm:$0xf]
  %v144 = vld [vmem:[%s4 + $0x9c] sm:$0xff]
  %v145 = vld [vmem:[%s4 + $0xa4] sm:$0xf]
  %v146 = vld [vmem:[%s4 + $0xa8] sm:$0xff]
  %v147 = vld [vmem:[%s4 + $0xb0] sm:$0xf]
  %v148 = vld [vmem:[%s4 + $0xb4] sm:$0xff]
  %v149 = vld [vmem:[%s4 + $0xbc] sm:$0xf]
  %v150 = vld [vmem:[%s1] sm:$0xf]
  %v151 = vld [vmem:[%s1 + $0x4] sm:$0xf]
  %v152 = vld [vmem:[%s1 + $0x8] sm:$0xf]
  %v153 = vld [vmem:[%s1 + $0xc] sm:$0xf]
  %v154 = vld [vmem:[%s1 + $0x10] sm:$0xf]
  %v155 = vld [vmem:[%s1 + $0x14] sm:$0xf]
  %v156 = vld [vmem:[%s1 + $0x18] sm:$0xf]
  %v157 = vld [vmem:[%s1 + $0x1c] sm:$0xf]
  %v158 = vld [vmem:[%s5] sm:$0xff]
  %v159 = vld [vmem:[%s5 + $0x8] sm:$0xf]
  %v160 = vld [vmem:[%s5 + $0xc] sm:$0xff]
  %v161 = vld [vmem:[%s5 + $0x14] sm:$0xf]
  %v162 = vld [vmem:[%s5 + $0x18] sm:$0xff]
  %v163 = vld [vmem:[%s5 + $0x20] sm:$0xf]
  %v164 = vld [vmem:[%s5 + $0x24] sm:$0xff]
  %v165 = vld [vmem:[%s5 + $0x2c] sm:$0xf]
  %v166 = vld [vmem:[%s5 + $0x30] sm:$0xff]
  %v167 = vld [vmem:[%s5 + $0x38] sm:$0xf]
  %v168 = vld [vmem:[%s5 + $0x3c] sm:$0xff]
  %v169 = vld [vmem:[%s5 + $0x44] sm:$0xf]
  %v170 = vld [vmem:[%s5 + $0x48] sm:$0xff]
  %v171 = vld [vmem:[%s5 + $0x50] sm:$0xf]
  %v172 = vld [vmem:[%s5 + $0x54] sm:$0xff]
  %v173 = vld [vmem:[%s5 + $0x5c] sm:$0xf]
  %v174 = vld [vmem:[%s5 + $0x60] sm:$0xff]
  %v175 = vld [vmem:[%s5 + $0x68] sm:$0xf]
  %v176 = vld [vmem:[%s5 + $0x6c] sm:$0xff]
  %v177 = vld [vmem:[%s5 + $0x74] sm:$0xf]
  %v178 = vld [vmem:[%s5 + $0x78] sm:$0xff]
  %v179 = vld [vmem:[%s5 + $0x80] sm:$0xf]
  %v180 = vld [vmem:[%s5 + $0x84] sm:$0xff]
  %v181 = vld [vmem:[%s5 + $0x8c] sm:$0xf]
  %v182 = vld [vmem:[%s5 + $0x90] sm:$0xff]
  %v183 = vld [vmem:[%s5 + $0x98] sm:$0xf]
  %v184 = vld [vmem:[%s5 + $0x9c] sm:$0xff]
  %v185 = vld [vmem:[%s5 + $0xa4] sm:$0xf]
  %v186 = vld [vmem:[%s5 + $0xa8] sm:$0xff]
  %v187 = vld [vmem:[%s5 + $0xb0] sm:$0xf]
  %v188 = vld [vmem:[%s5 + $0xb4] sm:$0xff]
  %v189 = vld [vmem:[%s5 + $0xbc] sm:$0xf]
  %v198 = vunpack.c.l.b16 %v150
  %v199 = vunpack.c.l.b16 %v151
  %v200 = vunpack.c.l.b16 %v152
  %v201 = vunpack.c.l.b16 %v153
  %v202 = vunpack.c.l.b16 %v154
  %v203 = vunpack.c.l.b16 %v155
  %v204 = vunpack.c.l.b16 %v156
  %v205 = vunpack.c.l.b16 %v157
  %v206 = vpack.c.b16 %v199, %v198
  %v207 = vpack.c.b16 %v201, %v200
  %v208 = vpack.c.b16 %v203, %v202
  %v209 = vpack.c.b16 %v205, %v204
  %v246 = vunpack.c.l.b16 %v158
  %v247 = vunpack.c.h.b16 %v158
  %v248 = vunpack.c.l.b16 %v159
  %v249 = vunpack.c.l.b16 %v160
  %v250 = vunpack.c.h.b16 %v160
  %v251 = vunpack.c.l.b16 %v161
  %v252 = vunpack.c.l.b16 %v162
  %v253 = vunpack.c.h.b16 %v162
  %v254 = vunpack.c.l.b16 %v163
  %v255 = vunpack.c.l.b16 %v164
  %v256 = vunpack.c.h.b16 %v164
  %v257 = vunpack.c.l.b16 %v165
  %v258 = vunpack.c.l.b16 %v166
  %v259 = vunpack.c.h.b16 %v166
  %v260 = vunpack.c.l.b16 %v167
  %v261 = vunpack.c.l.b16 %v168
  %v262 = vunpack.c.h.b16 %v168
  %v263 = vunpack.c.l.b16 %v169
  %v264 = vunpack.c.l.b16 %v170
  %v265 = vunpack.c.h.b16 %v170
  %v266 = vunpack.c.l.b16 %v171
  %v267 = vunpack.c.l.b16 %v172
  %v268 = vunpack.c.h.b16 %v172
  %v269 = vunpack.c.l.b16 %v173
  %v270 = vunpack.c.l.b16 %v174
  %v271 = vunpack.c.h.b16 %v174
  %v272 = vunpack.c.l.b16 %v175
  %v273 = vunpack.c.l.b16 %v176
  %v274 = vunpack.c.h.b16 %v176
  %v275 = vunpack.c.l.b16 %v177
  %v276 = vunpack.c.l.b16 %v178
  %v277 = vunpack.c.h.b16 %v178
  %v278 = vunpack.c.l.b16 %v179
  %v279 = vunpack.c.l.b16 %v180
  %v280 = vunpack.c.h.b16 %v180
  %v281 = vunpack.c.l.b16 %v181
  %v282 = vunpack.c.l.b16 %v182
  %v283 = vunpack.c.h.b16 %v182
  %v284 = vunpack.c.l.b16 %v183
  %v285 = vunpack.c.l.b16 %v184
  %v286 = vunpack.c.h.b16 %v184
  %v287 = vunpack.c.l.b16 %v185
  %v288 = vunpack.c.l.b16 %v186
  %v289 = vunpack.c.h.b16 %v186
  %v290 = vunpack.c.l.b16 %v187
  %v291 = vunpack.c.l.b16 %v188
  %v292 = vunpack.c.h.b16 %v188
  %v293 = vunpack.c.l.b16 %v189
  %v294 = vpack.c.b16 %v249, %v246
  %v295 = vpack.c.b16 %v250, %v247
  %v296 = vpack.c.b16 %v251, %v248
  %v297 = vpack.c.b16 %v255, %v252
  %v298 = vpack.c.b16 %v256, %v253
  %v299 = vpack.c.b16 %v257, %v254
  %v300 = vpack.c.b16 %v261, %v258
  %v301 = vpack.c.b16 %v262, %v259
  %v302 = vpack.c.b16 %v263, %v260
  %v303 = vpack.c.b16 %v267, %v264
  %v304 = vpack.c.b16 %v268, %v265
  %v305 = vpack.c.b16 %v269, %v266
  %v306 = vpack.c.b16 %v273, %v270
  %v307 = vpack.c.b16 %v274, %v271
  %v308 = vpack.c.b16 %v275, %v272
  %v309 = vpack.c.b16 %v279, %v276
  %v310 = vpack.c.b16 %v280, %v277
  %v311 = vpack.c.b16 %v281, %v278
  %v312 = vpack.c.b16 %v285, %v282
  %v313 = vpack.c.b16 %v286, %v283
  %v314 = vpack.c.b16 %v287, %v284
  %v315 = vpack.c.b16 %v291, %v288
  %v316 = vpack.c.b16 %v292, %v289
  %v317 = vpack.c.b16 %v293, %v290
  %342 = vmatprep.subr.bf16.mxu0 %v316
  %343 = vmatpush1.bf16.msra.mxu0 %v315
  %344 = vmatprep.subr.bf16.mxu0 %v313
  %345 = vmatpush1.bf16.msra.mxu0 %v312
  %346 = vmatprep.subr.bf16.mxu0 %v310
  %347 = vmatpush1.bf16.msra.mxu0 %v309
  %348 = vmatprep.subr.bf16.mxu0 %v307
  %349 = vmatpush1.bf16.msra.mxu0 %v306
  %350 = vmatprep.subr.bf16.mxu0 %v304
  %351 = vmatpush1.bf16.msra.mxu0 %v303
  %352 = vmatprep.subr.bf16.mxu0 %v301
  %353 = vmatpush1.bf16.msra.mxu0 %v300
  %354 = vmatprep.subr.bf16.mxu0 %v298
  %355 = vmatpush1.bf16.msra.mxu0 %v297
  %356 = vmatprep.subr.bf16.mxu0 %v295
  %357 = vmatpush1.bf16.msra.mxu0 %v294
  %358 = vmatprep.subr.bf16.mxu0 0
  %359 = vmatpush2.bf16.msra.mxu0 0
  %360 = vmatprep.subr.bf16.mxu0 0
  %361 = vmatpush2.bf16.msra.mxu0 0
  %362 = vmatprep.subr.bf16.mxu0 0
  %363 = vmatpush2.bf16.msra.mxu0 0
  %364 = vmatprep.subr.bf16.mxu0 0
  %365 = vmatpush2.bf16.msra.mxu0 0
  %366 = vmatprep.subr.bf16.mxu0 0
  %367 = vmatpush2.bf16.msra.mxu0 0
  %368 = vmatprep.subr.bf16.mxu0 0
  %369 = vmatpush2.bf16.msra.mxu0 0
  %370 = vmatprep.subr.bf16.mxu0 0
  %371 = vmatpush2.bf16.msra.mxu0 0
  %372 = vmatprep.subr.bf16.mxu0 0
  %373 = vmatpush2.bf16.msra.mxu0 0
  %374 = vmatprep.mubr.bf16.mxu0 0
  %375 = vmatmul.mubr.bf16.gmra.mxu0 %v206
  %v376 = vpop.f32.mrf.mxu0
  %v377 = vadd.f32 0.0, %v376
  %v378 = vpop.f32.mrf.mxu0
  %v379 = vadd.f32 0.0, %v378
  %v380 = vpop.f32.mrf.mxu0
  %v381 = vadd.f32 0.0, %v380
  %v382 = vpop.f32.mrf.mxu0
  %v383 = vadd.f32 0.0, %v382
  %384 = vmatprep.mubr.bf16.mxu0 0
  %385 = vmatmul.mubr.bf16.gmra.mxu0 %v207
  %v386 = vpop.f32.mrf.mxu0
  %v387 = vadd.f32 0.0, %v386
  %v388 = vpop.f32.mrf.mxu0
  %v389 = vadd.f32 0.0, %v388
  %v390 = vpop.f32.mrf.mxu0
  %v391 = vadd.f32 0.0, %v390
  %v392 = vpop.f32.mrf.mxu0
  %v393 = vadd.f32 0.0, %v392
  %394 = vmatprep.mubr.bf16.mxu0 0
  %395 = vmatmul.mubr.bf16.gmra.mxu0 %v208
  %v396 = vpop.f32.mrf.mxu0
  %v397 = vadd.f32 0.0, %v396
  %v398 = vpop.f32.mrf.mxu0
  %v399 = vadd.f32 0.0, %v398
  %v400 = vpop.f32.mrf.mxu0
  %v401 = vadd.f32 0.0, %v400
  %v402 = vpop.f32.mrf.mxu0
  %v403 = vadd.f32 0.0, %v402
  %404 = vmatprep.mubr.bf16.mxu0 0
  %405 = vmatmul.mubr.bf16.gmra.mxu0 %v209
  %v406 = vpop.f32.mrf.mxu0
  %v407 = vadd.f32 0.0, %v406
  %v408 = vpop.f32.mrf.mxu0
  %v409 = vadd.f32 0.0, %v408
  %v410 = vpop.f32.mrf.mxu0
  %v411 = vadd.f32 0.0, %v410
  %v412 = vpop.f32.mrf.mxu0
  %v413 = vadd.f32 0.0, %v412
  %414 = vdwg.mxu0
  %415 = vmatprep.subr.bf16.mxu0 0
  %416 = vmatpush1.bf16.msra.mxu0 %v317
  %417 = vmatprep.subr.bf16.mxu0 0
  %418 = vmatpush1.bf16.msra.mxu0 %v314
  %419 = vmatprep.subr.bf16.mxu0 0
  %420 = vmatpush1.bf16.msra.mxu0 %v311
  %421 = vmatprep.subr.bf16.mxu0 0
  %422 = vmatpush1.bf16.msra.mxu0 %v308
  %423 = vmatprep.subr.bf16.mxu0 0
  %424 = vmatpush1.bf16.msra.mxu0 %v305
  %425 = vmatprep.subr.bf16.mxu0 0
  %426 = vmatpush1.bf16.msra.mxu0 %v302
  %427 = vmatprep.subr.bf16.mxu0 0
  %428 = vmatpush1.bf16.msra.mxu0 %v299
  %429 = vmatprep.subr.bf16.mxu0 0
  %430 = vmatpush1.bf16.msra.mxu0 %v296
  %431 = vmatprep.subr.bf16.mxu0 0
  %432 = vmatpush2.bf16.msra.mxu0 0
  %433 = vmatprep.subr.bf16.mxu0 0
  %434 = vmatpush2.bf16.msra.mxu0 0
  %435 = vmatprep.subr.bf16.mxu0 0
  %436 = vmatpush2.bf16.msra.mxu0 0
  %437 = vmatprep.subr.bf16.mxu0 0
  %438 = vmatpush2.bf16.msra.mxu0 0
  %439 = vmatprep.subr.bf16.mxu0 0
  %440 = vmatpush2.bf16.msra.mxu0 0
  %441 = vmatprep.subr.bf16.mxu0 0
  %442 = vmatpush2.bf16.msra.mxu0 0
  %443 = vmatprep.subr.bf16.mxu0 0
  %444 = vmatpush2.bf16.msra.mxu0 0
  %445 = vmatprep.subr.bf16.mxu0 0
  %446 = vmatpush2.bf16.msra.mxu0 0
  %447 = vmatprep.mubr.bf16.mxu0 0
  %448 = vmatmul.mubr.bf16.gmra.mxu0 %v206
  %v449 = vpop.f32.mrf.mxu0
  %v450 = vadd.f32 0.0, %v449
  %v451 = vpop.f32.mrf.mxu0
  %v452 = vpop.f32.mrf.mxu0
  %v453 = vadd.f32 0.0, %v452
  %v454 = vpop.f32.mrf.mxu0
  %455 = vmatprep.mubr.bf16.mxu0 0
  %456 = vmatmul.mubr.bf16.gmra.mxu0 %v207
  %v457 = vpop.f32.mrf.mxu0
  %v458 = vadd.f32 0.0, %v457
  %v459 = vpop.f32.mrf.mxu0
  %v460 = vpop.f32.mrf.mxu0
  %v461 = vadd.f32 0.0, %v460
  %v462 = vpop.f32.mrf.mxu0
  %463 = vmatprep.mubr.bf16.mxu0 0
  %464 = vmatmul.mubr.bf16.gmra.mxu0 %v208
  %v465 = vpop.f32.mrf.mxu0
  %v466 = vadd.f32 0.0, %v465
  %v467 = vpop.f32.mrf.mxu0
  %v468 = vpop.f32.mrf.mxu0
  %v469 = vadd.f32 0.0, %v468
  %v470 = vpop.f32.mrf.mxu0
  %471 = vmatprep.mubr.bf16.mxu0 0
  %472 = vmatmul.mubr.bf16.gmra.mxu0 %v209
  %v473 = vpop.f32.mrf.mxu0
  %v474 = vadd.f32 0.0, %v473
  %v475 = vpop.f32.mrf.mxu0
  %v476 = vpop.f32.mrf.mxu0
  %v477 = vadd.f32 0.0, %v476
  %v478 = vpop.f32.mrf.mxu0
  %479 = vdwg.mxu0
  %v488 = vunpack.c.l.b16 %v110
  %v489 = vunpack.c.l.b16 %v111
  %v490 = vunpack.c.l.b16 %v112
  %v491 = vunpack.c.l.b16 %v113
  %v492 = vunpack.c.l.b16 %v114
  %v493 = vunpack.c.l.b16 %v115
  %v494 = vunpack.c.l.b16 %v116
  %v495 = vunpack.c.l.b16 %v117
  %v496 = vpack.c.b16 %v489, %v488
  %v497 = vpack.c.b16 %v491, %v490
  %v498 = vpack.c.b16 %v493, %v492
  %v499 = vpack.c.b16 %v495, %v494
  %v536 = vunpack.c.l.b16 %v118
  %v537 = vunpack.c.h.b16 %v118
  %v538 = vunpack.c.l.b16 %v119
  %v539 = vunpack.c.l.b16 %v120
  %v540 = vunpack.c.h.b16 %v120
  %v541 = vunpack.c.l.b16 %v121
  %v542 = vunpack.c.l.b16 %v122
  %v543 = vunpack.c.h.b16 %v122
  %v544 = vunpack.c.l.b16 %v123
  %v545 = vunpack.c.l.b16 %v124
  %v546 = vunpack.c.h.b16 %v124
  %v547 = vunpack.c.l.b16 %v125
  %v548 = vunpack.c.l.b16 %v126
  %v549 = vunpack.c.h.b16 %v126
  %v550 = vunpack.c.l.b16 %v127
  %v551 = vunpack.c.l.b16 %v128
  %v552 = vunpack.c.h.b16 %v128
  %v553 = vunpack.c.l.b16 %v129
  %v554 = vunpack.c.l.b16 %v130
  %v555 = vunpack.c.h.b16 %v130
  %v556 = vunpack.c.l.b16 %v131
  %v557 = vunpack.c.l.b16 %v132
  %v558 = vunpack.c.h.b16 %v132
  %v559 = vunpack.c.l.b16 %v133
  %v560 = vunpack.c.l.b16 %v134
  %v561 = vunpack.c.h.b16 %v134
  %v562 = vunpack.c.l.b16 %v135
  %v563 = vunpack.c.l.b16 %v136
  %v564 = vunpack.c.h.b16 %v136
  %v565 = vunpack.c.l.b16 %v137
  %v566 = vunpack.c.l.b16 %v138
  %v567 = vunpack.c.h.b16 %v138
  %v568 = vunpack.c.l.b16 %v139
  %v569 = vunpack.c.l.b16 %v140
  %v570 = vunpack.c.h.b16 %v140
  %v571 = vunpack.c.l.b16 %v141
  %v572 = vunpack.c.l.b16 %v142
  %v573 = vunpack.c.h.b16 %v142
  %v574 = vunpack.c.l.b16 %v143
  %v575 = vunpack.c.l.b16 %v144
  %v576 = vunpack.c.h.b16 %v144
  %v577 = vunpack.c.l.b16 %v145
  %v578 = vunpack.c.l.b16 %v146
  %v579 = vunpack.c.h.b16 %v146
  %v580 = vunpack.c.l.b16 %v147
  %v581 = vunpack.c.l.b16 %v148
  %v582 = vunpack.c.h.b16 %v148
  %v583 = vunpack.c.l.b16 %v149
  %v584 = vpack.c.b16 %v539, %v536
  %v585 = vpack.c.b16 %v540, %v537
  %v586 = vpack.c.b16 %v541, %v538
  %v587 = vpack.c.b16 %v545, %v542
  %v588 = vpack.c.b16 %v546, %v543
  %v589 = vpack.c.b16 %v547, %v544
  %v590 = vpack.c.b16 %v551, %v548
  %v591 = vpack.c.b16 %v552, %v549
  %v592 = vpack.c.b16 %v553, %v550
  %v593 = vpack.c.b16 %v557, %v554
  %v594 = vpack.c.b16 %v558, %v555
  %v595 = vpack.c.b16 %v559, %v556
  %v596 = vpack.c.b16 %v563, %v560
  %v597 = vpack.c.b16 %v564, %v561
  %v598 = vpack.c.b16 %v565, %v562
  %v599 = vpack.c.b16 %v569, %v566
  %v600 = vpack.c.b16 %v570, %v567
  %v601 = vpack.c.b16 %v571, %v568
  %v602 = vpack.c.b16 %v575, %v572
  %v603 = vpack.c.b16 %v576, %v573
  %v604 = vpack.c.b16 %v577, %v574
  %v605 = vpack.c.b16 %v581, %v578
  %v606 = vpack.c.b16 %v582, %v579
  %v607 = vpack.c.b16 %v583, %v580
  %632 = vmatprep.subr.bf16.mxu0 %v606
  %633 = vmatpush1.bf16.msra.mxu0 %v605
  %634 = vmatprep.subr.bf16.mxu0 %v603
  %635 = vmatpush1.bf16.msra.mxu0 %v602
  %636 = vmatprep.subr.bf16.mxu0 %v600
  %637 = vmatpush1.bf16.msra.mxu0 %v599
  %638 = vmatprep.subr.bf16.mxu0 %v597
  %639 = vmatpush1.bf16.msra.mxu0 %v596
  %640 = vmatprep.subr.bf16.mxu0 %v594
  %641 = vmatpush1.bf16.msra.mxu0 %v593
  %642 = vmatprep.subr.bf16.mxu0 %v591
  %643 = vmatpush1.bf16.msra.mxu0 %v590
  %644 = vmatprep.subr.bf16.mxu0 %v588
  %645 = vmatpush1.bf16.msra.mxu0 %v587
  %646 = vmatprep.subr.bf16.mxu0 %v585
  %647 = vmatpush1.bf16.msra.mxu0 %v584
  %648 = vmatprep.subr.bf16.mxu0 0
  %649 = vmatpush2.bf16.msra.mxu0 0
  %650 = vmatprep.subr.bf16.mxu0 0
  %651 = vmatpush2.bf16.msra.mxu0 0
  %652 = vmatprep.subr.bf16.mxu0 0
  %653 = vmatpush2.bf16.msra.mxu0 0
  %654 = vmatprep.subr.bf16.mxu0 0
  %655 = vmatpush2.bf16.msra.mxu0 0
  %656 = vmatprep.subr.bf16.mxu0 0
  %657 = vmatpush2.bf16.msra.mxu0 0
  %658 = vmatprep.subr.bf16.mxu0 0
  %659 = vmatpush2.bf16.msra.mxu0 0
  %660 = vmatprep.subr.bf16.mxu0 0
  %661 = vmatpush2.bf16.msra.mxu0 0
  %662 = vmatprep.subr.bf16.mxu0 0
  %663 = vmatpush2.bf16.msra.mxu0 0
  %664 = vmatprep.mubr.bf16.mxu0 0
  %665 = vmatmul.mubr.bf16.gmra.mxu0 %v496
  %v666 = vpop.f32.mrf.mxu0
  %v667 = vadd.f32 %v377, %v666
  %v668 = vpop.f32.mrf.mxu0
  %v669 = vadd.f32 %v379, %v668
  %v670 = vpop.f32.mrf.mxu0
  %v671 = vadd.f32 %v381, %v670
  %v672 = vpop.f32.mrf.mxu0
  %v673 = vadd.f32 %v383, %v672
  %674 = vmatprep.mubr.bf16.mxu0 0
  %675 = vmatmul.mubr.bf16.gmra.mxu0 %v497
  %v676 = vpop.f32.mrf.mxu0
  %v677 = vadd.f32 %v387, %v676
  %v678 = vpop.f32.mrf.mxu0
  %v679 = vadd.f32 %v389, %v678
  %v680 = vpop.f32.mrf.mxu0
  %v681 = vadd.f32 %v391, %v680
  %v682 = vpop.f32.mrf.mxu0
  %v683 = vadd.f32 %v393, %v682
  %684 = vmatprep.mubr.bf16.mxu0 0
  %685 = vmatmul.mubr.bf16.gmra.mxu0 %v498
  %v686 = vpop.f32.mrf.mxu0
  %v687 = vadd.f32 %v397, %v686
  %v688 = vpop.f32.mrf.mxu0
  %v689 = vadd.f32 %v399, %v688
  %v690 = vpop.f32.mrf.mxu0
  %v691 = vadd.f32 %v401, %v690
  %v692 = vpop.f32.mrf.mxu0
  %v693 = vadd.f32 %v403, %v692
  %694 = vmatprep.mubr.bf16.mxu0 0
  %695 = vmatmul.mubr.bf16.gmra.mxu0 %v499
  %v696 = vpop.f32.mrf.mxu0
  %v697 = vadd.f32 %v407, %v696
  %v698 = vpop.f32.mrf.mxu0
  %v699 = vadd.f32 %v409, %v698
  %v700 = vpop.f32.mrf.mxu0
  %v701 = vadd.f32 %v411, %v700
  %v702 = vpop.f32.mrf.mxu0
  %v703 = vadd.f32 %v413, %v702
  %704 = vdwg.mxu0
  %705 = vmatprep.subr.bf16.mxu0 0
  %706 = vmatpush1.bf16.msra.mxu0 %v607
  %707 = vmatprep.subr.bf16.mxu0 0
  %708 = vmatpush1.bf16.msra.mxu0 %v604
  %709 = vmatprep.subr.bf16.mxu0 0
  %710 = vmatpush1.bf16.msra.mxu0 %v601
  %711 = vmatprep.subr.bf16.mxu0 0
  %712 = vmatpush1.bf16.msra.mxu0 %v598
  %713 = vmatprep.subr.bf16.mxu0 0
  %714 = vmatpush1.bf16.msra.mxu0 %v595
  %715 = vmatprep.subr.bf16.mxu0 0
  %716 = vmatpush1.bf16.msra.mxu0 %v592
  %717 = vmatprep.subr.bf16.mxu0 0
  %718 = vmatpush1.bf16.msra.mxu0 %v589
  %719 = vmatprep.subr.bf16.mxu0 0
  %720 = vmatpush1.bf16.msra.mxu0 %v586
  %721 = vmatprep.subr.bf16.mxu0 0
  %722 = vmatpush2.bf16.msra.mxu0 0
  %723 = vmatprep.subr.bf16.mxu0 0
  %724 = vmatpush2.bf16.msra.mxu0 0
  %725 = vmatprep.subr.bf16.mxu0 0
  %726 = vmatpush2.bf16.msra.mxu0 0
  %727 = vmatprep.subr.bf16.mxu0 0
  %728 = vmatpush2.bf16.msra.mxu0 0
  %729 = vmatprep.subr.bf16.mxu0 0
  %730 = vmatpush2.bf16.msra.mxu0 0
  %731 = vmatprep.subr.bf16.mxu0 0
  %732 = vmatpush2.bf16.msra.mxu0 0
  %733 = vmatprep.subr.bf16.mxu0 0
  %734 = vmatpush2.bf16.msra.mxu0 0
  %735 = vmatprep.subr.bf16.mxu0 0
  %736 = vmatpush2.bf16.msra.mxu0 0
  %737 = vmatprep.mubr.bf16.mxu0 0
  %738 = vmatmul.mubr.bf16.gmra.mxu0 %v496
  %v739 = vpop.f32.mrf.mxu0
  %v740 = vadd.f32 %v450, %v739
  %v741 = vpop.f32.mrf.mxu0
  %v742 = vpop.f32.mrf.mxu0
  %v743 = vadd.f32 %v453, %v742
  %v744 = vpop.f32.mrf.mxu0
  %745 = vmatprep.mubr.bf16.mxu0 0
  %746 = vmatmul.mubr.bf16.gmra.mxu0 %v497
  %v747 = vpop.f32.mrf.mxu0
  %v748 = vadd.f32 %v458, %v747
  %v749 = vpop.f32.mrf.mxu0
  %v750 = vpop.f32.mrf.mxu0
  %v751 = vadd.f32 %v461, %v750
  %v752 = vpop.f32.mrf.mxu0
  %753 = vmatprep.mubr.bf16.mxu0 0
  %754 = vmatmul.mubr.bf16.gmra.mxu0 %v498
  %v755 = vpop.f32.mrf.mxu0
  %v756 = vadd.f32 %v466, %v755
  %v757 = vpop.f32.mrf.mxu0
  %v758 = vpop.f32.mrf.mxu0
  %v759 = vadd.f32 %v469, %v758
  %v760 = vpop.f32.mrf.mxu0
  %761 = vmatprep.mubr.bf16.mxu0 0
  %762 = vmatmul.mubr.bf16.gmra.mxu0 %v499
  %v763 = vpop.f32.mrf.mxu0
  %v764 = vadd.f32 %v474, %v763
  %v765 = vpop.f32.mrf.mxu0
  %v766 = vpop.f32.mrf.mxu0
  %v767 = vadd.f32 %v477, %v766
  %v768 = vpop.f32.mrf.mxu0
  %769 = vdwg.mxu0
  %v770 = vld [vmem:[%s9] sm:$0x7]
  %v772 = vlaneseq
  %v773 = vshrl.u32 %v772, 7
  %v774 = vsub.s32 0, %v773
  %v775 = vrot.slane %v770, %v774
  %v776 = vlaneseq
  %v777 = vshrl.u32 %v776, 7
  %v778 = vsub.s32 1, %v777
  %v779 = vrot.slane %v770, %v778
  %v780 = vlaneseq
  %v781 = vshrl.u32 %v780, 7
  %v782 = vsub.s32 2, %v781
  %v783 = vrot.slane %v770, %v782
  %v787 = vadd.f32 %v667, %v775
  %v788 = vadd.f32 %v669, %v779
  %v789 = vadd.f32 %v740, %v783
  %v790 = vadd.f32 %v671, %v775
  %v791 = vadd.f32 %v673, %v779
  %v792 = vadd.f32 %v743, %v783
  %v793 = vadd.f32 %v677, %v775
  %v794 = vadd.f32 %v679, %v779
  %v795 = vadd.f32 %v748, %v783
  %v796 = vadd.f32 %v681, %v775
  %v797 = vadd.f32 %v683, %v779
  %v798 = vadd.f32 %v751, %v783
  %v799 = vadd.f32 %v687, %v775
  %v800 = vadd.f32 %v689, %v779
  %v801 = vadd.f32 %v756, %v783
  %v802 = vadd.f32 %v691, %v775
  %v803 = vadd.f32 %v693, %v779
  %v804 = vadd.f32 %v759, %v783
  %v805 = vadd.f32 %v697, %v775
  %v806 = vadd.f32 %v699, %v779
  %v807 = vadd.f32 %v764, %v783
  %v808 = vadd.f32 %v701, %v775
  %v809 = vadd.f32 %v703, %v779
  %v810 = vadd.f32 %v767, %v783
  %811 = vst [vmem:[#allocation3] sm:$0xff] %v787
  %812 = vst [vmem:[#allocation3 + $0x8] sm:$0xff] %v788
  %813 = vst [vmem:[#allocation3 + $0x10] sm:$0xff] %v789
  %814 = vst [vmem:[#allocation3 + $0x18] sm:$0xff] %v790
  %815 = vst [vmem:[#allocation3 + $0x20] sm:$0xff] %v791
  %816 = vst [vmem:[#allocation3 + $0x28] sm:$0xff] %v792
  %817 = vst [vmem:[#allocation3 + $0x30] sm:$0xff] %v793
  %818 = vst [vmem:[#allocation3 + $0x38] sm:$0xff] %v794
  %819 = vst [vmem:[#allocation3 + $0x40] sm:$0xff] %v795
  %820 = vst [vmem:[#allocation3 + $0x48] sm:$0xff] %v796
  %821 = vst [vmem:[#allocation3 + $0x50] sm:$0xff] %v797
  %822 = vst [vmem:[#allocation3 + $0x58] sm:$0xff] %v798
  %823 = vst [vmem:[#allocation3 + $0x60] sm:$0xff] %v799
  %824 = vst [vmem:[#allocation3 + $0x68] sm:$0xff] %v800
  %825 = vst [vmem:[#allocation3 + $0x70] sm:$0xff] %v801
  %826 = vst [vmem:[#allocation3 + $0x78] sm:$0xff] %v802
  %827 = vst [vmem:[#allocation3 + $0x80] sm:$0xff] %v803
  %828 = vst [vmem:[#allocation3 + $0x88] sm:$0xff] %v804
  %829 = vst [vmem:[#allocation3 + $0x90] sm:$0xff] %v805
  %830 = vst [vmem:[#allocation3 + $0x98] sm:$0xff] %v806
  %831 = vst [vmem:[#allocation3 + $0xa0] sm:$0xff] %v807
  %832 = vst [vmem:[#allocation3 + $0xa8] sm:$0xff] %v808
  %833 = vst [vmem:[#allocation3 + $0xb0] sm:$0xff] %v809
  %834 = vst [vmem:[#allocation3 + $0xb8] sm:$0xff] %v810
  %v835 = vld [vmem:[%s92] sm:$0xf]
  %v836 = vld [vmem:[%s92 + $0x4] sm:$0xf]
  %v837 = vld [vmem:[%s92 + $0x8] sm:$0xf]
  %v838 = vld [vmem:[%s92 + $0xc] sm:$0xf]
  %v839 = vld [vmem:[%s92 + $0x10] sm:$0xf]
  %v840 = vld [vmem:[%s92 + $0x14] sm:$0xf]
  %v841 = vld [vmem:[%s92 + $0x18] sm:$0xf]
  %v842 = vld [vmem:[%s92 + $0x1c] sm:$0xf]
  %v843 = vld [vmem:[%s6] sm:$0xff]
  %v844 = vld [vmem:[%s6 + $0x8] sm:$0xf]
  %v845 = vld [vmem:[%s6 + $0xc] sm:$0xff]
  %v846 = vld [vmem:[%s6 + $0x14] sm:$0xf]
  %v847 = vld [vmem:[%s6 + $0x18] sm:$0xff]
  %v848 = vld [vmem:[%s6 + $0x20] sm:$0xf]
  %v849 = vld [vmem:[%s6 + $0x24] sm:$0xff]
  %v850 = vld [vmem:[%s6 + $0x2c] sm:$0xf]
  %v851 = vld [vmem:[%s6 + $0x30] sm:$0xff]
  %v852 = vld [vmem:[%s6 + $0x38] sm:$0xf]
  %v853 = vld [vmem:[%s6 + $0x3c] sm:$0xff]
  %v854 = vld [vmem:[%s6 + $0x44] sm:$0xf]
  %v855 = vld [vmem:[%s6 + $0x48] sm:$0xff]
  %v856 = vld [vmem:[%s6 + $0x50] sm:$0xf]
  %v857 = vld [vmem:[%s6 + $0x54] sm:$0xff]
  %v858 = vld [vmem:[%s6 + $0x5c] sm:$0xf]
  %v859 = vld [vmem:[%s6 + $0x60] sm:$0xff]
  %v860 = vld [vmem:[%s6 + $0x68] sm:$0xf]
  %v861 = vld [vmem:[%s6 + $0x6c] sm:$0xff]
  %v862 = vld [vmem:[%s6 + $0x74] sm:$0xf]
  %v863 = vld [vmem:[%s6 + $0x78] sm:$0xff]
  %v864 = vld [vmem:[%s6 + $0x80] sm:$0xf]
  %v865 = vld [vmem:[%s6 + $0x84] sm:$0xff]
  %v866 = vld [vmem:[%s6 + $0x8c] sm:$0xf]
  %v867 = vld [vmem:[%s6 + $0x90] sm:$0xff]
  %v868 = vld [vmem:[%s6 + $0x98] sm:$0xf]
  %v869 = vld [vmem:[%s6 + $0x9c] sm:$0xff]
  %v870 = vld [vmem:[%s6 + $0xa4] sm:$0xf]
  %v871 = vld [vmem:[%s6 + $0xa8] sm:$0xff]
  %v872 = vld [vmem:[%s6 + $0xb0] sm:$0xf]
  %v873 = vld [vmem:[%s6 + $0xb4] sm:$0xff]
  %v874 = vld [vmem:[%s6 + $0xbc] sm:$0xf]
  %v875 = vld [vmem:[%s100] sm:$0xf]
  %v876 = vld [vmem:[%s100 + $0x4] sm:$0xf]
  %v877 = vld [vmem:[%s100 + $0x8] sm:$0xf]
  %v878 = vld [vmem:[%s100 + $0xc] sm:$0xf]
  %v879 = vld [vmem:[%s100 + $0x10] sm:$0xf]
  %v880 = vld [vmem:[%s100 + $0x14] sm:$0xf]
  %v881 = vld [vmem:[%s100 + $0x18] sm:$0xf]
  %v882 = vld [vmem:[%s100 + $0x1c] sm:$0xf]
  %v883 = vld [vmem:[%s7] sm:$0xff]
  %v884 = vld [vmem:[%s7 + $0x8] sm:$0xf]
  %v885 = vld [vmem:[%s7 + $0xc] sm:$0xff]
  %v886 = vld [vmem:[%s7 + $0x14] sm:$0xf]
  %v887 = vld [vmem:[%s7 + $0x18] sm:$0xff]
  %v888 = vld [vmem:[%s7 + $0x20] sm:$0xf]
  %v889 = vld [vmem:[%s7 + $0x24] sm:$0xff]
  %v890 = vld [vmem:[%s7 + $0x2c] sm:$0xf]
  %v891 = vld [vmem:[%s7 + $0x30] sm:$0xff]
  %v892 = vld [vmem:[%s7 + $0x38] sm:$0xf]
  %v893 = vld [vmem:[%s7 + $0x3c] sm:$0xff]
  %v894 = vld [vmem:[%s7 + $0x44] sm:$0xf]
  %v895 = vld [vmem:[%s7 + $0x48] sm:$0xff]
  %v896 = vld [vmem:[%s7 + $0x50] sm:$0xf]
  %v897 = vld [vmem:[%s7 + $0x54] sm:$0xff]
  %v898 = vld [vmem:[%s7 + $0x5c] sm:$0xf]
  %v899 = vld [vmem:[%s7 + $0x60] sm:$0xff]
  %v900 = vld [vmem:[%s7 + $0x68] sm:$0xf]
  %v901 = vld [vmem:[%s7 + $0x6c] sm:$0xff]
  %v902 = vld [vmem:[%s7 + $0x74] sm:$0xf]
  %v903 = vld [vmem:[%s7 + $0x78] sm:$0xff]
  %v904 = vld [vmem:[%s7 + $0x80] sm:$0xf]
  %v905 = vld [vmem:[%s7 + $0x84] sm:$0xff]
  %v906 = vld [vmem:[%s7 + $0x8c] sm:$0xf]
  %v907 = vld [vmem:[%s7 + $0x90] sm:$0xff]
  %v908 = vld [vmem:[%s7 + $0x98] sm:$0xf]
  %v909 = vld [vmem:[%s7 + $0x9c] sm:$0xff]
  %v910 = vld [vmem:[%s7 + $0xa4] sm:$0xf]
  %v911 = vld [vmem:[%s7 + $0xa8] sm:$0xff]
  %v912 = vld [vmem:[%s7 + $0xb0] sm:$0xf]
  %v913 = vld [vmem:[%s7 + $0xb4] sm:$0xff]
  %v914 = vld [vmem:[%s7 + $0xbc] sm:$0xf]
  %v923 = vunpack.c.l.b16 %v875
  %v924 = vunpack.c.l.b16 %v876
  %v925 = vunpack.c.l.b16 %v877
  %v926 = vunpack.c.l.b16 %v878
  %v927 = vunpack.c.l.b16 %v879
  %v928 = vunpack.c.l.b16 %v880
  %v929 = vunpack.c.l.b16 %v881
  %v930 = vunpack.c.l.b16 %v882
  %v931 = vpack.c.b16 %v924, %v923
  %v932 = vpack.c.b16 %v926, %v925
  %v933 = vpack.c.b16 %v928, %v927
  %v934 = vpack.c.b16 %v930, %v929
  %v971 = vunpack.c.l.b16 %v883
  %v972 = vunpack.c.h.b16 %v883
  %v973 = vunpack.c.l.b16 %v884
  %v974 = vunpack.c.l.b16 %v885
  %v975 = vunpack.c.h.b16 %v885
  %v976 = vunpack.c.l.b16 %v886
  %v977 = vunpack.c.l.b16 %v887
  %v978 = vunpack.c.h.b16 %v887
  %v979 = vunpack.c.l.b16 %v888
  %v980 = vunpack.c.l.b16 %v889
  %v981 = vunpack.c.h.b16 %v889
  %v982 = vunpack.c.l.b16 %v890
  %v983 = vunpack.c.l.b16 %v891
  %v984 = vunpack.c.h.b16 %v891
  %v985 = vunpack.c.l.b16 %v892
  %v986 = vunpack.c.l.b16 %v893
  %v987 = vunpack.c.h.b16 %v893
  %v988 = vunpack.c.l.b16 %v894
  %v989 = vunpack.c.l.b16 %v895
  %v990 = vunpack.c.h.b16 %v895
  %v991 = vunpack.c.l.b16 %v896
  %v992 = vunpack.c.l.b16 %v897
  %v993 = vunpack.c.h.b16 %v897
  %v994 = vunpack.c.l.b16 %v898
  %v995 = vunpack.c.l.b16 %v899
  %v996 = vunpack.c.h.b16 %v899
  %v997 = vunpack.c.l.b16 %v900
  %v998 = vunpack.c.l.b16 %v901
  %v999 = vunpack.c.h.b16 %v901
  %v1000 = vunpack.c.l.b16 %v902
  %v1001 = vunpack.c.l.b16 %v903
  %v1002 = vunpack.c.h.b16 %v903
  %v1003 = vunpack.c.l.b16 %v904
  %v1004 = vunpack.c.l.b16 %v905
  %v1005 = vunpack.c.h.b16 %v905
  %v1006 = vunpack.c.l.b16 %v906
  %v1007 = vunpack.c.l.b16 %v907
  %v1008 = vunpack.c.h.b16 %v907
  %v1009 = vunpack.c.l.b16 %v908
  %v1010 = vunpack.c.l.b16 %v909
  %v1011 = vunpack.c.h.b16 %v909
  %v1012 = vunpack.c.l.b16 %v910
  %v1013 = vunpack.c.l.b16 %v911
  %v1014 = vunpack.c.h.b16 %v911
  %v1015 = vunpack.c.l.b16 %v912
  %v1016 = vunpack.c.l.b16 %v913
  %v1017 = vunpack.c.h.b16 %v913
  %v1018 = vunpack.c.l.b16 %v914
  %v1019 = vpack.c.b16 %v974, %v971
  %v1020 = vpack.c.b16 %v975, %v972
  %v1021 = vpack.c.b16 %v976, %v973
  %v1022 = vpack.c.b16 %v980, %v977
  %v1023 = vpack.c.b16 %v981, %v978
  %v1024 = vpack.c.b16 %v982, %v979
  %v1025 = vpack.c.b16 %v986, %v983
  %v1026 = vpack.c.b16 %v987, %v984
  %v1027 = vpack.c.b16 %v988, %v985
  %v1028 = vpack.c.b16 %v992, %v989
  %v1029 = vpack.c.b16 %v993, %v990
  %v1030 = vpack.c.b16 %v994, %v991
  %v1031 = vpack.c.b16 %v998, %v995
  %v1032 = vpack.c.b16 %v999, %v996
  %v1033 = vpack.c.b16 %v1000, %v997
  %v1034 = vpack.c.b16 %v1004, %v1001
  %v1035 = vpack.c.b16 %v1005, %v1002
  %v1036 = vpack.c.b16 %v1006, %v1003
  %v1037 = vpack.c.b16 %v1010, %v1007
  %v1038 = vpack.c.b16 %v1011, %v1008
  %v1039 = vpack.c.b16 %v1012, %v1009
  %v1040 = vpack.c.b16 %v1016, %v1013
  %v1041 = vpack.c.b16 %v1017, %v1014
  %v1042 = vpack.c.b16 %v1018, %v1015
  %1067 = vmatprep.subr.bf16.mxu0 %v1041
  %1068 = vmatpush1.bf16.msra.mxu0 %v1040
  %1069 = vmatprep.subr.bf16.mxu0 %v1038
  %1070 = vmatpush1.bf16.msra.mxu0 %v1037
  %1071 = vmatprep.subr.bf16.mxu0 %v1035
  %1072 = vmatpush1.bf16.msra.mxu0 %v1034
  %1073 = vmatprep.subr.bf16.mxu0 %v1032
  %1074 = vmatpush1.bf16.msra.mxu0 %v1031
  %1075 = vmatprep.subr.bf16.mxu0 %v1029
  %1076 = vmatpush1.bf16.msra.mxu0 %v1028
  %1077 = vmatprep.subr.bf16.mxu0 %v1026
  %1078 = vmatpush1.bf16.msra.mxu0 %v1025
  %1079 = vmatprep.subr.bf16.mxu0 %v1023
  %1080 = vmatpush1.bf16.msra.mxu0 %v1022
  %1081 = vmatprep.subr.bf16.mxu0 %v1020
  %1082 = vmatpush1.bf16.msra.mxu0 %v1019
  %1083 = vmatprep.subr.bf16.mxu0 0
  %1084 = vmatpush2.bf16.msra.mxu0 0
  %1085 = vmatprep.subr.bf16.mxu0 0
  %1086 = vmatpush2.bf16.msra.mxu0 0
  %1087 = vmatprep.subr.bf16.mxu0 0
  %1088 = vmatpush2.bf16.msra.mxu0 0
  %1089 = vmatprep.subr.bf16.mxu0 0
  %1090 = vmatpush2.bf16.msra.mxu0 0
  %1091 = vmatprep.subr.bf16.mxu0 0
  %1092 = vmatpush2.bf16.msra.mxu0 0
  %1093 = vmatprep.subr.bf16.mxu0 0
  %1094 = vmatpush2.bf16.msra.mxu0 0
  %1095 = vmatprep.subr.bf16.mxu0 0
  %1096 = vmatpush2.bf16.msra.mxu0 0
  %1097 = vmatprep.subr.bf16.mxu0 0
  %1098 = vmatpush2.bf16.msra.mxu0 0
  %1099 = vmatprep.mubr.bf16.mxu0 0
  %1100 = vmatmul.mubr.bf16.gmra.mxu0 %v931
  %v1101 = vpop.f32.mrf.mxu0
  %v1102 = vadd.f32 0.0, %v1101
  %v1103 = vpop.f32.mrf.mxu0
  %v1104 = vadd.f32 0.0, %v1103
  %v1105 = vpop.f32.mrf.mxu0
  %v1106 = vadd.f32 0.0, %v1105
  %v1107 = vpop.f32.mrf.mxu0
  %v1108 = vadd.f32 0.0, %v1107
  %1109 = vmatprep.mubr.bf16.mxu0 0
  %1110 = vmatmul.mubr.bf16.gmra.mxu0 %v932
  %v1111 = vpop.f32.mrf.mxu0
  %v1112 = vadd.f32 0.0, %v1111
  %v1113 = vpop.f32.mrf.mxu0
  %v1114 = vadd.f32 0.0, %v1113
  %v1115 = vpop.f32.mrf.mxu0
  %v1116 = vadd.f32 0.0, %v1115
  %v1117 = vpop.f32.mrf.mxu0
  %v1118 = vadd.f32 0.0, %v1117
  %1119 = vmatprep.mubr.bf16.mxu0 0
  %1120 = vmatmul.mubr.bf16.gmra.mxu0 %v933
  %v1121 = vpop.f32.mrf.mxu0
  %v1122 = vadd.f32 0.0, %v1121
  %v1123 = vpop.f32.mrf.mxu0
  %v1124 = vadd.f32 0.0, %v1123
  %v1125 = vpop.f32.mrf.mxu0
  %v1126 = vadd.f32 0.0, %v1125
  %v1127 = vpop.f32.mrf.mxu0
  %v1128 = vadd.f32 0.0, %v1127
  %1129 = vmatprep.mubr.bf16.mxu0 0
  %1130 = vmatmul.mubr.bf16.gmra.mxu0 %v934
  %v1131 = vpop.f32.mrf.mxu0
  %v1132 = vadd.f32 0.0, %v1131
  %v1133 = vpop.f32.mrf.mxu0
  %v1134 = vadd.f32 0.0, %v1133
  %v1135 = vpop.f32.mrf.mxu0
  %v1136 = vadd.f32 0.0, %v1135
  %v1137 = vpop.f32.mrf.mxu0
  %v1138 = vadd.f32 0.0, %v1137
  %1139 = vdwg.mxu0
  %1140 = vmatprep.subr.bf16.mxu0 0
  %1141 = vmatpush1.bf16.msra.mxu0 %v1042
  %1142 = vmatprep.subr.bf16.mxu0 0
  %1143 = vmatpush1.bf16.msra.mxu0 %v1039
  %1144 = vmatprep.subr.bf16.mxu0 0
  %1145 = vmatpush1.bf16.msra.mxu0 %v1036
  %1146 = vmatprep.subr.bf16.mxu0 0
  %1147 = vmatpush1.bf16.msra.mxu0 %v1033
  %1148 = vmatprep.subr.bf16.mxu0 0
  %1149 = vmatpush1.bf16.msra.mxu0 %v1030
  %1150 = vmatprep.subr.bf16.mxu0 0
  %1151 = vmatpush1.bf16.msra.mxu0 %v1027
  %1152 = vmatprep.subr.bf16.mxu0 0
  %1153 = vmatpush1.bf16.msra.mxu0 %v1024
  %1154 = vmatprep.subr.bf16.mxu0 0
  %1155 = vmatpush1.bf16.msra.mxu0 %v1021
  %1156 = vmatprep.subr.bf16.mxu0 0
  %1157 = vmatpush2.bf16.msra.mxu0 0
  %1158 = vmatprep.subr.bf16.mxu0 0
  %1159 = vmatpush2.bf16.msra.mxu0 0
  %1160 = vmatprep.subr.bf16.mxu0 0
  %1161 = vmatpush2.bf16.msra.mxu0 0
  %1162 = vmatprep.subr.bf16.mxu0 0
  %1163 = vmatpush2.bf16.msra.mxu0 0
  %1164 = vmatprep.subr.bf16.mxu0 0
  %1165 = vmatpush2.bf16.msra.mxu0 0
  %1166 = vmatprep.subr.bf16.mxu0 0
  %1167 = vmatpush2.bf16.msra.mxu0 0
  %1168 = vmatprep.subr.bf16.mxu0 0
  %1169 = vmatpush2.bf16.msra.mxu0 0
  %1170 = vmatprep.subr.bf16.mxu0 0
  %1171 = vmatpush2.bf16.msra.mxu0 0
  %1172 = vmatprep.mubr.bf16.mxu0 0
  %1173 = vmatmul.mubr.bf16.gmra.mxu0 %v931
  %v1174 = vpop.f32.mrf.mxu0
  %v1175 = vadd.f32 0.0, %v1174
  %v1176 = vpop.f32.mrf.mxu0
  %v1177 = vpop.f32.mrf.mxu0
  %v1178 = vadd.f32 0.0, %v1177
  %v1179 = vpop.f32.mrf.mxu0
  %1180 = vmatprep.mubr.bf16.mxu0 0
  %1181 = vmatmul.mubr.bf16.gmra.mxu0 %v932
  %v1182 = vpop.f32.mrf.mxu0
  %v1183 = vadd.f32 0.0, %v1182
  %v1184 = vpop.f32.mrf.mxu0
  %v1185 = vpop.f32.mrf.mxu0
  %v1186 = vadd.f32 0.0, %v1185
  %v1187 = vpop.f32.mrf.mxu0
  %1188 = vmatprep.mubr.bf16.mxu0 0
  %1189 = vmatmul.mubr.bf16.gmra.mxu0 %v933
  %v1190 = vpop.f32.mrf.mxu0
  %v1191 = vadd.f32 0.0, %v1190
  %v1192 = vpop.f32.mrf.mxu0
  %v1193 = vpop.f32.mrf.mxu0
  %v1194 = vadd.f32 0.0, %v1193
  %v1195 = vpop.f32.mrf.mxu0
  %1196 = vmatprep.mubr.bf16.mxu0 0
  %1197 = vmatmul.mubr.bf16.gmra.mxu0 %v934
  %v1198 = vpop.f32.mrf.mxu0
  %v1199 = vadd.f32 0.0, %v1198
  %v1200 = vpop.f32.mrf.mxu0
  %v1201 = vpop.f32.mrf.mxu0
  %v1202 = vadd.f32 0.0, %v1201
  %v1203 = vpop.f32.mrf.mxu0
  %1204 = vdwg.mxu0
  %v1213 = vunpack.c.l.b16 %v835
  %v1214 = vunpack.c.l.b16 %v836
  %v1215 = vunpack.c.l.b16 %v837
  %v1216 = vunpack.c.l.b16 %v838
  %v1217 = vunpack.c.l.b16 %v839
  %v1218 = vunpack.c.l.b16 %v840
  %v1219 = vunpack.c.l.b16 %v841
  %v1220 = vunpack.c.l.b16 %v842
  %v1221 = vpack.c.b16 %v1214, %v1213
  %v1222 = vpack.c.b16 %v1216, %v1215
  %v1223 = vpack.c.b16 %v1218, %v1217
  %v1224 = vpack.c.b16 %v1220, %v1219
  %v1261 = vunpack.c.l.b16 %v843
  %v1262 = vunpack.c.h.b16 %v843
  %v1263 = vunpack.c.l.b16 %v844
  %v1264 = vunpack.c.l.b16 %v845
  %v1265 = vunpack.c.h.b16 %v845
  %v1266 = vunpack.c.l.b16 %v846
  %v1267 = vunpack.c.l.b16 %v847
  %v1268 = vunpack.c.h.b16 %v847
  %v1269 = vunpack.c.l.b16 %v848
  %v1270 = vunpack.c.l.b16 %v849
  %v1271 = vunpack.c.h.b16 %v849
  %v1272 = vunpack.c.l.b16 %v850
  %v1273 = vunpack.c.l.b16 %v851
  %v1274 = vunpack.c.h.b16 %v851
  %v1275 = vunpack.c.l.b16 %v852
  %v1276 = vunpack.c.l.b16 %v853
  %v1277 = vunpack.c.h.b16 %v853
  %v1278 = vunpack.c.l.b16 %v854
  %v1279 = vunpack.c.l.b16 %v855
  %v1280 = vunpack.c.h.b16 %v855
  %v1281 = vunpack.c.l.b16 %v856
  %v1282 = vunpack.c.l.b16 %v857
  %v1283 = vunpack.c.h.b16 %v857
  %v1284 = vunpack.c.l.b16 %v858
  %v1285 = vunpack.c.l.b16 %v859
  %v1286 = vunpack.c.h.b16 %v859
  %v1287 = vunpack.c.l.b16 %v860
  %v1288 = vunpack.c.l.b16 %v861
  %v1289 = vunpack.c.h.b16 %v861
  %v1290 = vunpack.c.l.b16 %v862
  %v1291 = vunpack.c.l.b16 %v863
  %v1292 = vunpack.c.h.b16 %v863
  %v1293 = vunpack.c.l.b16 %v864
  %v1294 = vunpack.c.l.b16 %v865
  %v1295 = vunpack.c.h.b16 %v865
  %v1296 = vunpack.c.l.b16 %v866
  %v1297 = vunpack.c.l.b16 %v867
  %v1298 = vunpack.c.h.b16 %v867
  %v1299 = vunpack.c.l.b16 %v868
  %v1300 = vunpack.c.l.b16 %v869
  %v1301 = vunpack.c.h.b16 %v869
  %v1302 = vunpack.c.l.b16 %v870
  %v1303 = vunpack.c.l.b16 %v871
  %v1304 = vunpack.c.h.b16 %v871
  %v1305 = vunpack.c.l.b16 %v872
  %v1306 = vunpack.c.l.b16 %v873
  %v1307 = vunpack.c.h.b16 %v873
  %v1308 = vunpack.c.l.b16 %v874
  %v1309 = vpack.c.b16 %v1264, %v1261
  %v1310 = vpack.c.b16 %v1265, %v1262
  %v1311 = vpack.c.b16 %v1266, %v1263
  %v1312 = vpack.c.b16 %v1270, %v1267
  %v1313 = vpack.c.b16 %v1271, %v1268
  %v1314 = vpack.c.b16 %v1272, %v1269
  %v1315 = vpack.c.b16 %v1276, %v1273
  %v1316 = vpack.c.b16 %v1277, %v1274
  %v1317 = vpack.c.b16 %v1278, %v1275
  %v1318 = vpack.c.b16 %v1282, %v1279
  %v1319 = vpack.c.b16 %v1283, %v1280
  %v1320 = vpack.c.b16 %v1284, %v1281
  %v1321 = vpack.c.b16 %v1288, %v1285
  %v1322 = vpack.c.b16 %v1289, %v1286
  %v1323 = vpack.c.b16 %v1290, %v1287
  %v1324 = vpack.c.b16 %v1294, %v1291
  %v1325 = vpack.c.b16 %v1295, %v1292
  %v1326 = vpack.c.b16 %v1296, %v1293
  %v1327 = vpack.c.b16 %v1300, %v1297
  %v1328 = vpack.c.b16 %v1301, %v1298
  %v1329 = vpack.c.b16 %v1302, %v1299
  %v1330 = vpack.c.b16 %v1306, %v1303
  %v1331 = vpack.c.b16 %v1307, %v1304
  %v1332 = vpack.c.b16 %v1308, %v1305
  %1357 = vmatprep.subr.bf16.mxu0 %v1331
  %1358 = vmatpush1.bf16.msra.mxu0 %v1330
  %1359 = vmatprep.subr.bf16.mxu0 %v1328
  %1360 = vmatpush1.bf16.msra.mxu0 %v1327
  %1361 = vmatprep.subr.bf16.mxu0 %v1325
  %1362 = vmatpush1.bf16.msra.mxu0 %v1324
  %1363 = vmatprep.subr.bf16.mxu0 %v1322
  %1364 = vmatpush1.bf16.msra.mxu0 %v1321
  %1365 = vmatprep.subr.bf16.mxu0 %v1319
  %1366 = vmatpush1.bf16.msra.mxu0 %v1318
  %1367 = vmatprep.subr.bf16.mxu0 %v1316
  %1368 = vmatpush1.bf16.msra.mxu0 %v1315
  %1369 = vmatprep.subr.bf16.mxu0 %v1313
  %1370 = vmatpush1.bf16.msra.mxu0 %v1312
  %1371 = vmatprep.subr.bf16.mxu0 %v1310
  %1372 = vmatpush1.bf16.msra.mxu0 %v1309
  %1373 = vmatprep.subr.bf16.mxu0 0
  %1374 = vmatpush2.bf16.msra.mxu0 0
  %1375 = vmatprep.subr.bf16.mxu0 0
  %1376 = vmatpush2.bf16.msra.mxu0 0
  %1377 = vmatprep.subr.bf16.mxu0 0
  %1378 = vmatpush2.bf16.msra.mxu0 0
  %1379 = vmatprep.subr.bf16.mxu0 0
  %1380 = vmatpush2.bf16.msra.mxu0 0
  %1381 = vmatprep.subr.bf16.mxu0 0
  %1382 = vmatpush2.bf16.msra.mxu0 0
  %1383 = vmatprep.subr.bf16.mxu0 0
  %1384 = vmatpush2.bf16.msra.mxu0 0
  %1385 = vmatprep.subr.bf16.mxu0 0
  %1386 = vmatpush2.bf16.msra.mxu0 0
  %1387 = vmatprep.subr.bf16.mxu0 0
  %1388 = vmatpush2.bf16.msra.mxu0 0
  %1389 = vmatprep.mubr.bf16.mxu0 0
  %1390 = vmatmul.mubr.bf16.gmra.mxu0 %v1221
  %v1391 = vpop.f32.mrf.mxu0
  %v1392 = vadd.f32 %v1102, %v1391
  %v1393 = vpop.f32.mrf.mxu0
  %v1394 = vadd.f32 %v1104, %v1393
  %v1395 = vpop.f32.mrf.mxu0
  %v1396 = vadd.f32 %v1106, %v1395
  %v1397 = vpop.f32.mrf.mxu0
  %v1398 = vadd.f32 %v1108, %v1397
  %1399 = vmatprep.mubr.bf16.mxu0 0
  %1400 = vmatmul.mubr.bf16.gmra.mxu0 %v1222
  %v1401 = vpop.f32.mrf.mxu0
  %v1402 = vadd.f32 %v1112, %v1401
  %v1403 = vpop.f32.mrf.mxu0
  %v1404 = vadd.f32 %v1114, %v1403
  %v1405 = vpop.f32.mrf.mxu0
  %v1406 = vadd.f32 %v1116, %v1405
  %v1407 = vpop.f32.mrf.mxu0
  %v1408 = vadd.f32 %v1118, %v1407
  %1409 = vmatprep.mubr.bf16.mxu0 0
  %1410 = vmatmul.mubr.bf16.gmra.mxu0 %v1223
  %v1411 = vpop.f32.mrf.mxu0
  %v1412 = vadd.f32 %v1122, %v1411
  %v1413 = vpop.f32.mrf.mxu0
  %v1414 = vadd.f32 %v1124, %v1413
  %v1415 = vpop.f32.mrf.mxu0
  %v1416 = vadd.f32 %v1126, %v1415
  %v1417 = vpop.f32.mrf.mxu0
  %v1418 = vadd.f32 %v1128, %v1417
  %1419 = vmatprep.mubr.bf16.mxu0 0
  %1420 = vmatmul.mubr.bf16.gmra.mxu0 %v1224
  %v1421 = vpop.f32.mrf.mxu0
  %v1422 = vadd.f32 %v1132, %v1421
  %v1423 = vpop.f32.mrf.mxu0
  %v1424 = vadd.f32 %v1134, %v1423
  %v1425 = vpop.f32.mrf.mxu0
  %v1426 = vadd.f32 %v1136, %v1425
  %v1427 = vpop.f32.mrf.mxu0
  %v1428 = vadd.f32 %v1138, %v1427
  %1429 = vdwg.mxu0
  %1430 = vmatprep.subr.bf16.mxu0 0
  %1431 = vmatpush1.bf16.msra.mxu0 %v1332
  %1432 = vmatprep.subr.bf16.mxu0 0
  %1433 = vmatpush1.bf16.msra.mxu0 %v1329
  %1434 = vmatprep.subr.bf16.mxu0 0
  %1435 = vmatpush1.bf16.msra.mxu0 %v1326
  %1436 = vmatprep.subr.bf16.mxu0 0
  %1437 = vmatpush1.bf16.msra.mxu0 %v1323
  %1438 = vmatprep.subr.bf16.mxu0 0
  %1439 = vmatpush1.bf16.msra.mxu0 %v1320
  %1440 = vmatprep.subr.bf16.mxu0 0
  %1441 = vmatpush1.bf16.msra.mxu0 %v1317
  %1442 = vmatprep.subr.bf16.mxu0 0
  %1443 = vmatpush1.bf16.msra.mxu0 %v1314
  %1444 = vmatprep.subr.bf16.mxu0 0
  %1445 = vmatpush1.bf16.msra.mxu0 %v1311
  %1446 = vmatprep.subr.bf16.mxu0 0
  %1447 = vmatpush2.bf16.msra.mxu0 0
  %1448 = vmatprep.subr.bf16.mxu0 0
  %1449 = vmatpush2.bf16.msra.mxu0 0
  %1450 = vmatprep.subr.bf16.mxu0 0
  %1451 = vmatpush2.bf16.msra.mxu0 0
  %1452 = vmatprep.subr.bf16.mxu0 0
  %1453 = vmatpush2.bf16.msra.mxu0 0
  %1454 = vmatprep.subr.bf16.mxu0 0
  %1455 = vmatpush2.bf16.msra.mxu0 0
  %1456 = vmatprep.subr.bf16.mxu0 0
  %1457 = vmatpush2.bf16.msra.mxu0 0
  %1458 = vmatprep.subr.bf16.mxu0 0
  %1459 = vmatpush2.bf16.msra.mxu0 0
  %1460 = vmatprep.subr.bf16.mxu0 0
  %1461 = vmatpush2.bf16.msra.mxu0 0
  %1462 = vmatprep.mubr.bf16.mxu0 0
  %1463 = vmatmul.mubr.bf16.gmra.mxu0 %v1221
  %v1464 = vpop.f32.mrf.mxu0
  %v1465 = vadd.f32 %v1175, %v1464
  %v1466 = vpop.f32.mrf.mxu0
  %v1467 = vpop.f32.mrf.mxu0
  %v1468 = vadd.f32 %v1178, %v1467
  %v1469 = vpop.f32.mrf.mxu0
  %1470 = vmatprep.mubr.bf16.mxu0 0
  %1471 = vmatmul.mubr.bf16.gmra.mxu0 %v1222
  %v1472 = vpop.f32.mrf.mxu0
  %v1473 = vadd.f32 %v1183, %v1472
  %v1474 = vpop.f32.mrf.mxu0
  %v1475 = vpop.f32.mrf.mxu0
  %v1476 = vadd.f32 %v1186, %v1475
  %v1477 = vpop.f32.mrf.mxu0
  %1478 = vmatprep.mubr.bf16.mxu0 0
  %1479 = vmatmul.mubr.bf16.gmra.mxu0 %v1223
  %v1480 = vpop.f32.mrf.mxu0
  %v1481 = vadd.f32 %v1191, %v1480
  %v1482 = vpop.f32.mrf.mxu0
  %v1483 = vpop.f32.mrf.mxu0
  %v1484 = vadd.f32 %v1194, %v1483
  %v1485 = vpop.f32.mrf.mxu0
  %1486 = vmatprep.mubr.bf16.mxu0 0
  %1487 = vmatmul.mubr.bf16.gmra.mxu0 %v1224
  %v1488 = vpop.f32.mrf.mxu0
  %v1489 = vadd.f32 %v1199, %v1488
  %v1490 = vpop.f32.mrf.mxu0
  %v1491 = vpop.f32.mrf.mxu0
  %v1492 = vadd.f32 %v1202, %v1491
  %v1493 = vpop.f32.mrf.mxu0
  %1494 = vdwg.mxu0
  %v1495 = vld [vmem:[%s10] sm:$0x7]
  %v1497 = vlaneseq
  %v1498 = vshrl.u32 %v1497, 7
  %v1499 = vsub.s32 0, %v1498
  %v1500 = vrot.slane %v1495, %v1499
  %v1501 = vlaneseq
  %v1502 = vshrl.u32 %v1501, 7
  %v1503 = vsub.s32 1, %v1502
  %v1504 = vrot.slane %v1495, %v1503
  %v1505 = vlaneseq
  %v1506 = vshrl.u32 %v1505, 7
  %v1507 = vsub.s32 2, %v1506
  %v1508 = vrot.slane %v1495, %v1507
  %v1512 = vadd.f32 %v1392, %v1500
  %v1513 = vadd.f32 %v1394, %v1504
  %v1514 = vadd.f32 %v1465, %v1508
  %v1515 = vadd.f32 %v1396, %v1500
  %v1516 = vadd.f32 %v1398, %v1504
  %v1517 = vadd.f32 %v1468, %v1508
  %v1518 = vadd.f32 %v1402, %v1500
  %v1519 = vadd.f32 %v1404, %v1504
  %v1520 = vadd.f32 %v1473, %v1508
  %v1521 = vadd.f32 %v1406, %v1500
  %v1522 = vadd.f32 %v1408, %v1504
  %v1523 = vadd.f32 %v1476, %v1508
  %v1524 = vadd.f32 %v1412, %v1500
  %v1525 = vadd.f32 %v1414, %v1504
  %v1526 = vadd.f32 %v1481, %v1508
  %v1527 = vadd.f32 %v1416, %v1500
  %v1528 = vadd.f32 %v1418, %v1504
  %v1529 = vadd.f32 %v1484, %v1508
  %v1530 = vadd.f32 %v1422, %v1500
  %v1531 = vadd.f32 %v1424, %v1504
  %v1532 = vadd.f32 %v1489, %v1508
  %v1533 = vadd.f32 %v1426, %v1500
  %v1534 = vadd.f32 %v1428, %v1504
  %v1535 = vadd.f32 %v1492, %v1508
  %1536 = vst [vmem:[#allocation4] sm:$0xff] %v1512
  %1537 = vst [vmem:[#allocation4 + $0x8] sm:$0xff] %v1513
  %1538 = vst [vmem:[#allocation4 + $0x10] sm:$0xff] %v1514
  %1539 = vst [vmem:[#allocation4 + $0x18] sm:$0xff] %v1515
  %1540 = vst [vmem:[#allocation4 + $0x20] sm:$0xff] %v1516
  %1541 = vst [vmem:[#allocation4 + $0x28] sm:$0xff] %v1517
  %1542 = vst [vmem:[#allocation4 + $0x30] sm:$0xff] %v1518
  %1543 = vst [vmem:[#allocation4 + $0x38] sm:$0xff] %v1519
  %1544 = vst [vmem:[#allocation4 + $0x40] sm:$0xff] %v1520
  %1545 = vst [vmem:[#allocation4 + $0x48] sm:$0xff] %v1521
  %1546 = vst [vmem:[#allocation4 + $0x50] sm:$0xff] %v1522
  %1547 = vst [vmem:[#allocation4 + $0x58] sm:$0xff] %v1523
  %1548 = vst [vmem:[#allocation4 + $0x60] sm:$0xff] %v1524
  %1549 = vst [vmem:[#allocation4 + $0x68] sm:$0xff] %v1525
  %1550 = vst [vmem:[#allocation4 + $0x70] sm:$0xff] %v1526
  %1551 = vst [vmem:[#allocation4 + $0x78] sm:$0xff] %v1527
  %1552 = vst [vmem:[#allocation4 + $0x80] sm:$0xff] %v1528
  %1553 = vst [vmem:[#allocation4 + $0x88] sm:$0xff] %v1529
  %1554 = vst [vmem:[#allocation4 + $0x90] sm:$0xff] %v1530
  %1555 = vst [vmem:[#allocation4 + $0x98] sm:$0xff] %v1531
  %1556 = vst [vmem:[#allocation4 + $0xa0] sm:$0xff] %v1532
  %1557 = vst [vmem:[#allocation4 + $0xa8] sm:$0xff] %v1533
  %1558 = vst [vmem:[#allocation4 + $0xb0] sm:$0xff] %v1534
  %1559 = vst [vmem:[#allocation4 + $0xb8] sm:$0xff] %v1535
  %v1560 = vld [vmem:[%s8] sm:$0xff]
  %v1561 = vld [vmem:[%s8 + $0x8] sm:$0xff]
  %v1562 = vld [vmem:[%s8 + $0x10] sm:$0xff]
  %v1563 = vld [vmem:[%s8 + $0x18] sm:$0xff]
  %v1564 = vld [vmem:[%s8 + $0x20] sm:$0xff]
  %v1565 = vld [vmem:[%s8 + $0x28] sm:$0xff]
  %v1566 = vld [vmem:[%s8 + $0x30] sm:$0xff]
  %v1567 = vld [vmem:[%s8 + $0x38] sm:$0xff]
  %v1568 = vld [vmem:[%s8 + $0x40] sm:$0xff]
  %v1569 = vld [vmem:[%s8 + $0x48] sm:$0xff]
  %v1570 = vld [vmem:[%s8 + $0x50] sm:$0xff]
  %v1571 = vld [vmem:[%s8 + $0x58] sm:$0xff]
  %v1572 = vld [vmem:[%s8 + $0x60] sm:$0xff]
  %v1573 = vld [vmem:[%s8 + $0x68] sm:$0xff]
  %v1574 = vld [vmem:[%s8 + $0x70] sm:$0xff]
  %v1575 = vld [vmem:[%s8 + $0x78] sm:$0xff]
  %v1576 = vld [vmem:[%s8 + $0x80] sm:$0xff]
  %v1577 = vld [vmem:[%s8 + $0x88] sm:$0xff]
  %v1578 = vld [vmem:[%s8 + $0x90] sm:$0xff]
  %v1579 = vld [vmem:[%s8 + $0x98] sm:$0xff]
  %v1580 = vld [vmem:[%s8 + $0xa0] sm:$0xff]
  %v1581 = vld [vmem:[%s8 + $0xa8] sm:$0xff]
  %v1582 = vld [vmem:[%s8 + $0xb0] sm:$0xff]
  %v1583 = vld [vmem:[%s8 + $0xb8] sm:$0xff]
  %v1584 = vld [vmem:[%s8 + $0xc0] sm:$0xff]
  %v1585 = vld [vmem:[%s8 + $0xc8] sm:$0xff]
  %v1586 = vld [vmem:[%s8 + $0xd0] sm:$0xff]
  %v1587 = vld [vmem:[%s8 + $0xd8] sm:$0xff]
  %v1588 = vld [vmem:[%s8 + $0xe0] sm:$0xff]
  %v1589 = vld [vmem:[%s8 + $0xe8] sm:$0xff]
  %v1590 = vld [vmem:[%s8 + $0xf0] sm:$0xff]
  %v1591 = vld [vmem:[%s8 + $0xf8] sm:$0xff]
  %v1592 = vld [vmem:[%s8 + $0x100] sm:$0xff]
  %v1593 = vld [vmem:[%s8 + $0x108] sm:$0xff]
  %v1594 = vld [vmem:[%s8 + $0x110] sm:$0xff]
  %v1595 = vld [vmem:[%s8 + $0x118] sm:$0xff]
  %v1596 = vld [vmem:[%s8 + $0x120] sm:$0xff]
  %v1597 = vld [vmem:[%s8 + $0x128] sm:$0xff]
  %v1598 = vld [vmem:[%s8 + $0x130] sm:$0xff]
  %v1599 = vld [vmem:[%s8 + $0x138] sm:$0xff]
  %v1600 = vld [vmem:[%s8 + $0x140] sm:$0xff]
  %v1601 = vld [vmem:[%s8 + $0x148] sm:$0xff]
  %v1602 = vld [vmem:[%s8 + $0x150] sm:$0xff]
  %v1603 = vld [vmem:[%s8 + $0x158] sm:$0xff]
  %v1604 = vld [vmem:[%s8 + $0x160] sm:$0xff]
  %v1605 = vld [vmem:[%s8 + $0x168] sm:$0xff]
  %v1606 = vld [vmem:[%s8 + $0x170] sm:$0xff]
  %v1607 = vld [vmem:[%s8 + $0x178] sm:$0xff]
  %v1608 = vld [vmem:[%s8 + $0x180] sm:$0xff]
  %v1609 = vld [vmem:[%s8 + $0x188] sm:$0xff]
  %v1610 = vld [vmem:[%s8 + $0x190] sm:$0xff]
  %v1611 = vld [vmem:[%s8 + $0x198] sm:$0xff]
  %v1612 = vld [vmem:[%s8 + $0x1a0] sm:$0xff]
  %v1613 = vld [vmem:[%s8 + $0x1a8] sm:$0xff]
  %v1614 = vld [vmem:[%s8 + $0x1b0] sm:$0xff]
  %v1615 = vld [vmem:[%s8 + $0x1b8] sm:$0xff]
  %v1616 = vld [vmem:[%s8 + $0x1c0] sm:$0xff]
  %v1617 = vld [vmem:[%s8 + $0x1c8] sm:$0xff]
  %v1618 = vld [vmem:[%s8 + $0x1d0] sm:$0xff]
  %v1619 = vld [vmem:[%s8 + $0x1d8] sm:$0xff]
  %v1620 = vld [vmem:[%s8 + $0x1e0] sm:$0xff]
  %v1621 = vld [vmem:[%s8 + $0x1e8] sm:$0xff]
  %v1622 = vld [vmem:[%s8 + $0x1f0] sm:$0xff]
  %v1623 = vld [vmem:[%s8 + $0x1f8] sm:$0xff]
  %v1624 = vld [vmem:[%s8 + $0x200] sm:$0xff]
  %v1625 = vld [vmem:[%s8 + $0x208] sm:$0xff]
  %v1626 = vld [vmem:[%s8 + $0x210] sm:$0xff]
  %v1627 = vld [vmem:[%s8 + $0x218] sm:$0xff]
  %v1628 = vld [vmem:[%s8 + $0x220] sm:$0xff]
  %v1629 = vld [vmem:[%s8 + $0x228] sm:$0xff]
  %v1630 = vld [vmem:[%s8 + $0x230] sm:$0xff]
  %v1631 = vld [vmem:[%s8 + $0x238] sm:$0xff]
  %v1632 = vld [vmem:[%s8 + $0x240] sm:$0xff]
  %v1633 = vld [vmem:[%s8 + $0x248] sm:$0xff]
  %v1634 = vld [vmem:[%s8 + $0x250] sm:$0xff]
  %v1635 = vld [vmem:[%s8 + $0x258] sm:$0xff]
  %v1636 = vld [vmem:[%s8 + $0x260] sm:$0xff]
  %v1637 = vld [vmem:[%s8 + $0x268] sm:$0xff]
  %v1638 = vld [vmem:[%s8 + $0x270] sm:$0xff]
  %v1639 = vld [vmem:[%s8 + $0x278] sm:$0xff]
  %v1640 = vld [vmem:[%s8 + $0x280] sm:$0xff]
  %v1641 = vld [vmem:[%s8 + $0x288] sm:$0xff]
  %v1642 = vld [vmem:[%s8 + $0x290] sm:$0xff]
  %v1643 = vld [vmem:[%s8 + $0x298] sm:$0xff]
  %v1644 = vld [vmem:[%s8 + $0x2a0] sm:$0xff]
  %v1645 = vld [vmem:[%s8 + $0x2a8] sm:$0xff]
  %v1646 = vld [vmem:[%s8 + $0x2b0] sm:$0xff]
  %v1647 = vld [vmem:[%s8 + $0x2b8] sm:$0xff]
  %v1648 = vld [vmem:[%s8 + $0x2c0] sm:$0xff]
  %v1649 = vld [vmem:[%s8 + $0x2c8] sm:$0xff]
  %v1650 = vld [vmem:[%s8 + $0x2d0] sm:$0xff]
  %v1651 = vld [vmem:[%s8 + $0x2d8] sm:$0xff]
  %v1652 = vld [vmem:[%s8 + $0x2e0] sm:$0xff]
  %v1653 = vld [vmem:[%s8 + $0x2e8] sm:$0xff]
  %v1654 = vld [vmem:[%s8 + $0x2f0] sm:$0xff]
  %v1655 = vld [vmem:[%s8 + $0x2f8] sm:$0xff]
  %v1656 = vld [vmem:[%s11] sm:$0x1]
  %v1658 = vlaneseq
  %v1659 = vshrl.u32 %v1658, 7
  %v1660 = vsub.s32 0, %v1659
  %v1661 = vrot.slane %v1656, %v1660
  %v1663 = vld [vmem:[%s12] sm:$0x1]
  %v1665 = vlaneseq
  %v1666 = vshrl.u32 %v1665, 7
  %v1667 = vsub.s32 0, %v1666
  %v1668 = vrot.slane %v1663, %v1667
  %v1670 = vld [vmem:[#allocation2] sm:$0xff]
  %v1671 = vld [vmem:[#allocation2 + $0x8] sm:$0xff]
  %v1672 = vpack.c.bf16 %v1670, %v1670
  %v1673 = vpack.c.bf16 %v1671, %v1671
  %v1770 = vunpack.c.l.b16 %v1560
  %v1771 = vunpack.c.h.b16 %v1560
  %v1772 = vunpack.c.l.b16 %v1561
  %v1773 = vunpack.c.h.b16 %v1561
  %v1774 = vunpack.c.l.b16 %v1562
  %v1775 = vunpack.c.h.b16 %v1562
  %v1776 = vunpack.c.l.b16 %v1563
  %v1777 = vunpack.c.h.b16 %v1563
  %v1778 = vunpack.c.l.b16 %v1564
  %v1779 = vunpack.c.h.b16 %v1564
  %v1780 = vunpack.c.l.b16 %v1565
  %v1781 = vunpack.c.h.b16 %v1565
  %v1782 = vunpack.c.l.b16 %v1566
  %v1783 = vunpack.c.h.b16 %v1566
  %v1784 = vunpack.c.l.b16 %v1567
  %v1785 = vunpack.c.h.b16 %v1567
  %v1786 = vunpack.c.l.b16 %v1568
  %v1787 = vunpack.c.h.b16 %v1568
  %v1788 = vunpack.c.l.b16 %v1569
  %v1789 = vunpack.c.h.b16 %v1569
  %v1790 = vunpack.c.l.b16 %v1570
  %v1791 = vunpack.c.h.b16 %v1570
  %v1792 = vunpack.c.l.b16 %v1571
  %v1793 = vunpack.c.h.b16 %v1571
  %v1794 = vunpack.c.l.b16 %v1572
  %v1795 = vunpack.c.h.b16 %v1572
  %v1796 = vunpack.c.l.b16 %v1573
  %v1797 = vunpack.c.h.b16 %v1573
  %v1798 = vunpack.c.l.b16 %v1574
  %v1799 = vunpack.c.h.b16 %v1574
  %v1800 = vunpack.c.l.b16 %v1575
  %v1801 = vunpack.c.h.b16 %v1575
  %v1802 = vunpack.c.l.b16 %v1576
  %v1803 = vunpack.c.h.b16 %v1576
  %v1804 = vunpack.c.l.b16 %v1577
  %v1805 = vunpack.c.h.b16 %v1577
  %v1806 = vunpack.c.l.b16 %v1578
  %v1807 = vunpack.c.h.b16 %v1578
  %v1808 = vunpack.c.l.b16 %v1579
  %v1809 = vunpack.c.h.b16 %v1579
  %v1810 = vunpack.c.l.b16 %v1580
  %v1811 = vunpack.c.h.b16 %v1580
  %v1812 = vunpack.c.l.b16 %v1581
  %v1813 = vunpack.c.h.b16 %v1581
  %v1814 = vunpack.c.l.b16 %v1582
  %v1815 = vunpack.c.h.b16 %v1582
  %v1816 = vunpack.c.l.b16 %v1583
  %v1817 = vunpack.c.h.b16 %v1583
  %v1818 = vunpack.c.l.b16 %v1584
  %v1819 = vunpack.c.h.b16 %v1584
  %v1820 = vunpack.c.l.b16 %v1585
  %v1821 = vunpack.c.h.b16 %v1585
  %v1822 = vunpack.c.l.b16 %v1586
  %v1823 = vunpack.c.h.b16 %v1586
  %v1824 = vunpack.c.l.b16 %v1587
  %v1825 = vunpack.c.h.b16 %v1587
  %v1826 = vunpack.c.l.b16 %v1588
  %v1827 = vunpack.c.h.b16 %v1588
  %v1828 = vunpack.c.l.b16 %v1589
  %v1829 = vunpack.c.h.b16 %v1589
  %v1830 = vunpack.c.l.b16 %v1590
  %v1831 = vunpack.c.h.b16 %v1590
  %v1832 = vunpack.c.l.b16 %v1591
  %v1833 = vunpack.c.h.b16 %v1591
  %v1834 = vunpack.c.l.b16 %v1592
  %v1835 = vunpack.c.h.b16 %v1592
  %v1836 = vunpack.c.l.b16 %v1593
  %v1837 = vunpack.c.h.b16 %v1593
  %v1838 = vunpack.c.l.b16 %v1594
  %v1839 = vunpack.c.h.b16 %v1594
  %v1840 = vunpack.c.l.b16 %v1595
  %v1841 = vunpack.c.h.b16 %v1595
  %v1842 = vunpack.c.l.b16 %v1596
  %v1843 = vunpack.c.h.b16 %v1596
  %v1844 = vunpack.c.l.b16 %v1597
  %v1845 = vunpack.c.h.b16 %v1597
  %v1846 = vunpack.c.l.b16 %v1598
  %v1847 = vunpack.c.h.b16 %v1598
  %v1848 = vunpack.c.l.b16 %v1599
  %v1849 = vunpack.c.h.b16 %v1599
  %v1850 = vunpack.c.l.b16 %v1600
  %v1851 = vunpack.c.h.b16 %v1600
  %v1852 = vunpack.c.l.b16 %v1601
  %v1853 = vunpack.c.h.b16 %v1601
  %v1854 = vunpack.c.l.b16 %v1602
  %v1855 = vunpack.c.h.b16 %v1602
  %v1856 = vunpack.c.l.b16 %v1603
  %v1857 = vunpack.c.h.b16 %v1603
  %v1858 = vunpack.c.l.b16 %v1604
  %v1859 = vunpack.c.h.b16 %v1604
  %v1860 = vunpack.c.l.b16 %v1605
  %v1861 = vunpack.c.h.b16 %v1605
  %v1862 = vunpack.c.l.b16 %v1606
  %v1863 = vunpack.c.h.b16 %v1606
  %v1864 = vunpack.c.l.b16 %v1607
  %v1865 = vunpack.c.h.b16 %v1607
  %v1866 = vunpack.c.l.b16 %v1608
  %v1867 = vunpack.c.h.b16 %v1608
  %v1868 = vunpack.c.l.b16 %v1609
  %v1869 = vunpack.c.h.b16 %v1609
  %v1870 = vunpack.c.l.b16 %v1610
  %v1871 = vunpack.c.h.b16 %v1610
  %v1872 = vunpack.c.l.b16 %v1611
  %v1873 = vunpack.c.h.b16 %v1611
  %v1874 = vunpack.c.l.b16 %v1612
  %v1875 = vunpack.c.h.b16 %v1612
  %v1876 = vunpack.c.l.b16 %v1613
  %v1877 = vunpack.c.h.b16 %v1613
  %v1878 = vunpack.c.l.b16 %v1614
  %v1879 = vunpack.c.h.b16 %v1614
  %v1880 = vunpack.c.l.b16 %v1615
  %v1881 = vunpack.c.h.b16 %v1615
  %v1882 = vunpack.c.l.b16 %v1616
  %v1883 = vunpack.c.h.b16 %v1616
  %v1884 = vunpack.c.l.b16 %v1617
  %v1885 = vunpack.c.h.b16 %v1617
  %v1886 = vunpack.c.l.b16 %v1618
  %v1887 = vunpack.c.h.b16 %v1618
  %v1888 = vunpack.c.l.b16 %v1619
  %v1889 = vunpack.c.h.b16 %v1619
  %v1890 = vunpack.c.l.b16 %v1620
  %v1891 = vunpack.c.h.b16 %v1620
  %v1892 = vunpack.c.l.b16 %v1621
  %v1893 = vunpack.c.h.b16 %v1621
  %v1894 = vunpack.c.l.b16 %v1622
  %v1895 = vunpack.c.h.b16 %v1622
  %v1896 = vunpack.c.l.b16 %v1623
  %v1897 = vunpack.c.h.b16 %v1623
  %v1898 = vunpack.c.l.b16 %v1624
  %v1899 = vunpack.c.h.b16 %v1624
  %v1900 = vunpack.c.l.b16 %v1625
  %v1901 = vunpack.c.h.b16 %v1625
  %v1902 = vunpack.c.l.b16 %v1626
  %v1903 = vunpack.c.h.b16 %v1626
  %v1904 = vunpack.c.l.b16 %v1627
  %v1905 = vunpack.c.h.b16 %v1627
  %v1906 = vunpack.c.l.b16 %v1628
  %v1907 = vunpack.c.h.b16 %v1628
  %v1908 = vunpack.c.l.b16 %v1629
  %v1909 = vunpack.c.h.b16 %v1629
  %v1910 = vunpack.c.l.b16 %v1630
  %v1911 = vunpack.c.h.b16 %v1630
  %v1912 = vunpack.c.l.b16 %v1631
  %v1913 = vunpack.c.h.b16 %v1631
  %v1914 = vunpack.c.l.b16 %v1632
  %v1915 = vunpack.c.h.b16 %v1632
  %v1916 = vunpack.c.l.b16 %v1633
  %v1917 = vunpack.c.h.b16 %v1633
  %v1918 = vunpack.c.l.b16 %v1634
  %v1919 = vunpack.c.h.b16 %v1634
  %v1920 = vunpack.c.l.b16 %v1635
  %v1921 = vunpack.c.h.b16 %v1635
  %v1922 = vunpack.c.l.b16 %v1636
  %v1923 = vunpack.c.h.b16 %v1636
  %v1924 = vunpack.c.l.b16 %v1637
  %v1925 = vunpack.c.h.b16 %v1637
  %v1926 = vunpack.c.l.b16 %v1638
  %v1927 = vunpack.c.h.b16 %v1638
  %v1928 = vunpack.c.l.b16 %v1639
  %v1929 = vunpack.c.h.b16 %v1639
  %v1930 = vunpack.c.l.b16 %v1640
  %v1931 = vunpack.c.h.b16 %v1640
  %v1932 = vunpack.c.l.b16 %v1641
  %v1933 = vunpack.c.h.b16 %v1641
  %v1934 = vunpack.c.l.b16 %v1642
  %v1935 = vunpack.c.h.b16 %v1642
  %v1936 = vunpack.c.l.b16 %v1643
  %v1937 = vunpack.c.h.b16 %v1643
  %v1938 = vunpack.c.l.b16 %v1644
  %v1939 = vunpack.c.h.b16 %v1644
  %v1940 = vunpack.c.l.b16 %v1645
  %v1941 = vunpack.c.h.b16 %v1645
  %v1942 = vunpack.c.l.b16 %v1646
  %v1943 = vunpack.c.h.b16 %v1646
  %v1944 = vunpack.c.l.b16 %v1647
  %v1945 = vunpack.c.h.b16 %v1647
  %v1946 = vunpack.c.l.b16 %v1648
  %v1947 = vunpack.c.h.b16 %v1648
  %v1948 = vunpack.c.l.b16 %v1649
  %v1949 = vunpack.c.h.b16 %v1649
  %v1950 = vunpack.c.l.b16 %v1650
  %v1951 = vunpack.c.h.b16 %v1650
  %v1952 = vunpack.c.l.b16 %v1651
  %v1953 = vunpack.c.h.b16 %v1651
  %v1954 = vunpack.c.l.b16 %v1652
  %v1955 = vunpack.c.h.b16 %v1652
  %v1956 = vunpack.c.l.b16 %v1653
  %v1957 = vunpack.c.h.b16 %v1653
  %v1958 = vunpack.c.l.b16 %v1654
  %v1959 = vunpack.c.h.b16 %v1654
  %v1960 = vunpack.c.l.b16 %v1655
  %v1961 = vunpack.c.h.b16 %v1655
  %v1962 = vpack.c.b16 %v1776, %v1770
  %v1963 = vpack.c.b16 %v1777, %v1771
  %v1964 = vpack.c.b16 %v1778, %v1772
  %v1965 = vpack.c.b16 %v1779, %v1773
  %v1966 = vpack.c.b16 %v1780, %v1774
  %v1967 = vpack.c.b16 %v1781, %v1775
  %v1968 = vpack.c.b16 %v1788, %v1782
  %v1969 = vpack.c.b16 %v1789, %v1783
  %v1970 = vpack.c.b16 %v1790, %v1784
  %v1971 = vpack.c.b16 %v1791, %v1785
  %v1972 = vpack.c.b16 %v1792, %v1786
  %v1973 = vpack.c.b16 %v1793, %v1787
  %v1974 = vpack.c.b16 %v1800, %v1794
  %v1975 = vpack.c.b16 %v1801, %v1795
  %v1976 = vpack.c.b16 %v1802, %v1796
  %v1977 = vpack.c.b16 %v1803, %v1797
  %v1978 = vpack.c.b16 %v1804, %v1798
  %v1979 = vpack.c.b16 %v1805, %v1799
  %v1980 = vpack.c.b16 %v1812, %v1806
  %v1981 = vpack.c.b16 %v1813, %v1807
  %v1982 = vpack.c.b16 %v1814, %v1808
  %v1983 = vpack.c.b16 %v1815, %v1809
  %v1984 = vpack.c.b16 %v1816, %v1810
  %v1985 = vpack.c.b16 %v1817, %v1811
  %v1986 = vpack.c.b16 %v1824, %v1818
  %v1987 = vpack.c.b16 %v1825, %v1819
  %v1988 = vpack.c.b16 %v1826, %v1820
  %v1989 = vpack.c.b16 %v1827, %v1821
  %v1990 = vpack.c.b16 %v1828, %v1822
  %v1991 = vpack.c.b16 %v1829, %v1823
  %v1992 = vpack.c.b16 %v1836, %v1830
  %v1993 = vpack.c.b16 %v1837, %v1831
  %v1994 = vpack.c.b16 %v1838, %v1832
  %v1995 = vpack.c.b16 %v1839, %v1833
  %v1996 = vpack.c.b16 %v1840, %v1834
  %v1997 = vpack.c.b16 %v1841, %v1835
  %v1998 = vpack.c.b16 %v1848, %v1842
  %v1999 = vpack.c.b16 %v1849, %v1843
  %v2000 = vpack.c.b16 %v1850, %v1844
  %v2001 = vpack.c.b16 %v1851, %v1845
  %v2002 = vpack.c.b16 %v1852, %v1846
  %v2003 = vpack.c.b16 %v1853, %v1847
  %v2004 = vpack.c.b16 %v1860, %v1854
  %v2005 = vpack.c.b16 %v1861, %v1855
  %v2006 = vpack.c.b16 %v1862, %v1856
  %v2007 = vpack.c.b16 %v1863, %v1857
  %v2008 = vpack.c.b16 %v1864, %v1858
  %v2009 = vpack.c.b16 %v1865, %v1859
  %v2010 = vpack.c.b16 %v1872, %v1866
  %v2011 = vpack.c.b16 %v1873, %v1867
  %v2012 = vpack.c.b16 %v1874, %v1868
  %v2013 = vpack.c.b16 %v1875, %v1869
  %v2014 = vpack.c.b16 %v1876, %v1870
  %v2015 = vpack.c.b16 %v1877, %v1871
  %v2016 = vpack.c.b16 %v1884, %v1878
  %v2017 = vpack.c.b16 %v1885, %v1879
  %v2018 = vpack.c.b16 %v1886, %v1880
  %v2019 = vpack.c.b16 %v1887, %v1881
  %v2020 = vpack.c.b16 %v1888, %v1882
  %v2021 = vpack.c.b16 %v1889, %v1883
  %v2022 = vpack.c.b16 %v1896, %v1890
  %v2023 = vpack.c.b16 %v1897, %v1891
  %v2024 = vpack.c.b16 %v1898, %v1892
  %v2025 = vpack.c.b16 %v1899, %v1893
  %v2026 = vpack.c.b16 %v1900, %v1894
  %v2027 = vpack.c.b16 %v1901, %v1895
  %v2028 = vpack.c.b16 %v1908, %v1902
  %v2029 = vpack.c.b16 %v1909, %v1903
  %v2030 = vpack.c.b16 %v1910, %v1904
  %v2031 = vpack.c.b16 %v1911, %v1905
  %v2032 = vpack.c.b16 %v1912, %v1906
  %v2033 = vpack.c.b16 %v1913, %v1907
  %v2034 = vpack.c.b16 %v1920, %v1914
  %v2035 = vpack.c.b16 %v1921, %v1915
  %v2036 = vpack.c.b16 %v1922, %v1916
  %v2037 = vpack.c.b16 %v1923, %v1917
  %v2038 = vpack.c.b16 %v1924, %v1918
  %v2039 = vpack.c.b16 %v1925, %v1919
  %v2040 = vpack.c.b16 %v1932, %v1926
  %v2041 = vpack.c.b16 %v1933, %v1927
  %v2042 = vpack.c.b16 %v1934, %v1928
  %v2043 = vpack.c.b16 %v1935, %v1929
  %v2044 = vpack.c.b16 %v1936, %v1930
  %v2045 = vpack.c.b16 %v1937, %v1931
  %v2046 = vpack.c.b16 %v1944, %v1938
  %v2047 = vpack.c.b16 %v1945, %v1939
  %v2048 = vpack.c.b16 %v1946, %v1940
  %v2049 = vpack.c.b16 %v1947, %v1941
  %v2050 = vpack.c.b16 %v1948, %v1942
  %v2051 = vpack.c.b16 %v1949, %v1943
  %v2052 = vpack.c.b16 %v1956, %v1950
  %v2053 = vpack.c.b16 %v1957, %v1951
  %v2054 = vpack.c.b16 %v1958, %v1952
  %v2055 = vpack.c.b16 %v1959, %v1953
  %v2056 = vpack.c.b16 %v1960, %v1954
  %v2057 = vpack.c.b16 %v1961, %v1955
  %2154 = vmatprep.subr.bf16.mxu0 %v2005
  %2155 = vmatpush1.bf16.msra.mxu0 %v2004
  %2156 = vmatprep.subr.bf16.mxu0 %v1999
  %2157 = vmatpush1.bf16.msra.mxu0 %v1998
  %2158 = vmatprep.subr.bf16.mxu0 %v1993
  %2159 = vmatpush1.bf16.msra.mxu0 %v1992
  %2160 = vmatprep.subr.bf16.mxu0 %v1987
  %2161 = vmatpush1.bf16.msra.mxu0 %v1986
  %2162 = vmatprep.subr.bf16.mxu0 %v1981
  %2163 = vmatpush1.bf16.msra.mxu0 %v1980
  %2164 = vmatprep.subr.bf16.mxu0 %v1975
  %2165 = vmatpush1.bf16.msra.mxu0 %v1974
  %2166 = vmatprep.subr.bf16.mxu0 %v1969
  %2167 = vmatpush1.bf16.msra.mxu0 %v1968
  %2168 = vmatprep.subr.bf16.mxu0 %v1963
  %2169 = vmatpush1.bf16.msra.mxu0 %v1962
  %2170 = vmatprep.subr.bf16.mxu0 %v2053
  %2171 = vmatpush2.bf16.msra.mxu0 %v2052
  %2172 = vmatprep.subr.bf16.mxu0 %v2047
  %2173 = vmatpush2.bf16.msra.mxu0 %v2046
  %2174 = vmatprep.subr.bf16.mxu0 %v2041
  %2175 = vmatpush2.bf16.msra.mxu0 %v2040
  %2176 = vmatprep.subr.bf16.mxu0 %v2035
  %2177 = vmatpush2.bf16.msra.mxu0 %v2034
  %2178 = vmatprep.subr.bf16.mxu0 %v2029
  %2179 = vmatpush2.bf16.msra.mxu0 %v2028
  %2180 = vmatprep.subr.bf16.mxu0 %v2023
  %2181 = vmatpush2.bf16.msra.mxu0 %v2022
  %2182 = vmatprep.subr.bf16.mxu0 %v2017
  %2183 = vmatpush2.bf16.msra.mxu0 %v2016
  %2184 = vmatprep.subr.bf16.mxu0 %v2011
  %2185 = vmatpush2.bf16.msra.mxu0 %v2010
  %2186 = vmatprep.mubr.bf16.mxu0 %v1673
  %2187 = vmatmul.mubr.bf16.gmra.mxu0 %v1672
  %v2188 = vpop.f32.mrf.mxu0
  %v2189 = vadd.f32 0.0, %v2188
  %v2190 = vpop.f32.mrf.mxu0
  %v2191 = vadd.f32 0.0, %v2190
  %v2192 = vpop.f32.mrf.mxu0
  %v2193 = vpop.f32.mrf.mxu0
  %2194 = vdwg.mxu0
  %2195 = vmatprep.subr.bf16.mxu0 %v2007
  %2196 = vmatpush1.bf16.msra.mxu0 %v2006
  %2197 = vmatprep.subr.bf16.mxu0 %v2001
  %2198 = vmatpush1.bf16.msra.mxu0 %v2000
  %2199 = vmatprep.subr.bf16.mxu0 %v1995
  %2200 = vmatpush1.bf16.msra.mxu0 %v1994
  %2201 = vmatprep.subr.bf16.mxu0 %v1989
  %2202 = vmatpush1.bf16.msra.mxu0 %v1988
  %2203 = vmatprep.subr.bf16.mxu0 %v1983
  %2204 = vmatpush1.bf16.msra.mxu0 %v1982
  %2205 = vmatprep.subr.bf16.mxu0 %v1977
  %2206 = vmatpush1.bf16.msra.mxu0 %v1976
  %2207 = vmatprep.subr.bf16.mxu0 %v1971
  %2208 = vmatpush1.bf16.msra.mxu0 %v1970
  %2209 = vmatprep.subr.bf16.mxu0 %v1965
  %2210 = vmatpush1.bf16.msra.mxu0 %v1964
  %2211 = vmatprep.subr.bf16.mxu0 %v2055
  %2212 = vmatpush2.bf16.msra.mxu0 %v2054
  %2213 = vmatprep.subr.bf16.mxu0 %v2049
  %2214 = vmatpush2.bf16.msra.mxu0 %v2048
  %2215 = vmatprep.subr.bf16.mxu0 %v2043
  %2216 = vmatpush2.bf16.msra.mxu0 %v2042
  %2217 = vmatprep.subr.bf16.mxu0 %v2037
  %2218 = vmatpush2.bf16.msra.mxu0 %v2036
  %2219 = vmatprep.subr.bf16.mxu0 %v2031
  %2220 = vmatpush2.bf16.msra.mxu0 %v2030
  %2221 = vmatprep.subr.bf16.mxu0 %v2025
  %2222 = vmatpush2.bf16.msra.mxu0 %v2024
  %2223 = vmatprep.subr.bf16.mxu0 %v2019
  %2224 = vmatpush2.bf16.msra.mxu0 %v2018
  %2225 = vmatprep.subr.bf16.mxu0 %v2013
  %2226 = vmatpush2.bf16.msra.mxu0 %v2012
  %2227 = vmatprep.mubr.bf16.mxu0 %v1673
  %2228 = vmatmul.mubr.bf16.gmra.mxu0 %v1672
  %v2229 = vpop.f32.mrf.mxu0
  %v2230 = vadd.f32 0.0, %v2229
  %v2231 = vpop.f32.mrf.mxu0
  %v2232 = vadd.f32 0.0, %v2231
  %v2233 = vpop.f32.mrf.mxu0
  %v2234 = vpop.f32.mrf.mxu0
  %2235 = vdwg.mxu0
  %2236 = vmatprep.subr.bf16.mxu0 %v2009
  %2237 = vmatpush1.bf16.msra.mxu0 %v2008
  %2238 = vmatprep.subr.bf16.mxu0 %v2003
  %2239 = vmatpush1.bf16.msra.mxu0 %v2002
  %2240 = vmatprep.subr.bf16.mxu0 %v1997
  %2241 = vmatpush1.bf16.msra.mxu0 %v1996
  %2242 = vmatprep.subr.bf16.mxu0 %v1991
  %2243 = vmatpush1.bf16.msra.mxu0 %v1990
  %2244 = vmatprep.subr.bf16.mxu0 %v1985
  %2245 = vmatpush1.bf16.msra.mxu0 %v1984
  %2246 = vmatprep.subr.bf16.mxu0 %v1979
  %2247 = vmatpush1.bf16.msra.mxu0 %v1978
  %2248 = vmatprep.subr.bf16.mxu0 %v1973
  %2249 = vmatpush1.bf16.msra.mxu0 %v1972
  %2250 = vmatprep.subr.bf16.mxu0 %v1967
  %2251 = vmatpush1.bf16.msra.mxu0 %v1966
  %2252 = vmatprep.subr.bf16.mxu0 %v2057
  %2253 = vmatpush2.bf16.msra.mxu0 %v2056
  %2254 = vmatprep.subr.bf16.mxu0 %v2051
  %2255 = vmatpush2.bf16.msra.mxu0 %v2050
  %2256 = vmatprep.subr.bf16.mxu0 %v2045
  %2257 = vmatpush2.bf16.msra.mxu0 %v2044
  %2258 = vmatprep.subr.bf16.mxu0 %v2039
  %2259 = vmatpush2.bf16.msra.mxu0 %v2038
  %2260 = vmatprep.subr.bf16.mxu0 %v2033
  %2261 = vmatpush2.bf16.msra.mxu0 %v2032
  %2262 = vmatprep.subr.bf16.mxu0 %v2027
  %2263 = vmatpush2.bf16.msra.mxu0 %v2026
  %2264 = vmatprep.subr.bf16.mxu0 %v2021
  %2265 = vmatpush2.bf16.msra.mxu0 %v2020
  %2266 = vmatprep.subr.bf16.mxu0 %v2015
  %2267 = vmatpush2.bf16.msra.mxu0 %v2014
  %2268 = vmatprep.mubr.bf16.mxu0 %v1673
  %2269 = vmatmul.mubr.bf16.gmra.mxu0 %v1672
  %v2270 = vpop.f32.mrf.mxu0
  %v2271 = vadd.f32 0.0, %v2270
  %v2272 = vpop.f32.mrf.mxu0
  %v2273 = vadd.f32 0.0, %v2272
  %v2274 = vpop.f32.mrf.mxu0
  %v2275 = vpop.f32.mrf.mxu0
  %2276 = vdwg.mxu0
  %s2277 = smul.u32 0, 3
  %s2278 = smul.addr %s2277, 8
  %s2279 = scalar_lea.vmem [#allocation3], %s2278
  %v2280 = vld [vmem:[%s2279] sm:$0xff]
  %v2281 = vld [vmem:[%s2279 + $0x8] sm:$0xff]
  %v2282 = vld [vmem:[%s2279 + $0x10] sm:$0xff]
  %v2283 = vadd.f32 %v2280, %v2189
  %v2284 = vadd.f32 %v2281, %v2191
  %v2285 = vxor.u32 %v2283, 2147483648
  %v2286 = vxor.u32 %v2284, 2147483648
  %v2287 = vmul.f32 %v2285, 1.442695
  %v2288 = vpow.pop %v2287
  %v2289 = vmul.f32 %v2286, 1.442695
  %v2290 = vpow.pop %v2289
  %v2291 = vadd.f32 %v2288, 1.0
  %v2292 = vadd.f32 %v2290, 1.0
  %v2293 = vrcp.pop %v2291
  %v2294 = vmul.f32 1.0, %v2293
  %v2295 = vrcp.pop %v2292
  %v2296 = vmul.f32 1.0, %v2295
  %v2297 = vadd.f32 %v2230, %v1661
  %v2298 = vmul.f32 %v2294, %v2297
  %v2299 = vadd.f32 %v2282, %v2298
  %v2300 = vtanh.pop %v2299
  %v2301 = vsub.f32 1.0, %v2296
  %v2302 = vmul.f32 %v2301, %v2300
  %v2303 = vmul.f32 %v2296, %v1670
  %v2304 = vadd.f32 %v2302, %v2303
  %s2305 = smul.u32 7, 3
  %s2306 = smul.addr %s2305, 8
  %s2307 = scalar_lea.vmem [#allocation4], %s2306
  %v2308 = vld [vmem:[%s2307] sm:$0xff]
  %v2309 = vld [vmem:[%s2307 + $0x8] sm:$0xff]
  %v2310 = vld [vmem:[%s2307 + $0x10] sm:$0xff]
  %v2311 = vadd.f32 %v2308, %v2232
  %v2312 = vadd.f32 %v2309, %v2271
  %v2313 = vxor.u32 %v2311, 2147483648
  %v2314 = vxor.u32 %v2312, 2147483648
  %v2315 = vmul.f32 %v2313, 1.442695
  %v2316 = vpow.pop %v2315
  %v2317 = vmul.f32 %v2314, 1.442695
  %v2318 = vpow.pop %v2317
  %v2319 = vadd.f32 %v2316, 1.0
  %v2320 = vadd.f32 %v2318, 1.0
  %v2321 = vrcp.pop %v2319
  %v2322 = vmul.f32 1.0, %v2321
  %v2323 = vrcp.pop %v2320
  %v2324 = vmul.f32 1.0, %v2323
  %v2325 = vadd.f32 %v2273, %v1668
  %v2326 = vmul.f32 %v2322, %v2325
  %v2327 = vadd.f32 %v2310, %v2326
  %v2328 = vtanh.pop %v2327
  %v2329 = vsub.f32 1.0, %v2324
  %v2330 = vmul.f32 %v2329, %v2328
  %v2331 = vmul.f32 %v2324, %v1671
  %v2332 = vadd.f32 %v2330, %v2331
  %v2333 = vpack.c.bf16 %v2304, %v2304
  %v2334 = vpack.c.bf16 %v2332, %v2332
  %2335 = vmatprep.subr.bf16.mxu0 %v2005
  %2336 = vmatpush1.bf16.msra.mxu0 %v2004
  %2337 = vmatprep.subr.bf16.mxu0 %v1999
  %2338 = vmatpush1.bf16.msra.mxu0 %v1998
  %2339 = vmatprep.subr.bf16.mxu0 %v1993
  %2340 = vmatpush1.bf16.msra.mxu0 %v1992
  %2341 = vmatprep.subr.bf16.mxu0 %v1987
  %2342 = vmatpush1.bf16.msra.mxu0 %v1986
  %2343 = vmatprep.subr.bf16.mxu0 %v1981
  %2344 = vmatpush1.bf16.msra.mxu0 %v1980
  %2345 = vmatprep.subr.bf16.mxu0 %v1975
  %2346 = vmatpush1.bf16.msra.mxu0 %v1974
  %2347 = vmatprep.subr.bf16.mxu0 %v1969
  %2348 = vmatpush1.bf16.msra.mxu0 %v1968
  %2349 = vmatprep.subr.bf16.mxu0 %v1963
  %2350 = vmatpush1.bf16.msra.mxu0 %v1962
  %2351 = vmatprep.subr.bf16.mxu0 %v2053
  %2352 = vmatpush2.bf16.msra.mxu0 %v2052
  %2353 = vmatprep.subr.bf16.mxu0 %v2047
  %2354 = vmatpush2.bf16.msra.mxu0 %v2046
  %2355 = vmatprep.subr.bf16.mxu0 %v2041
  %2356 = vmatpush2.bf16.msra.mxu0 %v2040
  %2357 = vmatprep.subr.bf16.mxu0 %v2035
  %2358 = vmatpush2.bf16.msra.mxu0 %v2034
  %2359 = vmatprep.subr.bf16.mxu0 %v2029
  %2360 = vmatpush2.bf16.msra.mxu0 %v2028
  %2361 = vmatprep.subr.bf16.mxu0 %v2023
  %2362 = vmatpush2.bf16.msra.mxu0 %v2022
  %2363 = vmatprep.subr.bf16.mxu0 %v2017
  %2364 = vmatpush2.bf16.msra.mxu0 %v2016
  %2365 = vmatprep.subr.bf16.mxu0 %v2011
  %2366 = vmatpush2.bf16.msra.mxu0 %v2010
  %2367 = vmatprep.mubr.bf16.mxu0 %v2334
  %2368 = vmatmul.mubr.bf16.gmra.mxu0 %v2333
  %v2369 = vpop.f32.mrf.mxu0
  %v2370 = vadd.f32 0.0, %v2369
  %v2371 = vpop.f32.mrf.mxu0
  %v2372 = vadd.f32 0.0, %v2371
  %v2373 = vpop.f32.mrf.mxu0
  %v2374 = vpop.f32.mrf.mxu0
  %2375 = vdwg.mxu0
  %2376 = vmatprep.subr.bf16.mxu0 %v2007
  %2377 = vmatpush1.bf16.msra.mxu0 %v2006
  %2378 = vmatprep.subr.bf16.mxu0 %v2001
  %2379 = vmatpush1.bf16.msra.mxu0 %v2000
  %2380 = vmatprep.subr.bf16.mxu0 %v1995
  %2381 = vmatpush1.bf16.msra.mxu0 %v1994
  %2382 = vmatprep.subr.bf16.mxu0 %v1989
  %2383 = vmatpush1.bf16.msra.mxu0 %v1988
  %2384 = vmatprep.subr.bf16.mxu0 %v1983
  %2385 = vmatpush1.bf16.msra.mxu0 %v1982
  %2386 = vmatprep.subr.bf16.mxu0 %v1977
  %2387 = vmatpush1.bf16.msra.mxu0 %v1976
  %2388 = vmatprep.subr.bf16.mxu0 %v1971
  %2389 = vmatpush1.bf16.msra.mxu0 %v1970
  %2390 = vmatprep.subr.bf16.mxu0 %v1965
  %2391 = vmatpush1.bf16.msra.mxu0 %v1964
  %2392 = vmatprep.subr.bf16.mxu0 %v2055
  %2393 = vmatpush2.bf16.msra.mxu0 %v2054
  %2394 = vmatprep.subr.bf16.mxu0 %v2049
  %2395 = vmatpush2.bf16.msra.mxu0 %v2048
  %2396 = vmatprep.subr.bf16.mxu0 %v2043
  %2397 = vmatpush2.bf16.msra.mxu0 %v2042
  %2398 = vmatprep.subr.bf16.mxu0 %v2037
  %2399 = vmatpush2.bf16.msra.mxu0 %v2036
  %2400 = vmatprep.subr.bf16.mxu0 %v2031
  %2401 = vmatpush2.bf16.msra.mxu0 %v2030
  %2402 = vmatprep.subr.bf16.mxu0 %v2025
  %2403 = vmatpush2.bf16.msra.mxu0 %v2024
  %2404 = vmatprep.subr.bf16.mxu0 %v2019
  %2405 = vmatpush2.bf16.msra.mxu0 %v2018
  %2406 = vmatprep.subr.bf16.mxu0 %v2013
  %2407 = vmatpush2.bf16.msra.mxu0 %v2012
  %2408 = vmatprep.mubr.bf16.mxu0 %v2334
  %2409 = vmatmul.mubr.bf16.gmra.mxu0 %v2333
  %v2410 = vpop.f32.mrf.mxu0
  %v2411 = vadd.f32 0.0, %v2410
  %v2412 = vpop.f32.mrf.mxu0
  %v2413 = vadd.f32 0.0, %v2412
  %v2414 = vpop.f32.mrf.mxu0
  %v2415 = vpop.f32.mrf.mxu0
  %2416 = vdwg.mxu0
  %2417 = vmatprep.subr.bf16.mxu0 %v2009
  %2418 = vmatpush1.bf16.msra.mxu0 %v2008
  %2419 = vmatprep.subr.bf16.mxu0 %v2003
  %2420 = vmatpush1.bf16.msra.mxu0 %v2002
  %2421 = vmatprep.subr.bf16.mxu0 %v1997
  %2422 = vmatpush1.bf16.msra.mxu0 %v1996
  %2423 = vmatprep.subr.bf16.mxu0 %v1991
  %2424 = vmatpush1.bf16.msra.mxu0 %v1990
  %2425 = vmatprep.subr.bf16.mxu0 %v1985
  %2426 = vmatpush1.bf16.msra.mxu0 %v1984
  %2427 = vmatprep.subr.bf16.mxu0 %v1979
  %2428 = vmatpush1.bf16.msra.mxu0 %v1978
  %2429 = vmatprep.subr.bf16.mxu0 %v1973
  %2430 = vmatpush1.bf16.msra.mxu0 %v1972
  %2431 = vmatprep.subr.bf16.mxu0 %v1967
  %2432 = vmatpush1.bf16.msra.mxu0 %v1966
  %2433 = vmatprep.subr.bf16.mxu0 %v2057
  %2434 = vmatpush2.bf16.msra.mxu0 %v2056
  %2435 = vmatprep.subr.bf16.mxu0 %v2051
  %2436 = vmatpush2.bf16.msra.mxu0 %v2050
  %2437 = vmatprep.subr.bf16.mxu0 %v2045
  %2438 = vmatpush2.bf16.msra.mxu0 %v2044
  %2439 = vmatprep.subr.bf16.mxu0 %v2039
  %2440 = vmatpush2.bf16.msra.mxu0 %v2038
  %2441 = vmatprep.subr.bf16.mxu0 %v2033
  %2442 = vmatpush2.bf16.msra.mxu0 %v2032
  %2443 = vmatprep.subr.bf16.mxu0 %v2027
  %2444 = vmatpush2.bf16.msra.mxu0 %v2026
  %2445 = vmatprep.subr.bf16.mxu0 %v2021
  %2446 = vmatpush2.bf16.msra.mxu0 %v2020
  %2447 = vmatprep.subr.bf16.mxu0 %v2015
  %2448 = vmatpush2.bf16.msra.mxu0 %v2014
  %2449 = vmatprep.mubr.bf16.mxu0 %v2334
  %2450 = vmatmul.mubr.bf16.gmra.mxu0 %v2333
  %v2451 = vpop.f32.mrf.mxu0
  %v2452 = vadd.f32 0.0, %v2451
  %v2453 = vpop.f32.mrf.mxu0
  %v2454 = vadd.f32 0.0, %v2453
  %v2455 = vpop.f32.mrf.mxu0
  %v2456 = vpop.f32.mrf.mxu0
  %2457 = vdwg.mxu0
  %s2458 = smul.u32 1, 3
  %s2459 = smul.addr %s2458, 8
  %s2460 = scalar_lea.vmem [#allocation3], %s2459
  %v2461 = vld [vmem:[%s2460] sm:$0xff]
  %v2462 = vld [vmem:[%s2460 + $0x8] sm:$0xff]
  %v2463 = vld [vmem:[%s2460 + $0x10] sm:$0xff]
  %v2464 = vadd.f32 %v2461, %v2370
  %v2465 = vadd.f32 %v2462, %v2372
  %v2466 = vxor.u32 %v2464, 2147483648
  %v2467 = vxor.u32 %v2465, 2147483648
  %v2468 = vmul.f32 %v2466, 1.442695
  %v2469 = vpow.pop %v2468
  %v2470 = vmul.f32 %v2467, 1.442695
  %v2471 = vpow.pop %v2470
  %v2472 = vadd.f32 %v2469, 1.0
  %v2473 = vadd.f32 %v2471, 1.0
  %v2474 = vrcp.pop %v2472
  %v2475 = vmul.f32 1.0, %v2474
  %v2476 = vrcp.pop %v2473
  %v2477 = vmul.f32 1.0, %v2476
  %v2478 = vadd.f32 %v2411, %v1661
  %v2479 = vmul.f32 %v2475, %v2478
  %v2480 = vadd.f32 %v2463, %v2479
  %v2481 = vtanh.pop %v2480
  %v2482 = vsub.f32 1.0, %v2477
  %v2483 = vmul.f32 %v2482, %v2481
  %v2484 = vmul.f32 %v2477, %v2304
  %v2485 = vadd.f32 %v2483, %v2484
  %s2486 = smul.u32 6, 3
  %s2487 = smul.addr %s2486, 8
  %s2488 = scalar_lea.vmem [#allocation4], %s2487
  %v2489 = vld [vmem:[%s2488] sm:$0xff]
  %v2490 = vld [vmem:[%s2488 + $0x8] sm:$0xff]
  %v2491 = vld [vmem:[%s2488 + $0x10] sm:$0xff]
  %v2492 = vadd.f32 %v2489, %v2413
  %v2493 = vadd.f32 %v2490, %v2452
  %v2494 = vxor.u32 %v2492, 2147483648
  %v2495 = vxor.u32 %v2493, 2147483648
  %v2496 = vmul.f32 %v2494, 1.442695
  %v2497 = vpow.pop %v2496
  %v2498 = vmul.f32 %v2495, 1.442695
  %v2499 = vpow.pop %v2498
  %v2500 = vadd.f32 %v2497, 1.0
  %v2501 = vadd.f32 %v2499, 1.0
  %v2502 = vrcp.pop %v2500
  %v2503 = vmul.f32 1.0, %v2502
  %v2504 = vrcp.pop %v2501
  %v2505 = vmul.f32 1.0, %v2504
  %v2506 = vadd.f32 %v2454, %v1668
  %v2507 = vmul.f32 %v2503, %v2506
  %v2508 = vadd.f32 %v2491, %v2507
  %v2509 = vtanh.pop %v2508
  %v2510 = vsub.f32 1.0, %v2505
  %v2511 = vmul.f32 %v2510, %v2509
  %v2512 = vmul.f32 %v2505, %v2332
  %v2513 = vadd.f32 %v2511, %v2512
  %v2514 = vpack.c.bf16 %v2485, %v2485
  %v2515 = vpack.c.bf16 %v2513, %v2513
  %2516 = vmatprep.subr.bf16.mxu0 %v2005
  %2517 = vmatpush1.bf16.msra.mxu0 %v2004
  %2518 = vmatprep.subr.bf16.mxu0 %v1999
  %2519 = vmatpush1.bf16.msra.mxu0 %v1998
  %2520 = vmatprep.subr.bf16.mxu0 %v1993
  %2521 = vmatpush1.bf16.msra.mxu0 %v1992
  %2522 = vmatprep.subr.bf16.mxu0 %v1987
  %2523 = vmatpush1.bf16.msra.mxu0 %v1986
  %2524 = vmatprep.subr.bf16.mxu0 %v1981
  %2525 = vmatpush1.bf16.msra.mxu0 %v1980
  %2526 = vmatprep.subr.bf16.mxu0 %v1975
  %2527 = vmatpush1.bf16.msra.mxu0 %v1974
  %2528 = vmatprep.subr.bf16.mxu0 %v1969
  %2529 = vmatpush1.bf16.msra.mxu0 %v1968
  %2530 = vmatprep.subr.bf16.mxu0 %v1963
  %2531 = vmatpush1.bf16.msra.mxu0 %v1962
  %2532 = vmatprep.subr.bf16.mxu0 %v2053
  %2533 = vmatpush2.bf16.msra.mxu0 %v2052
  %2534 = vmatprep.subr.bf16.mxu0 %v2047
  %2535 = vmatpush2.bf16.msra.mxu0 %v2046
  %2536 = vmatprep.subr.bf16.mxu0 %v2041
  %2537 = vmatpush2.bf16.msra.mxu0 %v2040
  %2538 = vmatprep.subr.bf16.mxu0 %v2035
  %2539 = vmatpush2.bf16.msra.mxu0 %v2034
  %2540 = vmatprep.subr.bf16.mxu0 %v2029
  %2541 = vmatpush2.bf16.msra.mxu0 %v2028
  %2542 = vmatprep.subr.bf16.mxu0 %v2023
  %2543 = vmatpush2.bf16.msra.mxu0 %v2022
  %2544 = vmatprep.subr.bf16.mxu0 %v2017
  %2545 = vmatpush2.bf16.msra.mxu0 %v2016
  %2546 = vmatprep.subr.bf16.mxu0 %v2011
  %2547 = vmatpush2.bf16.msra.mxu0 %v2010
  %2548 = vmatprep.mubr.bf16.mxu0 %v2515
  %2549 = vmatmul.mubr.bf16.gmra.mxu0 %v2514
  %v2550 = vpop.f32.mrf.mxu0
  %v2551 = vadd.f32 0.0, %v2550
  %v2552 = vpop.f32.mrf.mxu0
  %v2553 = vadd.f32 0.0, %v2552
  %v2554 = vpop.f32.mrf.mxu0
  %v2555 = vpop.f32.mrf.mxu0
  %2556 = vdwg.mxu0
  %2557 = vmatprep.subr.bf16.mxu0 %v2007
  %2558 = vmatpush1.bf16.msra.mxu0 %v2006
  %2559 = vmatprep.subr.bf16.mxu0 %v2001
  %2560 = vmatpush1.bf16.msra.mxu0 %v2000
  %2561 = vmatprep.subr.bf16.mxu0 %v1995
  %2562 = vmatpush1.bf16.msra.mxu0 %v1994
  %2563 = vmatprep.subr.bf16.mxu0 %v1989
  %2564 = vmatpush1.bf16.msra.mxu0 %v1988
  %2565 = vmatprep.subr.bf16.mxu0 %v1983
  %2566 = vmatpush1.bf16.msra.mxu0 %v1982
  %2567 = vmatprep.subr.bf16.mxu0 %v1977
  %2568 = vmatpush1.bf16.msra.mxu0 %v1976
  %2569 = vmatprep.subr.bf16.mxu0 %v1971
  %2570 = vmatpush1.bf16.msra.mxu0 %v1970
  %2571 = vmatprep.subr.bf16.mxu0 %v1965
  %2572 = vmatpush1.bf16.msra.mxu0 %v1964
  %2573 = vmatprep.subr.bf16.mxu0 %v2055
  %2574 = vmatpush2.bf16.msra.mxu0 %v2054
  %2575 = vmatprep.subr.bf16.mxu0 %v2049
  %2576 = vmatpush2.bf16.msra.mxu0 %v2048
  %2577 = vmatprep.subr.bf16.mxu0 %v2043
  %2578 = vmatpush2.bf16.msra.mxu0 %v2042
  %2579 = vmatprep.subr.bf16.mxu0 %v2037
  %2580 = vmatpush2.bf16.msra.mxu0 %v2036
  %2581 = vmatprep.subr.bf16.mxu0 %v2031
  %2582 = vmatpush2.bf16.msra.mxu0 %v2030
  %2583 = vmatprep.subr.bf16.mxu0 %v2025
  %2584 = vmatpush2.bf16.msra.mxu0 %v2024
  %2585 = vmatprep.subr.bf16.mxu0 %v2019
  %2586 = vmatpush2.bf16.msra.mxu0 %v2018
  %2587 = vmatprep.subr.bf16.mxu0 %v2013
  %2588 = vmatpush2.bf16.msra.mxu0 %v2012
  %2589 = vmatprep.mubr.bf16.mxu0 %v2515
  %2590 = vmatmul.mubr.bf16.gmra.mxu0 %v2514
  %v2591 = vpop.f32.mrf.mxu0
  %v2592 = vadd.f32 0.0, %v2591
  %v2593 = vpop.f32.mrf.mxu0
  %v2594 = vadd.f32 0.0, %v2593
  %v2595 = vpop.f32.mrf.mxu0
  %v2596 = vpop.f32.mrf.mxu0
  %2597 = vdwg.mxu0
  %2598 = vmatprep.subr.bf16.mxu0 %v2009
  %2599 = vmatpush1.bf16.msra.mxu0 %v2008
  %2600 = vmatprep.subr.bf16.mxu0 %v2003
  %2601 = vmatpush1.bf16.msra.mxu0 %v2002
  %2602 = vmatprep.subr.bf16.mxu0 %v1997
  %2603 = vmatpush1.bf16.msra.mxu0 %v1996
  %2604 = vmatprep.subr.bf16.mxu0 %v1991
  %2605 = vmatpush1.bf16.msra.mxu0 %v1990
  %2606 = vmatprep.subr.bf16.mxu0 %v1985
  %2607 = vmatpush1.bf16.msra.mxu0 %v1984
  %2608 = vmatprep.subr.bf16.mxu0 %v1979
  %2609 = vmatpush1.bf16.msra.mxu0 %v1978
  %2610 = vmatprep.subr.bf16.mxu0 %v1973
  %2611 = vmatpush1.bf16.msra.mxu0 %v1972
  %2612 = vmatprep.subr.bf16.mxu0 %v1967
  %2613 = vmatpush1.bf16.msra.mxu0 %v1966
  %2614 = vmatprep.subr.bf16.mxu0 %v2057
  %2615 = vmatpush2.bf16.msra.mxu0 %v2056
  %2616 = vmatprep.subr.bf16.mxu0 %v2051
  %2617 = vmatpush2.bf16.msra.mxu0 %v2050
  %2618 = vmatprep.subr.bf16.mxu0 %v2045
  %2619 = vmatpush2.bf16.msra.mxu0 %v2044
  %2620 = vmatprep.subr.bf16.mxu0 %v2039
  %2621 = vmatpush2.bf16.msra.mxu0 %v2038
  %2622 = vmatprep.subr.bf16.mxu0 %v2033
  %2623 = vmatpush2.bf16.msra.mxu0 %v2032
  %2624 = vmatprep.subr.bf16.mxu0 %v2027
  %2625 = vmatpush2.bf16.msra.mxu0 %v2026
  %2626 = vmatprep.subr.bf16.mxu0 %v2021
  %2627 = vmatpush2.bf16.msra.mxu0 %v2020
  %2628 = vmatprep.subr.bf16.mxu0 %v2015
  %2629 = vmatpush2.bf16.msra.mxu0 %v2014
  %2630 = vmatprep.mubr.bf16.mxu0 %v2515
  %2631 = vmatmul.mubr.bf16.gmra.mxu0 %v2514
  %v2632 = vpop.f32.mrf.mxu0
  %v2633 = vadd.f32 0.0, %v2632
  %v2634 = vpop.f32.mrf.mxu0
  %v2635 = vadd.f32 0.0, %v2634
  %v2636 = vpop.f32.mrf.mxu0
  %v2637 = vpop.f32.mrf.mxu0
  %2638 = vdwg.mxu0
  %s2639 = smul.u32 2, 3
  %s2640 = smul.addr %s2639, 8
  %s2641 = scalar_lea.vmem [#allocation3], %s2640
  %v2642 = vld [vmem:[%s2641] sm:$0xff]
  %v2643 = vld [vmem:[%s2641 + $0x8] sm:$0xff]
  %v2644 = vld [vmem:[%s2641 + $0x10] sm:$0xff]
  %v2645 = vadd.f32 %v2642, %v2551
  %v2646 = vadd.f32 %v2643, %v2553
  %v2647 = vxor.u32 %v2645, 2147483648
  %v2648 = vxor.u32 %v2646, 2147483648
  %v2649 = vmul.f32 %v2647, 1.442695
  %v2650 = vpow.pop %v2649
  %v2651 = vmul.f32 %v2648, 1.442695
  %v2652 = vpow.pop %v2651
  %v2653 = vadd.f32 %v2650, 1.0
  %v2654 = vadd.f32 %v2652, 1.0
  %v2655 = vrcp.pop %v2653
  %v2656 = vmul.f32 1.0, %v2655
  %v2657 = vrcp.pop %v2654
  %v2658 = vmul.f32 1.0, %v2657
  %v2659 = vadd.f32 %v2592, %v1661
  %v2660 = vmul.f32 %v2656, %v2659
  %v2661 = vadd.f32 %v2644, %v2660
  %v2662 = vtanh.pop %v2661
  %v2663 = vsub.f32 1.0, %v2658
  %v2664 = vmul.f32 %v2663, %v2662
  %v2665 = vmul.f32 %v2658, %v2485
  %v2666 = vadd.f32 %v2664, %v2665
  %s2667 = smul.u32 5, 3
  %s2668 = smul.addr %s2667, 8
  %s2669 = scalar_lea.vmem [#allocation4], %s2668
  %v2670 = vld [vmem:[%s2669] sm:$0xff]
  %v2671 = vld [vmem:[%s2669 + $0x8] sm:$0xff]
  %v2672 = vld [vmem:[%s2669 + $0x10] sm:$0xff]
  %v2673 = vadd.f32 %v2670, %v2594
  %v2674 = vadd.f32 %v2671, %v2633
  %v2675 = vxor.u32 %v2673, 2147483648
  %v2676 = vxor.u32 %v2674, 2147483648
  %v2677 = vmul.f32 %v2675, 1.442695
  %v2678 = vpow.pop %v2677
  %v2679 = vmul.f32 %v2676, 1.442695
  %v2680 = vpow.pop %v2679
  %v2681 = vadd.f32 %v2678, 1.0
  %v2682 = vadd.f32 %v2680, 1.0
  %v2683 = vrcp.pop %v2681
  %v2684 = vmul.f32 1.0, %v2683
  %v2685 = vrcp.pop %v2682
  %v2686 = vmul.f32 1.0, %v2685
  %v2687 = vadd.f32 %v2635, %v1668
  %v2688 = vmul.f32 %v2684, %v2687
  %v2689 = vadd.f32 %v2672, %v2688
  %v2690 = vtanh.pop %v2689
  %v2691 = vsub.f32 1.0, %v2686
  %v2692 = vmul.f32 %v2691, %v2690
  %v2693 = vmul.f32 %v2686, %v2513
  %v2694 = vadd.f32 %v2692, %v2693
  %v2695 = vpack.c.bf16 %v2666, %v2666
  %v2696 = vpack.c.bf16 %v2694, %v2694
  %2697 = vmatprep.subr.bf16.mxu0 %v2005
  %2698 = vmatpush1.bf16.msra.mxu0 %v2004
  %2699 = vmatprep.subr.bf16.mxu0 %v1999
  %2700 = vmatpush1.bf16.msra.mxu0 %v1998
  %2701 = vmatprep.subr.bf16.mxu0 %v1993
  %2702 = vmatpush1.bf16.msra.mxu0 %v1992
  %2703 = vmatprep.subr.bf16.mxu0 %v1987
  %2704 = vmatpush1.bf16.msra.mxu0 %v1986
  %2705 = vmatprep.subr.bf16.mxu0 %v1981
  %2706 = vmatpush1.bf16.msra.mxu0 %v1980
  %2707 = vmatprep.subr.bf16.mxu0 %v1975
  %2708 = vmatpush1.bf16.msra.mxu0 %v1974
  %2709 = vmatprep.subr.bf16.mxu0 %v1969
  %2710 = vmatpush1.bf16.msra.mxu0 %v1968
  %2711 = vmatprep.subr.bf16.mxu0 %v1963
  %2712 = vmatpush1.bf16.msra.mxu0 %v1962
  %2713 = vmatprep.subr.bf16.mxu0 %v2053
  %2714 = vmatpush2.bf16.msra.mxu0 %v2052
  %2715 = vmatprep.subr.bf16.mxu0 %v2047
  %2716 = vmatpush2.bf16.msra.mxu0 %v2046
  %2717 = vmatprep.subr.bf16.mxu0 %v2041
  %2718 = vmatpush2.bf16.msra.mxu0 %v2040
  %2719 = vmatprep.subr.bf16.mxu0 %v2035
  %2720 = vmatpush2.bf16.msra.mxu0 %v2034
  %2721 = vmatprep.subr.bf16.mxu0 %v2029
  %2722 = vmatpush2.bf16.msra.mxu0 %v2028
  %2723 = vmatprep.subr.bf16.mxu0 %v2023
  %2724 = vmatpush2.bf16.msra.mxu0 %v2022
  %2725 = vmatprep.subr.bf16.mxu0 %v2017
  %2726 = vmatpush2.bf16.msra.mxu0 %v2016
  %2727 = vmatprep.subr.bf16.mxu0 %v2011
  %2728 = vmatpush2.bf16.msra.mxu0 %v2010
  %2729 = vmatprep.mubr.bf16.mxu0 %v2696
  %2730 = vmatmul.mubr.bf16.gmra.mxu0 %v2695
  %v2731 = vpop.f32.mrf.mxu0
  %v2732 = vadd.f32 0.0, %v2731
  %v2733 = vpop.f32.mrf.mxu0
  %v2734 = vadd.f32 0.0, %v2733
  %v2735 = vpop.f32.mrf.mxu0
  %v2736 = vpop.f32.mrf.mxu0
  %2737 = vdwg.mxu0
  %2738 = vmatprep.subr.bf16.mxu0 %v2007
  %2739 = vmatpush1.bf16.msra.mxu0 %v2006
  %2740 = vmatprep.subr.bf16.mxu0 %v2001
  %2741 = vmatpush1.bf16.msra.mxu0 %v2000
  %2742 = vmatprep.subr.bf16.mxu0 %v1995
  %2743 = vmatpush1.bf16.msra.mxu0 %v1994
  %2744 = vmatprep.subr.bf16.mxu0 %v1989
  %2745 = vmatpush1.bf16.msra.mxu0 %v1988
  %2746 = vmatprep.subr.bf16.mxu0 %v1983
  %2747 = vmatpush1.bf16.msra.mxu0 %v1982
  %2748 = vmatprep.subr.bf16.mxu0 %v1977
  %2749 = vmatpush1.bf16.msra.mxu0 %v1976
  %2750 = vmatprep.subr.bf16.mxu0 %v1971
  %2751 = vmatpush1.bf16.msra.mxu0 %v1970
  %2752 = vmatprep.subr.bf16.mxu0 %v1965
  %2753 = vmatpush1.bf16.msra.mxu0 %v1964
  %2754 = vmatprep.subr.bf16.mxu0 %v2055
  %2755 = vmatpush2.bf16.msra.mxu0 %v2054
  %2756 = vmatprep.subr.bf16.mxu0 %v2049
  %2757 = vmatpush2.bf16.msra.mxu0 %v2048
  %2758 = vmatprep.subr.bf16.mxu0 %v2043
  %2759 = vmatpush2.bf16.msra.mxu0 %v2042
  %2760 = vmatprep.subr.bf16.mxu0 %v2037
  %2761 = vmatpush2.bf16.msra.mxu0 %v2036
  %2762 = vmatprep.subr.bf16.mxu0 %v2031
  %2763 = vmatpush2.bf16.msra.mxu0 %v2030
  %2764 = vmatprep.subr.bf16.mxu0 %v2025
  %2765 = vmatpush2.bf16.msra.mxu0 %v2024
  %2766 = vmatprep.subr.bf16.mxu0 %v2019
  %2767 = vmatpush2.bf16.msra.mxu0 %v2018
  %2768 = vmatprep.subr.bf16.mxu0 %v2013
  %2769 = vmatpush2.bf16.msra.mxu0 %v2012
  %2770 = vmatprep.mubr.bf16.mxu0 %v2696
  %2771 = vmatmul.mubr.bf16.gmra.mxu0 %v2695
  %v2772 = vpop.f32.mrf.mxu0
  %v2773 = vadd.f32 0.0, %v2772
  %v2774 = vpop.f32.mrf.mxu0
  %v2775 = vadd.f32 0.0, %v2774
  %v2776 = vpop.f32.mrf.mxu0
  %v2777 = vpop.f32.mrf.mxu0
  %2778 = vdwg.mxu0
  %2779 = vmatprep.subr.bf16.mxu0 %v2009
  %2780 = vmatpush1.bf16.msra.mxu0 %v2008
  %2781 = vmatprep.subr.bf16.mxu0 %v2003
  %2782 = vmatpush1.bf16.msra.mxu0 %v2002
  %2783 = vmatprep.subr.bf16.mxu0 %v1997
  %2784 = vmatpush1.bf16.msra.mxu0 %v1996
  %2785 = vmatprep.subr.bf16.mxu0 %v1991
  %2786 = vmatpush1.bf16.msra.mxu0 %v1990
  %2787 = vmatprep.subr.bf16.mxu0 %v1985
  %2788 = vmatpush1.bf16.msra.mxu0 %v1984
  %2789 = vmatprep.subr.bf16.mxu0 %v1979
  %2790 = vmatpush1.bf16.msra.mxu0 %v1978
  %2791 = vmatprep.subr.bf16.mxu0 %v1973
  %2792 = vmatpush1.bf16.msra.mxu0 %v1972
  %2793 = vmatprep.subr.bf16.mxu0 %v1967
  %2794 = vmatpush1.bf16.msra.mxu0 %v1966
  %2795 = vmatprep.subr.bf16.mxu0 %v2057
  %2796 = vmatpush2.bf16.msra.mxu0 %v2056
  %2797 = vmatprep.subr.bf16.mxu0 %v2051
  %2798 = vmatpush2.bf16.msra.mxu0 %v2050
  %2799 = vmatprep.subr.bf16.mxu0 %v2045
  %2800 = vmatpush2.bf16.msra.mxu0 %v2044
  %2801 = vmatprep.subr.bf16.mxu0 %v2039
  %2802 = vmatpush2.bf16.msra.mxu0 %v2038
  %2803 = vmatprep.subr.bf16.mxu0 %v2033
  %2804 = vmatpush2.bf16.msra.mxu0 %v2032
  %2805 = vmatprep.subr.bf16.mxu0 %v2027
  %2806 = vmatpush2.bf16.msra.mxu0 %v2026
  %2807 = vmatprep.subr.bf16.mxu0 %v2021
  %2808 = vmatpush2.bf16.msra.mxu0 %v2020
  %2809 = vmatprep.subr.bf16.mxu0 %v2015
  %2810 = vmatpush2.bf16.msra.mxu0 %v2014
  %2811 = vmatprep.mubr.bf16.mxu0 %v2696
  %2812 = vmatmul.mubr.bf16.gmra.mxu0 %v2695
  %v2813 = vpop.f32.mrf.mxu0
  %v2814 = vadd.f32 0.0, %v2813
  %v2815 = vpop.f32.mrf.mxu0
  %v2816 = vadd.f32 0.0, %v2815
  %v2817 = vpop.f32.mrf.mxu0
  %v2818 = vpop.f32.mrf.mxu0
  %2819 = vdwg.mxu0
  %s2820 = smul.u32 3, 3
  %s2821 = smul.addr %s2820, 8
  %s2822 = scalar_lea.vmem [#allocation3], %s2821
  %v2823 = vld [vmem:[%s2822] sm:$0xff]
  %v2824 = vld [vmem:[%s2822 + $0x8] sm:$0xff]
  %v2825 = vld [vmem:[%s2822 + $0x10] sm:$0xff]
  %v2826 = vadd.f32 %v2823, %v2732
  %v2827 = vadd.f32 %v2824, %v2734
  %v2828 = vxor.u32 %v2826, 2147483648
  %v2829 = vxor.u32 %v2827, 2147483648
  %v2830 = vmul.f32 %v2828, 1.442695
  %v2831 = vpow.pop %v2830
  %v2832 = vmul.f32 %v2829, 1.442695
  %v2833 = vpow.pop %v2832
  %v2834 = vadd.f32 %v2831, 1.0
  %v2835 = vadd.f32 %v2833, 1.0
  %v2836 = vrcp.pop %v2834
  %v2837 = vmul.f32 1.0, %v2836
  %v2838 = vrcp.pop %v2835
  %v2839 = vmul.f32 1.0, %v2838
  %v2840 = vadd.f32 %v2773, %v1661
  %v2841 = vmul.f32 %v2837, %v2840
  %v2842 = vadd.f32 %v2825, %v2841
  %v2843 = vtanh.pop %v2842
  %v2844 = vsub.f32 1.0, %v2839
  %v2845 = vmul.f32 %v2844, %v2843
  %v2846 = vmul.f32 %v2839, %v2666
  %v2847 = vadd.f32 %v2845, %v2846
  %s2848 = smul.u32 4, 3
  %s2849 = smul.addr %s2848, 8
  %s2850 = scalar_lea.vmem [#allocation4], %s2849
  %v2851 = vld [vmem:[%s2850] sm:$0xff]
  %v2852 = vld [vmem:[%s2850 + $0x8] sm:$0xff]
  %v2853 = vld [vmem:[%s2850 + $0x10] sm:$0xff]
  %v2854 = vadd.f32 %v2851, %v2775
  %v2855 = vadd.f32 %v2852, %v2814
  %v2856 = vxor.u32 %v2854, 2147483648
  %v2857 = vxor.u32 %v2855, 2147483648
  %v2858 = vmul.f32 %v2856, 1.442695
  %v2859 = vpow.pop %v2858
  %v2860 = vmul.f32 %v2857, 1.442695
  %v2861 = vpow.pop %v2860
  %v2862 = vadd.f32 %v2859, 1.0
  %v2863 = vadd.f32 %v2861, 1.0
  %v2864 = vrcp.pop %v2862
  %v2865 = vmul.f32 1.0, %v2864
  %v2866 = vrcp.pop %v2863
  %v2867 = vmul.f32 1.0, %v2866
  %v2868 = vadd.f32 %v2816, %v1668
  %v2869 = vmul.f32 %v2865, %v2868
  %v2870 = vadd.f32 %v2853, %v2869
  %v2871 = vtanh.pop %v2870
  %v2872 = vsub.f32 1.0, %v2867
  %v2873 = vmul.f32 %v2872, %v2871
  %v2874 = vmul.f32 %v2867, %v2694
  %v2875 = vadd.f32 %v2873, %v2874
  %v2876 = vpack.c.bf16 %v2847, %v2847
  %v2877 = vpack.c.bf16 %v2875, %v2875
  %2878 = vmatprep.subr.bf16.mxu0 %v2005
  %2879 = vmatpush1.bf16.msra.mxu0 %v2004
  %2880 = vmatprep.subr.bf16.mxu0 %v1999
  %2881 = vmatpush1.bf16.msra.mxu0 %v1998
  %2882 = vmatprep.subr.bf16.mxu0 %v1993
  %2883 = vmatpush1.bf16.msra.mxu0 %v1992
  %2884 = vmatprep.subr.bf16.mxu0 %v1987
  %2885 = vmatpush1.bf16.msra.mxu0 %v1986
  %2886 = vmatprep.subr.bf16.mxu0 %v1981
  %2887 = vmatpush1.bf16.msra.mxu0 %v1980
  %2888 = vmatprep.subr.bf16.mxu0 %v1975
  %2889 = vmatpush1.bf16.msra.mxu0 %v1974
  %2890 = vmatprep.subr.bf16.mxu0 %v1969
  %2891 = vmatpush1.bf16.msra.mxu0 %v1968
  %2892 = vmatprep.subr.bf16.mxu0 %v1963
  %2893 = vmatpush1.bf16.msra.mxu0 %v1962
  %2894 = vmatprep.subr.bf16.mxu0 %v2053
  %2895 = vmatpush2.bf16.msra.mxu0 %v2052
  %2896 = vmatprep.subr.bf16.mxu0 %v2047
  %2897 = vmatpush2.bf16.msra.mxu0 %v2046
  %2898 = vmatprep.subr.bf16.mxu0 %v2041
  %2899 = vmatpush2.bf16.msra.mxu0 %v2040
  %2900 = vmatprep.subr.bf16.mxu0 %v2035
  %2901 = vmatpush2.bf16.msra.mxu0 %v2034
  %2902 = vmatprep.subr.bf16.mxu0 %v2029
  %2903 = vmatpush2.bf16.msra.mxu0 %v2028
  %2904 = vmatprep.subr.bf16.mxu0 %v2023
  %2905 = vmatpush2.bf16.msra.mxu0 %v2022
  %2906 = vmatprep.subr.bf16.mxu0 %v2017
  %2907 = vmatpush2.bf16.msra.mxu0 %v2016
  %2908 = vmatprep.subr.bf16.mxu0 %v2011
  %2909 = vmatpush2.bf16.msra.mxu0 %v2010
  %2910 = vmatprep.mubr.bf16.mxu0 %v2877
  %2911 = vmatmul.mubr.bf16.gmra.mxu0 %v2876
  %v2912 = vpop.f32.mrf.mxu0
  %v2913 = vadd.f32 0.0, %v2912
  %v2914 = vpop.f32.mrf.mxu0
  %v2915 = vadd.f32 0.0, %v2914
  %v2916 = vpop.f32.mrf.mxu0
  %v2917 = vpop.f32.mrf.mxu0
  %2918 = vdwg.mxu0
  %2919 = vmatprep.subr.bf16.mxu0 %v2007
  %2920 = vmatpush1.bf16.msra.mxu0 %v2006
  %2921 = vmatprep.subr.bf16.mxu0 %v2001
  %2922 = vmatpush1.bf16.msra.mxu0 %v2000
  %2923 = vmatprep.subr.bf16.mxu0 %v1995
  %2924 = vmatpush1.bf16.msra.mxu0 %v1994
  %2925 = vmatprep.subr.bf16.mxu0 %v1989
  %2926 = vmatpush1.bf16.msra.mxu0 %v1988
  %2927 = vmatprep.subr.bf16.mxu0 %v1983
  %2928 = vmatpush1.bf16.msra.mxu0 %v1982
  %2929 = vmatprep.subr.bf16.mxu0 %v1977
  %2930 = vmatpush1.bf16.msra.mxu0 %v1976
  %2931 = vmatprep.subr.bf16.mxu0 %v1971
  %2932 = vmatpush1.bf16.msra.mxu0 %v1970
  %2933 = vmatprep.subr.bf16.mxu0 %v1965
  %2934 = vmatpush1.bf16.msra.mxu0 %v1964
  %2935 = vmatprep.subr.bf16.mxu0 %v2055
  %2936 = vmatpush2.bf16.msra.mxu0 %v2054
  %2937 = vmatprep.subr.bf16.mxu0 %v2049
  %2938 = vmatpush2.bf16.msra.mxu0 %v2048
  %2939 = vmatprep.subr.bf16.mxu0 %v2043
  %2940 = vmatpush2.bf16.msra.mxu0 %v2042
  %2941 = vmatprep.subr.bf16.mxu0 %v2037
  %2942 = vmatpush2.bf16.msra.mxu0 %v2036
  %2943 = vmatprep.subr.bf16.mxu0 %v2031
  %2944 = vmatpush2.bf16.msra.mxu0 %v2030
  %2945 = vmatprep.subr.bf16.mxu0 %v2025
  %2946 = vmatpush2.bf16.msra.mxu0 %v2024
  %2947 = vmatprep.subr.bf16.mxu0 %v2019
  %2948 = vmatpush2.bf16.msra.mxu0 %v2018
  %2949 = vmatprep.subr.bf16.mxu0 %v2013
  %2950 = vmatpush2.bf16.msra.mxu0 %v2012
  %2951 = vmatprep.mubr.bf16.mxu0 %v2877
  %2952 = vmatmul.mubr.bf16.gmra.mxu0 %v2876
  %v2953 = vpop.f32.mrf.mxu0
  %v2954 = vadd.f32 0.0, %v2953
  %v2955 = vpop.f32.mrf.mxu0
  %v2956 = vadd.f32 0.0, %v2955
  %v2957 = vpop.f32.mrf.mxu0
  %v2958 = vpop.f32.mrf.mxu0
  %2959 = vdwg.mxu0
  %2960 = vmatprep.subr.bf16.mxu0 %v2009
  %2961 = vmatpush1.bf16.msra.mxu0 %v2008
  %2962 = vmatprep.subr.bf16.mxu0 %v2003
  %2963 = vmatpush1.bf16.msra.mxu0 %v2002
  %2964 = vmatprep.subr.bf16.mxu0 %v1997
  %2965 = vmatpush1.bf16.msra.mxu0 %v1996
  %2966 = vmatprep.subr.bf16.mxu0 %v1991
  %2967 = vmatpush1.bf16.msra.mxu0 %v1990
  %2968 = vmatprep.subr.bf16.mxu0 %v1985
  %2969 = vmatpush1.bf16.msra.mxu0 %v1984
  %2970 = vmatprep.subr.bf16.mxu0 %v1979
  %2971 = vmatpush1.bf16.msra.mxu0 %v1978
  %2972 = vmatprep.subr.bf16.mxu0 %v1973
  %2973 = vmatpush1.bf16.msra.mxu0 %v1972
  %2974 = vmatprep.subr.bf16.mxu0 %v1967
  %2975 = vmatpush1.bf16.msra.mxu0 %v1966
  %2976 = vmatprep.subr.bf16.mxu0 %v2057
  %2977 = vmatpush2.bf16.msra.mxu0 %v2056
  %2978 = vmatprep.subr.bf16.mxu0 %v2051
  %2979 = vmatpush2.bf16.msra.mxu0 %v2050
  %2980 = vmatprep.subr.bf16.mxu0 %v2045
  %2981 = vmatpush2.bf16.msra.mxu0 %v2044
  %2982 = vmatprep.subr.bf16.mxu0 %v2039
  %2983 = vmatpush2.bf16.msra.mxu0 %v2038
  %2984 = vmatprep.subr.bf16.mxu0 %v2033
  %2985 = vmatpush2.bf16.msra.mxu0 %v2032
  %2986 = vmatprep.subr.bf16.mxu0 %v2027
  %2987 = vmatpush2.bf16.msra.mxu0 %v2026
  %2988 = vmatprep.subr.bf16.mxu0 %v2021
  %2989 = vmatpush2.bf16.msra.mxu0 %v2020
  %2990 = vmatprep.subr.bf16.mxu0 %v2015
  %2991 = vmatpush2.bf16.msra.mxu0 %v2014
  %2992 = vmatprep.mubr.bf16.mxu0 %v2877
  %2993 = vmatmul.mubr.bf16.gmra.mxu0 %v2876
  %v2994 = vpop.f32.mrf.mxu0
  %v2995 = vadd.f32 0.0, %v2994
  %v2996 = vpop.f32.mrf.mxu0
  %v2997 = vadd.f32 0.0, %v2996
  %v2998 = vpop.f32.mrf.mxu0
  %v2999 = vpop.f32.mrf.mxu0
  %3000 = vdwg.mxu0
  %s3001 = smul.addr %s2848, 8
  %s3002 = scalar_lea.vmem [#allocation3], %s3001
  %v3003 = vld [vmem:[%s3002] sm:$0xff]
  %v3004 = vld [vmem:[%s3002 + $0x8] sm:$0xff]
  %v3005 = vld [vmem:[%s3002 + $0x10] sm:$0xff]
  %v3006 = vadd.f32 %v3003, %v2913
  %v3007 = vadd.f32 %v3004, %v2915
  %v3008 = vxor.u32 %v3006, 2147483648
  %v3009 = vxor.u32 %v3007, 2147483648
  %v3010 = vmul.f32 %v3008, 1.442695
  %v3011 = vpow.pop %v3010
  %v3012 = vmul.f32 %v3009, 1.442695
  %v3013 = vpow.pop %v3012
  %v3014 = vadd.f32 %v3011, 1.0
  %v3015 = vadd.f32 %v3013, 1.0
  %v3016 = vrcp.pop %v3014
  %v3017 = vmul.f32 1.0, %v3016
  %v3018 = vrcp.pop %v3015
  %v3019 = vmul.f32 1.0, %v3018
  %v3020 = vadd.f32 %v2954, %v1661
  %v3021 = vmul.f32 %v3017, %v3020
  %v3022 = vadd.f32 %v3005, %v3021
  %v3023 = vtanh.pop %v3022
  %v3024 = vsub.f32 1.0, %v3019
  %v3025 = vmul.f32 %v3024, %v3023
  %v3026 = vmul.f32 %v3019, %v2847
  %v3027 = vadd.f32 %v3025, %v3026
  %s3028 = smul.addr %s2820, 8
  %s3029 = scalar_lea.vmem [#allocation4], %s3028
  %v3030 = vld [vmem:[%s3029] sm:$0xff]
  %v3031 = vld [vmem:[%s3029 + $0x8] sm:$0xff]
  %v3032 = vld [vmem:[%s3029 + $0x10] sm:$0xff]
  %v3033 = vadd.f32 %v3030, %v2956
  %v3034 = vadd.f32 %v3031, %v2995
  %v3035 = vxor.u32 %v3033, 2147483648
  %v3036 = vxor.u32 %v3034, 2147483648
  %v3037 = vmul.f32 %v3035, 1.442695
  %v3038 = vpow.pop %v3037
  %v3039 = vmul.f32 %v3036, 1.442695
  %v3040 = vpow.pop %v3039
  %v3041 = vadd.f32 %v3038, 1.0
  %v3042 = vadd.f32 %v3040, 1.0
  %v3043 = vrcp.pop %v3041
  %v3044 = vmul.f32 1.0, %v3043
  %v3045 = vrcp.pop %v3042
  %v3046 = vmul.f32 1.0, %v3045
  %v3047 = vadd.f32 %v2997, %v1668
  %v3048 = vmul.f32 %v3044, %v3047
  %v3049 = vadd.f32 %v3032, %v3048
  %v3050 = vtanh.pop %v3049
  %v3051 = vsub.f32 1.0, %v3046
  %v3052 = vmul.f32 %v3051, %v3050
  %v3053 = vmul.f32 %v3046, %v2875
  %v3054 = vadd.f32 %v3052, %v3053
  %v3055 = vpack.c.bf16 %v3027, %v3027
  %v3056 = vpack.c.bf16 %v3054, %v3054
  %3057 = vmatprep.subr.bf16.mxu0 %v2005
  %3058 = vmatpush1.bf16.msra.mxu0 %v2004
  %3059 = vmatprep.subr.bf16.mxu0 %v1999
  %3060 = vmatpush1.bf16.msra.mxu0 %v1998
  %3061 = vmatprep.subr.bf16.mxu0 %v1993
  %3062 = vmatpush1.bf16.msra.mxu0 %v1992
  %3063 = vmatprep.subr.bf16.mxu0 %v1987
  %3064 = vmatpush1.bf16.msra.mxu0 %v1986
  %3065 = vmatprep.subr.bf16.mxu0 %v1981
  %3066 = vmatpush1.bf16.msra.mxu0 %v1980
  %3067 = vmatprep.subr.bf16.mxu0 %v1975
  %3068 = vmatpush1.bf16.msra.mxu0 %v1974
  %3069 = vmatprep.subr.bf16.mxu0 %v1969
  %3070 = vmatpush1.bf16.msra.mxu0 %v1968
  %3071 = vmatprep.subr.bf16.mxu0 %v1963
  %3072 = vmatpush1.bf16.msra.mxu0 %v1962
  %3073 = vmatprep.subr.bf16.mxu0 %v2053
  %3074 = vmatpush2.bf16.msra.mxu0 %v2052
  %3075 = vmatprep.subr.bf16.mxu0 %v2047
  %3076 = vmatpush2.bf16.msra.mxu0 %v2046
  %3077 = vmatprep.subr.bf16.mxu0 %v2041
  %3078 = vmatpush2.bf16.msra.mxu0 %v2040
  %3079 = vmatprep.subr.bf16.mxu0 %v2035
  %3080 = vmatpush2.bf16.msra.mxu0 %v2034
  %3081 = vmatprep.subr.bf16.mxu0 %v2029
  %3082 = vmatpush2.bf16.msra.mxu0 %v2028
  %3083 = vmatprep.subr.bf16.mxu0 %v2023
  %3084 = vmatpush2.bf16.msra.mxu0 %v2022
  %3085 = vmatprep.subr.bf16.mxu0 %v2017
  %3086 = vmatpush2.bf16.msra.mxu0 %v2016
  %3087 = vmatprep.subr.bf16.mxu0 %v2011
  %3088 = vmatpush2.bf16.msra.mxu0 %v2010
  %3089 = vmatprep.mubr.bf16.mxu0 %v3056
  %3090 = vmatmul.mubr.bf16.gmra.mxu0 %v3055
  %v3091 = vpop.f32.mrf.mxu0
  %v3092 = vadd.f32 0.0, %v3091
  %v3093 = vpop.f32.mrf.mxu0
  %v3094 = vadd.f32 0.0, %v3093
  %v3095 = vpop.f32.mrf.mxu0
  %v3096 = vpop.f32.mrf.mxu0
  %3097 = vdwg.mxu0
  %3098 = vmatprep.subr.bf16.mxu0 %v2007
  %3099 = vmatpush1.bf16.msra.mxu0 %v2006
  %3100 = vmatprep.subr.bf16.mxu0 %v2001
  %3101 = vmatpush1.bf16.msra.mxu0 %v2000
  %3102 = vmatprep.subr.bf16.mxu0 %v1995
  %3103 = vmatpush1.bf16.msra.mxu0 %v1994
  %3104 = vmatprep.subr.bf16.mxu0 %v1989
  %3105 = vmatpush1.bf16.msra.mxu0 %v1988
  %3106 = vmatprep.subr.bf16.mxu0 %v1983
  %3107 = vmatpush1.bf16.msra.mxu0 %v1982
  %3108 = vmatprep.subr.bf16.mxu0 %v1977
  %3109 = vmatpush1.bf16.msra.mxu0 %v1976
  %3110 = vmatprep.subr.bf16.mxu0 %v1971
  %3111 = vmatpush1.bf16.msra.mxu0 %v1970
  %3112 = vmatprep.subr.bf16.mxu0 %v1965
  %3113 = vmatpush1.bf16.msra.mxu0 %v1964
  %3114 = vmatprep.subr.bf16.mxu0 %v2055
  %3115 = vmatpush2.bf16.msra.mxu0 %v2054
  %3116 = vmatprep.subr.bf16.mxu0 %v2049
  %3117 = vmatpush2.bf16.msra.mxu0 %v2048
  %3118 = vmatprep.subr.bf16.mxu0 %v2043
  %3119 = vmatpush2.bf16.msra.mxu0 %v2042
  %3120 = vmatprep.subr.bf16.mxu0 %v2037
  %3121 = vmatpush2.bf16.msra.mxu0 %v2036
  %3122 = vmatprep.subr.bf16.mxu0 %v2031
  %3123 = vmatpush2.bf16.msra.mxu0 %v2030
  %3124 = vmatprep.subr.bf16.mxu0 %v2025
  %3125 = vmatpush2.bf16.msra.mxu0 %v2024
  %3126 = vmatprep.subr.bf16.mxu0 %v2019
  %3127 = vmatpush2.bf16.msra.mxu0 %v2018
  %3128 = vmatprep.subr.bf16.mxu0 %v2013
  %3129 = vmatpush2.bf16.msra.mxu0 %v2012
  %3130 = vmatprep.mubr.bf16.mxu0 %v3056
  %3131 = vmatmul.mubr.bf16.gmra.mxu0 %v3055
  %v3132 = vpop.f32.mrf.mxu0
  %v3133 = vadd.f32 0.0, %v3132
  %v3134 = vpop.f32.mrf.mxu0
  %v3135 = vadd.f32 0.0, %v3134
  %v3136 = vpop.f32.mrf.mxu0
  %v3137 = vpop.f32.mrf.mxu0
  %3138 = vdwg.mxu0
  %3139 = vmatprep.subr.bf16.mxu0 %v2009
  %3140 = vmatpush1.bf16.msra.mxu0 %v2008
  %3141 = vmatprep.subr.bf16.mxu0 %v2003
  %3142 = vmatpush1.bf16.msra.mxu0 %v2002
  %3143 = vmatprep.subr.bf16.mxu0 %v1997
  %3144 = vmatpush1.bf16.msra.mxu0 %v1996
  %3145 = vmatprep.subr.bf16.mxu0 %v1991
  %3146 = vmatpush1.bf16.msra.mxu0 %v1990
  %3147 = vmatprep.subr.bf16.mxu0 %v1985
  %3148 = vmatpush1.bf16.msra.mxu0 %v1984
  %3149 = vmatprep.subr.bf16.mxu0 %v1979
  %3150 = vmatpush1.bf16.msra.mxu0 %v1978
  %3151 = vmatprep.subr.bf16.mxu0 %v1973
  %3152 = vmatpush1.bf16.msra.mxu0 %v1972
  %3153 = vmatprep.subr.bf16.mxu0 %v1967
  %3154 = vmatpush1.bf16.msra.mxu0 %v1966
  %3155 = vmatprep.subr.bf16.mxu0 %v2057
  %3156 = vmatpush2.bf16.msra.mxu0 %v2056
  %3157 = vmatprep.subr.bf16.mxu0 %v2051
  %3158 = vmatpush2.bf16.msra.mxu0 %v2050
  %3159 = vmatprep.subr.bf16.mxu0 %v2045
  %3160 = vmatpush2.bf16.msra.mxu0 %v2044
  %3161 = vmatprep.subr.bf16.mxu0 %v2039
  %3162 = vmatpush2.bf16.msra.mxu0 %v2038
  %3163 = vmatprep.subr.bf16.mxu0 %v2033
  %3164 = vmatpush2.bf16.msra.mxu0 %v2032
  %3165 = vmatprep.subr.bf16.mxu0 %v2027
  %3166 = vmatpush2.bf16.msra.mxu0 %v2026
  %3167 = vmatprep.subr.bf16.mxu0 %v2021
  %3168 = vmatpush2.bf16.msra.mxu0 %v2020
  %3169 = vmatprep.subr.bf16.mxu0 %v2015
  %3170 = vmatpush2.bf16.msra.mxu0 %v2014
  %3171 = vmatprep.mubr.bf16.mxu0 %v3056
  %3172 = vmatmul.mubr.bf16.gmra.mxu0 %v3055
  %v3173 = vpop.f32.mrf.mxu0
  %v3174 = vadd.f32 0.0, %v3173
  %v3175 = vpop.f32.mrf.mxu0
  %v3176 = vadd.f32 0.0, %v3175
  %v3177 = vpop.f32.mrf.mxu0
  %v3178 = vpop.f32.mrf.mxu0
  %3179 = vdwg.mxu0
  %s3180 = smul.addr %s2667, 8
  %s3181 = scalar_lea.vmem [#allocation3], %s3180
  %v3182 = vld [vmem:[%s3181] sm:$0xff]
  %v3183 = vld [vmem:[%s3181 + $0x8] sm:$0xff]
  %v3184 = vld [vmem:[%s3181 + $0x10] sm:$0xff]
  %v3185 = vadd.f32 %v3182, %v3092
  %v3186 = vadd.f32 %v3183, %v3094
  %v3187 = vxor.u32 %v3185, 2147483648
  %v3188 = vxor.u32 %v3186, 2147483648
  %v3189 = vmul.f32 %v3187, 1.442695
  %v3190 = vpow.pop %v3189
  %v3191 = vmul.f32 %v3188, 1.442695
  %v3192 = vpow.pop %v3191
  %v3193 = vadd.f32 %v3190, 1.0
  %v3194 = vadd.f32 %v3192, 1.0
  %v3195 = vrcp.pop %v3193
  %v3196 = vmul.f32 1.0, %v3195
  %v3197 = vrcp.pop %v3194
  %v3198 = vmul.f32 1.0, %v3197
  %v3199 = vadd.f32 %v3133, %v1661
  %v3200 = vmul.f32 %v3196, %v3199
  %v3201 = vadd.f32 %v3184, %v3200
  %v3202 = vtanh.pop %v3201
  %v3203 = vsub.f32 1.0, %v3198
  %v3204 = vmul.f32 %v3203, %v3202
  %v3205 = vmul.f32 %v3198, %v3027
  %v3206 = vadd.f32 %v3204, %v3205
  %s3207 = smul.addr %s2639, 8
  %s3208 = scalar_lea.vmem [#allocation4], %s3207
  %v3209 = vld [vmem:[%s3208] sm:$0xff]
  %v3210 = vld [vmem:[%s3208 + $0x8] sm:$0xff]
  %v3211 = vld [vmem:[%s3208 + $0x10] sm:$0xff]
  %v3212 = vadd.f32 %v3209, %v3135
  %v3213 = vadd.f32 %v3210, %v3174
  %v3214 = vxor.u32 %v3212, 2147483648
  %v3215 = vxor.u32 %v3213, 2147483648
  %v3216 = vmul.f32 %v3214, 1.442695
  %v3217 = vpow.pop %v3216
  %v3218 = vmul.f32 %v3215, 1.442695
  %v3219 = vpow.pop %v3218
  %v3220 = vadd.f32 %v3217, 1.0
  %v3221 = vadd.f32 %v3219, 1.0
  %v3222 = vrcp.pop %v3220
  %v3223 = vmul.f32 1.0, %v3222
  %v3224 = vrcp.pop %v3221
  %v3225 = vmul.f32 1.0, %v3224
  %v3226 = vadd.f32 %v3176, %v1668
  %v3227 = vmul.f32 %v3223, %v3226
  %v3228 = vadd.f32 %v3211, %v3227
  %v3229 = vtanh.pop %v3228
  %v3230 = vsub.f32 1.0, %v3225
  %v3231 = vmul.f32 %v3230, %v3229
  %v3232 = vmul.f32 %v3225, %v3054
  %v3233 = vadd.f32 %v3231, %v3232
  %v3234 = vpack.c.bf16 %v3206, %v3206
  %v3235 = vpack.c.bf16 %v3233, %v3233
  %3236 = vmatprep.subr.bf16.mxu0 %v2005
  %3237 = vmatpush1.bf16.msra.mxu0 %v2004
  %3238 = vmatprep.subr.bf16.mxu0 %v1999
  %3239 = vmatpush1.bf16.msra.mxu0 %v1998
  %3240 = vmatprep.subr.bf16.mxu0 %v1993
  %3241 = vmatpush1.bf16.msra.mxu0 %v1992
  %3242 = vmatprep.subr.bf16.mxu0 %v1987
  %3243 = vmatpush1.bf16.msra.mxu0 %v1986
  %3244 = vmatprep.subr.bf16.mxu0 %v1981
  %3245 = vmatpush1.bf16.msra.mxu0 %v1980
  %3246 = vmatprep.subr.bf16.mxu0 %v1975
  %3247 = vmatpush1.bf16.msra.mxu0 %v1974
  %3248 = vmatprep.subr.bf16.mxu0 %v1969
  %3249 = vmatpush1.bf16.msra.mxu0 %v1968
  %3250 = vmatprep.subr.bf16.mxu0 %v1963
  %3251 = vmatpush1.bf16.msra.mxu0 %v1962
  %3252 = vmatprep.subr.bf16.mxu0 %v2053
  %3253 = vmatpush2.bf16.msra.mxu0 %v2052
  %3254 = vmatprep.subr.bf16.mxu0 %v2047
  %3255 = vmatpush2.bf16.msra.mxu0 %v2046
  %3256 = vmatprep.subr.bf16.mxu0 %v2041
  %3257 = vmatpush2.bf16.msra.mxu0 %v2040
  %3258 = vmatprep.subr.bf16.mxu0 %v2035
  %3259 = vmatpush2.bf16.msra.mxu0 %v2034
  %3260 = vmatprep.subr.bf16.mxu0 %v2029
  %3261 = vmatpush2.bf16.msra.mxu0 %v2028
  %3262 = vmatprep.subr.bf16.mxu0 %v2023
  %3263 = vmatpush2.bf16.msra.mxu0 %v2022
  %3264 = vmatprep.subr.bf16.mxu0 %v2017
  %3265 = vmatpush2.bf16.msra.mxu0 %v2016
  %3266 = vmatprep.subr.bf16.mxu0 %v2011
  %3267 = vmatpush2.bf16.msra.mxu0 %v2010
  %3268 = vmatprep.mubr.bf16.mxu0 %v3235
  %3269 = vmatmul.mubr.bf16.gmra.mxu0 %v3234
  %v3270 = vpop.f32.mrf.mxu0
  %v3271 = vadd.f32 0.0, %v3270
  %v3272 = vpop.f32.mrf.mxu0
  %v3273 = vadd.f32 0.0, %v3272
  %v3274 = vpop.f32.mrf.mxu0
  %v3275 = vpop.f32.mrf.mxu0
  %3276 = vdwg.mxu0
  %3277 = vmatprep.subr.bf16.mxu0 %v2007
  %3278 = vmatpush1.bf16.msra.mxu0 %v2006
  %3279 = vmatprep.subr.bf16.mxu0 %v2001
  %3280 = vmatpush1.bf16.msra.mxu0 %v2000
  %3281 = vmatprep.subr.bf16.mxu0 %v1995
  %3282 = vmatpush1.bf16.msra.mxu0 %v1994
  %3283 = vmatprep.subr.bf16.mxu0 %v1989
  %3284 = vmatpush1.bf16.msra.mxu0 %v1988
  %3285 = vmatprep.subr.bf16.mxu0 %v1983
  %3286 = vmatpush1.bf16.msra.mxu0 %v1982
  %3287 = vmatprep.subr.bf16.mxu0 %v1977
  %3288 = vmatpush1.bf16.msra.mxu0 %v1976
  %3289 = vmatprep.subr.bf16.mxu0 %v1971
  %3290 = vmatpush1.bf16.msra.mxu0 %v1970
  %3291 = vmatprep.subr.bf16.mxu0 %v1965
  %3292 = vmatpush1.bf16.msra.mxu0 %v1964
  %3293 = vmatprep.subr.bf16.mxu0 %v2055
  %3294 = vmatpush2.bf16.msra.mxu0 %v2054
  %3295 = vmatprep.subr.bf16.mxu0 %v2049
  %3296 = vmatpush2.bf16.msra.mxu0 %v2048
  %3297 = vmatprep.subr.bf16.mxu0 %v2043
  %3298 = vmatpush2.bf16.msra.mxu0 %v2042
  %3299 = vmatprep.subr.bf16.mxu0 %v2037
  %3300 = vmatpush2.bf16.msra.mxu0 %v2036
  %3301 = vmatprep.subr.bf16.mxu0 %v2031
  %3302 = vmatpush2.bf16.msra.mxu0 %v2030
  %3303 = vmatprep.subr.bf16.mxu0 %v2025
  %3304 = vmatpush2.bf16.msra.mxu0 %v2024
  %3305 = vmatprep.subr.bf16.mxu0 %v2019
  %3306 = vmatpush2.bf16.msra.mxu0 %v2018
  %3307 = vmatprep.subr.bf16.mxu0 %v2013
  %3308 = vmatpush2.bf16.msra.mxu0 %v2012
  %3309 = vmatprep.mubr.bf16.mxu0 %v3235
  %3310 = vmatmul.mubr.bf16.gmra.mxu0 %v3234
  %v3311 = vpop.f32.mrf.mxu0
  %v3312 = vadd.f32 0.0, %v3311
  %v3313 = vpop.f32.mrf.mxu0
  %v3314 = vadd.f32 0.0, %v3313
  %v3315 = vpop.f32.mrf.mxu0
  %v3316 = vpop.f32.mrf.mxu0
  %3317 = vdwg.mxu0
  %3318 = vmatprep.subr.bf16.mxu0 %v2009
  %3319 = vmatpush1.bf16.msra.mxu0 %v2008
  %3320 = vmatprep.subr.bf16.mxu0 %v2003
  %3321 = vmatpush1.bf16.msra.mxu0 %v2002
  %3322 = vmatprep.subr.bf16.mxu0 %v1997
  %3323 = vmatpush1.bf16.msra.mxu0 %v1996
  %3324 = vmatprep.subr.bf16.mxu0 %v1991
  %3325 = vmatpush1.bf16.msra.mxu0 %v1990
  %3326 = vmatprep.subr.bf16.mxu0 %v1985
  %3327 = vmatpush1.bf16.msra.mxu0 %v1984
  %3328 = vmatprep.subr.bf16.mxu0 %v1979
  %3329 = vmatpush1.bf16.msra.mxu0 %v1978
  %3330 = vmatprep.subr.bf16.mxu0 %v1973
  %3331 = vmatpush1.bf16.msra.mxu0 %v1972
  %3332 = vmatprep.subr.bf16.mxu0 %v1967
  %3333 = vmatpush1.bf16.msra.mxu0 %v1966
  %3334 = vmatprep.subr.bf16.mxu0 %v2057
  %3335 = vmatpush2.bf16.msra.mxu0 %v2056
  %3336 = vmatprep.subr.bf16.mxu0 %v2051
  %3337 = vmatpush2.bf16.msra.mxu0 %v2050
  %3338 = vmatprep.subr.bf16.mxu0 %v2045
  %3339 = vmatpush2.bf16.msra.mxu0 %v2044
  %3340 = vmatprep.subr.bf16.mxu0 %v2039
  %3341 = vmatpush2.bf16.msra.mxu0 %v2038
  %3342 = vmatprep.subr.bf16.mxu0 %v2033
  %3343 = vmatpush2.bf16.msra.mxu0 %v2032
  %3344 = vmatprep.subr.bf16.mxu0 %v2027
  %3345 = vmatpush2.bf16.msra.mxu0 %v2026
  %3346 = vmatprep.subr.bf16.mxu0 %v2021
  %3347 = vmatpush2.bf16.msra.mxu0 %v2020
  %3348 = vmatprep.subr.bf16.mxu0 %v2015
  %3349 = vmatpush2.bf16.msra.mxu0 %v2014
  %3350 = vmatprep.mubr.bf16.mxu0 %v3235
  %3351 = vmatmul.mubr.bf16.gmra.mxu0 %v3234
  %v3352 = vpop.f32.mrf.mxu0
  %v3353 = vadd.f32 0.0, %v3352
  %v3354 = vpop.f32.mrf.mxu0
  %v3355 = vadd.f32 0.0, %v3354
  %v3356 = vpop.f32.mrf.mxu0
  %v3357 = vpop.f32.mrf.mxu0
  %3358 = vdwg.mxu0
  %s3359 = smul.addr %s2486, 8
  %s3360 = scalar_lea.vmem [#allocation3], %s3359
  %v3361 = vld [vmem:[%s3360] sm:$0xff]
  %v3362 = vld [vmem:[%s3360 + $0x8] sm:$0xff]
  %v3363 = vld [vmem:[%s3360 + $0x10] sm:$0xff]
  %v3364 = vadd.f32 %v3361, %v3271
  %v3365 = vadd.f32 %v3362, %v3273
  %v3366 = vxor.u32 %v3364, 2147483648
  %v3367 = vxor.u32 %v3365, 2147483648
  %v3368 = vmul.f32 %v3366, 1.442695
  %v3369 = vpow.pop %v3368
  %v3370 = vmul.f32 %v3367, 1.442695
  %v3371 = vpow.pop %v3370
  %v3372 = vadd.f32 %v3369, 1.0
  %v3373 = vadd.f32 %v3371, 1.0
  %v3374 = vrcp.pop %v3372
  %v3375 = vmul.f32 1.0, %v3374
  %v3376 = vrcp.pop %v3373
  %v3377 = vmul.f32 1.0, %v3376
  %v3378 = vadd.f32 %v3312, %v1661
  %v3379 = vmul.f32 %v3375, %v3378
  %v3380 = vadd.f32 %v3363, %v3379
  %v3381 = vtanh.pop %v3380
  %v3382 = vsub.f32 1.0, %v3377
  %v3383 = vmul.f32 %v3382, %v3381
  %v3384 = vmul.f32 %v3377, %v3206
  %v3385 = vadd.f32 %v3383, %v3384
  %s3386 = smul.addr %s2458, 8
  %s3387 = scalar_lea.vmem [#allocation4], %s3386
  %v3388 = vld [vmem:[%s3387] sm:$0xff]
  %v3389 = vld [vmem:[%s3387 + $0x8] sm:$0xff]
  %v3390 = vld [vmem:[%s3387 + $0x10] sm:$0xff]
  %v3391 = vadd.f32 %v3388, %v3314
  %v3392 = vadd.f32 %v3389, %v3353
  %v3393 = vxor.u32 %v3391, 2147483648
  %v3394 = vxor.u32 %v3392, 2147483648
  %v3395 = vmul.f32 %v3393, 1.442695
  %v3396 = vpow.pop %v3395
  %v3397 = vmul.f32 %v3394, 1.442695
  %v3398 = vpow.pop %v3397
  %v3399 = vadd.f32 %v3396, 1.0
  %v3400 = vadd.f32 %v3398, 1.0
  %v3401 = vrcp.pop %v3399
  %v3402 = vmul.f32 1.0, %v3401
  %v3403 = vrcp.pop %v3400
  %v3404 = vmul.f32 1.0, %v3403
  %v3405 = vadd.f32 %v3355, %v1668
  %v3406 = vmul.f32 %v3402, %v3405
  %v3407 = vadd.f32 %v3390, %v3406
  %v3408 = vtanh.pop %v3407
  %v3409 = vsub.f32 1.0, %v3404
  %v3410 = vmul.f32 %v3409, %v3408
  %v3411 = vmul.f32 %v3404, %v3233
  %v3412 = vadd.f32 %v3410, %v3411
  %v3413 = vpack.c.bf16 %v3385, %v3385
  %v3414 = vpack.c.bf16 %v3412, %v3412
  %3415 = vmatprep.subr.bf16.mxu0 %v2005
  %3416 = vmatpush1.bf16.msra.mxu0 %v2004
  %3417 = vmatprep.subr.bf16.mxu0 %v1999
  %3418 = vmatpush1.bf16.msra.mxu0 %v1998
  %3419 = vmatprep.subr.bf16.mxu0 %v1993
  %3420 = vmatpush1.bf16.msra.mxu0 %v1992
  %3421 = vmatprep.subr.bf16.mxu0 %v1987
  %3422 = vmatpush1.bf16.msra.mxu0 %v1986
  %3423 = vmatprep.subr.bf16.mxu0 %v1981
  %3424 = vmatpush1.bf16.msra.mxu0 %v1980
  %3425 = vmatprep.subr.bf16.mxu0 %v1975
  %3426 = vmatpush1.bf16.msra.mxu0 %v1974
  %3427 = vmatprep.subr.bf16.mxu0 %v1969
  %3428 = vmatpush1.bf16.msra.mxu0 %v1968
  %3429 = vmatprep.subr.bf16.mxu0 %v1963
  %3430 = vmatpush1.bf16.msra.mxu0 %v1962
  %3431 = vmatprep.subr.bf16.mxu0 %v2053
  %3432 = vmatpush2.bf16.msra.mxu0 %v2052
  %3433 = vmatprep.subr.bf16.mxu0 %v2047
  %3434 = vmatpush2.bf16.msra.mxu0 %v2046
  %3435 = vmatprep.subr.bf16.mxu0 %v2041
  %3436 = vmatpush2.bf16.msra.mxu0 %v2040
  %3437 = vmatprep.subr.bf16.mxu0 %v2035
  %3438 = vmatpush2.bf16.msra.mxu0 %v2034
  %3439 = vmatprep.subr.bf16.mxu0 %v2029
  %3440 = vmatpush2.bf16.msra.mxu0 %v2028
  %3441 = vmatprep.subr.bf16.mxu0 %v2023
  %3442 = vmatpush2.bf16.msra.mxu0 %v2022
  %3443 = vmatprep.subr.bf16.mxu0 %v2017
  %3444 = vmatpush2.bf16.msra.mxu0 %v2016
  %3445 = vmatprep.subr.bf16.mxu0 %v2011
  %3446 = vmatpush2.bf16.msra.mxu0 %v2010
  %3447 = vmatprep.mubr.bf16.mxu0 %v3414
  %3448 = vmatmul.mubr.bf16.gmra.mxu0 %v3413
  %v3449 = vpop.f32.mrf.mxu0
  %v3450 = vadd.f32 0.0, %v3449
  %v3451 = vpop.f32.mrf.mxu0
  %v3452 = vadd.f32 0.0, %v3451
  %v3453 = vpop.f32.mrf.mxu0
  %v3454 = vpop.f32.mrf.mxu0
  %3455 = vdwg.mxu0
  %3456 = vmatprep.subr.bf16.mxu0 %v2007
  %3457 = vmatpush1.bf16.msra.mxu0 %v2006
  %3458 = vmatprep.subr.bf16.mxu0 %v2001
  %3459 = vmatpush1.bf16.msra.mxu0 %v2000
  %3460 = vmatprep.subr.bf16.mxu0 %v1995
  %3461 = vmatpush1.bf16.msra.mxu0 %v1994
  %3462 = vmatprep.subr.bf16.mxu0 %v1989
  %3463 = vmatpush1.bf16.msra.mxu0 %v1988
  %3464 = vmatprep.subr.bf16.mxu0 %v1983
  %3465 = vmatpush1.bf16.msra.mxu0 %v1982
  %3466 = vmatprep.subr.bf16.mxu0 %v1977
  %3467 = vmatpush1.bf16.msra.mxu0 %v1976
  %3468 = vmatprep.subr.bf16.mxu0 %v1971
  %3469 = vmatpush1.bf16.msra.mxu0 %v1970
  %3470 = vmatprep.subr.bf16.mxu0 %v1965
  %3471 = vmatpush1.bf16.msra.mxu0 %v1964
  %3472 = vmatprep.subr.bf16.mxu0 %v2055
  %3473 = vmatpush2.bf16.msra.mxu0 %v2054
  %3474 = vmatprep.subr.bf16.mxu0 %v2049
  %3475 = vmatpush2.bf16.msra.mxu0 %v2048
  %3476 = vmatprep.subr.bf16.mxu0 %v2043
  %3477 = vmatpush2.bf16.msra.mxu0 %v2042
  %3478 = vmatprep.subr.bf16.mxu0 %v2037
  %3479 = vmatpush2.bf16.msra.mxu0 %v2036
  %3480 = vmatprep.subr.bf16.mxu0 %v2031
  %3481 = vmatpush2.bf16.msra.mxu0 %v2030
  %3482 = vmatprep.subr.bf16.mxu0 %v2025
  %3483 = vmatpush2.bf16.msra.mxu0 %v2024
  %3484 = vmatprep.subr.bf16.mxu0 %v2019
  %3485 = vmatpush2.bf16.msra.mxu0 %v2018
  %3486 = vmatprep.subr.bf16.mxu0 %v2013
  %3487 = vmatpush2.bf16.msra.mxu0 %v2012
  %3488 = vmatprep.mubr.bf16.mxu0 %v3414
  %3489 = vmatmul.mubr.bf16.gmra.mxu0 %v3413
  %v3490 = vpop.f32.mrf.mxu0
  %v3491 = vadd.f32 0.0, %v3490
  %v3492 = vpop.f32.mrf.mxu0
  %v3493 = vadd.f32 0.0, %v3492
  %v3494 = vpop.f32.mrf.mxu0
  %v3495 = vpop.f32.mrf.mxu0
  %3496 = vdwg.mxu0
  %3497 = vmatprep.subr.bf16.mxu0 %v2009
  %3498 = vmatpush1.bf16.msra.mxu0 %v2008
  %3499 = vmatprep.subr.bf16.mxu0 %v2003
  %3500 = vmatpush1.bf16.msra.mxu0 %v2002
  %3501 = vmatprep.subr.bf16.mxu0 %v1997
  %3502 = vmatpush1.bf16.msra.mxu0 %v1996
  %3503 = vmatprep.subr.bf16.mxu0 %v1991
  %3504 = vmatpush1.bf16.msra.mxu0 %v1990
  %3505 = vmatprep.subr.bf16.mxu0 %v1985
  %3506 = vmatpush1.bf16.msra.mxu0 %v1984
  %3507 = vmatprep.subr.bf16.mxu0 %v1979
  %3508 = vmatpush1.bf16.msra.mxu0 %v1978
  %3509 = vmatprep.subr.bf16.mxu0 %v1973
  %3510 = vmatpush1.bf16.msra.mxu0 %v1972
  %3511 = vmatprep.subr.bf16.mxu0 %v1967
  %3512 = vmatpush1.bf16.msra.mxu0 %v1966
  %3513 = vmatprep.subr.bf16.mxu0 %v2057
  %3514 = vmatpush2.bf16.msra.mxu0 %v2056
  %3515 = vmatprep.subr.bf16.mxu0 %v2051
  %3516 = vmatpush2.bf16.msra.mxu0 %v2050
  %3517 = vmatprep.subr.bf16.mxu0 %v2045
  %3518 = vmatpush2.bf16.msra.mxu0 %v2044
  %3519 = vmatprep.subr.bf16.mxu0 %v2039
  %3520 = vmatpush2.bf16.msra.mxu0 %v2038
  %3521 = vmatprep.subr.bf16.mxu0 %v2033
  %3522 = vmatpush2.bf16.msra.mxu0 %v2032
  %3523 = vmatprep.subr.bf16.mxu0 %v2027
  %3524 = vmatpush2.bf16.msra.mxu0 %v2026
  %3525 = vmatprep.subr.bf16.mxu0 %v2021
  %3526 = vmatpush2.bf16.msra.mxu0 %v2020
  %3527 = vmatprep.subr.bf16.mxu0 %v2015
  %3528 = vmatpush2.bf16.msra.mxu0 %v2014
  %3529 = vmatprep.mubr.bf16.mxu0 %v3414
  %3530 = vmatmul.mubr.bf16.gmra.mxu0 %v3413
  %v3531 = vpop.f32.mrf.mxu0
  %v3532 = vadd.f32 0.0, %v3531
  %v3533 = vpop.f32.mrf.mxu0
  %v3534 = vadd.f32 0.0, %v3533
  %v3535 = vpop.f32.mrf.mxu0
  %v3536 = vpop.f32.mrf.mxu0
  %3537 = vdwg.mxu0
  %s3538 = smul.addr %s2305, 8
  %s3539 = scalar_lea.vmem [#allocation3], %s3538
  %v3540 = vld [vmem:[%s3539] sm:$0xff]
  %v3541 = vld [vmem:[%s3539 + $0x8] sm:$0xff]
  %v3542 = vld [vmem:[%s3539 + $0x10] sm:$0xff]
  %v3543 = vadd.f32 %v3540, %v3450
  %v3544 = vadd.f32 %v3541, %v3452
  %v3545 = vxor.u32 %v3543, 2147483648
  %v3546 = vxor.u32 %v3544, 2147483648
  %v3547 = vmul.f32 %v3545, 1.442695
  %v3548 = vpow.pop %v3547
  %v3549 = vmul.f32 %v3546, 1.442695
  %v3550 = vpow.pop %v3549
  %v3551 = vadd.f32 %v3548, 1.0
  %v3552 = vadd.f32 %v3550, 1.0
  %v3553 = vrcp.pop %v3551
  %v3554 = vmul.f32 1.0, %v3553
  %v3555 = vrcp.pop %v3552
  %v3556 = vmul.f32 1.0, %v3555
  %v3557 = vadd.f32 %v3491, %v1661
  %v3558 = vmul.f32 %v3554, %v3557
  %v3559 = vadd.f32 %v3542, %v3558
  %v3560 = vtanh.pop %v3559
  %v3561 = vsub.f32 1.0, %v3556
  %v3562 = vmul.f32 %v3561, %v3560
  %v3563 = vmul.f32 %v3556, %v3385
  %v3564 = vadd.f32 %v3562, %v3563
  %s3565 = smul.addr %s2277, 8
  %s3566 = scalar_lea.vmem [#allocation4], %s3565
  %v3567 = vld [vmem:[%s3566] sm:$0xff]
  %v3568 = vld [vmem:[%s3566 + $0x8] sm:$0xff]
  %v3569 = vld [vmem:[%s3566 + $0x10] sm:$0xff]
  %v3570 = vadd.f32 %v3567, %v3493
  %v3571 = vadd.f32 %v3568, %v3532
  %v3572 = vxor.u32 %v3570, 2147483648
  %v3573 = vxor.u32 %v3571, 2147483648
  %v3574 = vmul.f32 %v3572, 1.442695
  %v3575 = vpow.pop %v3574
  %v3576 = vmul.f32 %v3573, 1.442695
  %v3577 = vpow.pop %v3576
  %v3578 = vadd.f32 %v3575, 1.0
  %v3579 = vadd.f32 %v3577, 1.0
  %v3580 = vrcp.pop %v3578
  %v3581 = vmul.f32 1.0, %v3580
  %v3582 = vrcp.pop %v3579
  %v3583 = vmul.f32 1.0, %v3582
  %v3584 = vadd.f32 %v3534, %v1668
  %v3585 = vmul.f32 %v3581, %v3584
  %v3586 = vadd.f32 %v3569, %v3585
  %v3587 = vtanh.pop %v3586
  %v3588 = vsub.f32 1.0, %v3583
  %v3589 = vmul.f32 %v3588, %v3587
  %v3590 = vmul.f32 %v3583, %v3412
  %v3591 = vadd.f32 %v3589, %v3590
  %3592 = vst [vmem:[#allocation2] sm:$0xff] %v3564
  %3593 = vst [vmem:[#allocation2 + $0x8] sm:$0xff] %v3591
  // Predicated region
  $region78: #{rnn_gru_forward.3} parent=0 // pred_check
    %p3594 = pneg %p104
  $region79: #{rnn_gru_forward.3} parent=0 // pred_check_branch
    %3596 = sbr.rel (%p3594) target = $region81
  $region80: #{rnn_gru_forward.3} parent=0 // pred_region
    %v3597 = vld [vmem:[%s13] sm:$0xff]
    %v3598 = vld [vmem:[%s13 + $0x8] sm:$0xff]
    %v3599 = vld [vmem:[%s13 + $0x10] sm:$0xff]
    %v3600 = vld [vmem:[%s13 + $0x18] sm:$0xff]
    %v3601 = vld [vmem:[%s13 + $0x20] sm:$0xff]
    %v3602 = vld [vmem:[%s13 + $0x28] sm:$0xff]
    %v3603 = vld [vmem:[%s13 + $0x30] sm:$0xff]
    %v3604 = vld [vmem:[%s13 + $0x38] sm:$0xff]
    %v3605 = vld [vmem:[%s13 + $0x40] sm:$0xff]
    %v3606 = vld [vmem:[%s13 + $0x48] sm:$0xff]
    %v3607 = vld [vmem:[%s13 + $0x50] sm:$0xff]
    %v3608 = vld [vmem:[%s13 + $0x58] sm:$0xff]
    %v3609 = vld [vmem:[%s13 + $0x60] sm:$0xff]
    %v3610 = vld [vmem:[%s13 + $0x68] sm:$0xff]
    %v3611 = vld [vmem:[%s13 + $0x70] sm:$0xff]
    %v3612 = vld [vmem:[%s13 + $0x78] sm:$0xff]
    %v3613 = vld [vmem:[%s14] sm:$0xff]
    %v3614 = vld [vmem:[%s14 + $0x8] sm:$0xff]
    %v3615 = vld [vmem:[%s14 + $0x10] sm:$0xff]
    %v3616 = vld [vmem:[%s14 + $0x18] sm:$0xff]
    %v3617 = vld [vmem:[%s14 + $0x20] sm:$0xff]
    %v3618 = vld [vmem:[%s14 + $0x28] sm:$0xff]
    %v3619 = vld [vmem:[%s14 + $0x30] sm:$0xff]
    %v3620 = vld [vmem:[%s14 + $0x38] sm:$0xff]
    %v3621 = vld [vmem:[%s14 + $0x40] sm:$0xff]
    %v3622 = vld [vmem:[%s14 + $0x48] sm:$0xff]
    %v3623 = vld [vmem:[%s14 + $0x50] sm:$0xff]
    %v3624 = vld [vmem:[%s14 + $0x58] sm:$0xff]
    %v3625 = vld [vmem:[%s14 + $0x60] sm:$0xff]
    %v3626 = vld [vmem:[%s14 + $0x68] sm:$0xff]
    %v3627 = vld [vmem:[%s14 + $0x70] sm:$0xff]
    %v3628 = vld [vmem:[%s14 + $0x78] sm:$0xff]
    %3629 = vmatprep.subr.mxu0 0.0
    %3630 = vmatpush1.msra.mxu0 %v3628
    %3631 = vmatprep.subr.mxu0 0.0
    %3632 = vmatpush1.msra.mxu0 %v3627
    %3633 = vmatprep.subr.mxu0 0.0
    %3634 = vmatpush1.msra.mxu0 %v3626
    %3635 = vmatprep.subr.mxu0 0.0
    %3636 = vmatpush1.msra.mxu0 %v3625
    %3637 = vmatprep.subr.mxu0 0.0
    %3638 = vmatpush1.msra.mxu0 %v3624
    %3639 = vmatprep.subr.mxu0 0.0
    %3640 = vmatpush1.msra.mxu0 %v3623
    %3641 = vmatprep.subr.mxu0 0.0
    %3642 = vmatpush1.msra.mxu0 %v3622
    %3643 = vmatprep.subr.mxu0 0.0
    %3644 = vmatpush1.msra.mxu0 %v3621
    %3645 = vmatprep.subr.mxu0 0.0
    %3646 = vmatpush1.msra.mxu0 %v3620
    %3647 = vmatprep.subr.mxu0 0.0
    %3648 = vmatpush1.msra.mxu0 %v3619
    %3649 = vmatprep.subr.mxu0 0.0
    %3650 = vmatpush1.msra.mxu0 %v3618
    %3651 = vmatprep.subr.mxu0 0.0
    %3652 = vmatpush1.msra.mxu0 %v3617
    %3653 = vmatprep.subr.mxu0 0.0
    %3654 = vmatpush1.msra.mxu0 %v3616
    %3655 = vmatprep.subr.mxu0 0.0
    %3656 = vmatpush1.msra.mxu0 %v3615
    %3657 = vmatprep.subr.mxu0 0.0
    %3658 = vmatpush1.msra.mxu0 %v3614
    %3659 = vmatprep.subr.mxu0 0.0
    %3660 = vmatpush1.msra.mxu0 %v3613
    %3661 = vmatprep.subr.mxu0 0.0
    %3662 = vmatpush2.msra.mxu0 0.0
    %3663 = vmatprep.subr.mxu0 0.0
    %3664 = vmatpush2.msra.mxu0 0.0
    %3665 = vmatprep.subr.mxu0 0.0
    %3666 = vmatpush2.msra.mxu0 0.0
    %3667 = vmatprep.subr.mxu0 0.0
    %3668 = vmatpush2.msra.mxu0 0.0
    %3669 = vmatprep.subr.mxu0 0.0
    %3670 = vmatpush2.msra.mxu0 0.0
    %3671 = vmatprep.subr.mxu0 0.0
    %3672 = vmatpush2.msra.mxu0 0.0
    %3673 = vmatprep.subr.mxu0 0.0
    %3674 = vmatpush2.msra.mxu0 0.0
    %3675 = vmatprep.subr.mxu0 0.0
    %3676 = vmatpush2.msra.mxu0 0.0
    %3677 = vmatprep.subr.mxu0 0.0
    %3678 = vmatpush2.msra.mxu0 0.0
    %3679 = vmatprep.subr.mxu0 0.0
    %3680 = vmatpush2.msra.mxu0 0.0
    %3681 = vmatprep.subr.mxu0 0.0
    %3682 = vmatpush2.msra.mxu0 0.0
    %3683 = vmatprep.subr.mxu0 0.0
    %3684 = vmatpush2.msra.mxu0 0.0
    %3685 = vmatprep.subr.mxu0 0.0
    %3686 = vmatpush2.msra.mxu0 0.0
    %3687 = vmatprep.subr.mxu0 0.0
    %3688 = vmatpush2.msra.mxu0 0.0
    %3689 = vmatprep.subr.mxu0 0.0
    %3690 = vmatpush2.msra.mxu0 0.0
    %3691 = vmatprep.subr.mxu0 0.0
    %3692 = vmatpush2.msra.mxu0 0.0
    %3693 = vmatprep.mubr.f32.mxu0 0.0
    %3694 = vmatmul.mubr.f32.gmra.mxu0 %v3591
    %v3695 = vpop.f32.mrf.mxu0
    %v3696 = vadd.f32 0.0, %v3695
    %v3697 = vpop.f32.mrf.mxu0
    %3698 = vdwg.mxu0
    %3699 = vmatprep.subr.mxu0 0.0
    %3700 = vmatpush1.msra.mxu0 %v3612
    %3701 = vmatprep.subr.mxu0 0.0
    %3702 = vmatpush1.msra.mxu0 %v3611
    %3703 = vmatprep.subr.mxu0 0.0
    %3704 = vmatpush1.msra.mxu0 %v3610
    %3705 = vmatprep.subr.mxu0 0.0
    %3706 = vmatpush1.msra.mxu0 %v3609
    %3707 = vmatprep.subr.mxu0 0.0
    %3708 = vmatpush1.msra.mxu0 %v3608
    %3709 = vmatprep.subr.mxu0 0.0
    %3710 = vmatpush1.msra.mxu0 %v3607
    %3711 = vmatprep.subr.mxu0 0.0
    %3712 = vmatpush1.msra.mxu0 %v3606
    %3713 = vmatprep.subr.mxu0 0.0
    %3714 = vmatpush1.msra.mxu0 %v3605
    %3715 = vmatprep.subr.mxu0 0.0
    %3716 = vmatpush1.msra.mxu0 %v3604
    %3717 = vmatprep.subr.mxu0 0.0
    %3718 = vmatpush1.msra.mxu0 %v3603
    %3719 = vmatprep.subr.mxu0 0.0
    %3720 = vmatpush1.msra.mxu0 %v3602
    %3721 = vmatprep.subr.mxu0 0.0
    %3722 = vmatpush1.msra.mxu0 %v3601
    %3723 = vmatprep.subr.mxu0 0.0
    %3724 = vmatpush1.msra.mxu0 %v3600
    %3725 = vmatprep.subr.mxu0 0.0
    %3726 = vmatpush1.msra.mxu0 %v3599
    %3727 = vmatprep.subr.mxu0 0.0
    %3728 = vmatpush1.msra.mxu0 %v3598
    %3729 = vmatprep.subr.mxu0 0.0
    %3730 = vmatpush1.msra.mxu0 %v3597
    %3731 = vmatprep.subr.mxu0 0.0
    %3732 = vmatpush2.msra.mxu0 0.0
    %3733 = vmatprep.subr.mxu0 0.0
    %3734 = vmatpush2.msra.mxu0 0.0
    %3735 = vmatprep.subr.mxu0 0.0
    %3736 = vmatpush2.msra.mxu0 0.0
    %3737 = vmatprep.subr.mxu0 0.0
    %3738 = vmatpush2.msra.mxu0 0.0
    %3739 = vmatprep.subr.mxu0 0.0
    %3740 = vmatpush2.msra.mxu0 0.0
    %3741 = vmatprep.subr.mxu0 0.0
    %3742 = vmatpush2.msra.mxu0 0.0
    %3743 = vmatprep.subr.mxu0 0.0
    %3744 = vmatpush2.msra.mxu0 0.0
    %3745 = vmatprep.subr.mxu0 0.0
    %3746 = vmatpush2.msra.mxu0 0.0
    %3747 = vmatprep.subr.mxu0 0.0
    %3748 = vmatpush2.msra.mxu0 0.0
    %3749 = vmatprep.subr.mxu0 0.0
    %3750 = vmatpush2.msra.mxu0 0.0
    %3751 = vmatprep.subr.mxu0 0.0
    %3752 = vmatpush2.msra.mxu0 0.0
    %3753 = vmatprep.subr.mxu0 0.0
    %3754 = vmatpush2.msra.mxu0 0.0
    %3755 = vmatprep.subr.mxu0 0.0
    %3756 = vmatpush2.msra.mxu0 0.0
    %3757 = vmatprep.subr.mxu0 0.0
    %3758 = vmatpush2.msra.mxu0 0.0
    %3759 = vmatprep.subr.mxu0 0.0
    %3760 = vmatpush2.msra.mxu0 0.0
    %3761 = vmatprep.subr.mxu0 0.0
    %3762 = vmatpush2.msra.mxu0 0.0
    %3763 = vmatprep.mubr.f32.mxu0 0.0
    %3764 = vmatmul.mubr.f32.gmra.mxu0 %v3564
    %v3765 = vpop.f32.mrf.mxu0
    %v3766 = vadd.f32 %v3696, %v3765
    %v3767 = vpop.f32.mrf.mxu0
    %3768 = vdwg.mxu0
    %v3769 = vld [vmem:[%s15] sm:$0x1]
    %v3771 = vlaneseq
    %v3772 = vshrl.u32 %v3771, 7
    %v3773 = vsub.s32 0, %v3772
    %v3774 = vrot.slane %v3769, %v3773
    %v3776 = vadd.f32 %v3766, %v3774
    %v3777 = vmax.f32 %v3776, 0.0
    %v3778 = vld [vmem:[%s16] sm:$0xff]
    %v3779 = vld [vmem:[%s16 + $0x8] sm:$0xff]
    %v3780 = vld [vmem:[%s16 + $0x10] sm:$0xff]
    %v3781 = vld [vmem:[%s16 + $0x18] sm:$0xff]
    %v3782 = vld [vmem:[%s17] sm:$0x1]
    %v3784 = vlaneseq
    %v3785 = vshrl.u32 %v3784, 7
    %v3786 = vsub.s32 0, %v3785
    %v3787 = vrot.slane %v3782, %v3786
    %vm3789 = vcmask 261120
    %v3791 = vsel %vm3789, %v3777, 0
    %3793 = vmatprep.subr.mxu0 0.0
    %3794 = vmatpush1.msra.mxu0 0.0
    %3795 = vmatprep.subr.mxu0 0.0
    %3796 = vmatpush1.msra.mxu0 0.0
    %3797 = vmatprep.subr.mxu0 0.0
    %3798 = vmatpush1.msra.mxu0 0.0
    %3799 = vmatprep.subr.mxu0 0.0
    %3800 = vmatpush1.msra.mxu0 0.0
    %3801 = vmatprep.subr.mxu0 0.0
    %3802 = vmatpush1.msra.mxu0 0.0
    %3803 = vmatprep.subr.mxu0 0.0
    %3804 = vmatpush1.msra.mxu0 0.0
    %3805 = vmatprep.subr.mxu0 0.0
    %3806 = vmatpush1.msra.mxu0 0.0
    %3807 = vmatprep.subr.mxu0 0.0
    %3808 = vmatpush1.msra.mxu0 0.0
    %3809 = vmatprep.subr.mxu0 0.0
    %3810 = vmatpush1.msra.mxu0 0.0
    %3811 = vmatprep.subr.mxu0 0.0
    %3812 = vmatpush1.msra.mxu0 0.0
    %3813 = vmatprep.subr.mxu0 0.0
    %3814 = vmatpush1.msra.mxu0 0.0
    %3815 = vmatprep.subr.mxu0 0.0
    %3816 = vmatpush1.msra.mxu0 0.0
    %3817 = vmatprep.subr.mxu0 0.0
    %3818 = vmatpush1.msra.mxu0 %v3781
    %3819 = vmatprep.subr.mxu0 0.0
    %3820 = vmatpush1.msra.mxu0 %v3780
    %3821 = vmatprep.subr.mxu0 0.0
    %3822 = vmatpush1.msra.mxu0 %v3779
    %3823 = vmatprep.subr.mxu0 0.0
    %3824 = vmatpush1.msra.mxu0 %v3778
    %3825 = vmatprep.subr.mxu0 0.0
    %3826 = vmatpush2.msra.mxu0 0.0
    %3827 = vmatprep.subr.mxu0 0.0
    %3828 = vmatpush2.msra.mxu0 0.0
    %3829 = vmatprep.subr.mxu0 0.0
    %3830 = vmatpush2.msra.mxu0 0.0
    %3831 = vmatprep.subr.mxu0 0.0
    %3832 = vmatpush2.msra.mxu0 0.0
    %3833 = vmatprep.subr.mxu0 0.0
    %3834 = vmatpush2.msra.mxu0 0.0
    %3835 = vmatprep.subr.mxu0 0.0
    %3836 = vmatpush2.msra.mxu0 0.0
    %3837 = vmatprep.subr.mxu0 0.0
    %3838 = vmatpush2.msra.mxu0 0.0
    %3839 = vmatprep.subr.mxu0 0.0
    %3840 = vmatpush2.msra.mxu0 0.0
    %3841 = vmatprep.subr.mxu0 0.0
    %3842 = vmatpush2.msra.mxu0 0.0
    %3843 = vmatprep.subr.mxu0 0.0
    %3844 = vmatpush2.msra.mxu0 0.0
    %3845 = vmatprep.subr.mxu0 0.0
    %3846 = vmatpush2.msra.mxu0 0.0
    %3847 = vmatprep.subr.mxu0 0.0
    %3848 = vmatpush2.msra.mxu0 0.0
    %3849 = vmatprep.subr.mxu0 0.0
    %3850 = vmatpush2.msra.mxu0 0.0
    %3851 = vmatprep.subr.mxu0 0.0
    %3852 = vmatpush2.msra.mxu0 0.0
    %3853 = vmatprep.subr.mxu0 0.0
    %3854 = vmatpush2.msra.mxu0 0.0
    %3855 = vmatprep.subr.mxu0 0.0
    %3856 = vmatpush2.msra.mxu0 0.0
    %3857 = vmatprep.mubr.f32.mxu0 0.0
    %3858 = vmatmul.mubr.f32.gmra.mxu0 %v3791
    %v3859 = vpop.f32.mrf.mxu0
    %v3860 = vadd.f32 %v3787, %v3859
    %v3861 = vpop.f32.mrf.mxu0
    %3862 = vdwg.mxu0
    %3863 = vst [vmem:[%s18] sm:$0xff] %v3860
  $region81: #{rnn_gru_forward.3} parent=0 // pred_fallthru
    _
  // Predicated region
  $region82: #{rnn_gru_forward.3} parent=0 // pred_check
    _
  $region83: #{rnn_gru_forward.3} parent=0 // pred_check_branch
    %3865 = sbr.rel (0) target = $region85
  $region84: #{rnn_gru_forward.3} parent=0 // pred_region
    _
  $region85: #{rnn_gru_forward.3} parent=0 // pred_fallthru
    _
  // Predicated region
  $region86: #{rnn_gru_forward.3} parent=0 // pred_check
    _
  $region87: #{rnn_gru_forward.3} parent=0 // pred_check_branch
    %3867 = sbr.rel (0) target = $region89
  $region88: #{rnn_gru_forward.3} parent=0 // pred_region
    _
  $region89: #{rnn_gru_forward.3} parent=0 // pred_fallthru
    _

</llo_original>
